<compile_context>
chip_gen: v5e
topology: v5e:2x2
jax: 0.10.0
libtpu: 0.0.40
codegen_flags: <defaults>
</compile_context>

<pallas_src>
import functools

import jax
import jax.numpy as jnp
import numpy as np
from jax.experimental import pallas as pl
from jax.experimental.pallas import tpu as pltpu

DIM_IN = 2
DIM_OUT = 1
DIM_HIDDEN = 32   # hidden width
RES_BLOCKS = 4    # number of residual blocks (the reference reads a global `res_blocks`)
MAX_TILE_N = 1024  # upper bound on points per grid step (multiple of 128)


def respinn_kernel(p_ref, wf_ref, bf_ref, w0_ref, b0_ref, w1_ref, b1_ref,
                   wl_ref, bl_ref, out_ref, s4_ref):
    # p_ref: (2, TN) points, row 0 = t, row 1 = x  (feature-major layout)
    # s4_ref: persistent VMEM scratch (H, 4*TN) holding the 4 tangent streams
    tn = p_ref.shape[1]
    n_blocks = w0_ref.shape[0]

    t_row = p_ref[0:1, :]                  # (1, TN)
    x_row = p_ref[1:2, :]                  # (1, TN)
    wf = wf_ref[...]                       # (H, 2) = Wf^T
    wt_col = wf[:, 0:1]                    # (H, 1) d h / d t
    wx_col = wf[:, 1:2]                    # (H, 1) d h / d x

    # first linear layer on the VPU (K=2 contraction -> outer-product broadcasts)
    h = wt_col * t_row + wx_col * x_row + bf_ref[...]   # (H, TN)
    dt = wt_col                            # tangent d h/dt (lazy (H,1) broadcast)
    dx = wx_col                            # tangent d h/dx
    dxx = None                             # exactly zero before the first block

    def fused4(wT, v, g_t, g_x, g_xx):
        # write the 4 streams straight into the persistent scratch (no concat),
        # then one MXU matmul over the whole (H, 4*TN) slab
        s4_ref[:, 0 * tn:1 * tn] = v
        s4_ref[:, 1 * tn:2 * tn] = g_t
        s4_ref[:, 2 * tn:3 * tn] = g_x
        s4_ref[:, 3 * tn:4 * tn] = g_xx
        return jnp.dot(wT, s4_ref[...], preferred_element_type=jnp.float32)

    for i in range(n_blocks):              # static unroll (small, fixed)
        w0 = w0_ref[i]                     # (H, H) = W0^T
        b0 = b0_ref[i]                     # (H, 1)
        w1 = w1_ref[i]
        b1 = b1_ref[i]

        # act0  (sigma'' folded: spp*dx^2 + sp*dxx == sp*((1-2s)*dx^2 + dxx))
        s = jax.nn.sigmoid(h)
        sp = s * (1.0 - s)
        c = (1.0 - 2.0 * s) * dx * dx
        gxx = c if dxx is None else c + dxx
        # fc0 (fused over the 4 streams)
        r = fused4(w0, s, sp * dt, sp * dx, sp * gxx)
        z = r[:, 0:tn] + b0
        z_dt = r[:, tn:2 * tn]
        z_dx = r[:, 2 * tn:3 * tn]
        z_dxx = r[:, 3 * tn:4 * tn]

        # act1
        s2 = jax.nn.sigmoid(z)
        sp2 = s2 * (1.0 - s2)
        gxx2 = (1.0 - 2.0 * s2) * z_dx * z_dx + z_dxx
        # fc1 (fused)
        r1 = fused4(w1, s2, sp2 * z_dt, sp2 * z_dx, sp2 * gxx2)

        # residual add
        h = h + r1[:, 0:tn] + b1
        dt = dt + r1[:, tn:2 * tn]
        dx = dx + r1[:, 2 * tn:3 * tn]
        dxx = r1[:, 3 * tn:4 * tn] if dxx is None else dxx + r1[:, 3 * tn:4 * tn]

    # final activation + last linear layer.
    # The output width is 1, so instead of an M=1 MXU matmul we do a VPU multiply
    # by the wl column and an XLU sublane reduction over the packed scratch.
    s = jax.nn.sigmoid(h)
    sp = s * (1.0 - s)
    c = (1.0 - 2.0 * s) * dx * dx
    gxx = c if dxx is None else c + dxx
    s4_ref[:, 0 * tn:1 * tn] = s
    s4_ref[:, 1 * tn:2 * tn] = sp * dt
    s4_ref[:, 2 * tn:3 * tn] = sp * dx
    s4_ref[:, 3 * tn:4 * tn] = sp * gxx
    wl_col = wl_ref[...]                                  # (H, 1)
    r = jnp.sum(wl_col * s4_ref[...], axis=0, keepdims=True)   # (1, 4*TN)

    u = r[:, 0:tn] + bl_ref[...]
    u_t = r[:, tn:2 * tn]
    u_x = r[:, 2 * tn:3 * tn]
    u_xx = r[:, 3 * tn:4 * tn]

    # Allen-Cahn residual: f = u_t - 1e-4 * u_xx + 5 u^3 - 5 u
    f = u_t - 0.0001 * u_xx + 5.0 * u * u * u - 5.0 * u

    # single lane-dense packed store of all five outputs
    out_ref[...] = jnp.concatenate([u, u_t, u_x, u_xx, f], axis=0)


def _choose_tile(n, max_tile=MAX_TILE_N):
    """Multiple of 128, <= max_tile, and grid >= 2 whenever n > 128
    (keeps both v7x TensorCores busy and caps padding waste)."""
    half = (n + 1) // 2
    t = ((half + 127) // 128) * 128
    return max(128, min(max_tile, t))


def run_net_packed(params, pts, tile_n=None, max_tile=MAX_TILE_N):
    """pts: (N, 2) float32 [t, x].  Returns (5, N): rows [u, u_t, u_x, u_xx, f]."""
    n = pts.shape[0]
    if tile_n is None:
        tile_n = _choose_tile(n, max_tile)
    n_pad = ((n + tile_n - 1) // tile_n) * tile_n
    if n_pad != n:
        pts = jnp.concatenate(
            [pts, jnp.zeros((n_pad - n, DIM_IN), pts.dtype)], axis=0)
    p_t = pts.T.astype(jnp.float32)                       # (2, n_pad), lane-dense

    # pre-transpose weights to feature-major (out, in) for the kernel
    wfT = params["wf"].T                                  # (H, 2)
    bfT = params["bf"].T                                  # (H, 1)
    w0T = jnp.swapaxes(params["w0"], 1, 2)                # (nb, H, H)
    b0T = jnp.swapaxes(params["b0"], 1, 2)                # (nb, H, 1)
    w1T = jnp.swapaxes(params["w1"], 1, 2)
    b1T = jnp.swapaxes(params["b1"], 1, 2)
    wl_col = params["wl"]                                 # (H, 1) column (VPU/XLU path)
    bl = params["bl"]                                     # (1, 1)

    h_dim = wfT.shape[0]
    nb = w0T.shape[0]

    def full_spec(shape):
        nd = len(shape)

        def idx(i):
            return (0,) * nd

        return pl.BlockSpec(shape, idx)

    # advisory cost hint for the XLA scheduler
    n_act_layers = 2 * nb + 1
    flops = int(n_pad) * (nb * 2 * 4 * 2 * h_dim * h_dim + 40 * h_dim)
    transcendentals = int(n_pad) * n_act_layers * h_dim
    w_bytes = 4 * int(wfT.size + bfT.size + w0T.size + b0T.size
                      + w1T.size + b1T.size + wl_col.size + bl.size)
    io_bytes = 4 * int(p_t.size + 5 * n_pad)
    cost = pl.CostEstimate(flops=flops, transcendentals=transcendentals,
                           bytes_accessed=io_bytes + w_bytes)

    out = pl.pallas_call(
        respinn_kernel,
        out_shape=jax.ShapeDtypeStruct((5, n_pad), jnp.float32),
        grid=(n_pad // tile_n,),
        in_specs=[
            pl.BlockSpec((DIM_IN, tile_n), lambda i: (0, i)),   # points (t; x)
            full_spec((h_dim, DIM_IN)),                         # wf^T
            full_spec((h_dim, 1)),                              # bf^T
            full_spec((nb, h_dim, h_dim)),                      # w0^T (stacked)
            full_spec((nb, h_dim, 1)),                          # b0^T
            full_spec((nb, h_dim, h_dim)),                      # w1^T
            full_spec((nb, h_dim, 1)),                          # b1^T
            full_spec((h_dim, 1)),                              # wl column
            full_spec((1, 1)),                                  # bl
        ],
        out_specs=pl.BlockSpec((5, tile_n), lambda i: (0, i)),
        scratch_shapes=[pltpu.VMEM((h_dim, 4 * tile_n), jnp.float32)],
        compiler_params=pltpu.CompilerParams(
            dimension_semantics=("parallel",)),
        cost_estimate=cost,
    )(p_t, wfT, bfT, w0T, b0T, w1T, b1T, wl_col, bl)
    return out[:, :n]


def respinn_ac_forward(params, p, p_bc=None, p_ic=None, tile_n=None):
    """Mirrors ResPINN_AC.forward(problem, p, p_bc, p_ic)."""
    if p_bc is None:
        out = run_net_packed(params, p, tile_n)
        return out[0:1, :].T                               # u, (N, 1)

    n, nb_, ni = p.shape[0], p_bc.shape[0], p_ic.shape[0]
    # intended periodic-BC semantics: p_bcop is p_bc with x negated
    p_bcop = p_bc.at[:, 1].set(-p_bc[:, 1])
    # single merged launch over all four point sets (tile-padded)
    all_pts = jnp.concatenate([p, p_bc, p_bcop, p_ic], axis=0)
    out = run_net_packed(params, all_pts, tile_n)          # (5, n + 2*nb + ni)

    f = out[4:5, :n].T
    u_b = out[0:1, n:n + nb_].T
    u_b_x = out[2:3, n:n + nb_].T
    u_bop = out[0:1, n + nb_:n + 2 * nb_].T
    u_bop_x = out[2:3, n + nb_:n + 2 * nb_].T
    iv_bar = out[0:1, n + 2 * nb_:n + 2 * nb_ + ni].T
    bv_bar = u_b - u_bop
    bv_x_bar = u_b_x - u_bop_x
    return f, bv_bar, bv_x_bar, iv_bar


# ----------------------------------------------------------------------------
# deterministic parameter init (xavier_normal for weights, small normal biases)
# ----------------------------------------------------------------------------
def init_params(key, h_dim=DIM_HIDDEN, n_blocks=RES_BLOCKS):
    def xavier(k, fan_in, fan_out, shape):
        std = float(np.sqrt(2.0 / (fan_in + fan_out)))
        return std * jax.random.normal(k, shape, jnp.float32)

    keys = jax.random.split(key, 8)
    params = {
        "wf": xavier(keys[0], DIM_IN, h_dim, (DIM_IN, h_dim)),
        "bf": 0.01 * jax.random.normal(keys[1], (1, h_dim), jnp.float32),
        "w0": xavier(keys[2], h_dim, h_dim, (n_blocks, h_dim, h_dim)),
        "b0": 0.01 * jax.random.normal(keys[3], (n_blocks, 1, h_dim), jnp.float32),
        "w1": xavier(keys[4], h_dim, h_dim, (n_blocks, h_dim, h_dim)),
        "b1": 0.01 * jax.random.normal(keys[5], (n_blocks, 1, h_dim), jnp.float32),
        "wl": xavier(keys[6], h_dim, DIM_OUT, (h_dim, DIM_OUT)),
        "bl": 0.01 * jax.random.normal(keys[7], (1, DIM_OUT), jnp.float32),
    }
    return params


# ----------------------------------------------------------------------------
# pure-JAX reference (autodiff) for correctness checking
# ----------------------------------------------------------------------------
def ref_scalar(params, pt):
    h = pt @ params["wf"] + params["bf"][0]
    for i in range(params["w0"].shape[0]):
        s = jax.nn.sigmoid(h)
        z = s @ params["w0"][i] + params["b0"][i, 0]
        s2 = jax.nn.sigmoid(z)
        z1 = s2 @ params["w1"][i] + params["b1"][i, 0]
        h = h + z1
    s = jax.nn.sigmoid(h)
    return (s @ params["wl"] + params["bl"][0])[0]


def ref_outputs(params, p):
    u_fn = functools.partial(ref_scalar, params)
    u = jax.vmap(u_fn)(p)[:, None]
    g = jax.vmap(jax.grad(u_fn))(p)
    u_t = g[:, 0:1]
    u_x = g[:, 1:2]
    ux_fn = lambda pt: jax.grad(u_fn)(pt)[1]
    u_xx = jax.vmap(lambda pt: jax.grad(ux_fn)(pt)[1])(p)[:, None]
    f = u_t - 0.0001 * u_xx + 5.0 * u ** 3 - 5.0 * u
    return u, u_t, u_x, u_xx, f


if __name__ == "__main__":
    key = jax.random.PRNGKey(0)
    kp, k1, k1b, k2, k3 = jax.random.split(key, 5)
    params = init_params(kp)

    # collocation points p = (t, x), boundary points p_bc, initial points p_ic
    n, n_bc, n_ic = 256, 64, 64
    t = jax.random.uniform(k1, (n, 1), jnp.float32, 0.0, 1.0)
    x = jax.random.uniform(k1b, (n, 1), jnp.float32, -1.0, 1.0)
    p = jnp.concatenate([t, x], axis=1)
    t_bc = jax.random.uniform(k2, (n_bc, 1), jnp.float32, 0.0, 1.0)
    p_bc = jnp.concatenate([t_bc, jnp.ones((n_bc, 1), jnp.float32)], axis=1)
    x_ic = jax.random.uniform(k3, (n_ic, 1), jnp.float32, -1.0, 1.0)
    p_ic = jnp.concatenate([jnp.zeros((n_ic, 1), jnp.float32), x_ic], axis=1)

    f, bv_bar, bv_x_bar, iv_bar = respinn_ac_forward(params, p, p_bc, p_ic)
    jax.block_until_ready((f, bv_bar, bv_x_bar, iv_bar))

    # correctness check against pure-JAX autodiff reference
    u_r, ut_r, ux_r, uxx_r, f_r = ref_outputs(params, p)
    p_bcop = p_bc.at[:, 1].set(-p_bc[:, 1])
    ub_r, _, ubx_r, _, _ = ref_outputs(params, p_bc)
    ubo_r, _, ubox_r, _, _ = ref_outputs(params, p_bcop)
    iv_r, _, _, _, _ = ref_outputs(params, p_ic)

    np.testing.assert_allclose(np.asarray(f), np.asarray(f_r), atol=5e-4, rtol=5e-4)
    np.testing.assert_allclose(np.asarray(bv_bar), np.asarray(ub_r - ubo_r), atol=5e-4, rtol=5e-4)
    np.testing.assert_allclose(np.asarray(bv_x_bar), np.asarray(ubx_r - ubox_r), atol=5e-4, rtol=5e-4)
    np.testing.assert_allclose(np.asarray(iv_bar), np.asarray(iv_r), atol=5e-4, rtol=5e-4)

    print("KERNEL_OK")
</pallas_src>

<mosaic_0001>
module attributes {stable_mosaic.version = 11 : i64} {
  func.func @respinn_kernel(%arg0: i32, %arg1: memref<2x256xf32, #tpu.memory_space<vmem>>, %arg2: memref<32x2xf32, #tpu.memory_space<vmem>>, %arg3: memref<32x1xf32, #tpu.memory_space<vmem>>, %arg4: memref<4x32x32xf32, #tpu.memory_space<vmem>>, %arg5: memref<4x32x1xf32, #tpu.memory_space<vmem>>, %arg6: memref<4x32x32xf32, #tpu.memory_space<vmem>>, %arg7: memref<4x32x1xf32, #tpu.memory_space<vmem>>, %arg8: memref<32x1xf32, #tpu.memory_space<vmem>>, %arg9: memref<1x1xf32, #tpu.memory_space<vmem>>, %arg10: memref<5x256xf32, #tpu.memory_space<vmem>>, %arg11: memref<32x1024xf32, #tpu.memory_space<vmem>>) attributes {dimension_semantics = [#tpu.dimension_semantics<parallel>], iteration_bounds = array<i64: 2>, scalar_prefetch = 0 : i64, scratch_operands = 1 : i64, tpu.core_type = #tpu.core_type<tc>, window_params = [{transform_indices = @transform_0, window_bounds = array<i64: 2, 256>}, {pipeline_mode = #tpu.pipeline_mode<synchronous>, transform_indices = @transform_1, window_bounds = array<i64: 32, 2>}, {pipeline_mode = #tpu.pipeline_mode<synchronous>, transform_indices = @transform_2, window_bounds = array<i64: 32, 1>}, {pipeline_mode = #tpu.pipeline_mode<synchronous>, transform_indices = @transform_3, window_bounds = array<i64: 4, 32, 32>}, {pipeline_mode = #tpu.pipeline_mode<synchronous>, transform_indices = @transform_4, window_bounds = array<i64: 4, 32, 1>}, {pipeline_mode = #tpu.pipeline_mode<synchronous>, transform_indices = @transform_5, window_bounds = array<i64: 4, 32, 32>}, {pipeline_mode = #tpu.pipeline_mode<synchronous>, transform_indices = @transform_6, window_bounds = array<i64: 4, 32, 1>}, {pipeline_mode = #tpu.pipeline_mode<synchronous>, transform_indices = @transform_7, window_bounds = array<i64: 32, 1>}, {pipeline_mode = #tpu.pipeline_mode<synchronous>, transform_indices = @transform_8, window_bounds = array<i64: 1, 1>}, {transform_indices = @transform_9, window_bounds = array<i64: 5, 256>}]} {
    %c0 = arith.constant 0 : index
    %c0_0 = arith.constant 0 : index
    %0 = vector.load %arg1[%c0, %c0_0] : memref<2x256xf32, #tpu.memory_space<vmem>>, vector<1x256xf32>
    %c1 = arith.constant 1 : index
    %c0_1 = arith.constant 0 : index
    %1 = vector.load %arg1[%c1, %c0_1] : memref<2x256xf32, #tpu.memory_space<vmem>>, vector<1x256xf32>
    %c0_2 = arith.constant 0 : index
    %c0_3 = arith.constant 0 : index
    %2 = vector.load %arg2[%c0_2, %c0_3] : memref<32x2xf32, #tpu.memory_space<vmem>>, vector<32x2xf32>
    %3 = vector.extract_strided_slice %2 {offsets = [0, 0], sizes = [32, 1], strides = [1, 1]} : vector<32x2xf32> to vector<32x1xf32>
    %4 = vector.extract_strided_slice %2 {offsets = [0, 1], sizes = [32, 1], strides = [1, 1]} : vector<32x2xf32> to vector<32x1xf32>
    %5 = vector.broadcast %3 : vector<32x1xf32> to vector<32x256xf32>
    %6 = vector.broadcast %0 : vector<1x256xf32> to vector<32x256xf32>
    %7 = arith.mulf %5, %6 : vector<32x256xf32>
    %8 = vector.broadcast %4 : vector<32x1xf32> to vector<32x256xf32>
    %9 = vector.broadcast %1 : vector<1x256xf32> to vector<32x256xf32>
    %10 = arith.mulf %8, %9 : vector<32x256xf32>
    %11 = arith.addf %7, %10 : vector<32x256xf32>
    %c0_4 = arith.constant 0 : index
    %c0_5 = arith.constant 0 : index
    %12 = vector.load %arg3[%c0_4, %c0_5] : memref<32x1xf32, #tpu.memory_space<vmem>>, vector<32x1xf32>
    %13 = vector.broadcast %12 : vector<32x1xf32> to vector<32x256xf32>
    %14 = arith.addf %11, %13 : vector<32x256xf32>
    %c0_6 = arith.constant 0 : index
    %c0_7 = arith.constant 0 : index
    %c0_8 = arith.constant 0 : index
    %15 = vector.load %arg4[%c0_6, %c0_7, %c0_8] : memref<4x32x32xf32, #tpu.memory_space<vmem>>, vector<1x32x32xf32>
    %16 = vector.shape_cast %15 : vector<1x32x32xf32> to vector<32x32xf32>
    %c0_9 = arith.constant 0 : index
    %c0_10 = arith.constant 0 : index
    %c0_11 = arith.constant 0 : index
    %17 = vector.load %arg5[%c0_9, %c0_10, %c0_11] : memref<4x32x1xf32, #tpu.memory_space<vmem>>, vector<1x32x1xf32>
    %18 = vector.shape_cast %17 : vector<1x32x1xf32> to vector<32x1xf32>
    %c0_12 = arith.constant 0 : index
    %c0_13 = arith.constant 0 : index
    %c0_14 = arith.constant 0 : index
    %19 = vector.load %arg6[%c0_12, %c0_13, %c0_14] : memref<4x32x32xf32, #tpu.memory_space<vmem>>, vector<1x32x32xf32>
    %20 = vector.shape_cast %19 : vector<1x32x32xf32> to vector<32x32xf32>
    %c0_15 = arith.constant 0 : index
    %c0_16 = arith.constant 0 : index
    %c0_17 = arith.constant 0 : index
    %21 = vector.load %arg7[%c0_15, %c0_16, %c0_17] : memref<4x32x1xf32, #tpu.memory_space<vmem>>, vector<1x32x1xf32>
    %22 = vector.shape_cast %21 : vector<1x32x1xf32> to vector<32x1xf32>
    %23 = arith.negf %14 : vector<32x256xf32>
    %24 = math.exp %23 : vector<32x256xf32>
    %cst = arith.constant 1.000000e+00 : f32
    %25 = vector.broadcast %cst : f32 to vector<32x256xf32>
    %26 = arith.addf %25, %24 : vector<32x256xf32>
    %27 = arith.divf %25, %26 : vector<32x256xf32>
    %cst_18 = arith.constant 1.000000e+00 : f32
    %28 = vector.broadcast %cst_18 : f32 to vector<32x256xf32>
    %29 = arith.subf %28, %27 : vector<32x256xf32>
    %30 = arith.mulf %27, %29 : vector<32x256xf32>
    %cst_19 = arith.constant 2.000000e+00 : f32
    %31 = vector.broadcast %cst_19 : f32 to vector<32x256xf32>
    %32 = arith.mulf %31, %27 : vector<32x256xf32>
    %cst_20 = arith.constant 1.000000e+00 : f32
    %33 = vector.broadcast %cst_20 : f32 to vector<32x256xf32>
    %34 = arith.subf %33, %32 : vector<32x256xf32>
    %35 = vector.broadcast %4 : vector<32x1xf32> to vector<32x256xf32>
    %36 = arith.mulf %34, %35 : vector<32x256xf32>
    %37 = vector.broadcast %4 : vector<32x1xf32> to vector<32x256xf32>
    %38 = arith.mulf %36, %37 : vector<32x256xf32>
    %39 = vector.broadcast %3 : vector<32x1xf32> to vector<32x256xf32>
    %40 = arith.mulf %30, %39 : vector<32x256xf32>
    %41 = vector.broadcast %4 : vector<32x1xf32> to vector<32x256xf32>
    %42 = arith.mulf %30, %41 : vector<32x256xf32>
    %43 = arith.mulf %30, %38 : vector<32x256xf32>
    %c0_21 = arith.constant 0 : index
    %c0_22 = arith.constant 0 : index
    %44 = vector.load %arg11[%c0_21, %c0_22] : memref<32x1024xf32, #tpu.memory_space<vmem>>, vector<32x256xf32>
    tpu.vector_store %arg11[%c0_21, %c0_22], %27 {strides = array<i32>} : memref<32x1024xf32, #tpu.memory_space<vmem>>, vector<32x256xf32>,
    %c0_23 = arith.constant 0 : index
    %c256 = arith.constant 256 : index
    %45 = vector.load %arg11[%c0_23, %c256] : memref<32x1024xf32, #tpu.memory_space<vmem>>, vector<32x256xf32>
    tpu.vector_store %arg11[%c0_23, %c256], %40 {strides = array<i32>} : memref<32x1024xf32, #tpu.memory_space<vmem>>, vector<32x256xf32>,
    %c0_24 = arith.constant 0 : index
    %c512 = arith.constant 512 : index
    %46 = vector.load %arg11[%c0_24, %c512] : memref<32x1024xf32, #tpu.memory_space<vmem>>, vector<32x256xf32>
    tpu.vector_store %arg11[%c0_24, %c512], %42 {strides = array<i32>} : memref<32x1024xf32, #tpu.memory_space<vmem>>, vector<32x256xf32>,
    %c0_25 = arith.constant 0 : index
    %c768 = arith.constant 768 : index
    %47 = vector.load %arg11[%c0_25, %c768] : memref<32x1024xf32, #tpu.memory_space<vmem>>, vector<32x256xf32>
    tpu.vector_store %arg11[%c0_25, %c768], %43 {strides = array<i32>} : memref<32x1024xf32, #tpu.memory_space<vmem>>, vector<32x256xf32>,
    %c0_26 = arith.constant 0 : index
    %c0_27 = arith.constant 0 : index
    %48 = vector.load %arg11[%c0_26, %c0_27] : memref<32x1024xf32, #tpu.memory_space<vmem>>, vector<32x1024xf32>
    %cst_28 = arith.constant dense<0.000000e+00> : vector<32x1024xf32>
    %49 = tpu.matmul %16, %48, %cst_28 {dimension_numbers = #tpu.dot_dimension_numbers<[1], [0], [0], [1], [0, 0, 1, 1], [], []>} : vector<32x32xf32>, vector<32x1024xf32>, vector<32x1024xf32> -> vector<32x1024xf32>
    %50 = vector.extract_strided_slice %49 {offsets = [0, 0], sizes = [32, 256], strides = [1, 1]} : vector<32x1024xf32> to vector<32x256xf32>
    %51 = vector.broadcast %18 : vector<32x1xf32> to vector<32x256xf32>
    %52 = arith.addf %50, %51 : vector<32x256xf32>
    %53 = vector.extract_strided_slice %49 {offsets = [0, 256], sizes = [32, 256], strides = [1, 1]} : vector<32x1024xf32> to vector<32x256xf32>
    %54 = vector.extract_strided_slice %49 {offsets = [0, 512], sizes = [32, 256], strides = [1, 1]} : vector<32x1024xf32> to vector<32x256xf32>
    %55 = vector.extract_strided_slice %49 {offsets = [0, 768], sizes = [32, 256], strides = [1, 1]} : vector<32x1024xf32> to vector<32x256xf32>
    %56 = arith.negf %52 : vector<32x256xf32>
    %57 = math.exp %56 : vector<32x256xf32>
    %cst_29 = arith.constant 1.000000e+00 : f32
    %58 = vector.broadcast %cst_29 : f32 to vector<32x256xf32>
    %59 = arith.addf %58, %57 : vector<32x256xf32>
    %60 = arith.divf %58, %59 : vector<32x256xf32>
    %cst_30 = arith.constant 1.000000e+00 : f32
    %61 = vector.broadcast %cst_30 : f32 to vector<32x256xf32>
    %62 = arith.subf %61, %60 : vector<32x256xf32>
    %63 = arith.mulf %60, %62 : vector<32x256xf32>
    %cst_31 = arith.constant 2.000000e+00 : f32
    %64 = vector.broadcast %cst_31 : f32 to vector<32x256xf32>
    %65 = arith.mulf %64, %60 : vector<32x256xf32>
    %cst_32 = arith.constant 1.000000e+00 : f32
    %66 = vector.broadcast %cst_32 : f32 to vector<32x256xf32>
    %67 = arith.subf %66, %65 : vector<32x256xf32>
    %68 = arith.mulf %67, %54 : vector<32x256xf32>
    %69 = arith.mulf %68, %54 : vector<32x256xf32>
    %70 = arith.addf %69, %55 : vector<32x256xf32>
    %71 = arith.mulf %63, %53 : vector<32x256xf32>
    %72 = arith.mulf %63, %54 : vector<32x256xf32>
    %73 = arith.mulf %63, %70 : vector<32x256xf32>
    %c0_33 = arith.constant 0 : index
    %c0_34 = arith.constant 0 : index
    %74 = vector.load %arg11[%c0_33, %c0_34] : memref<32x1024xf32, #tpu.memory_space<vmem>>, vector<32x256xf32>
    tpu.vector_store %arg11[%c0_33, %c0_34], %60 {strides = array<i32>} : memref<32x1024xf32, #tpu.memory_space<vmem>>, vector<32x256xf32>,
    %c0_35 = arith.constant 0 : index
    %c256_36 = arith.constant 256 : index
    %75 = vector.load %arg11[%c0_35, %c256_36] : memref<32x1024xf32, #tpu.memory_space<vmem>>, vector<32x256xf32>
    tpu.vector_store %arg11[%c0_35, %c256_36], %71 {strides = array<i32>} : memref<32x1024xf32, #tpu.memory_space<vmem>>, vector<32x256xf32>,
    %c0_37 = arith.constant 0 : index
    %c512_38 = arith.constant 512 : index
    %76 = vector.load %arg11[%c0_37, %c512_38] : memref<32x1024xf32, #tpu.memory_space<vmem>>, vector<32x256xf32>
    tpu.vector_store %arg11[%c0_37, %c512_38], %72 {strides = array<i32>} : memref<32x1024xf32, #tpu.memory_space<vmem>>, vector<32x256xf32>,
    %c0_39 = arith.constant 0 : index
    %c768_40 = arith.constant 768 : index
    %77 = vector.load %arg11[%c0_39, %c768_40] : memref<32x1024xf32, #tpu.memory_space<vmem>>, vector<32x256xf32>
    tpu.vector_store %arg11[%c0_39, %c768_40], %73 {strides = array<i32>} : memref<32x1024xf32, #tpu.memory_space<vmem>>, vector<32x256xf32>,
    %c0_41 = arith.constant 0 : index
    %c0_42 = arith.constant 0 : index
    %78 = vector.load %arg11[%c0_41, %c0_42] : memref<32x1024xf32, #tpu.memory_space<vmem>>, vector<32x1024xf32>
    %cst_43 = arith.constant dense<0.000000e+00> : vector<32x1024xf32>
    %79 = tpu.matmul %20, %78, %cst_43 {dimension_numbers = #tpu.dot_dimension_numbers<[1], [0], [0], [1], [0, 0, 1, 1], [], []>} : vector<32x32xf32>, vector<32x1024xf32>, vector<32x1024xf32> -> vector<32x1024xf32>
    %80 = vector.extract_strided_slice %79 {offsets = [0, 0], sizes = [32, 256], strides = [1, 1]} : vector<32x1024xf32> to vector<32x256xf32>
    %81 = arith.addf %14, %80 : vector<32x256xf32>
    %82 = vector.broadcast %22 : vector<32x1xf32> to vector<32x256xf32>
    %83 = arith.addf %81, %82 : vector<32x256xf32>
    %84 = vector.extract_strided_slice %79 {offsets = [0, 256], sizes = [32, 256], strides = [1, 1]} : vector<32x1024xf32> to vector<32x256xf32>
    %85 = vector.broadcast %3 : vector<32x1xf32> to vector<32x256xf32>
    %86 = arith.addf %85, %84 : vector<32x256xf32>
    %87 = vector.extract_strided_slice %79 {offsets = [0, 512], sizes = [32, 256], strides = [1, 1]} : vector<32x1024xf32> to vector<32x256xf32>
    %88 = vector.broadcast %4 : vector<32x1xf32> to vector<32x256xf32>
    %89 = arith.addf %88, %87 : vector<32x256xf32>
    %90 = vector.extract_strided_slice %79 {offsets = [0, 768], sizes = [32, 256], strides = [1, 1]} : vector<32x1024xf32> to vector<32x256xf32>
    %c1_44 = arith.constant 1 : index
    %c0_45 = arith.constant 0 : index
    %c0_46 = arith.constant 0 : index
    %91 = vector.load %arg4[%c1_44, %c0_45, %c0_46] : memref<4x32x32xf32, #tpu.memory_space<vmem>>, vector<1x32x32xf32>
    %92 = vector.shape_cast %91 : vector<1x32x32xf32> to vector<32x32xf32>
    %c1_47 = arith.constant 1 : index
    %c0_48 = arith.constant 0 : index
    %c0_49 = arith.constant 0 : index
    %93 = vector.load %arg5[%c1_47, %c0_48, %c0_49] : memref<4x32x1xf32, #tpu.memory_space<vmem>>, vector<1x32x1xf32>
    %94 = vector.shape_cast %93 : vector<1x32x1xf32> to vector<32x1xf32>
    %c1_50 = arith.constant 1 : index
    %c0_51 = arith.constant 0 : index
    %c0_52 = arith.constant 0 : index
    %95 = vector.load %arg6[%c1_50, %c0_51, %c0_52] : memref<4x32x32xf32, #tpu.memory_space<vmem>>, vector<1x32x32xf32>
    %96 = vector.shape_cast %95 : vector<1x32x32xf32> to vector<32x32xf32>
    %c1_53 = arith.constant 1 : index
    %c0_54 = arith.constant 0 : index
    %c0_55 = arith.constant 0 : index
    %97 = vector.load %arg7[%c1_53, %c0_54, %c0_55] : memref<4x32x1xf32, #tpu.memory_space<vmem>>, vector<1x32x1xf32>
    %98 = vector.shape_cast %97 : vector<1x32x1xf32> to vector<32x1xf32>
    %99 = arith.negf %83 : vector<32x256xf32>
    %100 = math.exp %99 : vector<32x256xf32>
    %cst_56 = arith.constant 1.000000e+00 : f32
    %101 = vector.broadcast %cst_56 : f32 to vector<32x256xf32>
    %102 = arith.addf %101, %100 : vector<32x256xf32>
    %103 = arith.divf %101, %102 : vector<32x256xf32>
    %cst_57 = arith.constant 1.000000e+00 : f32
    %104 = vector.broadcast %cst_57 : f32 to vector<32x256xf32>
    %105 = arith.subf %104, %103 : vector<32x256xf32>
    %106 = arith.mulf %103, %105 : vector<32x256xf32>
    %cst_58 = arith.constant 2.000000e+00 : f32
    %107 = vector.broadcast %cst_58 : f32 to vector<32x256xf32>
    %108 = arith.mulf %107, %103 : vector<32x256xf32>
    %cst_59 = arith.constant 1.000000e+00 : f32
    %109 = vector.broadcast %cst_59 : f32 to vector<32x256xf32>
    %110 = arith.subf %109, %108 : vector<32x256xf32>
    %111 = arith.mulf %110, %89 : vector<32x256xf32>
    %112 = arith.mulf %111, %89 : vector<32x256xf32>
    %113 = arith.addf %112, %90 : vector<32x256xf32>
    %114 = arith.mulf %106, %86 : vector<32x256xf32>
    %115 = arith.mulf %106, %89 : vector<32x256xf32>
    %116 = arith.mulf %106, %113 : vector<32x256xf32>
    %c0_60 = arith.constant 0 : index
    %c0_61 = arith.constant 0 : index
    %117 = vector.load %arg11[%c0_60, %c0_61] : memref<32x1024xf32, #tpu.memory_space<vmem>>, vector<32x256xf32>
    tpu.vector_store %arg11[%c0_60, %c0_61], %103 {strides = array<i32>} : memref<32x1024xf32, #tpu.memory_space<vmem>>, vector<32x256xf32>,
    %c0_62 = arith.constant 0 : index
    %c256_63 = arith.constant 256 : index
    %118 = vector.load %arg11[%c0_62, %c256_63] : memref<32x1024xf32, #tpu.memory_space<vmem>>, vector<32x256xf32>
    tpu.vector_store %arg11[%c0_62, %c256_63], %114 {strides = array<i32>} : memref<32x1024xf32, #tpu.memory_space<vmem>>, vector<32x256xf32>,
    %c0_64 = arith.constant 0 : index
    %c512_65 = arith.constant 512 : index
    %119 = vector.load %arg11[%c0_64, %c512_65] : memref<32x1024xf32, #tpu.memory_space<vmem>>, vector<32x256xf32>
    tpu.vector_store %arg11[%c0_64, %c512_65], %115 {strides = array<i32>} : memref<32x1024xf32, #tpu.memory_space<vmem>>, vector<32x256xf32>,
    %c0_66 = arith.constant 0 : index
    %c768_67 = arith.constant 768 : index
    %120 = vector.load %arg11[%c0_66, %c768_67] : memref<32x1024xf32, #tpu.memory_space<vmem>>, vector<32x256xf32>
    tpu.vector_store %arg11[%c0_66, %c768_67], %116 {strides = array<i32>} : memref<32x1024xf32, #tpu.memory_space<vmem>>, vector<32x256xf32>,
    %c0_68 = arith.constant 0 : index
    %c0_69 = arith.constant 0 : index
    %121 = vector.load %arg11[%c0_68, %c0_69] : memref<32x1024xf32, #tpu.memory_space<vmem>>, vector<32x1024xf32>
    %cst_70 = arith.constant dense<0.000000e+00> : vector<32x1024xf32>
    %122 = tpu.matmul %92, %121, %cst_70 {dimension_numbers = #tpu.dot_dimension_numbers<[1], [0], [0], [1], [0, 0, 1, 1], [], []>} : vector<32x32xf32>, vector<32x1024xf32>, vector<32x1024xf32> -> vector<32x1024xf32>
    %123 = vector.extract_strided_slice %122 {offsets = [0, 0], sizes = [32, 256], strides = [1, 1]} : vector<32x1024xf32> to vector<32x256xf32>
    %124 = vector.broadcast %94 : vector<32x1xf32> to vector<32x256xf32>
    %125 = arith.addf %123, %124 : vector<32x256xf32>
    %126 = vector.extract_strided_slice %122 {offsets = [0, 256], sizes = [32, 256], strides = [1, 1]} : vector<32x1024xf32> to vector<32x256xf32>
    %127 = vector.extract_strided_slice %122 {offsets = [0, 512], sizes = [32, 256], strides = [1, 1]} : vector<32x1024xf32> to vector<32x256xf32>
    %128 = vector.extract_strided_slice %122 {offsets = [0, 768], sizes = [32, 256], strides = [1, 1]} : vector<32x1024xf32> to vector<32x256xf32>
    %129 = arith.negf %125 : vector<32x256xf32>
    %130 = math.exp %129 : vector<32x256xf32>
    %cst_71 = arith.constant 1.000000e+00 : f32
    %131 = vector.broadcast %cst_71 : f32 to vector<32x256xf32>
    %132 = arith.addf %131, %130 : vector<32x256xf32>
    %133 = arith.divf %131, %132 : vector<32x256xf32>
    %cst_72 = arith.constant 1.000000e+00 : f32
    %134 = vector.broadcast %cst_72 : f32 to vector<32x256xf32>
    %135 = arith.subf %134, %133 : vector<32x256xf32>
    %136 = arith.mulf %133, %135 : vector<32x256xf32>
    %cst_73 = arith.constant 2.000000e+00 : f32
    %137 = vector.broadcast %cst_73 : f32 to vector<32x256xf32>
    %138 = arith.mulf %137, %133 : vector<32x256xf32>
    %cst_74 = arith.constant 1.000000e+00 : f32
    %139 = vector.broadcast %cst_74 : f32 to vector<32x256xf32>
    %140 = arith.subf %139, %138 : vector<32x256xf32>
    %141 = arith.mulf %140, %127 : vector<32x256xf32>
    %142 = arith.mulf %141, %127 : vector<32x256xf32>
    %143 = arith.addf %142, %128 : vector<32x256xf32>
    %144 = arith.mulf %136, %126 : vector<32x256xf32>
    %145 = arith.mulf %136, %127 : vector<32x256xf32>
    %146 = arith.mulf %136, %143 : vector<32x256xf32>
    %c0_75 = arith.constant 0 : index
    %c0_76 = arith.constant 0 : index
    %147 = vector.load %arg11[%c0_75, %c0_76] : memref<32x1024xf32, #tpu.memory_space<vmem>>, vector<32x256xf32>
    tpu.vector_store %arg11[%c0_75, %c0_76], %133 {strides = array<i32>} : memref<32x1024xf32, #tpu.memory_space<vmem>>, vector<32x256xf32>,
    %c0_77 = arith.constant 0 : index
    %c256_78 = arith.constant 256 : index
    %148 = vector.load %arg11[%c0_77, %c256_78] : memref<32x1024xf32, #tpu.memory_space<vmem>>, vector<32x256xf32>
    tpu.vector_store %arg11[%c0_77, %c256_78], %144 {strides = array<i32>} : memref<32x1024xf32, #tpu.memory_space<vmem>>, vector<32x256xf32>,
    %c0_79 = arith.constant 0 : index
    %c512_80 = arith.constant 512 : index
    %149 = vector.load %arg11[%c0_79, %c512_80] : memref<32x1024xf32, #tpu.memory_space<vmem>>, vector<32x256xf32>
    tpu.vector_store %arg11[%c0_79, %c512_80], %145 {strides = array<i32>} : memref<32x1024xf32, #tpu.memory_space<vmem>>, vector<32x256xf32>,
    %c0_81 = arith.constant 0 : index
    %c768_82 = arith.constant 768 : index
    %150 = vector.load %arg11[%c0_81, %c768_82] : memref<32x1024xf32, #tpu.memory_space<vmem>>, vector<32x256xf32>
    tpu.vector_store %arg11[%c0_81, %c768_82], %146 {strides = array<i32>} : memref<32x1024xf32, #tpu.memory_space<vmem>>, vector<32x256xf32>,
    %c0_83 = arith.constant 0 : index
    %c0_84 = arith.constant 0 : index
    %151 = vector.load %arg11[%c0_83, %c0_84] : memref<32x1024xf32, #tpu.memory_space<vmem>>, vector<32x1024xf32>
    %cst_85 = arith.constant dense<0.000000e+00> : vector<32x1024xf32>
    %152 = tpu.matmul %96, %151, %cst_85 {dimension_numbers = #tpu.dot_dimension_numbers<[1], [0], [0], [1], [0, 0, 1, 1], [], []>} : vector<32x32xf32>, vector<32x1024xf32>, vector<32x1024xf32> -> vector<32x1024xf32>
    %153 = vector.extract_strided_slice %152 {offsets = [0, 0], sizes = [32, 256], strides = [1, 1]} : vector<32x1024xf32> to vector<32x256xf32>
    %154 = arith.addf %83, %153 : vector<32x256xf32>
    %155 = vector.broadcast %98 : vector<32x1xf32> to vector<32x256xf32>
    %156 = arith.addf %154, %155 : vector<32x256xf32>
    %157 = vector.extract_strided_slice %152 {offsets = [0, 256], sizes = [32, 256], strides = [1, 1]} : vector<32x1024xf32> to vector<32x256xf32>
    %158 = arith.addf %86, %157 : vector<32x256xf32>
    %159 = vector.extract_strided_slice %152 {offsets = [0, 512], sizes = [32, 256], strides = [1, 1]} : vector<32x1024xf32> to vector<32x256xf32>
    %160 = arith.addf %89, %159 : vector<32x256xf32>
    %161 = vector.extract_strided_slice %152 {offsets = [0, 768], sizes = [32, 256], strides = [1, 1]} : vector<32x1024xf32> to vector<32x256xf32>
    %162 = arith.addf %90, %161 : vector<32x256xf32>
    %c2 = arith.constant 2 : index
    %c0_86 = arith.constant 0 : index
    %c0_87 = arith.constant 0 : index
    %163 = vector.load %arg4[%c2, %c0_86, %c0_87] : memref<4x32x32xf32, #tpu.memory_space<vmem>>, vector<1x32x32xf32>
    %164 = vector.shape_cast %163 : vector<1x32x32xf32> to vector<32x32xf32>
    %c2_88 = arith.constant 2 : index
    %c0_89 = arith.constant 0 : index
    %c0_90 = arith.constant 0 : index
    %165 = vector.load %arg5[%c2_88, %c0_89, %c0_90] : memref<4x32x1xf32, #tpu.memory_space<vmem>>, vector<1x32x1xf32>
    %166 = vector.shape_cast %165 : vector<1x32x1xf32> to vector<32x1xf32>
    %c2_91 = arith.constant 2 : index
    %c0_92 = arith.constant 0 : index
    %c0_93 = arith.constant 0 : index
    %167 = vector.load %arg6[%c2_91, %c0_92, %c0_93] : memref<4x32x32xf32, #tpu.memory_space<vmem>>, vector<1x32x32xf32>
    %168 = vector.shape_cast %167 : vector<1x32x32xf32> to vector<32x32xf32>
    %c2_94 = arith.constant 2 : index
    %c0_95 = arith.constant 0 : index
    %c0_96 = arith.constant 0 : index
    %169 = vector.load %arg7[%c2_94, %c0_95, %c0_96] : memref<4x32x1xf32, #tpu.memory_space<vmem>>, vector<1x32x1xf32>
    %170 = vector.shape_cast %169 : vector<1x32x1xf32> to vector<32x1xf32>
    %171 = arith.negf %156 : vector<32x256xf32>
    %172 = math.exp %171 : vector<32x256xf32>
    %cst_97 = arith.constant 1.000000e+00 : f32
    %173 = vector.broadcast %cst_97 : f32 to vector<32x256xf32>
    %174 = arith.addf %173, %172 : vector<32x256xf32>
    %175 = arith.divf %173, %174 : vector<32x256xf32>
    %cst_98 = arith.constant 1.000000e+00 : f32
    %176 = vector.broadcast %cst_98 : f32 to vector<32x256xf32>
    %177 = arith.subf %176, %175 : vector<32x256xf32>
    %178 = arith.mulf %175, %177 : vector<32x256xf32>
    %cst_99 = arith.constant 2.000000e+00 : f32
    %179 = vector.broadcast %cst_99 : f32 to vector<32x256xf32>
    %180 = arith.mulf %179, %175 : vector<32x256xf32>
    %cst_100 = arith.constant 1.000000e+00 : f32
    %181 = vector.broadcast %cst_100 : f32 to vector<32x256xf32>
    %182 = arith.subf %181, %180 : vector<32x256xf32>
    %183 = arith.mulf %182, %160 : vector<32x256xf32>
    %184 = arith.mulf %183, %160 : vector<32x256xf32>
    %185 = arith.addf %184, %162 : vector<32x256xf32>
    %186 = arith.mulf %178, %158 : vector<32x256xf32>
    %187 = arith.mulf %178, %160 : vector<32x256xf32>
    %188 = arith.mulf %178, %185 : vector<32x256xf32>
    %c0_101 = arith.constant 0 : index
    %c0_102 = arith.constant 0 : index
    %189 = vector.load %arg11[%c0_101, %c0_102] : memref<32x1024xf32, #tpu.memory_space<vmem>>, vector<32x256xf32>
    tpu.vector_store %arg11[%c0_101, %c0_102], %175 {strides = array<i32>} : memref<32x1024xf32, #tpu.memory_space<vmem>>, vector<32x256xf32>,
    %c0_103 = arith.constant 0 : index
    %c256_104 = arith.constant 256 : index
    %190 = vector.load %arg11[%c0_103, %c256_104] : memref<32x1024xf32, #tpu.memory_space<vmem>>, vector<32x256xf32>
    tpu.vector_store %arg11[%c0_103, %c256_104], %186 {strides = array<i32>} : memref<32x1024xf32, #tpu.memory_space<vmem>>, vector<32x256xf32>,
    %c0_105 = arith.constant 0 : index
    %c512_106 = arith.constant 512 : index
    %191 = vector.load %arg11[%c0_105, %c512_106] : memref<32x1024xf32, #tpu.memory_space<vmem>>, vector<32x256xf32>
    tpu.vector_store %arg11[%c0_105, %c512_106], %187 {strides = array<i32>} : memref<32x1024xf32, #tpu.memory_space<vmem>>, vector<32x256xf32>,
    %c0_107 = arith.constant 0 : index
    %c768_108 = arith.constant 768 : index
    %192 = vector.load %arg11[%c0_107, %c768_108] : memref<32x1024xf32, #tpu.memory_space<vmem>>, vector<32x256xf32>
    tpu.vector_store %arg11[%c0_107, %c768_108], %188 {strides = array<i32>} : memref<32x1024xf32, #tpu.memory_space<vmem>>, vector<32x256xf32>,
    %c0_109 = arith.constant 0 : index
    %c0_110 = arith.constant 0 : index
    %193 = vector.load %arg11[%c0_109, %c0_110] : memref<32x1024xf32, #tpu.memory_space<vmem>>, vector<32x1024xf32>
    %cst_111 = arith.constant dense<0.000000e+00> : vector<32x1024xf32>
    %194 = tpu.matmul %164, %193, %cst_111 {dimension_numbers = #tpu.dot_dimension_numbers<[1], [0], [0], [1], [0, 0, 1, 1], [], []>} : vector<32x32xf32>, vector<32x1024xf32>, vector<32x1024xf32> -> vector<32x1024xf32>
    %195 = vector.extract_strided_slice %194 {offsets = [0, 0], sizes = [32, 256], strides = [1, 1]} : vector<32x1024xf32> to vector<32x256xf32>
    %196 = vector.broadcast %166 : vector<32x1xf32> to vector<32x256xf32>
    %197 = arith.addf %195, %196 : vector<32x256xf32>
    %198 = vector.extract_strided_slice %194 {offsets = [0, 256], sizes = [32, 256], strides = [1, 1]} : vector<32x1024xf32> to vector<32x256xf32>
    %199 = vector.extract_strided_slice %194 {offsets = [0, 512], sizes = [32, 256], strides = [1, 1]} : vector<32x1024xf32> to vector<32x256xf32>
    %200 = vector.extract_strided_slice %194 {offsets = [0, 768], sizes = [32, 256], strides = [1, 1]} : vector<32x1024xf32> to vector<32x256xf32>
    %201 = arith.negf %197 : vector<32x256xf32>
    %202 = math.exp %201 : vector<32x256xf32>
    %cst_112 = arith.constant 1.000000e+00 : f32
    %203 = vector.broadcast %cst_112 : f32 to vector<32x256xf32>
    %204 = arith.addf %203, %202 : vector<32x256xf32>
    %205 = arith.divf %203, %204 : vector<32x256xf32>
    %cst_113 = arith.constant 1.000000e+00 : f32
    %206 = vector.broadcast %cst_113 : f32 to vector<32x256xf32>
    %207 = arith.subf %206, %205 : vector<32x256xf32>
    %208 = arith.mulf %205, %207 : vector<32x256xf32>
    %cst_114 = arith.constant 2.000000e+00 : f32
    %209 = vector.broadcast %cst_114 : f32 to vector<32x256xf32>
    %210 = arith.mulf %209, %205 : vector<32x256xf32>
    %cst_115 = arith.constant 1.000000e+00 : f32
    %211 = vector.broadcast %cst_115 : f32 to vector<32x256xf32>
    %212 = arith.subf %211, %210 : vector<32x256xf32>
    %213 = arith.mulf %212, %199 : vector<32x256xf32>
    %214 = arith.mulf %213, %199 : vector<32x256xf32>
    %215 = arith.addf %214, %200 : vector<32x256xf32>
    %216 = arith.mulf %208, %198 : vector<32x256xf32>
    %217 = arith.mulf %208, %199 : vector<32x256xf32>
    %218 = arith.mulf %208, %215 : vector<32x256xf32>
    %c0_116 = arith.constant 0 : index
    %c0_117 = arith.constant 0 : index
    %219 = vector.load %arg11[%c0_116, %c0_117] : memref<32x1024xf32, #tpu.memory_space<vmem>>, vector<32x256xf32>
    tpu.vector_store %arg11[%c0_116, %c0_117], %205 {strides = array<i32>} : memref<32x1024xf32, #tpu.memory_space<vmem>>, vector<32x256xf32>,
    %c0_118 = arith.constant 0 : index
    %c256_119 = arith.constant 256 : index
    %220 = vector.load %arg11[%c0_118, %c256_119] : memref<32x1024xf32, #tpu.memory_space<vmem>>, vector<32x256xf32>
    tpu.vector_store %arg11[%c0_118, %c256_119], %216 {strides = array<i32>} : memref<32x1024xf32, #tpu.memory_space<vmem>>, vector<32x256xf32>,
    %c0_120 = arith.constant 0 : index
    %c512_121 = arith.constant 512 : index
    %221 = vector.load %arg11[%c0_120, %c512_121] : memref<32x1024xf32, #tpu.memory_space<vmem>>, vector<32x256xf32>
    tpu.vector_store %arg11[%c0_120, %c512_121], %217 {strides = array<i32>} : memref<32x1024xf32, #tpu.memory_space<vmem>>, vector<32x256xf32>,
    %c0_122 = arith.constant 0 : index
    %c768_123 = arith.constant 768 : index
    %222 = vector.load %arg11[%c0_122, %c768_123] : memref<32x1024xf32, #tpu.memory_space<vmem>>, vector<32x256xf32>
    tpu.vector_store %arg11[%c0_122, %c768_123], %218 {strides = array<i32>} : memref<32x1024xf32, #tpu.memory_space<vmem>>, vector<32x256xf32>,
    %c0_124 = arith.constant 0 : index
    %c0_125 = arith.constant 0 : index
    %223 = vector.load %arg11[%c0_124, %c0_125] : memref<32x1024xf32, #tpu.memory_space<vmem>>, vector<32x1024xf32>
    %cst_126 = arith.constant dense<0.000000e+00> : vector<32x1024xf32>
    %224 = tpu.matmul %168, %223, %cst_126 {dimension_numbers = #tpu.dot_dimension_numbers<[1], [0], [0], [1], [0, 0, 1, 1], [], []>} : vector<32x32xf32>, vector<32x1024xf32>, vector<32x1024xf32> -> vector<32x1024xf32>
    %225 = vector.extract_strided_slice %224 {offsets = [0, 0], sizes = [32, 256], strides = [1, 1]} : vector<32x1024xf32> to vector<32x256xf32>
    %226 = arith.addf %156, %225 : vector<32x256xf32>
    %227 = vector.broadcast %170 : vector<32x1xf32> to vector<32x256xf32>
    %228 = arith.addf %226, %227 : vector<32x256xf32>
    %229 = vector.extract_strided_slice %224 {offsets = [0, 256], sizes = [32, 256], strides = [1, 1]} : vector<32x1024xf32> to vector<32x256xf32>
    %230 = arith.addf %158, %229 : vector<32x256xf32>
    %231 = vector.extract_strided_slice %224 {offsets = [0, 512], sizes = [32, 256], strides = [1, 1]} : vector<32x1024xf32> to vector<32x256xf32>
    %232 = arith.addf %160, %231 : vector<32x256xf32>
    %233 = vector.extract_strided_slice %224 {offsets = [0, 768], sizes = [32, 256], strides = [1, 1]} : vector<32x1024xf32> to vector<32x256xf32>
    %234 = arith.addf %162, %233 : vector<32x256xf32>
    %c3 = arith.constant 3 : index
    %c0_127 = arith.constant 0 : index
    %c0_128 = arith.constant 0 : index
    %235 = vector.load %arg4[%c3, %c0_127, %c0_128] : memref<4x32x32xf32, #tpu.memory_space<vmem>>, vector<1x32x32xf32>
    %236 = vector.shape_cast %235 : vector<1x32x32xf32> to vector<32x32xf32>
    %c3_129 = arith.constant 3 : index
    %c0_130 = arith.constant 0 : index
    %c0_131 = arith.constant 0 : index
    %237 = vector.load %arg5[%c3_129, %c0_130, %c0_131] : memref<4x32x1xf32, #tpu.memory_space<vmem>>, vector<1x32x1xf32>
    %238 = vector.shape_cast %237 : vector<1x32x1xf32> to vector<32x1xf32>
    %c3_132 = arith.constant 3 : index
    %c0_133 = arith.constant 0 : index
    %c0_134 = arith.constant 0 : index
    %239 = vector.load %arg6[%c3_132, %c0_133, %c0_134] : memref<4x32x32xf32, #tpu.memory_space<vmem>>, vector<1x32x32xf32>
    %240 = vector.shape_cast %239 : vector<1x32x32xf32> to vector<32x32xf32>
    %c3_135 = arith.constant 3 : index
    %c0_136 = arith.constant 0 : index
    %c0_137 = arith.constant 0 : index
    %241 = vector.load %arg7[%c3_135, %c0_136, %c0_137] : memref<4x32x1xf32, #tpu.memory_space<vmem>>, vector<1x32x1xf32>
    %242 = vector.shape_cast %241 : vector<1x32x1xf32> to vector<32x1xf32>
    %243 = arith.negf %228 : vector<32x256xf32>
    %244 = math.exp %243 : vector<32x256xf32>
    %cst_138 = arith.constant 1.000000e+00 : f32
    %245 = vector.broadcast %cst_138 : f32 to vector<32x256xf32>
    %246 = arith.addf %245, %244 : vector<32x256xf32>
    %247 = arith.divf %245, %246 : vector<32x256xf32>
    %cst_139 = arith.constant 1.000000e+00 : f32
    %248 = vector.broadcast %cst_139 : f32 to vector<32x256xf32>
    %249 = arith.subf %248, %247 : vector<32x256xf32>
    %250 = arith.mulf %247, %249 : vector<32x256xf32>
    %cst_140 = arith.constant 2.000000e+00 : f32
    %251 = vector.broadcast %cst_140 : f32 to vector<32x256xf32>
    %252 = arith.mulf %251, %247 : vector<32x256xf32>
    %cst_141 = arith.constant 1.000000e+00 : f32
    %253 = vector.broadcast %cst_141 : f32 to vector<32x256xf32>
    %254 = arith.subf %253, %252 : vector<32x256xf32>
    %255 = arith.mulf %254, %232 : vector<32x256xf32>
    %256 = arith.mulf %255, %232 : vector<32x256xf32>
    %257 = arith.addf %256, %234 : vector<32x256xf32>
    %258 = arith.mulf %250, %230 : vector<32x256xf32>
    %259 = arith.mulf %250, %232 : vector<32x256xf32>
    %260 = arith.mulf %250, %257 : vector<32x256xf32>
    %c0_142 = arith.constant 0 : index
    %c0_143 = arith.constant 0 : index
    %261 = vector.load %arg11[%c0_142, %c0_143] : memref<32x1024xf32, #tpu.memory_space<vmem>>, vector<32x256xf32>
    tpu.vector_store %arg11[%c0_142, %c0_143], %247 {strides = array<i32>} : memref<32x1024xf32, #tpu.memory_space<vmem>>, vector<32x256xf32>,
    %c0_144 = arith.constant 0 : index
    %c256_145 = arith.constant 256 : index
    %262 = vector.load %arg11[%c0_144, %c256_145] : memref<32x1024xf32, #tpu.memory_space<vmem>>, vector<32x256xf32>
    tpu.vector_store %arg11[%c0_144, %c256_145], %258 {strides = array<i32>} : memref<32x1024xf32, #tpu.memory_space<vmem>>, vector<32x256xf32>,
    %c0_146 = arith.constant 0 : index
    %c512_147 = arith.constant 512 : index
    %263 = vector.load %arg11[%c0_146, %c512_147] : memref<32x1024xf32, #tpu.memory_space<vmem>>, vector<32x256xf32>
    tpu.vector_store %arg11[%c0_146, %c512_147], %259 {strides = array<i32>} : memref<32x1024xf32, #tpu.memory_space<vmem>>, vector<32x256xf32>,
    %c0_148 = arith.constant 0 : index
    %c768_149 = arith.constant 768 : index
    %264 = vector.load %arg11[%c0_148, %c768_149] : memref<32x1024xf32, #tpu.memory_space<vmem>>, vector<32x256xf32>
    tpu.vector_store %arg11[%c0_148, %c768_149], %260 {strides = array<i32>} : memref<32x1024xf32, #tpu.memory_space<vmem>>, vector<32x256xf32>,
    %c0_150 = arith.constant 0 : index
    %c0_151 = arith.constant 0 : index
    %265 = vector.load %arg11[%c0_150, %c0_151] : memref<32x1024xf32, #tpu.memory_space<vmem>>, vector<32x1024xf32>
    %cst_152 = arith.constant dense<0.000000e+00> : vector<32x1024xf32>
    %266 = tpu.matmul %236, %265, %cst_152 {dimension_numbers = #tpu.dot_dimension_numbers<[1], [0], [0], [1], [0, 0, 1, 1], [], []>} : vector<32x32xf32>, vector<32x1024xf32>, vector<32x1024xf32> -> vector<32x1024xf32>
    %267 = vector.extract_strided_slice %266 {offsets = [0, 0], sizes = [32, 256], strides = [1, 1]} : vector<32x1024xf32> to vector<32x256xf32>
    %268 = vector.broadcast %238 : vector<32x1xf32> to vector<32x256xf32>
    %269 = arith.addf %267, %268 : vector<32x256xf32>
    %270 = vector.extract_strided_slice %266 {offsets = [0, 256], sizes = [32, 256], strides = [1, 1]} : vector<32x1024xf32> to vector<32x256xf32>
    %271 = vector.extract_strided_slice %266 {offsets = [0, 512], sizes = [32, 256], strides = [1, 1]} : vector<32x1024xf32> to vector<32x256xf32>
    %272 = vector.extract_strided_slice %266 {offsets = [0, 768], sizes = [32, 256], strides = [1, 1]} : vector<32x1024xf32> to vector<32x256xf32>
    %273 = arith.negf %269 : vector<32x256xf32>
    %274 = math.exp %273 : vector<32x256xf32>
    %cst_153 = arith.constant 1.000000e+00 : f32
    %275 = vector.broadcast %cst_153 : f32 to vector<32x256xf32>
    %276 = arith.addf %275, %274 : vector<32x256xf32>
    %277 = arith.divf %275, %276 : vector<32x256xf32>
    %cst_154 = arith.constant 1.000000e+00 : f32
    %278 = vector.broadcast %cst_154 : f32 to vector<32x256xf32>
    %279 = arith.subf %278, %277 : vector<32x256xf32>
    %280 = arith.mulf %277, %279 : vector<32x256xf32>
    %cst_155 = arith.constant 2.000000e+00 : f32
    %281 = vector.broadcast %cst_155 : f32 to vector<32x256xf32>
    %282 = arith.mulf %281, %277 : vector<32x256xf32>
    %cst_156 = arith.constant 1.000000e+00 : f32
    %283 = vector.broadcast %cst_156 : f32 to vector<32x256xf32>
    %284 = arith.subf %283, %282 : vector<32x256xf32>
    %285 = arith.mulf %284, %271 : vector<32x256xf32>
    %286 = arith.mulf %285, %271 : vector<32x256xf32>
    %287 = arith.addf %286, %272 : vector<32x256xf32>
    %288 = arith.mulf %280, %270 : vector<32x256xf32>
    %289 = arith.mulf %280, %271 : vector<32x256xf32>
    %290 = arith.mulf %280, %287 : vector<32x256xf32>
    %c0_157 = arith.constant 0 : index
    %c0_158 = arith.constant 0 : index
    %291 = vector.load %arg11[%c0_157, %c0_158] : memref<32x1024xf32, #tpu.memory_space<vmem>>, vector<32x256xf32>
    tpu.vector_store %arg11[%c0_157, %c0_158], %277 {strides = array<i32>} : memref<32x1024xf32, #tpu.memory_space<vmem>>, vector<32x256xf32>,
    %c0_159 = arith.constant 0 : index
    %c256_160 = arith.constant 256 : index
    %292 = vector.load %arg11[%c0_159, %c256_160] : memref<32x1024xf32, #tpu.memory_space<vmem>>, vector<32x256xf32>
    tpu.vector_store %arg11[%c0_159, %c256_160], %288 {strides = array<i32>} : memref<32x1024xf32, #tpu.memory_space<vmem>>, vector<32x256xf32>,
    %c0_161 = arith.constant 0 : index
    %c512_162 = arith.constant 512 : index
    %293 = vector.load %arg11[%c0_161, %c512_162] : memref<32x1024xf32, #tpu.memory_space<vmem>>, vector<32x256xf32>
    tpu.vector_store %arg11[%c0_161, %c512_162], %289 {strides = array<i32>} : memref<32x1024xf32, #tpu.memory_space<vmem>>, vector<32x256xf32>,
    %c0_163 = arith.constant 0 : index
    %c768_164 = arith.constant 768 : index
    %294 = vector.load %arg11[%c0_163, %c768_164] : memref<32x1024xf32, #tpu.memory_space<vmem>>, vector<32x256xf32>
    tpu.vector_store %arg11[%c0_163, %c768_164], %290 {strides = array<i32>} : memref<32x1024xf32, #tpu.memory_space<vmem>>, vector<32x256xf32>,
    %c0_165 = arith.constant 0 : index
    %c0_166 = arith.constant 0 : index
    %295 = vector.load %arg11[%c0_165, %c0_166] : memref<32x1024xf32, #tpu.memory_space<vmem>>, vector<32x1024xf32>
    %cst_167 = arith.constant dense<0.000000e+00> : vector<32x1024xf32>
    %296 = tpu.matmul %240, %295, %cst_167 {dimension_numbers = #tpu.dot_dimension_numbers<[1], [0], [0], [1], [0, 0, 1, 1], [], []>} : vector<32x32xf32>, vector<32x1024xf32>, vector<32x1024xf32> -> vector<32x1024xf32>
    %297 = vector.extract_strided_slice %296 {offsets = [0, 0], sizes = [32, 256], strides = [1, 1]} : vector<32x1024xf32> to vector<32x256xf32>
    %298 = arith.addf %228, %297 : vector<32x256xf32>
    %299 = vector.broadcast %242 : vector<32x1xf32> to vector<32x256xf32>
    %300 = arith.addf %298, %299 : vector<32x256xf32>
    %301 = vector.extract_strided_slice %296 {offsets = [0, 256], sizes = [32, 256], strides = [1, 1]} : vector<32x1024xf32> to vector<32x256xf32>
    %302 = arith.addf %230, %301 : vector<32x256xf32>
    %303 = vector.extract_strided_slice %296 {offsets = [0, 512], sizes = [32, 256], strides = [1, 1]} : vector<32x1024xf32> to vector<32x256xf32>
    %304 = arith.addf %232, %303 : vector<32x256xf32>
    %305 = vector.extract_strided_slice %296 {offsets = [0, 768], sizes = [32, 256], strides = [1, 1]} : vector<32x1024xf32> to vector<32x256xf32>
    %306 = arith.addf %234, %305 : vector<32x256xf32>
    %307 = arith.negf %300 : vector<32x256xf32>
    %308 = math.exp %307 : vector<32x256xf32>
    %cst_168 = arith.constant 1.000000e+00 : f32
    %309 = vector.broadcast %cst_168 : f32 to vector<32x256xf32>
    %310 = arith.addf %309, %308 : vector<32x256xf32>
    %311 = arith.divf %309, %310 : vector<32x256xf32>
    %cst_169 = arith.constant 1.000000e+00 : f32
    %312 = vector.broadcast %cst_169 : f32 to vector<32x256xf32>
    %313 = arith.subf %312, %311 : vector<32x256xf32>
    %314 = arith.mulf %311, %313 : vector<32x256xf32>
    %cst_170 = arith.constant 2.000000e+00 : f32
    %315 = vector.broadcast %cst_170 : f32 to vector<32x256xf32>
    %316 = arith.mulf %315, %311 : vector<32x256xf32>
    %cst_171 = arith.constant 1.000000e+00 : f32
    %317 = vector.broadcast %cst_171 : f32 to vector<32x256xf32>
    %318 = arith.subf %317, %316 : vector<32x256xf32>
    %319 = arith.mulf %318, %304 : vector<32x256xf32>
    %320 = arith.mulf %319, %304 : vector<32x256xf32>
    %321 = arith.addf %320, %306 : vector<32x256xf32>
    %c0_172 = arith.constant 0 : index
    %c0_173 = arith.constant 0 : index
    %322 = vector.load %arg11[%c0_172, %c0_173] : memref<32x1024xf32, #tpu.memory_space<vmem>>, vector<32x256xf32>
    tpu.vector_store %arg11[%c0_172, %c0_173], %311 {strides = array<i32>} : memref<32x1024xf32, #tpu.memory_space<vmem>>, vector<32x256xf32>,
    %323 = arith.mulf %314, %302 : vector<32x256xf32>
    %c0_174 = arith.constant 0 : index
    %c256_175 = arith.constant 256 : index
    %324 = vector.load %arg11[%c0_174, %c256_175] : memref<32x1024xf32, #tpu.memory_space<vmem>>, vector<32x256xf32>
    tpu.vector_store %arg11[%c0_174, %c256_175], %323 {strides = array<i32>} : memref<32x1024xf32, #tpu.memory_space<vmem>>, vector<32x256xf32>,
    %325 = arith.mulf %314, %304 : vector<32x256xf32>
    %c0_176 = arith.constant 0 : index
    %c512_177 = arith.constant 512 : index
    %326 = vector.load %arg11[%c0_176, %c512_177] : memref<32x1024xf32, #tpu.memory_space<vmem>>, vector<32x256xf32>
    tpu.vector_store %arg11[%c0_176, %c512_177], %325 {strides = array<i32>} : memref<32x1024xf32, #tpu.memory_space<vmem>>, vector<32x256xf32>,
    %327 = arith.mulf %314, %321 : vector<32x256xf32>
    %c0_178 = arith.constant 0 : index
    %c768_179 = arith.constant 768 : index
    %328 = vector.load %arg11[%c0_178, %c768_179] : memref<32x1024xf32, #tpu.memory_space<vmem>>, vector<32x256xf32>
    tpu.vector_store %arg11[%c0_178, %c768_179], %327 {strides = array<i32>} : memref<32x1024xf32, #tpu.memory_space<vmem>>, vector<32x256xf32>,
    %c0_180 = arith.constant 0 : index
    %c0_181 = arith.constant 0 : index
    %329 = vector.load %arg8[%c0_180, %c0_181] : memref<32x1xf32, #tpu.memory_space<vmem>>, vector<32x1xf32>
    %c0_182 = arith.constant 0 : index
    %c0_183 = arith.constant 0 : index
    %330 = vector.load %arg11[%c0_182, %c0_183] : memref<32x1024xf32, #tpu.memory_space<vmem>>, vector<32x1024xf32>
    %331 = vector.broadcast %329 : vector<32x1xf32> to vector<32x1024xf32>
    %332 = arith.mulf %331, %330 : vector<32x1024xf32>
    %cst_184 = arith.constant dense<0.000000e+00> : vector<1024xf32>
    %333 = vector.multi_reduction <add>, %332, %cst_184 [0] : vector<32x1024xf32> to vector<1024xf32>
    %334 = vector.shape_cast %333 : vector<1024xf32> to vector<1x1024xf32>
    %335 = vector.extract_strided_slice %334 {offsets = [0, 0], sizes = [1, 256], strides = [1, 1]} : vector<1x1024xf32> to vector<1x256xf32>
    %c0_185 = arith.constant 0 : index
    %c0_186 = arith.constant 0 : index
    %336 = vector.load %arg9[%c0_185, %c0_186] : memref<1x1xf32, #tpu.memory_space<vmem>>, vector<1x1xf32>
    %337 = vector.broadcast %336 : vector<1x1xf32> to vector<1x256xf32>
    %338 = arith.addf %335, %337 : vector<1x256xf32>
    %339 = vector.extract_strided_slice %334 {offsets = [0, 256], sizes = [1, 256], strides = [1, 1]} : vector<1x1024xf32> to vector<1x256xf32>
    %340 = vector.extract_strided_slice %334 {offsets = [0, 512], sizes = [1, 256], strides = [1, 1]} : vector<1x1024xf32> to vector<1x256xf32>
    %341 = vector.extract_strided_slice %334 {offsets = [0, 768], sizes = [1, 256], strides = [1, 1]} : vector<1x1024xf32> to vector<1x256xf32>
    %cst_187 = arith.constant 9.99999974E-5 : f32
    %342 = vector.broadcast %cst_187 : f32 to vector<1x256xf32>
    %343 = arith.mulf %342, %341 : vector<1x256xf32>
    %344 = arith.subf %339, %343 : vector<1x256xf32>
    %cst_188 = arith.constant 5.000000e+00 : f32
    %345 = vector.broadcast %cst_188 : f32 to vector<1x256xf32>
    %346 = arith.mulf %345, %338 : vector<1x256xf32>
    %347 = arith.mulf %346, %338 : vector<1x256xf32>
    %348 = arith.mulf %347, %338 : vector<1x256xf32>
    %349 = arith.addf %344, %348 : vector<1x256xf32>
    %cst_189 = arith.constant 5.000000e+00 : f32
    %350 = vector.broadcast %cst_189 : f32 to vector<1x256xf32>
    %351 = arith.mulf %350, %338 : vector<1x256xf32>
    %352 = arith.subf %349, %351 : vector<1x256xf32>
    %353 = tpu.concatenate %338, %339, %340, %341, %352 in 0 : vector<1x256xf32>, vector<1x256xf32>, vector<1x256xf32>, vector<1x256xf32>, vector<1x256xf32> -> vector<5x256xf32>
    %c0_190 = arith.constant 0 : index
    %c0_191 = arith.constant 0 : index
    %354 = vector.load %arg10[%c0_190, %c0_191] : memref<5x256xf32, #tpu.memory_space<vmem>>, vector<5x256xf32>
    tpu.vector_store %arg10[%c0_190, %c0_191], %353 {strides = array<i32>} : memref<5x256xf32, #tpu.memory_space<vmem>>, vector<5x256xf32>,
    return
  }
  func.func @transform_0(%arg0: i32) -> (i32, i32) {
    %c0_i32 = arith.constant 0 : i32
    %c0_i32_0 = arith.constant 0 : i32
    return %c0_i32, %arg0 : i32, i32
  }
  func.func @transform_1(%arg0: i32) -> (i32, i32) {
    %c0_i32 = arith.constant 0 : i32
    %c0_i32_0 = arith.constant 0 : i32
    %c0_i32_1 = arith.constant 0 : i32
    return %c0_i32, %c0_i32_0 : i32, i32
  }
  func.func @transform_2(%arg0: i32) -> (i32, i32) {
    %c0_i32 = arith.constant 0 : i32
    %c0_i32_0 = arith.constant 0 : i32
    %c0_i32_1 = arith.constant 0 : i32
    return %c0_i32, %c0_i32_0 : i32, i32
  }
  func.func @transform_3(%arg0: i32) -> (i32, i32, i32) {
    %c0_i32 = arith.constant 0 : i32
    %c0_i32_0 = arith.constant 0 : i32
    %c0_i32_1 = arith.constant 0 : i32
    %c0_i32_2 = arith.constant 0 : i32
    return %c0_i32, %c0_i32_0, %c0_i32_1 : i32, i32, i32
  }
  func.func @transform_4(%arg0: i32) -> (i32, i32, i32) {
    %c0_i32 = arith.constant 0 : i32
    %c0_i32_0 = arith.constant 0 : i32
    %c0_i32_1 = arith.constant 0 : i32
    %c0_i32_2 = arith.constant 0 : i32
    return %c0_i32, %c0_i32_0, %c0_i32_1 : i32, i32, i32
  }
  func.func @transform_5(%arg0: i32) -> (i32, i32, i32) {
    %c0_i32 = arith.constant 0 : i32
    %c0_i32_0 = arith.constant 0 : i32
    %c0_i32_1 = arith.constant 0 : i32
    %c0_i32_2 = arith.constant 0 : i32
    return %c0_i32, %c0_i32_0, %c0_i32_1 : i32, i32, i32
  }
  func.func @transform_6(%arg0: i32) -> (i32, i32, i32) {
    %c0_i32 = arith.constant 0 : i32
    %c0_i32_0 = arith.constant 0 : i32
    %c0_i32_1 = arith.constant 0 : i32
    %c0_i32_2 = arith.constant 0 : i32
    return %c0_i32, %c0_i32_0, %c0_i32_1 : i32, i32, i32
  }
  func.func @transform_7(%arg0: i32) -> (i32, i32) {
    %c0_i32 = arith.constant 0 : i32
    %c0_i32_0 = arith.constant 0 : i32
    %c0_i32_1 = arith.constant 0 : i32
    return %c0_i32, %c0_i32_0 : i32, i32
  }
  func.func @transform_8(%arg0: i32) -> (i32, i32) {
    %c0_i32 = arith.constant 0 : i32
    %c0_i32_0 = arith.constant 0 : i32
    %c0_i32_1 = arith.constant 0 : i32
    return %c0_i32, %c0_i32_0 : i32, i32
  }
  func.func @transform_9(%arg0: i32) -> (i32, i32) {
    %c0_i32 = arith.constant 0 : i32
    %c0_i32_0 = arith.constant 0 : i32
    return %c0_i32, %arg0 : i32, i32
  }
}

</mosaic_0001>

<llo_original>
// kernel: tpu_custom_call.1
$region0: #{tpu_custom_call.1}
  #allocation0 [shape = 'u32[]', space=smem, size = 0x4, offset = 0x4, fixed_abs, tag = 'smem constant byte address 0x4 - core index']
  #allocation1 [shape = 'u32[72,128]{1,0:T(1,128)}', space=vmem, size = 0x9000, scoped, tag = 'internal scratch']
  #allocation2 [shape = 'f32[32,1024]{1,0:T(8,128)}', space=vmem, size = 0x20000, scoped, tag = 'scratch operand']
  #allocation3 [shape = 'f32[1,1]{1,0:T(1,128)S(1)}', space=vmem, size = 0x200, scoped, tag = 'scoped memory for tpu_custom_call.1']
  %s0 = inlined_call_operand.vmem [shape: f32[2,512], index: 0, kind: input, shape index: {}]
  %s1 = inlined_call_operand.vmem [shape: f32[32,2], index: 1, kind: input, shape index: {}]
  %s2 = inlined_call_operand.vmem [shape: f32[32,1], index: 2, kind: input, shape index: {}]
  %s3 = inlined_call_operand.vmem [shape: f32[4,32,32], index: 3, kind: input, shape index: {}]
  %s4 = inlined_call_operand.vmem [shape: f32[4,32,1], index: 4, kind: input, shape index: {}]
  %s5 = inlined_call_operand.vmem [shape: f32[4,32,32], index: 5, kind: input, shape index: {}]
  %s6 = inlined_call_operand.vmem [shape: f32[4,32,1], index: 6, kind: input, shape index: {}]
  %s7 = inlined_call_operand.vmem [shape: f32[32,1], index: 7, kind: input, shape index: {}]
  %s8 = inlined_call_operand.<no memory space> [shape: f32[1,1], index: 8, kind: input, shape index: {}]
  %s9 = inlined_call_operand.hbm [shape: f32[5,512], index: 9, kind: output, shape index: {}]
  %s10 = sld [smem:[#allocation0]]
  $region69: #{tpu_custom_call.1} parent=0
    _
  %s12 = ssub.s32 1, %s10
  %s13 = scalar_select 0, %s12, %s10
  %v14 = vstv %s8
  %15 = vst [vmem:[#allocation3] sm:$0x1] %v14
  $region1: #{tpu_custom_call.1} parent=0
    #allocation4 [shape = 'u8[16384]{0}', space=vmem, size = 0x4000, scoped, tag = 'output window, operand 0']
    #allocation5 [shape = 's32[2]{0}', space=sflag, size = 0x8, scoped, tag = 'scoped memory for tpu_custom_call.1']
    %16 = vsyncpa [#allocation5], 0
    %s17 = scalar_lea.sflag [#allocation5], 1
    %18 = vsyncpa %s17, 0
    loop: start=0, step=1, limit=4
    $region2: #{tpu_custom_call.1} parent=1 // loop_pre_header
      _
    $region3: #{tpu_custom_call.1} parent=1 // loop_header
      %s20 = sphi 0, %s24
      %p21 = scmp.ge.s32.totalorder %s20, 4
      %s30 = sphi 0, %s32
      %s33 = sphi 0, %s30
      %s34 = sphi 0, %s33
      %s50 = sphi 0, %s34
      %s54 = sphi 0, %s54
      %s56 = sphi 0, %s54
      %s57 = sphi 0, %s56
      %s71 = sphi 0, %s57
      %s75 = sphi 0, %s75
      %s77 = sphi 0, %s75
      %s78 = sphi 0, %s77
      %s92 = sphi 0, %s78
      %s96 = sphi 0, %s96
      %s98 = sphi 0, %s96
      %s99 = sphi 0, %s98
      %s113 = sphi 0, %s99
      %s117 = sphi 0, %s117
      %s119 = sphi 0, %s117
      %s120 = sphi 0, %s119
      %s134 = sphi 0, %s120
      %s138 = sphi 0, %s138
      %s140 = sphi 0, %s138
      %s141 = sphi 0, %s140
      %s155 = sphi 0, %s141
      %s159 = sphi 0, %s159
      %s161 = sphi 0, %s159
      %s162 = sphi 0, %s161
      %s176 = sphi 0, %s162
      %s180 = sphi 0, %s180
      %s182 = sphi 0, %s180
      %s183 = sphi 0, %s182
      %s197 = sphi 0, %s183
      %s201 = sphi 0, %s201
      %s203 = sphi 0, %s201
      %s204 = sphi 0, %s203
      %s218 = sphi 0, %s204
      %s224 = sphi 0, %s226
      %s227 = sphi 0, %s224
      %s228 = sphi 0, %s227
      %s244 = sphi 0, %s228
    $region4: #{tpu_custom_call.1} parent=1 // loop_header_branch
      %23 = sbr.rel (%p21) target = $region8
    $region5: #{tpu_custom_call.1} parent=1 // loop_body
      %s25 = ssub.s32 %s20, 1
      %s26 = ssub.s32 %s20, 2
      %s27 = sadd.s32 %s20, 1
      %s28 = ssub.s32 %s20, %s27
      %p29 = scmp.eq.s32.totalorder %s28, 0
      %s31 = sadd.s32 %s30, 1
      %s32 = scalar_select %p29, %s30, %s31
      %p35 = pneg %p29
      %p36 = scmp.eq.s32.totalorder %s20, 1
      %p37 = por %p35, %p36
      %p38 = scmp.ne.s32.totalorder %s30, %s33
      %p39 = scmp.eq.s32.totalorder %s20, 0
      %p40 = por %p38, %p39
      %p41 = scmp.ne.s32.totalorder %s30, %s33
      %p42 = scmp.eq.s32.totalorder %s25, 1
      %p43 = por %p41, %p42
      %p44 = scmp.ne.s32.totalorder %s33, %s34
      %p45 = scmp.eq.s32.totalorder %s25, 0
      %p46 = por %p44, %p45
      %p47 = scmp.ne.s32.totalorder %s33, %s34
      %p48 = scmp.eq.s32.totalorder %s26, 1
      %p49 = por %p47, %p48
      %p51 = scmp.ne.s32.totalorder %s34, %s50
      %p52 = scmp.eq.s32.totalorder %s26, 0
      %p53 = por %p51, %p52
      %s55 = sadd.s32 %s54, 1
      %p58 = scmp.eq.s32.totalorder %s20, 1
      %p59 = scmp.ne.s32.totalorder %s54, %s56
      %p60 = scmp.eq.s32.totalorder %s20, 0
      %p61 = por %p59, %p60
      %p62 = scmp.ne.s32.totalorder %s54, %s56
      %p63 = scmp.eq.s32.totalorder %s25, 1
      %p64 = por %p62, %p63
      %p65 = scmp.ne.s32.totalorder %s56, %s57
      %p66 = scmp.eq.s32.totalorder %s25, 0
      %p67 = por %p65, %p66
      %p68 = scmp.ne.s32.totalorder %s56, %s57
      %p69 = scmp.eq.s32.totalorder %s26, 1
      %p70 = por %p68, %p69
      %p72 = scmp.ne.s32.totalorder %s57, %s71
      %p73 = scmp.eq.s32.totalorder %s26, 0
      %p74 = por %p72, %p73
      %s76 = sadd.s32 %s75, 1
      %p79 = scmp.eq.s32.totalorder %s20, 1
      %p80 = scmp.ne.s32.totalorder %s75, %s77
      %p81 = scmp.eq.s32.totalorder %s20, 0
      %p82 = por %p80, %p81
      %p83 = scmp.ne.s32.totalorder %s75, %s77
      %p84 = scmp.eq.s32.totalorder %s25, 1
      %p85 = por %p83, %p84
      %p86 = scmp.ne.s32.totalorder %s77, %s78
      %p87 = scmp.eq.s32.totalorder %s25, 0
      %p88 = por %p86, %p87
      %p89 = scmp.ne.s32.totalorder %s77, %s78
      %p90 = scmp.eq.s32.totalorder %s26, 1
      %p91 = por %p89, %p90
      %p93 = scmp.ne.s32.totalorder %s78, %s92
      %p94 = scmp.eq.s32.totalorder %s26, 0
      %p95 = por %p93, %p94
      %s97 = sadd.s32 %s96, 1
      %p100 = scmp.eq.s32.totalorder %s20, 1
      %p101 = scmp.ne.s32.totalorder %s96, %s98
      %p102 = scmp.eq.s32.totalorder %s20, 0
      %p103 = por %p101, %p102
      %p104 = scmp.ne.s32.totalorder %s96, %s98
      %p105 = scmp.eq.s32.totalorder %s25, 1
      %p106 = por %p104, %p105
      %p107 = scmp.ne.s32.totalorder %s98, %s99
      %p108 = scmp.eq.s32.totalorder %s25, 0
      %p109 = por %p107, %p108
      %p110 = scmp.ne.s32.totalorder %s98, %s99
      %p111 = scmp.eq.s32.totalorder %s26, 1
      %p112 = por %p110, %p111
      %p114 = scmp.ne.s32.totalorder %s99, %s113
      %p115 = scmp.eq.s32.totalorder %s26, 0
      %p116 = por %p114, %p115
      %s118 = sadd.s32 %s117, 1
      %p121 = scmp.eq.s32.totalorder %s20, 1
      %p122 = scmp.ne.s32.totalorder %s117, %s119
      %p123 = scmp.eq.s32.totalorder %s20, 0
      %p124 = por %p122, %p123
      %p125 = scmp.ne.s32.totalorder %s117, %s119
      %p126 = scmp.eq.s32.totalorder %s25, 1
      %p127 = por %p125, %p126
      %p128 = scmp.ne.s32.totalorder %s119, %s120
      %p129 = scmp.eq.s32.totalorder %s25, 0
      %p130 = por %p128, %p129
      %p131 = scmp.ne.s32.totalorder %s119, %s120
      %p132 = scmp.eq.s32.totalorder %s26, 1
      %p133 = por %p131, %p132
      %p135 = scmp.ne.s32.totalorder %s120, %s134
      %p136 = scmp.eq.s32.totalorder %s26, 0
      %p137 = por %p135, %p136
      %s139 = sadd.s32 %s138, 1
      %p142 = scmp.eq.s32.totalorder %s20, 1
      %p143 = scmp.ne.s32.totalorder %s138, %s140
      %p144 = scmp.eq.s32.totalorder %s20, 0
      %p145 = por %p143, %p144
      %p146 = scmp.ne.s32.totalorder %s138, %s140
      %p147 = scmp.eq.s32.totalorder %s25, 1
      %p148 = por %p146, %p147
      %p149 = scmp.ne.s32.totalorder %s140, %s141
      %p150 = scmp.eq.s32.totalorder %s25, 0
      %p151 = por %p149, %p150
      %p152 = scmp.ne.s32.totalorder %s140, %s141
      %p153 = scmp.eq.s32.totalorder %s26, 1
      %p154 = por %p152, %p153
      %p156 = scmp.ne.s32.totalorder %s141, %s155
      %p157 = scmp.eq.s32.totalorder %s26, 0
      %p158 = por %p156, %p157
      %s160 = sadd.s32 %s159, 1
      %p163 = scmp.eq.s32.totalorder %s20, 1
      %p164 = scmp.ne.s32.totalorder %s159, %s161
      %p165 = scmp.eq.s32.totalorder %s20, 0
      %p166 = por %p164, %p165
      %p167 = scmp.ne.s32.totalorder %s159, %s161
      %p168 = scmp.eq.s32.totalorder %s25, 1
      %p169 = por %p167, %p168
      %p170 = scmp.ne.s32.totalorder %s161, %s162
      %p171 = scmp.eq.s32.totalorder %s25, 0
      %p172 = por %p170, %p171
      %p173 = scmp.ne.s32.totalorder %s161, %s162
      %p174 = scmp.eq.s32.totalorder %s26, 1
      %p175 = por %p173, %p174
      %p177 = scmp.ne.s32.totalorder %s162, %s176
      %p178 = scmp.eq.s32.totalorder %s26, 0
      %p179 = por %p177, %p178
      %s181 = sadd.s32 %s180, 1
      %p184 = scmp.eq.s32.totalorder %s20, 1
      %p185 = scmp.ne.s32.totalorder %s180, %s182
      %p186 = scmp.eq.s32.totalorder %s20, 0
      %p187 = por %p185, %p186
      %p188 = scmp.ne.s32.totalorder %s180, %s182
      %p189 = scmp.eq.s32.totalorder %s25, 1
      %p190 = por %p188, %p189
      %p191 = scmp.ne.s32.totalorder %s182, %s183
      %p192 = scmp.eq.s32.totalorder %s25, 0
      %p193 = por %p191, %p192
      %p194 = scmp.ne.s32.totalorder %s182, %s183
      %p195 = scmp.eq.s32.totalorder %s26, 1
      %p196 = por %p194, %p195
      %p198 = scmp.ne.s32.totalorder %s183, %s197
      %p199 = scmp.eq.s32.totalorder %s26, 0
      %p200 = por %p198, %p199
      %s202 = sadd.s32 %s201, 1
      %p205 = scmp.eq.s32.totalorder %s20, 1
      %p206 = scmp.ne.s32.totalorder %s201, %s203
      %p207 = scmp.eq.s32.totalorder %s20, 0
      %p208 = por %p206, %p207
      %p209 = scmp.ne.s32.totalorder %s201, %s203
      %p210 = scmp.eq.s32.totalorder %s25, 1
      %p211 = por %p209, %p210
      %p212 = scmp.ne.s32.totalorder %s203, %s204
      %p213 = scmp.eq.s32.totalorder %s25, 0
      %p214 = por %p212, %p213
      %p215 = scmp.ne.s32.totalorder %s203, %s204
      %p216 = scmp.eq.s32.totalorder %s26, 1
      %p217 = por %p215, %p216
      %p219 = scmp.ne.s32.totalorder %s204, %s218
      %p220 = scmp.eq.s32.totalorder %s26, 0
      %p221 = por %p219, %p220
      %s222 = ssub.s32 %s20, %s27
      %p223 = scmp.eq.s32.totalorder %s222, 0
      %s225 = sadd.s32 %s224, 1
      %s226 = scalar_select %p223, %s224, %s225
      %p229 = pneg %p223
      %p230 = scmp.eq.s32.totalorder %s20, 1
      %p231 = por %p229, %p230
      %p232 = scmp.ne.s32.totalorder %s224, %s227
      %p233 = scmp.eq.s32.totalorder %s20, 0
      %p234 = por %p232, %p233
      %p235 = scmp.ne.s32.totalorder %s224, %s227
      %p236 = scmp.eq.s32.totalorder %s25, 1
      %p237 = por %p235, %p236
      %p238 = scmp.ne.s32.totalorder %s227, %s228
      %p239 = scmp.eq.s32.totalorder %s25, 0
      %p240 = por %p238, %p239
      %p241 = scmp.ne.s32.totalorder %s227, %s228
      %p242 = scmp.eq.s32.totalorder %s26, 1
      %p243 = por %p241, %p242
      %p245 = scmp.ne.s32.totalorder %s228, %s244
      %p246 = scmp.eq.s32.totalorder %s26, 0
      %p247 = por %p245, %p246
      %p248 = scmp.le.s32.totalorder 1, %s20
      %p249 = scmp.lt.s32.totalorder %s20, 3
      %p250 = pnand %p248, %p249
      %p251 = pneg %p250
      // Predicated region
      $region9: #{tpu_custom_call.1} parent=5 // pred_check
        _
      $region10: #{tpu_custom_call.1} parent=5 // pred_check_branch
        %253 = sbr.rel (%p250) target = $region12
      $region11: #{tpu_custom_call.1} parent=5 // pred_region
        %s254 = ssub.s32 %s20, 1
        // Predicated region
        $region13: #{tpu_custom_call.1} parent=11 // pred_check
          %p255 = pneg %p67
        $region14: #{tpu_custom_call.1} parent=11 // pred_check_branch
          %257 = sbr.rel (%p255) target = $region16
        $region15: #{tpu_custom_call.1} parent=11 // pred_region
          _
        $region16: #{tpu_custom_call.1} parent=11 // pred_fallthru
          _
        // Predicated region
        $region17: #{tpu_custom_call.1} parent=11 // pred_check
          %p258 = pneg %p88
        $region18: #{tpu_custom_call.1} parent=11 // pred_check_branch
          %260 = sbr.rel (%p258) target = $region20
        $region19: #{tpu_custom_call.1} parent=11 // pred_region
          _
        $region20: #{tpu_custom_call.1} parent=11 // pred_fallthru
          _
        // Predicated region
        $region21: #{tpu_custom_call.1} parent=11 // pred_check
          %p261 = pneg %p109
        $region22: #{tpu_custom_call.1} parent=11 // pred_check_branch
          %263 = sbr.rel (%p261) target = $region24
        $region23: #{tpu_custom_call.1} parent=11 // pred_region
          _
        $region24: #{tpu_custom_call.1} parent=11 // pred_fallthru
          _
        // Predicated region
        $region25: #{tpu_custom_call.1} parent=11 // pred_check
          %p264 = pneg %p130
        $region26: #{tpu_custom_call.1} parent=11 // pred_check_branch
          %266 = sbr.rel (%p264) target = $region28
        $region27: #{tpu_custom_call.1} parent=11 // pred_region
          _
        $region28: #{tpu_custom_call.1} parent=11 // pred_fallthru
          _
        // Predicated region
        $region29: #{tpu_custom_call.1} parent=11 // pred_check
          %p267 = pneg %p151
        $region30: #{tpu_custom_call.1} parent=11 // pred_check_branch
          %269 = sbr.rel (%p267) target = $region32
        $region31: #{tpu_custom_call.1} parent=11 // pred_region
          _
        $region32: #{tpu_custom_call.1} parent=11 // pred_fallthru
          _
        // Predicated region
        $region33: #{tpu_custom_call.1} parent=11 // pred_check
          %p270 = pneg %p172
        $region34: #{tpu_custom_call.1} parent=11 // pred_check_branch
          %272 = sbr.rel (%p270) target = $region36
        $region35: #{tpu_custom_call.1} parent=11 // pred_region
          _
        $region36: #{tpu_custom_call.1} parent=11 // pred_fallthru
          _
        // Predicated region
        $region37: #{tpu_custom_call.1} parent=11 // pred_check
          %p273 = pneg %p193
        $region38: #{tpu_custom_call.1} parent=11 // pred_check_branch
          %275 = sbr.rel (%p273) target = $region40
        $region39: #{tpu_custom_call.1} parent=11 // pred_region
          _
        $region40: #{tpu_custom_call.1} parent=11 // pred_fallthru
          _
        // Predicated region
        $region41: #{tpu_custom_call.1} parent=11 // pred_check
          %p276 = pneg %p214
        $region42: #{tpu_custom_call.1} parent=11 // pred_check_branch
          %278 = sbr.rel (%p276) target = $region44
        $region43: #{tpu_custom_call.1} parent=11 // pred_region
          _
        $region44: #{tpu_custom_call.1} parent=11 // pred_fallthru
          _
      $region12: #{tpu_custom_call.1} parent=5 // pred_fallthru
        _
      %p279 = scmp.lt.s32.totalorder %s20, 2
      // Predicated region
      $region45: #{tpu_custom_call.1} parent=5 // pred_check
        %p280 = pneg %p279
      $region46: #{tpu_custom_call.1} parent=5 // pred_check_branch
        %282 = sbr.rel (%p280) target = $region48
      $region47: #{tpu_custom_call.1} parent=5 // pred_region
        // Predicated region
        $region49: #{tpu_custom_call.1} parent=47 // pred_check
          %p283 = pneg %p40
        $region50: #{tpu_custom_call.1} parent=47 // pred_check_branch
          %285 = sbr.rel (%p283) target = $region52
        $region51: #{tpu_custom_call.1} parent=47 // pred_region
          %s286 = smul.u32 2, %s20
          %p287 = scmp.lt.s32.totalorder %s286, 3
          %s288 = scalar_select %p287, %s286, 3
          %s289 = smul.addr %s288, 2
          %s290 = scalar_lea.vmem %s0, %s289
          %s291 = smul.u32 2, %s20
        $region52: #{tpu_custom_call.1} parent=47 // pred_fallthru
          _
      $region48: #{tpu_custom_call.1} parent=5 // pred_fallthru
        _
      %p292 = scmp.le.s32.totalorder 1, %s20
      %p293 = scmp.lt.s32.totalorder %s20, 3
      %p294 = pnand %p292, %p293
      %p295 = pneg %p294
      // Predicated region
      $region53: #{tpu_custom_call.1} parent=5 // pred_check
        _
      $region54: #{tpu_custom_call.1} parent=5 // pred_check_branch
        %297 = sbr.rel (%p294) target = $region56
      $region55: #{tpu_custom_call.1} parent=5 // pred_region
        %s298 = ssub.s32 %s20, 1
        %s299 = smul.u32 2, %s25
        %p300 = scmp.lt.s32.totalorder %s299, 3
        %s301 = scalar_select %p300, %s299, 3
        %s302 = smul.addr %s301, 2
        %s303 = scalar_lea.vmem %s0, %s302
        %p304 = pneg %p46
        %p305 = pneg %p43
        %p306 = pneg %p67
        %p307 = pneg %p64
        %p308 = pneg %p88
        %p309 = pneg %p85
        %p310 = pneg %p109
        %p311 = pneg %p106
        %p312 = pneg %p130
        %p313 = pneg %p127
        %p314 = pneg %p151
        %p315 = pneg %p148
        %p316 = pneg %p172
        %p317 = pneg %p169
        %p318 = pneg %p193
        %p319 = pneg %p190
        %p320 = pneg %p214
        %p321 = pneg %p211
        %p322 = pneg %p240
        %p323 = pneg %p237
        %s324 = sand.u32 %s227, 1
        %s325 = scalar_lea.sflag [#allocation5], %s324
        %s326 = sand.u32 %s227, 1
        %s327 = smul.addr %s326, 16
        %s328 = scalar_lea.vmem [#allocation4], %s327
        %s329 = smul.u32 2, %s25
        %p330 = scmp.lt.s32.totalorder %s329, 3
        %s331 = scalar_select %p330, %s329, 3
        %s332 = smul.addr %s331, 2
        %s333 = scalar_lea.vmem %s0, %s332
        %s334 = smul.u32 2, %s25
        %s335 = smul.u32 2, %s25
        %v336 = vld [vmem:[%s333] ss:$2 sm:$0x3]
        %s337 = scalar_lea.vmem %s333, 1
        %v338 = vld [vmem:[%s337] ss:$2 sm:$0x3]
        %v339 = vld [vmem:[%s1] sm:$0xff]
        %v340 = vld [vmem:[%s1 + $0x8] sm:$0xff]
        %v341 = vld [vmem:[%s1 + $0x10] sm:$0xff]
        %v342 = vld [vmem:[%s1 + $0x18] sm:$0xff]
        %344 = vset.pattern.permute.xlu0 0
        %345 = vperm.xlu0 %344, %v339
        %v346 = vpop.permute.xlu0 %345
        %349 = vset.pattern.permute.xlu0 0
        %350 = vperm.xlu0 %349, %v340
        %v351 = vpop.permute.xlu0 %350
        %354 = vset.pattern.permute.xlu0 0
        %355 = vperm.xlu0 %354, %v341
        %v356 = vpop.permute.xlu0 %355
        %359 = vset.pattern.permute.xlu0 0
        %360 = vperm.xlu0 %359, %v342
        %v361 = vpop.permute.xlu0 %360
        %v364 = vperm.slane %v336, 0
        %v365 = vperm.slane %v336, 1
        %v368 = vmul.f32 %v346, %v364
        %v369 = vmul.f32 %v346, %v365
        %v370 = vmul.f32 %v351, %v364
        %v371 = vmul.f32 %v351, %v365
        %v372 = vmul.f32 %v356, %v364
        %v373 = vmul.f32 %v356, %v365
        %v374 = vmul.f32 %v361, %v364
        %v375 = vmul.f32 %v361, %v365
        %376 = vset.pattern.permute.xlu0 1
        %377 = vperm.xlu0 %376, %v339
        %v378 = vpop.permute.xlu0 %377
        %380 = vset.pattern.permute.xlu0 1
        %381 = vperm.xlu0 %380, %v340
        %v382 = vpop.permute.xlu0 %381
        %384 = vset.pattern.permute.xlu0 1
        %385 = vperm.xlu0 %384, %v341
        %v386 = vpop.permute.xlu0 %385
        %388 = vset.pattern.permute.xlu0 1
        %389 = vperm.xlu0 %388, %v342
        %v390 = vpop.permute.xlu0 %389
        %v393 = vperm.slane %v338, 0
        %v394 = vperm.slane %v338, 1
        %v397 = vmul.f32 %v378, %v393
        %v398 = vmul.f32 %v378, %v394
        %v399 = vmul.f32 %v382, %v393
        %v400 = vmul.f32 %v382, %v394
        %v401 = vmul.f32 %v386, %v393
        %v402 = vmul.f32 %v386, %v394
        %v403 = vmul.f32 %v390, %v393
        %v404 = vmul.f32 %v390, %v394
        %v405 = vadd.f32 %v368, %v397
        %v406 = vadd.f32 %v369, %v398
        %v407 = vadd.f32 %v370, %v399
        %v408 = vadd.f32 %v371, %v400
        %v409 = vadd.f32 %v372, %v401
        %v410 = vadd.f32 %v373, %v402
        %v411 = vadd.f32 %v374, %v403
        %v412 = vadd.f32 %v375, %v404
        %v413 = vld [vmem:[%s2] sm:$0xff]
        %v414 = vld [vmem:[%s2 + $0x8] sm:$0xff]
        %v415 = vld [vmem:[%s2 + $0x10] sm:$0xff]
        %v416 = vld [vmem:[%s2 + $0x18] sm:$0xff]
        %418 = vset.pattern.permute.xlu0 0
        %419 = vperm.xlu0 %418, %v413
        %v420 = vpop.permute.xlu0 %419
        %423 = vset.pattern.permute.xlu0 0
        %424 = vperm.xlu0 %423, %v414
        %v425 = vpop.permute.xlu0 %424
        %428 = vset.pattern.permute.xlu0 0
        %429 = vperm.xlu0 %428, %v415
        %v430 = vpop.permute.xlu0 %429
        %433 = vset.pattern.permute.xlu0 0
        %434 = vperm.xlu0 %433, %v416
        %v435 = vpop.permute.xlu0 %434
        %v437 = vadd.f32 %v405, %v420
        %v438 = vadd.f32 %v406, %v420
        %v439 = vadd.f32 %v407, %v425
        %v440 = vadd.f32 %v408, %v425
        %v441 = vadd.f32 %v409, %v430
        %v442 = vadd.f32 %v410, %v430
        %v443 = vadd.f32 %v411, %v435
        %v444 = vadd.f32 %v412, %v435
        %v445 = vld [vmem:[%s3] sm:$0xff]
        %v446 = vld [vmem:[%s3 + $0x8] sm:$0xff]
        %v447 = vld [vmem:[%s3 + $0x10] sm:$0xff]
        %v448 = vld [vmem:[%s3 + $0x18] sm:$0xff]
        %v449 = vld [vmem:[%s4] sm:$0xff]
        %v450 = vld [vmem:[%s4 + $0x8] sm:$0xff]
        %v451 = vld [vmem:[%s4 + $0x10] sm:$0xff]
        %v452 = vld [vmem:[%s4 + $0x18] sm:$0xff]
        %v453 = vld [vmem:[%s5] sm:$0xff]
        %v454 = vld [vmem:[%s5 + $0x8] sm:$0xff]
        %v455 = vld [vmem:[%s5 + $0x10] sm:$0xff]
        %v456 = vld [vmem:[%s5 + $0x18] sm:$0xff]
        %v457 = vld [vmem:[%s6] sm:$0xff]
        %v458 = vld [vmem:[%s6 + $0x8] sm:$0xff]
        %v459 = vld [vmem:[%s6 + $0x10] sm:$0xff]
        %v460 = vld [vmem:[%s6 + $0x18] sm:$0xff]
        %v461 = vxor.u32 %v437, 2147483648
        %v462 = vxor.u32 %v438, 2147483648
        %v463 = vxor.u32 %v439, 2147483648
        %v464 = vxor.u32 %v440, 2147483648
        %v465 = vxor.u32 %v441, 2147483648
        %v466 = vxor.u32 %v442, 2147483648
        %v467 = vxor.u32 %v443, 2147483648
        %v468 = vxor.u32 %v444, 2147483648
        %v469 = vmul.f32 %v461, 1.442695
        %v470 = vpow.pop %v469
        %v471 = vmul.f32 %v462, 1.442695
        %v472 = vpow.pop %v471
        %v473 = vmul.f32 %v463, 1.442695
        %v474 = vpow.pop %v473
        %v475 = vmul.f32 %v464, 1.442695
        %v476 = vpow.pop %v475
        %v477 = vmul.f32 %v465, 1.442695
        %v478 = vpow.pop %v477
        %v479 = vmul.f32 %v466, 1.442695
        %v480 = vpow.pop %v479
        %v481 = vmul.f32 %v467, 1.442695
        %v482 = vpow.pop %v481
        %v483 = vmul.f32 %v468, 1.442695
        %v484 = vpow.pop %v483
        %v485 = vadd.f32 %v470, 1.0
        %v486 = vadd.f32 %v472, 1.0
        %v487 = vadd.f32 %v474, 1.0
        %v488 = vadd.f32 %v476, 1.0
        %v489 = vadd.f32 %v478, 1.0
        %v490 = vadd.f32 %v480, 1.0
        %v491 = vadd.f32 %v482, 1.0
        %v492 = vadd.f32 %v484, 1.0
        %v493 = vrcp.pop %v485
        %v494 = vmul.f32 %v485, %v493
        %v495 = vsub.f32 1.0, %v494
        %v496 = vmul.f32 %v493, %v495
        %v497 = vadd.f32 %v493, %v496
        %vm498 = vweird.f32 %v485
        %vm499 = vweird.f32 %v493
        %vm500 = vmor %vm498, %vm499
        %v501 = vsel %vm500, %v493, %v497
        %v502 = vand.u32 2147483647, %v485
        %vm503 = vcmp.eq.f32.partialorder %v502, 8.507059e+37
        %v504 = vand.u32 %v485, 2147483648
        %v505 = vor.u32 1.1754944e-38, %v504
        %v506 = vsel %vm503, %v505, %v501
        %v507 = vmul.f32 1.0, %v506
        %v508 = vrcp.pop %v486
        %v509 = vmul.f32 %v486, %v508
        %v510 = vsub.f32 1.0, %v509
        %v511 = vmul.f32 %v508, %v510
        %v512 = vadd.f32 %v508, %v511
        %vm513 = vweird.f32 %v486
        %vm514 = vweird.f32 %v508
        %vm515 = vmor %vm513, %vm514
        %v516 = vsel %vm515, %v508, %v512
        %v517 = vand.u32 2147483647, %v486
        %vm518 = vcmp.eq.f32.partialorder %v517, 8.507059e+37
        %v519 = vand.u32 %v486, 2147483648
        %v520 = vor.u32 1.1754944e-38, %v519
        %v521 = vsel %vm518, %v520, %v516
        %v522 = vmul.f32 1.0, %v521
        %v523 = vrcp.pop %v487
        %v524 = vmul.f32 %v487, %v523
        %v525 = vsub.f32 1.0, %v524
        %v526 = vmul.f32 %v523, %v525
        %v527 = vadd.f32 %v523, %v526
        %vm528 = vweird.f32 %v487
        %vm529 = vweird.f32 %v523
        %vm530 = vmor %vm528, %vm529
        %v531 = vsel %vm530, %v523, %v527
        %v532 = vand.u32 2147483647, %v487
        %vm533 = vcmp.eq.f32.partialorder %v532, 8.507059e+37
        %v534 = vand.u32 %v487, 2147483648
        %v535 = vor.u32 1.1754944e-38, %v534
        %v536 = vsel %vm533, %v535, %v531
        %v537 = vmul.f32 1.0, %v536
        %v538 = vrcp.pop %v488
        %v539 = vmul.f32 %v488, %v538
        %v540 = vsub.f32 1.0, %v539
        %v541 = vmul.f32 %v538, %v540
        %v542 = vadd.f32 %v538, %v541
        %vm543 = vweird.f32 %v488
        %vm544 = vweird.f32 %v538
        %vm545 = vmor %vm543, %vm544
        %v546 = vsel %vm545, %v538, %v542
        %v547 = vand.u32 2147483647, %v488
        %vm548 = vcmp.eq.f32.partialorder %v547, 8.507059e+37
        %v549 = vand.u32 %v488, 2147483648
        %v550 = vor.u32 1.1754944e-38, %v549
        %v551 = vsel %vm548, %v550, %v546
        %v552 = vmul.f32 1.0, %v551
        %v553 = vrcp.pop %v489
        %v554 = vmul.f32 %v489, %v553
        %v555 = vsub.f32 1.0, %v554
        %v556 = vmul.f32 %v553, %v555
        %v557 = vadd.f32 %v553, %v556
        %vm558 = vweird.f32 %v489
        %vm559 = vweird.f32 %v553
        %vm560 = vmor %vm558, %vm559
        %v561 = vsel %vm560, %v553, %v557
        %v562 = vand.u32 2147483647, %v489
        %vm563 = vcmp.eq.f32.partialorder %v562, 8.507059e+37
        %v564 = vand.u32 %v489, 2147483648
        %v565 = vor.u32 1.1754944e-38, %v564
        %v566 = vsel %vm563, %v565, %v561
        %v567 = vmul.f32 1.0, %v566
        %v568 = vrcp.pop %v490
        %v569 = vmul.f32 %v490, %v568
        %v570 = vsub.f32 1.0, %v569
        %v571 = vmul.f32 %v568, %v570
        %v572 = vadd.f32 %v568, %v571
        %vm573 = vweird.f32 %v490
        %vm574 = vweird.f32 %v568
        %vm575 = vmor %vm573, %vm574
        %v576 = vsel %vm575, %v568, %v572
        %v577 = vand.u32 2147483647, %v490
        %vm578 = vcmp.eq.f32.partialorder %v577, 8.507059e+37
        %v579 = vand.u32 %v490, 2147483648
        %v580 = vor.u32 1.1754944e-38, %v579
        %v581 = vsel %vm578, %v580, %v576
        %v582 = vmul.f32 1.0, %v581
        %v583 = vrcp.pop %v491
        %v584 = vmul.f32 %v491, %v583
        %v585 = vsub.f32 1.0, %v584
        %v586 = vmul.f32 %v583, %v585
        %v587 = vadd.f32 %v583, %v586
        %vm588 = vweird.f32 %v491
        %vm589 = vweird.f32 %v583
        %vm590 = vmor %vm588, %vm589
        %v591 = vsel %vm590, %v583, %v587
        %v592 = vand.u32 2147483647, %v491
        %vm593 = vcmp.eq.f32.partialorder %v592, 8.507059e+37
        %v594 = vand.u32 %v491, 2147483648
        %v595 = vor.u32 1.1754944e-38, %v594
        %v596 = vsel %vm593, %v595, %v591
        %v597 = vmul.f32 1.0, %v596
        %v598 = vrcp.pop %v492
        %v599 = vmul.f32 %v492, %v598
        %v600 = vsub.f32 1.0, %v599
        %v601 = vmul.f32 %v598, %v600
        %v602 = vadd.f32 %v598, %v601
        %vm603 = vweird.f32 %v492
        %vm604 = vweird.f32 %v598
        %vm605 = vmor %vm603, %vm604
        %v606 = vsel %vm605, %v598, %v602
        %v607 = vand.u32 2147483647, %v492
        %vm608 = vcmp.eq.f32.partialorder %v607, 8.507059e+37
        %v609 = vand.u32 %v492, 2147483648
        %v610 = vor.u32 1.1754944e-38, %v609
        %v611 = vsel %vm608, %v610, %v606
        %v612 = vmul.f32 1.0, %v611
        %v613 = vsub.f32 1.0, %v507
        %v614 = vsub.f32 1.0, %v522
        %v615 = vsub.f32 1.0, %v537
        %v616 = vsub.f32 1.0, %v552
        %v617 = vsub.f32 1.0, %v567
        %v618 = vsub.f32 1.0, %v582
        %v619 = vsub.f32 1.0, %v597
        %v620 = vsub.f32 1.0, %v612
        %v621 = vmul.f32 %v507, %v613
        %v622 = vmul.f32 %v522, %v614
        %v623 = vmul.f32 %v537, %v615
        %v624 = vmul.f32 %v552, %v616
        %v625 = vmul.f32 %v567, %v617
        %v626 = vmul.f32 %v582, %v618
        %v627 = vmul.f32 %v597, %v619
        %v628 = vmul.f32 %v612, %v620
        %v629 = vmul.f32 %v507, 2.0
        %v630 = vmul.f32 %v522, 2.0
        %v631 = vmul.f32 %v537, 2.0
        %v632 = vmul.f32 %v552, 2.0
        %v633 = vmul.f32 %v567, 2.0
        %v634 = vmul.f32 %v582, 2.0
        %v635 = vmul.f32 %v597, 2.0
        %v636 = vmul.f32 %v612, 2.0
        %v637 = vsub.f32 1.0, %v629
        %v638 = vsub.f32 1.0, %v630
        %v639 = vsub.f32 1.0, %v631
        %v640 = vsub.f32 1.0, %v632
        %v641 = vsub.f32 1.0, %v633
        %v642 = vsub.f32 1.0, %v634
        %v643 = vsub.f32 1.0, %v635
        %v644 = vsub.f32 1.0, %v636
        %v645 = vmul.f32 %v637, %v378
        %v646 = vmul.f32 %v638, %v378
        %v647 = vmul.f32 %v639, %v382
        %v648 = vmul.f32 %v640, %v382
        %v649 = vmul.f32 %v641, %v386
        %v650 = vmul.f32 %v642, %v386
        %v651 = vmul.f32 %v643, %v390
        %v652 = vmul.f32 %v644, %v390
        %v653 = vmul.f32 %v645, %v378
        %v654 = vmul.f32 %v646, %v378
        %v655 = vmul.f32 %v647, %v382
        %v656 = vmul.f32 %v648, %v382
        %v657 = vmul.f32 %v649, %v386
        %v658 = vmul.f32 %v650, %v386
        %v659 = vmul.f32 %v651, %v390
        %v660 = vmul.f32 %v652, %v390
        %v661 = vmul.f32 %v621, %v346
        %v662 = vmul.f32 %v622, %v346
        %v663 = vmul.f32 %v623, %v351
        %v664 = vmul.f32 %v624, %v351
        %v665 = vmul.f32 %v625, %v356
        %v666 = vmul.f32 %v626, %v356
        %v667 = vmul.f32 %v627, %v361
        %v668 = vmul.f32 %v628, %v361
        %v669 = vmul.f32 %v621, %v378
        %v670 = vmul.f32 %v622, %v378
        %v671 = vmul.f32 %v623, %v382
        %v672 = vmul.f32 %v624, %v382
        %v673 = vmul.f32 %v625, %v386
        %v674 = vmul.f32 %v626, %v386
        %v675 = vmul.f32 %v627, %v390
        %v676 = vmul.f32 %v628, %v390
        %v677 = vmul.f32 %v621, %v653
        %v678 = vmul.f32 %v622, %v654
        %v679 = vmul.f32 %v623, %v655
        %v680 = vmul.f32 %v624, %v656
        %v681 = vmul.f32 %v625, %v657
        %v682 = vmul.f32 %v626, %v658
        %v683 = vmul.f32 %v627, %v659
        %v684 = vmul.f32 %v628, %v660
        %685 = vst [vmem:[#allocation2] sm:$0xff] %v507
        %686 = vst [vmem:[#allocation2 + $0x8] sm:$0xff] %v522
        %687 = vst [vmem:[#allocation2 + $0x40] sm:$0xff] %v537
        %688 = vst [vmem:[#allocation2 + $0x48] sm:$0xff] %v552
        %689 = vst [vmem:[#allocation2 + $0x80] sm:$0xff] %v567
        %690 = vst [vmem:[#allocation2 + $0x88] sm:$0xff] %v582
        %691 = vst [vmem:[#allocation2 + $0xc0] sm:$0xff] %v597
        %692 = vst [vmem:[#allocation2 + $0xc8] sm:$0xff] %v612
        %693 = vst [vmem:[#allocation2 + $0x10] sm:$0xff] %v661
        %694 = vst [vmem:[#allocation2 + $0x18] sm:$0xff] %v662
        %695 = vst [vmem:[#allocation2 + $0x50] sm:$0xff] %v663
        %696 = vst [vmem:[#allocation2 + $0x58] sm:$0xff] %v664
        %697 = vst [vmem:[#allocation2 + $0x90] sm:$0xff] %v665
        %698 = vst [vmem:[#allocation2 + $0x98] sm:$0xff] %v666
        %699 = vst [vmem:[#allocation2 + $0xd0] sm:$0xff] %v667
        %700 = vst [vmem:[#allocation2 + $0xd8] sm:$0xff] %v668
        %701 = vst [vmem:[#allocation2 + $0x20] sm:$0xff] %v669
        %702 = vst [vmem:[#allocation2 + $0x28] sm:$0xff] %v670
        %703 = vst [vmem:[#allocation2 + $0x60] sm:$0xff] %v671
        %704 = vst [vmem:[#allocation2 + $0x68] sm:$0xff] %v672
        %705 = vst [vmem:[#allocation2 + $0xa0] sm:$0xff] %v673
        %706 = vst [vmem:[#allocation2 + $0xa8] sm:$0xff] %v674
        %707 = vst [vmem:[#allocation2 + $0xe0] sm:$0xff] %v675
        %708 = vst [vmem:[#allocation2 + $0xe8] sm:$0xff] %v676
        %709 = vst [vmem:[#allocation2 + $0x30] sm:$0xff] %v677
        %710 = vst [vmem:[#allocation2 + $0x38] sm:$0xff] %v678
        %711 = vst [vmem:[#allocation2 + $0x70] sm:$0xff] %v679
        %712 = vst [vmem:[#allocation2 + $0x78] sm:$0xff] %v680
        %713 = vst [vmem:[#allocation2 + $0xb0] sm:$0xff] %v681
        %714 = vst [vmem:[#allocation2 + $0xb8] sm:$0xff] %v682
        %715 = vst [vmem:[#allocation2 + $0xf0] sm:$0xff] %v683
        %716 = vst [vmem:[#allocation2 + $0xf8] sm:$0xff] %v684
        %v717 = vld [vmem:[#allocation2] sm:$0xff]
        %v718 = vld [vmem:[#allocation2 + $0x8] sm:$0xff]
        %v719 = vld [vmem:[#allocation2 + $0x10] sm:$0xff]
        %v720 = vld [vmem:[#allocation2 + $0x18] sm:$0xff]
        %v721 = vld [vmem:[#allocation2 + $0x20] sm:$0xff]
        %v722 = vld [vmem:[#allocation2 + $0x28] sm:$0xff]
        %v723 = vld [vmem:[#allocation2 + $0x30] sm:$0xff]
        %v724 = vld [vmem:[#allocation2 + $0x38] sm:$0xff]
        %v725 = vld [vmem:[#allocation2 + $0x40] sm:$0xff]
        %v726 = vld [vmem:[#allocation2 + $0x48] sm:$0xff]
        %v727 = vld [vmem:[#allocation2 + $0x50] sm:$0xff]
        %v728 = vld [vmem:[#allocation2 + $0x58] sm:$0xff]
        %v729 = vld [vmem:[#allocation2 + $0x60] sm:$0xff]
        %v730 = vld [vmem:[#allocation2 + $0x68] sm:$0xff]
        %v731 = vld [vmem:[#allocation2 + $0x70] sm:$0xff]
        %v732 = vld [vmem:[#allocation2 + $0x78] sm:$0xff]
        %v733 = vld [vmem:[#allocation2 + $0x80] sm:$0xff]
        %v734 = vld [vmem:[#allocation2 + $0x88] sm:$0xff]
        %v735 = vld [vmem:[#allocation2 + $0x90] sm:$0xff]
        %v736 = vld [vmem:[#allocation2 + $0x98] sm:$0xff]
        %v737 = vld [vmem:[#allocation2 + $0xa0] sm:$0xff]
        %v738 = vld [vmem:[#allocation2 + $0xa8] sm:$0xff]
        %v739 = vld [vmem:[#allocation2 + $0xb0] sm:$0xff]
        %v740 = vld [vmem:[#allocation2 + $0xb8] sm:$0xff]
        %v741 = vld [vmem:[#allocation2 + $0xc0] sm:$0xff]
        %v742 = vld [vmem:[#allocation2 + $0xc8] sm:$0xff]
        %v743 = vld [vmem:[#allocation2 + $0xd0] sm:$0xff]
        %v744 = vld [vmem:[#allocation2 + $0xd8] sm:$0xff]
        %v745 = vld [vmem:[#allocation2 + $0xe0] sm:$0xff]
        %v746 = vld [vmem:[#allocation2 + $0xe8] sm:$0xff]
        %v747 = vld [vmem:[#allocation2 + $0xf0] sm:$0xff]
        %v748 = vld [vmem:[#allocation2 + $0xf8] sm:$0xff]
        %vm749 = vcmask 261120
        %v751 = vsel %vm749, %v445, 0
        %v754 = vsel %vm749, %v446, 0
        %v757 = vsel %vm749, %v447, 0
        %v760 = vsel %vm749, %v448, 0
        %762 = vmatpush.msra.mxu0 0.0
        %763 = vmatpush.msra.mxu0 0.0
        %764 = vmatpush.msra.mxu0 0.0
        %765 = vmatpush.msra.mxu0 0.0
        %766 = vmatpush.msra.mxu0 0.0
        %767 = vmatpush.msra.mxu0 0.0
        %768 = vmatpush.msra.mxu0 0.0
        %769 = vmatpush.msra.mxu0 0.0
        %770 = vmatpush.msra.mxu0 0.0
        %771 = vmatpush.msra.mxu0 0.0
        %772 = vmatpush.msra.mxu0 0.0
        %773 = vmatpush.msra.mxu0 0.0
        %774 = vmatpush.msra.mxu0 %v741
        %775 = vmatpush.msra.mxu0 %v733
        %776 = vmatpush.msra.mxu0 %v725
        %777 = vmatpush.msra.mxu0 %v717
        %778 = vmatmul.f32.gmra.mxu0 %v751
        %v779 = vpop.f32.mrf.mxu0
        %v780 = vadd.f32 0.0, %v779
        %781 = vmatmul.f32.gmra.mxu0 %v754
        %v782 = vpop.f32.mrf.mxu0
        %v783 = vadd.f32 0.0, %v782
        %784 = vmatmul.f32.gmra.mxu0 %v757
        %v785 = vpop.f32.mrf.mxu0
        %v786 = vadd.f32 0.0, %v785
        %787 = vmatmul.f32.gmra.mxu0 %v760
        %v788 = vpop.f32.mrf.mxu0
        %v789 = vadd.f32 0.0, %v788
        %790 = vdwg.mxu0
        %791 = vmatpush.msra.mxu0 0.0
        %792 = vmatpush.msra.mxu0 0.0
        %793 = vmatpush.msra.mxu0 0.0
        %794 = vmatpush.msra.mxu0 0.0
        %795 = vmatpush.msra.mxu0 0.0
        %796 = vmatpush.msra.mxu0 0.0
        %797 = vmatpush.msra.mxu0 0.0
        %798 = vmatpush.msra.mxu0 0.0
        %799 = vmatpush.msra.mxu0 0.0
        %800 = vmatpush.msra.mxu0 0.0
        %801 = vmatpush.msra.mxu0 0.0
        %802 = vmatpush.msra.mxu0 0.0
        %803 = vmatpush.msra.mxu0 %v742
        %804 = vmatpush.msra.mxu0 %v734
        %805 = vmatpush.msra.mxu0 %v726
        %806 = vmatpush.msra.mxu0 %v718
        %807 = vmatmul.f32.gmra.mxu0 %v751
        %v808 = vpop.f32.mrf.mxu0
        %v809 = vadd.f32 0.0, %v808
        %810 = vmatmul.f32.gmra.mxu0 %v754
        %v811 = vpop.f32.mrf.mxu0
        %v812 = vadd.f32 0.0, %v811
        %813 = vmatmul.f32.gmra.mxu0 %v757
        %v814 = vpop.f32.mrf.mxu0
        %v815 = vadd.f32 0.0, %v814
        %816 = vmatmul.f32.gmra.mxu0 %v760
        %v817 = vpop.f32.mrf.mxu0
        %v818 = vadd.f32 0.0, %v817
        %819 = vdwg.mxu0
        %820 = vmatpush.msra.mxu0 0.0
        %821 = vmatpush.msra.mxu0 0.0
        %822 = vmatpush.msra.mxu0 0.0
        %823 = vmatpush.msra.mxu0 0.0
        %824 = vmatpush.msra.mxu0 0.0
        %825 = vmatpush.msra.mxu0 0.0
        %826 = vmatpush.msra.mxu0 0.0
        %827 = vmatpush.msra.mxu0 0.0
        %828 = vmatpush.msra.mxu0 0.0
        %829 = vmatpush.msra.mxu0 0.0
        %830 = vmatpush.msra.mxu0 0.0
        %831 = vmatpush.msra.mxu0 0.0
        %832 = vmatpush.msra.mxu0 %v743
        %833 = vmatpush.msra.mxu0 %v735
        %834 = vmatpush.msra.mxu0 %v727
        %835 = vmatpush.msra.mxu0 %v719
        %836 = vmatmul.f32.gmra.mxu0 %v751
        %v837 = vpop.f32.mrf.mxu0
        %v838 = vadd.f32 0.0, %v837
        %839 = vmatmul.f32.gmra.mxu0 %v754
        %v840 = vpop.f32.mrf.mxu0
        %v841 = vadd.f32 0.0, %v840
        %842 = vmatmul.f32.gmra.mxu0 %v757
        %v843 = vpop.f32.mrf.mxu0
        %v844 = vadd.f32 0.0, %v843
        %845 = vmatmul.f32.gmra.mxu0 %v760
        %v846 = vpop.f32.mrf.mxu0
        %v847 = vadd.f32 0.0, %v846
        %848 = vdwg.mxu0
        %849 = vmatpush.msra.mxu0 0.0
        %850 = vmatpush.msra.mxu0 0.0
        %851 = vmatpush.msra.mxu0 0.0
        %852 = vmatpush.msra.mxu0 0.0
        %853 = vmatpush.msra.mxu0 0.0
        %854 = vmatpush.msra.mxu0 0.0
        %855 = vmatpush.msra.mxu0 0.0
        %856 = vmatpush.msra.mxu0 0.0
        %857 = vmatpush.msra.mxu0 0.0
        %858 = vmatpush.msra.mxu0 0.0
        %859 = vmatpush.msra.mxu0 0.0
        %860 = vmatpush.msra.mxu0 0.0
        %861 = vmatpush.msra.mxu0 %v744
        %862 = vmatpush.msra.mxu0 %v736
        %863 = vmatpush.msra.mxu0 %v728
        %864 = vmatpush.msra.mxu0 %v720
        %865 = vmatmul.f32.gmra.mxu0 %v751
        %v866 = vpop.f32.mrf.mxu0
        %v867 = vadd.f32 0.0, %v866
        %868 = vmatmul.f32.gmra.mxu0 %v754
        %v869 = vpop.f32.mrf.mxu0
        %v870 = vadd.f32 0.0, %v869
        %871 = vmatmul.f32.gmra.mxu0 %v757
        %v872 = vpop.f32.mrf.mxu0
        %v873 = vadd.f32 0.0, %v872
        %874 = vmatmul.f32.gmra.mxu0 %v760
        %v875 = vpop.f32.mrf.mxu0
        %v876 = vadd.f32 0.0, %v875
        %877 = vdwg.mxu0
        %878 = vmatpush.msra.mxu0 0.0
        %879 = vmatpush.msra.mxu0 0.0
        %880 = vmatpush.msra.mxu0 0.0
        %881 = vmatpush.msra.mxu0 0.0
        %882 = vmatpush.msra.mxu0 0.0
        %883 = vmatpush.msra.mxu0 0.0
        %884 = vmatpush.msra.mxu0 0.0
        %885 = vmatpush.msra.mxu0 0.0
        %886 = vmatpush.msra.mxu0 0.0
        %887 = vmatpush.msra.mxu0 0.0
        %888 = vmatpush.msra.mxu0 0.0
        %889 = vmatpush.msra.mxu0 0.0
        %890 = vmatpush.msra.mxu0 %v745
        %891 = vmatpush.msra.mxu0 %v737
        %892 = vmatpush.msra.mxu0 %v729
        %893 = vmatpush.msra.mxu0 %v721
        %894 = vmatmul.f32.gmra.mxu0 %v751
        %v895 = vpop.f32.mrf.mxu0
        %v896 = vadd.f32 0.0, %v895
        %897 = vmatmul.f32.gmra.mxu0 %v754
        %v898 = vpop.f32.mrf.mxu0
        %v899 = vadd.f32 0.0, %v898
        %900 = vmatmul.f32.gmra.mxu0 %v757
        %v901 = vpop.f32.mrf.mxu0
        %v902 = vadd.f32 0.0, %v901
        %903 = vmatmul.f32.gmra.mxu0 %v760
        %v904 = vpop.f32.mrf.mxu0
        %v905 = vadd.f32 0.0, %v904
        %906 = vdwg.mxu0
        %907 = vmatpush.msra.mxu0 0.0
        %908 = vmatpush.msra.mxu0 0.0
        %909 = vmatpush.msra.mxu0 0.0
        %910 = vmatpush.msra.mxu0 0.0
        %911 = vmatpush.msra.mxu0 0.0
        %912 = vmatpush.msra.mxu0 0.0
        %913 = vmatpush.msra.mxu0 0.0
        %914 = vmatpush.msra.mxu0 0.0
        %915 = vmatpush.msra.mxu0 0.0
        %916 = vmatpush.msra.mxu0 0.0
        %917 = vmatpush.msra.mxu0 0.0
        %918 = vmatpush.msra.mxu0 0.0
        %919 = vmatpush.msra.mxu0 %v746
        %920 = vmatpush.msra.mxu0 %v738
        %921 = vmatpush.msra.mxu0 %v730
        %922 = vmatpush.msra.mxu0 %v722
        %923 = vmatmul.f32.gmra.mxu0 %v751
        %v924 = vpop.f32.mrf.mxu0
        %v925 = vadd.f32 0.0, %v924
        %926 = vmatmul.f32.gmra.mxu0 %v754
        %v927 = vpop.f32.mrf.mxu0
        %v928 = vadd.f32 0.0, %v927
        %929 = vmatmul.f32.gmra.mxu0 %v757
        %v930 = vpop.f32.mrf.mxu0
        %v931 = vadd.f32 0.0, %v930
        %932 = vmatmul.f32.gmra.mxu0 %v760
        %v933 = vpop.f32.mrf.mxu0
        %v934 = vadd.f32 0.0, %v933
        %935 = vdwg.mxu0
        %936 = vmatpush.msra.mxu0 0.0
        %937 = vmatpush.msra.mxu0 0.0
        %938 = vmatpush.msra.mxu0 0.0
        %939 = vmatpush.msra.mxu0 0.0
        %940 = vmatpush.msra.mxu0 0.0
        %941 = vmatpush.msra.mxu0 0.0
        %942 = vmatpush.msra.mxu0 0.0
        %943 = vmatpush.msra.mxu0 0.0
        %944 = vmatpush.msra.mxu0 0.0
        %945 = vmatpush.msra.mxu0 0.0
        %946 = vmatpush.msra.mxu0 0.0
        %947 = vmatpush.msra.mxu0 0.0
        %948 = vmatpush.msra.mxu0 %v747
        %949 = vmatpush.msra.mxu0 %v739
        %950 = vmatpush.msra.mxu0 %v731
        %951 = vmatpush.msra.mxu0 %v723
        %952 = vmatmul.f32.gmra.mxu0 %v751
        %v953 = vpop.f32.mrf.mxu0
        %v954 = vadd.f32 0.0, %v953
        %955 = vmatmul.f32.gmra.mxu0 %v754
        %v956 = vpop.f32.mrf.mxu0
        %v957 = vadd.f32 0.0, %v956
        %958 = vmatmul.f32.gmra.mxu0 %v757
        %v959 = vpop.f32.mrf.mxu0
        %v960 = vadd.f32 0.0, %v959
        %961 = vmatmul.f32.gmra.mxu0 %v760
        %v962 = vpop.f32.mrf.mxu0
        %v963 = vadd.f32 0.0, %v962
        %964 = vdwg.mxu0
        %965 = vmatpush.msra.mxu0 0.0
        %966 = vmatpush.msra.mxu0 0.0
        %967 = vmatpush.msra.mxu0 0.0
        %968 = vmatpush.msra.mxu0 0.0
        %969 = vmatpush.msra.mxu0 0.0
        %970 = vmatpush.msra.mxu0 0.0
        %971 = vmatpush.msra.mxu0 0.0
        %972 = vmatpush.msra.mxu0 0.0
        %973 = vmatpush.msra.mxu0 0.0
        %974 = vmatpush.msra.mxu0 0.0
        %975 = vmatpush.msra.mxu0 0.0
        %976 = vmatpush.msra.mxu0 0.0
        %977 = vmatpush.msra.mxu0 %v748
        %978 = vmatpush.msra.mxu0 %v740
        %979 = vmatpush.msra.mxu0 %v732
        %980 = vmatpush.msra.mxu0 %v724
        %981 = vmatmul.f32.gmra.mxu0 %v751
        %v982 = vpop.f32.mrf.mxu0
        %v983 = vadd.f32 0.0, %v982
        %984 = vmatmul.f32.gmra.mxu0 %v754
        %v985 = vpop.f32.mrf.mxu0
        %v986 = vadd.f32 0.0, %v985
        %987 = vmatmul.f32.gmra.mxu0 %v757
        %v988 = vpop.f32.mrf.mxu0
        %v989 = vadd.f32 0.0, %v988
        %990 = vmatmul.f32.gmra.mxu0 %v760
        %v991 = vpop.f32.mrf.mxu0
        %v992 = vadd.f32 0.0, %v991
        %993 = vdwg.mxu0
        %995 = vset.pattern.permute.xlu0 0
        %996 = vperm.xlu0 %995, %v449
        %v997 = vpop.permute.xlu0 %996
        %1000 = vset.pattern.permute.xlu0 0
        %1001 = vperm.xlu0 %1000, %v450
        %v1002 = vpop.permute.xlu0 %1001
        %1005 = vset.pattern.permute.xlu0 0
        %1006 = vperm.xlu0 %1005, %v451
        %v1007 = vpop.permute.xlu0 %1006
        %1010 = vset.pattern.permute.xlu0 0
        %1011 = vperm.xlu0 %1010, %v452
        %v1012 = vpop.permute.xlu0 %1011
        %v1014 = vadd.f32 %v780, %v997
        %v1015 = vadd.f32 %v809, %v997
        %v1016 = vadd.f32 %v783, %v1002
        %v1017 = vadd.f32 %v812, %v1002
        %v1018 = vadd.f32 %v786, %v1007
        %v1019 = vadd.f32 %v815, %v1007
        %v1020 = vadd.f32 %v789, %v1012
        %v1021 = vadd.f32 %v818, %v1012
        %v1022 = vxor.u32 %v1014, 2147483648
        %v1023 = vxor.u32 %v1015, 2147483648
        %v1024 = vxor.u32 %v1016, 2147483648
        %v1025 = vxor.u32 %v1017, 2147483648
        %v1026 = vxor.u32 %v1018, 2147483648
        %v1027 = vxor.u32 %v1019, 2147483648
        %v1028 = vxor.u32 %v1020, 2147483648
        %v1029 = vxor.u32 %v1021, 2147483648
        %v1030 = vmul.f32 %v1022, 1.442695
        %v1031 = vpow.pop %v1030
        %v1032 = vmul.f32 %v1023, 1.442695
        %v1033 = vpow.pop %v1032
        %v1034 = vmul.f32 %v1024, 1.442695
        %v1035 = vpow.pop %v1034
        %v1036 = vmul.f32 %v1025, 1.442695
        %v1037 = vpow.pop %v1036
        %v1038 = vmul.f32 %v1026, 1.442695
        %v1039 = vpow.pop %v1038
        %v1040 = vmul.f32 %v1027, 1.442695
        %v1041 = vpow.pop %v1040
        %v1042 = vmul.f32 %v1028, 1.442695
        %v1043 = vpow.pop %v1042
        %v1044 = vmul.f32 %v1029, 1.442695
        %v1045 = vpow.pop %v1044
        %v1046 = vadd.f32 %v1031, 1.0
        %v1047 = vadd.f32 %v1033, 1.0
        %v1048 = vadd.f32 %v1035, 1.0
        %v1049 = vadd.f32 %v1037, 1.0
        %v1050 = vadd.f32 %v1039, 1.0
        %v1051 = vadd.f32 %v1041, 1.0
        %v1052 = vadd.f32 %v1043, 1.0
        %v1053 = vadd.f32 %v1045, 1.0
        %v1054 = vrcp.pop %v1046
        %v1055 = vmul.f32 %v1046, %v1054
        %v1056 = vsub.f32 1.0, %v1055
        %v1057 = vmul.f32 %v1054, %v1056
        %v1058 = vadd.f32 %v1054, %v1057
        %vm1059 = vweird.f32 %v1046
        %vm1060 = vweird.f32 %v1054
        %vm1061 = vmor %vm1059, %vm1060
        %v1062 = vsel %vm1061, %v1054, %v1058
        %v1063 = vand.u32 2147483647, %v1046
        %vm1064 = vcmp.eq.f32.partialorder %v1063, 8.507059e+37
        %v1065 = vand.u32 %v1046, 2147483648
        %v1066 = vor.u32 1.1754944e-38, %v1065
        %v1067 = vsel %vm1064, %v1066, %v1062
        %v1068 = vmul.f32 1.0, %v1067
        %v1069 = vrcp.pop %v1047
        %v1070 = vmul.f32 %v1047, %v1069
        %v1071 = vsub.f32 1.0, %v1070
        %v1072 = vmul.f32 %v1069, %v1071
        %v1073 = vadd.f32 %v1069, %v1072
        %vm1074 = vweird.f32 %v1047
        %vm1075 = vweird.f32 %v1069
        %vm1076 = vmor %vm1074, %vm1075
        %v1077 = vsel %vm1076, %v1069, %v1073
        %v1078 = vand.u32 2147483647, %v1047
        %vm1079 = vcmp.eq.f32.partialorder %v1078, 8.507059e+37
        %v1080 = vand.u32 %v1047, 2147483648
        %v1081 = vor.u32 1.1754944e-38, %v1080
        %v1082 = vsel %vm1079, %v1081, %v1077
        %v1083 = vmul.f32 1.0, %v1082
        %v1084 = vrcp.pop %v1048
        %v1085 = vmul.f32 %v1048, %v1084
        %v1086 = vsub.f32 1.0, %v1085
        %v1087 = vmul.f32 %v1084, %v1086
        %v1088 = vadd.f32 %v1084, %v1087
        %vm1089 = vweird.f32 %v1048
        %vm1090 = vweird.f32 %v1084
        %vm1091 = vmor %vm1089, %vm1090
        %v1092 = vsel %vm1091, %v1084, %v1088
        %v1093 = vand.u32 2147483647, %v1048
        %vm1094 = vcmp.eq.f32.partialorder %v1093, 8.507059e+37
        %v1095 = vand.u32 %v1048, 2147483648
        %v1096 = vor.u32 1.1754944e-38, %v1095
        %v1097 = vsel %vm1094, %v1096, %v1092
        %v1098 = vmul.f32 1.0, %v1097
        %v1099 = vrcp.pop %v1049
        %v1100 = vmul.f32 %v1049, %v1099
        %v1101 = vsub.f32 1.0, %v1100
        %v1102 = vmul.f32 %v1099, %v1101
        %v1103 = vadd.f32 %v1099, %v1102
        %vm1104 = vweird.f32 %v1049
        %vm1105 = vweird.f32 %v1099
        %vm1106 = vmor %vm1104, %vm1105
        %v1107 = vsel %vm1106, %v1099, %v1103
        %v1108 = vand.u32 2147483647, %v1049
        %vm1109 = vcmp.eq.f32.partialorder %v1108, 8.507059e+37
        %v1110 = vand.u32 %v1049, 2147483648
        %v1111 = vor.u32 1.1754944e-38, %v1110
        %v1112 = vsel %vm1109, %v1111, %v1107
        %v1113 = vmul.f32 1.0, %v1112
        %v1114 = vrcp.pop %v1050
        %v1115 = vmul.f32 %v1050, %v1114
        %v1116 = vsub.f32 1.0, %v1115
        %v1117 = vmul.f32 %v1114, %v1116
        %v1118 = vadd.f32 %v1114, %v1117
        %vm1119 = vweird.f32 %v1050
        %vm1120 = vweird.f32 %v1114
        %vm1121 = vmor %vm1119, %vm1120
        %v1122 = vsel %vm1121, %v1114, %v1118
        %v1123 = vand.u32 2147483647, %v1050
        %vm1124 = vcmp.eq.f32.partialorder %v1123, 8.507059e+37
        %v1125 = vand.u32 %v1050, 2147483648
        %v1126 = vor.u32 1.1754944e-38, %v1125
        %v1127 = vsel %vm1124, %v1126, %v1122
        %v1128 = vmul.f32 1.0, %v1127
        %v1129 = vrcp.pop %v1051
        %v1130 = vmul.f32 %v1051, %v1129
        %v1131 = vsub.f32 1.0, %v1130
        %v1132 = vmul.f32 %v1129, %v1131
        %v1133 = vadd.f32 %v1129, %v1132
        %vm1134 = vweird.f32 %v1051
        %vm1135 = vweird.f32 %v1129
        %vm1136 = vmor %vm1134, %vm1135
        %v1137 = vsel %vm1136, %v1129, %v1133
        %v1138 = vand.u32 2147483647, %v1051
        %vm1139 = vcmp.eq.f32.partialorder %v1138, 8.507059e+37
        %v1140 = vand.u32 %v1051, 2147483648
        %v1141 = vor.u32 1.1754944e-38, %v1140
        %v1142 = vsel %vm1139, %v1141, %v1137
        %v1143 = vmul.f32 1.0, %v1142
        %v1144 = vrcp.pop %v1052
        %v1145 = vmul.f32 %v1052, %v1144
        %v1146 = vsub.f32 1.0, %v1145
        %v1147 = vmul.f32 %v1144, %v1146
        %v1148 = vadd.f32 %v1144, %v1147
        %vm1149 = vweird.f32 %v1052
        %vm1150 = vweird.f32 %v1144
        %vm1151 = vmor %vm1149, %vm1150
        %v1152 = vsel %vm1151, %v1144, %v1148
        %v1153 = vand.u32 2147483647, %v1052
        %vm1154 = vcmp.eq.f32.partialorder %v1153, 8.507059e+37
        %v1155 = vand.u32 %v1052, 2147483648
        %v1156 = vor.u32 1.1754944e-38, %v1155
        %v1157 = vsel %vm1154, %v1156, %v1152
        %v1158 = vmul.f32 1.0, %v1157
        %v1159 = vrcp.pop %v1053
        %v1160 = vmul.f32 %v1053, %v1159
        %v1161 = vsub.f32 1.0, %v1160
        %v1162 = vmul.f32 %v1159, %v1161
        %v1163 = vadd.f32 %v1159, %v1162
        %vm1164 = vweird.f32 %v1053
        %vm1165 = vweird.f32 %v1159
        %vm1166 = vmor %vm1164, %vm1165
        %v1167 = vsel %vm1166, %v1159, %v1163
        %v1168 = vand.u32 2147483647, %v1053
        %vm1169 = vcmp.eq.f32.partialorder %v1168, 8.507059e+37
        %v1170 = vand.u32 %v1053, 2147483648
        %v1171 = vor.u32 1.1754944e-38, %v1170
        %v1172 = vsel %vm1169, %v1171, %v1167
        %v1173 = vmul.f32 1.0, %v1172
        %v1174 = vsub.f32 1.0, %v1068
        %v1175 = vsub.f32 1.0, %v1083
        %v1176 = vsub.f32 1.0, %v1098
        %v1177 = vsub.f32 1.0, %v1113
        %v1178 = vsub.f32 1.0, %v1128
        %v1179 = vsub.f32 1.0, %v1143
        %v1180 = vsub.f32 1.0, %v1158
        %v1181 = vsub.f32 1.0, %v1173
        %v1182 = vmul.f32 %v1068, %v1174
        %v1183 = vmul.f32 %v1083, %v1175
        %v1184 = vmul.f32 %v1098, %v1176
        %v1185 = vmul.f32 %v1113, %v1177
        %v1186 = vmul.f32 %v1128, %v1178
        %v1187 = vmul.f32 %v1143, %v1179
        %v1188 = vmul.f32 %v1158, %v1180
        %v1189 = vmul.f32 %v1173, %v1181
        %v1190 = vmul.f32 %v1068, 2.0
        %v1191 = vmul.f32 %v1083, 2.0
        %v1192 = vmul.f32 %v1098, 2.0
        %v1193 = vmul.f32 %v1113, 2.0
        %v1194 = vmul.f32 %v1128, 2.0
        %v1195 = vmul.f32 %v1143, 2.0
        %v1196 = vmul.f32 %v1158, 2.0
        %v1197 = vmul.f32 %v1173, 2.0
        %v1198 = vsub.f32 1.0, %v1190
        %v1199 = vsub.f32 1.0, %v1191
        %v1200 = vsub.f32 1.0, %v1192
        %v1201 = vsub.f32 1.0, %v1193
        %v1202 = vsub.f32 1.0, %v1194
        %v1203 = vsub.f32 1.0, %v1195
        %v1204 = vsub.f32 1.0, %v1196
        %v1205 = vsub.f32 1.0, %v1197
        %v1206 = vmul.f32 %v1198, %v896
        %v1207 = vmul.f32 %v1199, %v925
        %v1208 = vmul.f32 %v1200, %v899
        %v1209 = vmul.f32 %v1201, %v928
        %v1210 = vmul.f32 %v1202, %v902
        %v1211 = vmul.f32 %v1203, %v931
        %v1212 = vmul.f32 %v1204, %v905
        %v1213 = vmul.f32 %v1205, %v934
        %v1214 = vmul.f32 %v1206, %v896
        %v1215 = vmul.f32 %v1207, %v925
        %v1216 = vmul.f32 %v1208, %v899
        %v1217 = vmul.f32 %v1209, %v928
        %v1218 = vmul.f32 %v1210, %v902
        %v1219 = vmul.f32 %v1211, %v931
        %v1220 = vmul.f32 %v1212, %v905
        %v1221 = vmul.f32 %v1213, %v934
        %v1222 = vadd.f32 %v1214, %v954
        %v1223 = vadd.f32 %v1215, %v983
        %v1224 = vadd.f32 %v1216, %v957
        %v1225 = vadd.f32 %v1217, %v986
        %v1226 = vadd.f32 %v1218, %v960
        %v1227 = vadd.f32 %v1219, %v989
        %v1228 = vadd.f32 %v1220, %v963
        %v1229 = vadd.f32 %v1221, %v992
        %v1230 = vmul.f32 %v1182, %v838
        %v1231 = vmul.f32 %v1183, %v867
        %v1232 = vmul.f32 %v1184, %v841
        %v1233 = vmul.f32 %v1185, %v870
        %v1234 = vmul.f32 %v1186, %v844
        %v1235 = vmul.f32 %v1187, %v873
        %v1236 = vmul.f32 %v1188, %v847
        %v1237 = vmul.f32 %v1189, %v876
        %v1238 = vmul.f32 %v1182, %v896
        %v1239 = vmul.f32 %v1183, %v925
        %v1240 = vmul.f32 %v1184, %v899
        %v1241 = vmul.f32 %v1185, %v928
        %v1242 = vmul.f32 %v1186, %v902
        %v1243 = vmul.f32 %v1187, %v931
        %v1244 = vmul.f32 %v1188, %v905
        %v1245 = vmul.f32 %v1189, %v934
        %v1246 = vmul.f32 %v1182, %v1222
        %v1247 = vmul.f32 %v1183, %v1223
        %v1248 = vmul.f32 %v1184, %v1224
        %v1249 = vmul.f32 %v1185, %v1225
        %v1250 = vmul.f32 %v1186, %v1226
        %v1251 = vmul.f32 %v1187, %v1227
        %v1252 = vmul.f32 %v1188, %v1228
        %v1253 = vmul.f32 %v1189, %v1229
        %1254 = vst [vmem:[#allocation2] sm:$0xff] %v1068
        %1255 = vst [vmem:[#allocation2 + $0x8] sm:$0xff] %v1083
        %1256 = vst [vmem:[#allocation2 + $0x40] sm:$0xff] %v1098
        %1257 = vst [vmem:[#allocation2 + $0x48] sm:$0xff] %v1113
        %1258 = vst [vmem:[#allocation2 + $0x80] sm:$0xff] %v1128
        %1259 = vst [vmem:[#allocation2 + $0x88] sm:$0xff] %v1143
        %1260 = vst [vmem:[#allocation2 + $0xc0] sm:$0xff] %v1158
        %1261 = vst [vmem:[#allocation2 + $0xc8] sm:$0xff] %v1173
        %1262 = vst [vmem:[#allocation2 + $0x10] sm:$0xff] %v1230
        %1263 = vst [vmem:[#allocation2 + $0x18] sm:$0xff] %v1231
        %1264 = vst [vmem:[#allocation2 + $0x50] sm:$0xff] %v1232
        %1265 = vst [vmem:[#allocation2 + $0x58] sm:$0xff] %v1233
        %1266 = vst [vmem:[#allocation2 + $0x90] sm:$0xff] %v1234
        %1267 = vst [vmem:[#allocation2 + $0x98] sm:$0xff] %v1235
        %1268 = vst [vmem:[#allocation2 + $0xd0] sm:$0xff] %v1236
        %1269 = vst [vmem:[#allocation2 + $0xd8] sm:$0xff] %v1237
        %1270 = vst [vmem:[#allocation2 + $0x20] sm:$0xff] %v1238
        %1271 = vst [vmem:[#allocation2 + $0x28] sm:$0xff] %v1239
        %1272 = vst [vmem:[#allocation2 + $0x60] sm:$0xff] %v1240
        %1273 = vst [vmem:[#allocation2 + $0x68] sm:$0xff] %v1241
        %1274 = vst [vmem:[#allocation2 + $0xa0] sm:$0xff] %v1242
        %1275 = vst [vmem:[#allocation2 + $0xa8] sm:$0xff] %v1243
        %1276 = vst [vmem:[#allocation2 + $0xe0] sm:$0xff] %v1244
        %1277 = vst [vmem:[#allocation2 + $0xe8] sm:$0xff] %v1245
        %1278 = vst [vmem:[#allocation2 + $0x30] sm:$0xff] %v1246
        %1279 = vst [vmem:[#allocation2 + $0x38] sm:$0xff] %v1247
        %1280 = vst [vmem:[#allocation2 + $0x70] sm:$0xff] %v1248
        %1281 = vst [vmem:[#allocation2 + $0x78] sm:$0xff] %v1249
        %1282 = vst [vmem:[#allocation2 + $0xb0] sm:$0xff] %v1250
        %1283 = vst [vmem:[#allocation2 + $0xb8] sm:$0xff] %v1251
        %1284 = vst [vmem:[#allocation2 + $0xf0] sm:$0xff] %v1252
        %1285 = vst [vmem:[#allocation2 + $0xf8] sm:$0xff] %v1253
        %v1286 = vld [vmem:[#allocation2] sm:$0xff]
        %v1287 = vld [vmem:[#allocation2 + $0x8] sm:$0xff]
        %v1288 = vld [vmem:[#allocation2 + $0x10] sm:$0xff]
        %v1289 = vld [vmem:[#allocation2 + $0x18] sm:$0xff]
        %v1290 = vld [vmem:[#allocation2 + $0x20] sm:$0xff]
        %v1291 = vld [vmem:[#allocation2 + $0x28] sm:$0xff]
        %v1292 = vld [vmem:[#allocation2 + $0x30] sm:$0xff]
        %v1293 = vld [vmem:[#allocation2 + $0x38] sm:$0xff]
        %v1294 = vld [vmem:[#allocation2 + $0x40] sm:$0xff]
        %v1295 = vld [vmem:[#allocation2 + $0x48] sm:$0xff]
        %v1296 = vld [vmem:[#allocation2 + $0x50] sm:$0xff]
        %v1297 = vld [vmem:[#allocation2 + $0x58] sm:$0xff]
        %v1298 = vld [vmem:[#allocation2 + $0x60] sm:$0xff]
        %v1299 = vld [vmem:[#allocation2 + $0x68] sm:$0xff]
        %v1300 = vld [vmem:[#allocation2 + $0x70] sm:$0xff]
        %v1301 = vld [vmem:[#allocation2 + $0x78] sm:$0xff]
        %v1302 = vld [vmem:[#allocation2 + $0x80] sm:$0xff]
        %v1303 = vld [vmem:[#allocation2 + $0x88] sm:$0xff]
        %v1304 = vld [vmem:[#allocation2 + $0x90] sm:$0xff]
        %v1305 = vld [vmem:[#allocation2 + $0x98] sm:$0xff]
        %v1306 = vld [vmem:[#allocation2 + $0xa0] sm:$0xff]
        %v1307 = vld [vmem:[#allocation2 + $0xa8] sm:$0xff]
        %v1308 = vld [vmem:[#allocation2 + $0xb0] sm:$0xff]
        %v1309 = vld [vmem:[#allocation2 + $0xb8] sm:$0xff]
        %v1310 = vld [vmem:[#allocation2 + $0xc0] sm:$0xff]
        %v1311 = vld [vmem:[#allocation2 + $0xc8] sm:$0xff]
        %v1312 = vld [vmem:[#allocation2 + $0xd0] sm:$0xff]
        %v1313 = vld [vmem:[#allocation2 + $0xd8] sm:$0xff]
        %v1314 = vld [vmem:[#allocation2 + $0xe0] sm:$0xff]
        %v1315 = vld [vmem:[#allocation2 + $0xe8] sm:$0xff]
        %v1316 = vld [vmem:[#allocation2 + $0xf0] sm:$0xff]
        %v1317 = vld [vmem:[#allocation2 + $0xf8] sm:$0xff]
        %v1319 = vsel %vm749, %v453, 0
        %v1322 = vsel %vm749, %v454, 0
        %v1325 = vsel %vm749, %v455, 0
        %v1328 = vsel %vm749, %v456, 0
        %1330 = vmatpush.msra.mxu0 0.0
        %1331 = vmatpush.msra.mxu0 0.0
        %1332 = vmatpush.msra.mxu0 0.0
        %1333 = vmatpush.msra.mxu0 0.0
        %1334 = vmatpush.msra.mxu0 0.0
        %1335 = vmatpush.msra.mxu0 0.0
        %1336 = vmatpush.msra.mxu0 0.0
        %1337 = vmatpush.msra.mxu0 0.0
        %1338 = vmatpush.msra.mxu0 0.0
        %1339 = vmatpush.msra.mxu0 0.0
        %1340 = vmatpush.msra.mxu0 0.0
        %1341 = vmatpush.msra.mxu0 0.0
        %1342 = vmatpush.msra.mxu0 %v1310
        %1343 = vmatpush.msra.mxu0 %v1302
        %1344 = vmatpush.msra.mxu0 %v1294
        %1345 = vmatpush.msra.mxu0 %v1286
        %1346 = vmatmul.f32.gmra.mxu0 %v1319
        %v1347 = vpop.f32.mrf.mxu0
        %v1348 = vadd.f32 0.0, %v1347
        %1349 = vmatmul.f32.gmra.mxu0 %v1322
        %v1350 = vpop.f32.mrf.mxu0
        %v1351 = vadd.f32 0.0, %v1350
        %1352 = vmatmul.f32.gmra.mxu0 %v1325
        %v1353 = vpop.f32.mrf.mxu0
        %v1354 = vadd.f32 0.0, %v1353
        %1355 = vmatmul.f32.gmra.mxu0 %v1328
        %v1356 = vpop.f32.mrf.mxu0
        %v1357 = vadd.f32 0.0, %v1356
        %1358 = vdwg.mxu0
        %1359 = vmatpush.msra.mxu0 0.0
        %1360 = vmatpush.msra.mxu0 0.0
        %1361 = vmatpush.msra.mxu0 0.0
        %1362 = vmatpush.msra.mxu0 0.0
        %1363 = vmatpush.msra.mxu0 0.0
        %1364 = vmatpush.msra.mxu0 0.0
        %1365 = vmatpush.msra.mxu0 0.0
        %1366 = vmatpush.msra.mxu0 0.0
        %1367 = vmatpush.msra.mxu0 0.0
        %1368 = vmatpush.msra.mxu0 0.0
        %1369 = vmatpush.msra.mxu0 0.0
        %1370 = vmatpush.msra.mxu0 0.0
        %1371 = vmatpush.msra.mxu0 %v1311
        %1372 = vmatpush.msra.mxu0 %v1303
        %1373 = vmatpush.msra.mxu0 %v1295
        %1374 = vmatpush.msra.mxu0 %v1287
        %1375 = vmatmul.f32.gmra.mxu0 %v1319
        %v1376 = vpop.f32.mrf.mxu0
        %v1377 = vadd.f32 0.0, %v1376
        %1378 = vmatmul.f32.gmra.mxu0 %v1322
        %v1379 = vpop.f32.mrf.mxu0
        %v1380 = vadd.f32 0.0, %v1379
        %1381 = vmatmul.f32.gmra.mxu0 %v1325
        %v1382 = vpop.f32.mrf.mxu0
        %v1383 = vadd.f32 0.0, %v1382
        %1384 = vmatmul.f32.gmra.mxu0 %v1328
        %v1385 = vpop.f32.mrf.mxu0
        %v1386 = vadd.f32 0.0, %v1385
        %1387 = vdwg.mxu0
        %1388 = vmatpush.msra.mxu0 0.0
        %1389 = vmatpush.msra.mxu0 0.0
        %1390 = vmatpush.msra.mxu0 0.0
        %1391 = vmatpush.msra.mxu0 0.0
        %1392 = vmatpush.msra.mxu0 0.0
        %1393 = vmatpush.msra.mxu0 0.0
        %1394 = vmatpush.msra.mxu0 0.0
        %1395 = vmatpush.msra.mxu0 0.0
        %1396 = vmatpush.msra.mxu0 0.0
        %1397 = vmatpush.msra.mxu0 0.0
        %1398 = vmatpush.msra.mxu0 0.0
        %1399 = vmatpush.msra.mxu0 0.0
        %1400 = vmatpush.msra.mxu0 %v1312
        %1401 = vmatpush.msra.mxu0 %v1304
        %1402 = vmatpush.msra.mxu0 %v1296
        %1403 = vmatpush.msra.mxu0 %v1288
        %1404 = vmatmul.f32.gmra.mxu0 %v1319
        %v1405 = vpop.f32.mrf.mxu0
        %v1406 = vadd.f32 0.0, %v1405
        %1407 = vmatmul.f32.gmra.mxu0 %v1322
        %v1408 = vpop.f32.mrf.mxu0
        %v1409 = vadd.f32 0.0, %v1408
        %1410 = vmatmul.f32.gmra.mxu0 %v1325
        %v1411 = vpop.f32.mrf.mxu0
        %v1412 = vadd.f32 0.0, %v1411
        %1413 = vmatmul.f32.gmra.mxu0 %v1328
        %v1414 = vpop.f32.mrf.mxu0
        %v1415 = vadd.f32 0.0, %v1414
        %1416 = vdwg.mxu0
        %1417 = vmatpush.msra.mxu0 0.0
        %1418 = vmatpush.msra.mxu0 0.0
        %1419 = vmatpush.msra.mxu0 0.0
        %1420 = vmatpush.msra.mxu0 0.0
        %1421 = vmatpush.msra.mxu0 0.0
        %1422 = vmatpush.msra.mxu0 0.0
        %1423 = vmatpush.msra.mxu0 0.0
        %1424 = vmatpush.msra.mxu0 0.0
        %1425 = vmatpush.msra.mxu0 0.0
        %1426 = vmatpush.msra.mxu0 0.0
        %1427 = vmatpush.msra.mxu0 0.0
        %1428 = vmatpush.msra.mxu0 0.0
        %1429 = vmatpush.msra.mxu0 %v1313
        %1430 = vmatpush.msra.mxu0 %v1305
        %1431 = vmatpush.msra.mxu0 %v1297
        %1432 = vmatpush.msra.mxu0 %v1289
        %1433 = vmatmul.f32.gmra.mxu0 %v1319
        %v1434 = vpop.f32.mrf.mxu0
        %v1435 = vadd.f32 0.0, %v1434
        %1436 = vmatmul.f32.gmra.mxu0 %v1322
        %v1437 = vpop.f32.mrf.mxu0
        %v1438 = vadd.f32 0.0, %v1437
        %1439 = vmatmul.f32.gmra.mxu0 %v1325
        %v1440 = vpop.f32.mrf.mxu0
        %v1441 = vadd.f32 0.0, %v1440
        %1442 = vmatmul.f32.gmra.mxu0 %v1328
        %v1443 = vpop.f32.mrf.mxu0
        %v1444 = vadd.f32 0.0, %v1443
        %1445 = vdwg.mxu0
        %1446 = vmatpush.msra.mxu0 0.0
        %1447 = vmatpush.msra.mxu0 0.0
        %1448 = vmatpush.msra.mxu0 0.0
        %1449 = vmatpush.msra.mxu0 0.0
        %1450 = vmatpush.msra.mxu0 0.0
        %1451 = vmatpush.msra.mxu0 0.0
        %1452 = vmatpush.msra.mxu0 0.0
        %1453 = vmatpush.msra.mxu0 0.0
        %1454 = vmatpush.msra.mxu0 0.0
        %1455 = vmatpush.msra.mxu0 0.0
        %1456 = vmatpush.msra.mxu0 0.0
        %1457 = vmatpush.msra.mxu0 0.0
        %1458 = vmatpush.msra.mxu0 %v1314
        %1459 = vmatpush.msra.mxu0 %v1306
        %1460 = vmatpush.msra.mxu0 %v1298
        %1461 = vmatpush.msra.mxu0 %v1290
        %1462 = vmatmul.f32.gmra.mxu0 %v1319
        %v1463 = vpop.f32.mrf.mxu0
        %v1464 = vadd.f32 0.0, %v1463
        %1465 = vmatmul.f32.gmra.mxu0 %v1322
        %v1466 = vpop.f32.mrf.mxu0
        %v1467 = vadd.f32 0.0, %v1466
        %1468 = vmatmul.f32.gmra.mxu0 %v1325
        %v1469 = vpop.f32.mrf.mxu0
        %v1470 = vadd.f32 0.0, %v1469
        %1471 = vmatmul.f32.gmra.mxu0 %v1328
        %v1472 = vpop.f32.mrf.mxu0
        %v1473 = vadd.f32 0.0, %v1472
        %1474 = vdwg.mxu0
        %1475 = vmatpush.msra.mxu0 0.0
        %1476 = vmatpush.msra.mxu0 0.0
        %1477 = vmatpush.msra.mxu0 0.0
        %1478 = vmatpush.msra.mxu0 0.0
        %1479 = vmatpush.msra.mxu0 0.0
        %1480 = vmatpush.msra.mxu0 0.0
        %1481 = vmatpush.msra.mxu0 0.0
        %1482 = vmatpush.msra.mxu0 0.0
        %1483 = vmatpush.msra.mxu0 0.0
        %1484 = vmatpush.msra.mxu0 0.0
        %1485 = vmatpush.msra.mxu0 0.0
        %1486 = vmatpush.msra.mxu0 0.0
        %1487 = vmatpush.msra.mxu0 %v1315
        %1488 = vmatpush.msra.mxu0 %v1307
        %1489 = vmatpush.msra.mxu0 %v1299
        %1490 = vmatpush.msra.mxu0 %v1291
        %1491 = vmatmul.f32.gmra.mxu0 %v1319
        %v1492 = vpop.f32.mrf.mxu0
        %v1493 = vadd.f32 0.0, %v1492
        %1494 = vmatmul.f32.gmra.mxu0 %v1322
        %v1495 = vpop.f32.mrf.mxu0
        %v1496 = vadd.f32 0.0, %v1495
        %1497 = vmatmul.f32.gmra.mxu0 %v1325
        %v1498 = vpop.f32.mrf.mxu0
        %v1499 = vadd.f32 0.0, %v1498
        %1500 = vmatmul.f32.gmra.mxu0 %v1328
        %v1501 = vpop.f32.mrf.mxu0
        %v1502 = vadd.f32 0.0, %v1501
        %1503 = vdwg.mxu0
        %1504 = vmatpush.msra.mxu0 0.0
        %1505 = vmatpush.msra.mxu0 0.0
        %1506 = vmatpush.msra.mxu0 0.0
        %1507 = vmatpush.msra.mxu0 0.0
        %1508 = vmatpush.msra.mxu0 0.0
        %1509 = vmatpush.msra.mxu0 0.0
        %1510 = vmatpush.msra.mxu0 0.0
        %1511 = vmatpush.msra.mxu0 0.0
        %1512 = vmatpush.msra.mxu0 0.0
        %1513 = vmatpush.msra.mxu0 0.0
        %1514 = vmatpush.msra.mxu0 0.0
        %1515 = vmatpush.msra.mxu0 0.0
        %1516 = vmatpush.msra.mxu0 %v1316
        %1517 = vmatpush.msra.mxu0 %v1308
        %1518 = vmatpush.msra.mxu0 %v1300
        %1519 = vmatpush.msra.mxu0 %v1292
        %1520 = vmatmul.f32.gmra.mxu0 %v1319
        %v1521 = vpop.f32.mrf.mxu0
        %v1522 = vadd.f32 0.0, %v1521
        %1523 = vmatmul.f32.gmra.mxu0 %v1322
        %v1524 = vpop.f32.mrf.mxu0
        %v1525 = vadd.f32 0.0, %v1524
        %1526 = vmatmul.f32.gmra.mxu0 %v1325
        %v1527 = vpop.f32.mrf.mxu0
        %v1528 = vadd.f32 0.0, %v1527
        %1529 = vmatmul.f32.gmra.mxu0 %v1328
        %v1530 = vpop.f32.mrf.mxu0
        %v1531 = vadd.f32 0.0, %v1530
        %1532 = vdwg.mxu0
        %1533 = vmatpush.msra.mxu0 0.0
        %1534 = vmatpush.msra.mxu0 0.0
        %1535 = vmatpush.msra.mxu0 0.0
        %1536 = vmatpush.msra.mxu0 0.0
        %1537 = vmatpush.msra.mxu0 0.0
        %1538 = vmatpush.msra.mxu0 0.0
        %1539 = vmatpush.msra.mxu0 0.0
        %1540 = vmatpush.msra.mxu0 0.0
        %1541 = vmatpush.msra.mxu0 0.0
        %1542 = vmatpush.msra.mxu0 0.0
        %1543 = vmatpush.msra.mxu0 0.0
        %1544 = vmatpush.msra.mxu0 0.0
        %1545 = vmatpush.msra.mxu0 %v1317
        %1546 = vmatpush.msra.mxu0 %v1309
        %1547 = vmatpush.msra.mxu0 %v1301
        %1548 = vmatpush.msra.mxu0 %v1293
        %1549 = vmatmul.f32.gmra.mxu0 %v1319
        %v1550 = vpop.f32.mrf.mxu0
        %v1551 = vadd.f32 0.0, %v1550
        %1552 = vmatmul.f32.gmra.mxu0 %v1322
        %v1553 = vpop.f32.mrf.mxu0
        %v1554 = vadd.f32 0.0, %v1553
        %1555 = vmatmul.f32.gmra.mxu0 %v1325
        %v1556 = vpop.f32.mrf.mxu0
        %v1557 = vadd.f32 0.0, %v1556
        %1558 = vmatmul.f32.gmra.mxu0 %v1328
        %v1559 = vpop.f32.mrf.mxu0
        %v1560 = vadd.f32 0.0, %v1559
        %1561 = vdwg.mxu0
        %v1562 = vadd.f32 %v437, %v1348
        %v1563 = vadd.f32 %v438, %v1377
        %v1564 = vadd.f32 %v439, %v1351
        %v1565 = vadd.f32 %v440, %v1380
        %v1566 = vadd.f32 %v441, %v1354
        %v1567 = vadd.f32 %v442, %v1383
        %v1568 = vadd.f32 %v443, %v1357
        %v1569 = vadd.f32 %v444, %v1386
        %1571 = vset.pattern.permute.xlu0 0
        %1572 = vperm.xlu0 %1571, %v457
        %v1573 = vpop.permute.xlu0 %1572
        %1576 = vset.pattern.permute.xlu0 0
        %1577 = vperm.xlu0 %1576, %v458
        %v1578 = vpop.permute.xlu0 %1577
        %1581 = vset.pattern.permute.xlu0 0
        %1582 = vperm.xlu0 %1581, %v459
        %v1583 = vpop.permute.xlu0 %1582
        %1586 = vset.pattern.permute.xlu0 0
        %1587 = vperm.xlu0 %1586, %v460
        %v1588 = vpop.permute.xlu0 %1587
        %v1590 = vadd.f32 %v1562, %v1573
        %v1591 = vadd.f32 %v1563, %v1573
        %v1592 = vadd.f32 %v1564, %v1578
        %v1593 = vadd.f32 %v1565, %v1578
        %v1594 = vadd.f32 %v1566, %v1583
        %v1595 = vadd.f32 %v1567, %v1583
        %v1596 = vadd.f32 %v1568, %v1588
        %v1597 = vadd.f32 %v1569, %v1588
        %v1598 = vadd.f32 %v346, %v1406
        %v1599 = vadd.f32 %v346, %v1435
        %v1600 = vadd.f32 %v351, %v1409
        %v1601 = vadd.f32 %v351, %v1438
        %v1602 = vadd.f32 %v356, %v1412
        %v1603 = vadd.f32 %v356, %v1441
        %v1604 = vadd.f32 %v361, %v1415
        %v1605 = vadd.f32 %v361, %v1444
        %v1606 = vadd.f32 %v378, %v1464
        %v1607 = vadd.f32 %v378, %v1493
        %v1608 = vadd.f32 %v382, %v1467
        %v1609 = vadd.f32 %v382, %v1496
        %v1610 = vadd.f32 %v386, %v1470
        %v1611 = vadd.f32 %v386, %v1499
        %v1612 = vadd.f32 %v390, %v1473
        %v1613 = vadd.f32 %v390, %v1502
        %s1614 = scalar_lea.vmem %s3, 32
        %v1615 = vld [vmem:[%s1614] sm:$0xff]
        %v1616 = vld [vmem:[%s1614 + $0x8] sm:$0xff]
        %v1617 = vld [vmem:[%s1614 + $0x10] sm:$0xff]
        %v1618 = vld [vmem:[%s1614 + $0x18] sm:$0xff]
        %s1619 = scalar_lea.vmem %s4, 32
        %v1620 = vld [vmem:[%s1619] sm:$0xff]
        %v1621 = vld [vmem:[%s1619 + $0x8] sm:$0xff]
        %v1622 = vld [vmem:[%s1619 + $0x10] sm:$0xff]
        %v1623 = vld [vmem:[%s1619 + $0x18] sm:$0xff]
        %s1624 = scalar_lea.vmem %s5, 32
        %v1625 = vld [vmem:[%s1624] sm:$0xff]
        %v1626 = vld [vmem:[%s1624 + $0x8] sm:$0xff]
        %v1627 = vld [vmem:[%s1624 + $0x10] sm:$0xff]
        %v1628 = vld [vmem:[%s1624 + $0x18] sm:$0xff]
        %s1629 = scalar_lea.vmem %s6, 32
        %v1630 = vld [vmem:[%s1629] sm:$0xff]
        %v1631 = vld [vmem:[%s1629 + $0x8] sm:$0xff]
        %v1632 = vld [vmem:[%s1629 + $0x10] sm:$0xff]
        %v1633 = vld [vmem:[%s1629 + $0x18] sm:$0xff]
        %v1634 = vxor.u32 %v1590, 2147483648
        %v1635 = vxor.u32 %v1591, 2147483648
        %v1636 = vxor.u32 %v1592, 2147483648
        %v1637 = vxor.u32 %v1593, 2147483648
        %v1638 = vxor.u32 %v1594, 2147483648
        %v1639 = vxor.u32 %v1595, 2147483648
        %v1640 = vxor.u32 %v1596, 2147483648
        %v1641 = vxor.u32 %v1597, 2147483648
        %v1642 = vmul.f32 %v1634, 1.442695
        %v1643 = vpow.pop %v1642
        %v1644 = vmul.f32 %v1635, 1.442695
        %v1645 = vpow.pop %v1644
        %v1646 = vmul.f32 %v1636, 1.442695
        %v1647 = vpow.pop %v1646
        %v1648 = vmul.f32 %v1637, 1.442695
        %v1649 = vpow.pop %v1648
        %v1650 = vmul.f32 %v1638, 1.442695
        %v1651 = vpow.pop %v1650
        %v1652 = vmul.f32 %v1639, 1.442695
        %v1653 = vpow.pop %v1652
        %v1654 = vmul.f32 %v1640, 1.442695
        %v1655 = vpow.pop %v1654
        %v1656 = vmul.f32 %v1641, 1.442695
        %v1657 = vpow.pop %v1656
        %v1658 = vadd.f32 %v1643, 1.0
        %v1659 = vadd.f32 %v1645, 1.0
        %v1660 = vadd.f32 %v1647, 1.0
        %v1661 = vadd.f32 %v1649, 1.0
        %v1662 = vadd.f32 %v1651, 1.0
        %v1663 = vadd.f32 %v1653, 1.0
        %v1664 = vadd.f32 %v1655, 1.0
        %v1665 = vadd.f32 %v1657, 1.0
        %v1666 = vrcp.pop %v1658
        %v1667 = vmul.f32 %v1658, %v1666
        %v1668 = vsub.f32 1.0, %v1667
        %v1669 = vmul.f32 %v1666, %v1668
        %v1670 = vadd.f32 %v1666, %v1669
        %vm1671 = vweird.f32 %v1658
        %vm1672 = vweird.f32 %v1666
        %vm1673 = vmor %vm1671, %vm1672
        %v1674 = vsel %vm1673, %v1666, %v1670
        %v1675 = vand.u32 2147483647, %v1658
        %vm1676 = vcmp.eq.f32.partialorder %v1675, 8.507059e+37
        %v1677 = vand.u32 %v1658, 2147483648
        %v1678 = vor.u32 1.1754944e-38, %v1677
        %v1679 = vsel %vm1676, %v1678, %v1674
        %v1680 = vmul.f32 1.0, %v1679
        %v1681 = vrcp.pop %v1659
        %v1682 = vmul.f32 %v1659, %v1681
        %v1683 = vsub.f32 1.0, %v1682
        %v1684 = vmul.f32 %v1681, %v1683
        %v1685 = vadd.f32 %v1681, %v1684
        %vm1686 = vweird.f32 %v1659
        %vm1687 = vweird.f32 %v1681
        %vm1688 = vmor %vm1686, %vm1687
        %v1689 = vsel %vm1688, %v1681, %v1685
        %v1690 = vand.u32 2147483647, %v1659
        %vm1691 = vcmp.eq.f32.partialorder %v1690, 8.507059e+37
        %v1692 = vand.u32 %v1659, 2147483648
        %v1693 = vor.u32 1.1754944e-38, %v1692
        %v1694 = vsel %vm1691, %v1693, %v1689
        %v1695 = vmul.f32 1.0, %v1694
        %v1696 = vrcp.pop %v1660
        %v1697 = vmul.f32 %v1660, %v1696
        %v1698 = vsub.f32 1.0, %v1697
        %v1699 = vmul.f32 %v1696, %v1698
        %v1700 = vadd.f32 %v1696, %v1699
        %vm1701 = vweird.f32 %v1660
        %vm1702 = vweird.f32 %v1696
        %vm1703 = vmor %vm1701, %vm1702
        %v1704 = vsel %vm1703, %v1696, %v1700
        %v1705 = vand.u32 2147483647, %v1660
        %vm1706 = vcmp.eq.f32.partialorder %v1705, 8.507059e+37
        %v1707 = vand.u32 %v1660, 2147483648
        %v1708 = vor.u32 1.1754944e-38, %v1707
        %v1709 = vsel %vm1706, %v1708, %v1704
        %v1710 = vmul.f32 1.0, %v1709
        %v1711 = vrcp.pop %v1661
        %v1712 = vmul.f32 %v1661, %v1711
        %v1713 = vsub.f32 1.0, %v1712
        %v1714 = vmul.f32 %v1711, %v1713
        %v1715 = vadd.f32 %v1711, %v1714
        %vm1716 = vweird.f32 %v1661
        %vm1717 = vweird.f32 %v1711
        %vm1718 = vmor %vm1716, %vm1717
        %v1719 = vsel %vm1718, %v1711, %v1715
        %v1720 = vand.u32 2147483647, %v1661
        %vm1721 = vcmp.eq.f32.partialorder %v1720, 8.507059e+37
        %v1722 = vand.u32 %v1661, 2147483648
        %v1723 = vor.u32 1.1754944e-38, %v1722
        %v1724 = vsel %vm1721, %v1723, %v1719
        %v1725 = vmul.f32 1.0, %v1724
        %v1726 = vrcp.pop %v1662
        %v1727 = vmul.f32 %v1662, %v1726
        %v1728 = vsub.f32 1.0, %v1727
        %v1729 = vmul.f32 %v1726, %v1728
        %v1730 = vadd.f32 %v1726, %v1729
        %vm1731 = vweird.f32 %v1662
        %vm1732 = vweird.f32 %v1726
        %vm1733 = vmor %vm1731, %vm1732
        %v1734 = vsel %vm1733, %v1726, %v1730
        %v1735 = vand.u32 2147483647, %v1662
        %vm1736 = vcmp.eq.f32.partialorder %v1735, 8.507059e+37
        %v1737 = vand.u32 %v1662, 2147483648
        %v1738 = vor.u32 1.1754944e-38, %v1737
        %v1739 = vsel %vm1736, %v1738, %v1734
        %v1740 = vmul.f32 1.0, %v1739
        %v1741 = vrcp.pop %v1663
        %v1742 = vmul.f32 %v1663, %v1741
        %v1743 = vsub.f32 1.0, %v1742
        %v1744 = vmul.f32 %v1741, %v1743
        %v1745 = vadd.f32 %v1741, %v1744
        %vm1746 = vweird.f32 %v1663
        %vm1747 = vweird.f32 %v1741
        %vm1748 = vmor %vm1746, %vm1747
        %v1749 = vsel %vm1748, %v1741, %v1745
        %v1750 = vand.u32 2147483647, %v1663
        %vm1751 = vcmp.eq.f32.partialorder %v1750, 8.507059e+37
        %v1752 = vand.u32 %v1663, 2147483648
        %v1753 = vor.u32 1.1754944e-38, %v1752
        %v1754 = vsel %vm1751, %v1753, %v1749
        %v1755 = vmul.f32 1.0, %v1754
        %v1756 = vrcp.pop %v1664
        %v1757 = vmul.f32 %v1664, %v1756
        %v1758 = vsub.f32 1.0, %v1757
        %v1759 = vmul.f32 %v1756, %v1758
        %v1760 = vadd.f32 %v1756, %v1759
        %vm1761 = vweird.f32 %v1664
        %vm1762 = vweird.f32 %v1756
        %vm1763 = vmor %vm1761, %vm1762
        %v1764 = vsel %vm1763, %v1756, %v1760
        %v1765 = vand.u32 2147483647, %v1664
        %vm1766 = vcmp.eq.f32.partialorder %v1765, 8.507059e+37
        %v1767 = vand.u32 %v1664, 2147483648
        %v1768 = vor.u32 1.1754944e-38, %v1767
        %v1769 = vsel %vm1766, %v1768, %v1764
        %v1770 = vmul.f32 1.0, %v1769
        %v1771 = vrcp.pop %v1665
        %v1772 = vmul.f32 %v1665, %v1771
        %v1773 = vsub.f32 1.0, %v1772
        %v1774 = vmul.f32 %v1771, %v1773
        %v1775 = vadd.f32 %v1771, %v1774
        %vm1776 = vweird.f32 %v1665
        %vm1777 = vweird.f32 %v1771
        %vm1778 = vmor %vm1776, %vm1777
        %v1779 = vsel %vm1778, %v1771, %v1775
        %v1780 = vand.u32 2147483647, %v1665
        %vm1781 = vcmp.eq.f32.partialorder %v1780, 8.507059e+37
        %v1782 = vand.u32 %v1665, 2147483648
        %v1783 = vor.u32 1.1754944e-38, %v1782
        %v1784 = vsel %vm1781, %v1783, %v1779
        %v1785 = vmul.f32 1.0, %v1784
        %v1786 = vsub.f32 1.0, %v1680
        %v1787 = vsub.f32 1.0, %v1695
        %v1788 = vsub.f32 1.0, %v1710
        %v1789 = vsub.f32 1.0, %v1725
        %v1790 = vsub.f32 1.0, %v1740
        %v1791 = vsub.f32 1.0, %v1755
        %v1792 = vsub.f32 1.0, %v1770
        %v1793 = vsub.f32 1.0, %v1785
        %v1794 = vmul.f32 %v1680, %v1786
        %v1795 = vmul.f32 %v1695, %v1787
        %v1796 = vmul.f32 %v1710, %v1788
        %v1797 = vmul.f32 %v1725, %v1789
        %v1798 = vmul.f32 %v1740, %v1790
        %v1799 = vmul.f32 %v1755, %v1791
        %v1800 = vmul.f32 %v1770, %v1792
        %v1801 = vmul.f32 %v1785, %v1793
        %v1802 = vmul.f32 %v1680, 2.0
        %v1803 = vmul.f32 %v1695, 2.0
        %v1804 = vmul.f32 %v1710, 2.0
        %v1805 = vmul.f32 %v1725, 2.0
        %v1806 = vmul.f32 %v1740, 2.0
        %v1807 = vmul.f32 %v1755, 2.0
        %v1808 = vmul.f32 %v1770, 2.0
        %v1809 = vmul.f32 %v1785, 2.0
        %v1810 = vsub.f32 1.0, %v1802
        %v1811 = vsub.f32 1.0, %v1803
        %v1812 = vsub.f32 1.0, %v1804
        %v1813 = vsub.f32 1.0, %v1805
        %v1814 = vsub.f32 1.0, %v1806
        %v1815 = vsub.f32 1.0, %v1807
        %v1816 = vsub.f32 1.0, %v1808
        %v1817 = vsub.f32 1.0, %v1809
        %v1818 = vmul.f32 %v1810, %v1606
        %v1819 = vmul.f32 %v1811, %v1607
        %v1820 = vmul.f32 %v1812, %v1608
        %v1821 = vmul.f32 %v1813, %v1609
        %v1822 = vmul.f32 %v1814, %v1610
        %v1823 = vmul.f32 %v1815, %v1611
        %v1824 = vmul.f32 %v1816, %v1612
        %v1825 = vmul.f32 %v1817, %v1613
        %v1826 = vmul.f32 %v1818, %v1606
        %v1827 = vmul.f32 %v1819, %v1607
        %v1828 = vmul.f32 %v1820, %v1608
        %v1829 = vmul.f32 %v1821, %v1609
        %v1830 = vmul.f32 %v1822, %v1610
        %v1831 = vmul.f32 %v1823, %v1611
        %v1832 = vmul.f32 %v1824, %v1612
        %v1833 = vmul.f32 %v1825, %v1613
        %v1834 = vadd.f32 %v1826, %v1522
        %v1835 = vadd.f32 %v1827, %v1551
        %v1836 = vadd.f32 %v1828, %v1525
        %v1837 = vadd.f32 %v1829, %v1554
        %v1838 = vadd.f32 %v1830, %v1528
        %v1839 = vadd.f32 %v1831, %v1557
        %v1840 = vadd.f32 %v1832, %v1531
        %v1841 = vadd.f32 %v1833, %v1560
        %v1842 = vmul.f32 %v1794, %v1598
        %v1843 = vmul.f32 %v1795, %v1599
        %v1844 = vmul.f32 %v1796, %v1600
        %v1845 = vmul.f32 %v1797, %v1601
        %v1846 = vmul.f32 %v1798, %v1602
        %v1847 = vmul.f32 %v1799, %v1603
        %v1848 = vmul.f32 %v1800, %v1604
        %v1849 = vmul.f32 %v1801, %v1605
        %v1850 = vmul.f32 %v1794, %v1606
        %v1851 = vmul.f32 %v1795, %v1607
        %v1852 = vmul.f32 %v1796, %v1608
        %v1853 = vmul.f32 %v1797, %v1609
        %v1854 = vmul.f32 %v1798, %v1610
        %v1855 = vmul.f32 %v1799, %v1611
        %v1856 = vmul.f32 %v1800, %v1612
        %v1857 = vmul.f32 %v1801, %v1613
        %v1858 = vmul.f32 %v1794, %v1834
        %v1859 = vmul.f32 %v1795, %v1835
        %v1860 = vmul.f32 %v1796, %v1836
        %v1861 = vmul.f32 %v1797, %v1837
        %v1862 = vmul.f32 %v1798, %v1838
        %v1863 = vmul.f32 %v1799, %v1839
        %v1864 = vmul.f32 %v1800, %v1840
        %v1865 = vmul.f32 %v1801, %v1841
        %1866 = vst [vmem:[#allocation2] sm:$0xff] %v1680
        %1867 = vst [vmem:[#allocation2 + $0x8] sm:$0xff] %v1695
        %1868 = vst [vmem:[#allocation2 + $0x40] sm:$0xff] %v1710
        %1869 = vst [vmem:[#allocation2 + $0x48] sm:$0xff] %v1725
        %1870 = vst [vmem:[#allocation2 + $0x80] sm:$0xff] %v1740
        %1871 = vst [vmem:[#allocation2 + $0x88] sm:$0xff] %v1755
        %1872 = vst [vmem:[#allocation2 + $0xc0] sm:$0xff] %v1770
        %1873 = vst [vmem:[#allocation2 + $0xc8] sm:$0xff] %v1785
        %1874 = vst [vmem:[#allocation2 + $0x10] sm:$0xff] %v1842
        %1875 = vst [vmem:[#allocation2 + $0x18] sm:$0xff] %v1843
        %1876 = vst [vmem:[#allocation2 + $0x50] sm:$0xff] %v1844
        %1877 = vst [vmem:[#allocation2 + $0x58] sm:$0xff] %v1845
        %1878 = vst [vmem:[#allocation2 + $0x90] sm:$0xff] %v1846
        %1879 = vst [vmem:[#allocation2 + $0x98] sm:$0xff] %v1847
        %1880 = vst [vmem:[#allocation2 + $0xd0] sm:$0xff] %v1848
        %1881 = vst [vmem:[#allocation2 + $0xd8] sm:$0xff] %v1849
        %1882 = vst [vmem:[#allocation2 + $0x20] sm:$0xff] %v1850
        %1883 = vst [vmem:[#allocation2 + $0x28] sm:$0xff] %v1851
        %1884 = vst [vmem:[#allocation2 + $0x60] sm:$0xff] %v1852
        %1885 = vst [vmem:[#allocation2 + $0x68] sm:$0xff] %v1853
        %1886 = vst [vmem:[#allocation2 + $0xa0] sm:$0xff] %v1854
        %1887 = vst [vmem:[#allocation2 + $0xa8] sm:$0xff] %v1855
        %1888 = vst [vmem:[#allocation2 + $0xe0] sm:$0xff] %v1856
        %1889 = vst [vmem:[#allocation2 + $0xe8] sm:$0xff] %v1857
        %1890 = vst [vmem:[#allocation2 + $0x30] sm:$0xff] %v1858
        %1891 = vst [vmem:[#allocation2 + $0x38] sm:$0xff] %v1859
        %1892 = vst [vmem:[#allocation2 + $0x70] sm:$0xff] %v1860
        %1893 = vst [vmem:[#allocation2 + $0x78] sm:$0xff] %v1861
        %1894 = vst [vmem:[#allocation2 + $0xb0] sm:$0xff] %v1862
        %1895 = vst [vmem:[#allocation2 + $0xb8] sm:$0xff] %v1863
        %1896 = vst [vmem:[#allocation2 + $0xf0] sm:$0xff] %v1864
        %1897 = vst [vmem:[#allocation2 + $0xf8] sm:$0xff] %v1865
        %v1898 = vld [vmem:[#allocation2] sm:$0xff]
        %v1899 = vld [vmem:[#allocation2 + $0x8] sm:$0xff]
        %v1900 = vld [vmem:[#allocation2 + $0x10] sm:$0xff]
        %v1901 = vld [vmem:[#allocation2 + $0x18] sm:$0xff]
        %v1902 = vld [vmem:[#allocation2 + $0x20] sm:$0xff]
        %v1903 = vld [vmem:[#allocation2 + $0x28] sm:$0xff]
        %v1904 = vld [vmem:[#allocation2 + $0x30] sm:$0xff]
        %v1905 = vld [vmem:[#allocation2 + $0x38] sm:$0xff]
        %v1906 = vld [vmem:[#allocation2 + $0x40] sm:$0xff]
        %v1907 = vld [vmem:[#allocation2 + $0x48] sm:$0xff]
        %v1908 = vld [vmem:[#allocation2 + $0x50] sm:$0xff]
        %v1909 = vld [vmem:[#allocation2 + $0x58] sm:$0xff]
        %v1910 = vld [vmem:[#allocation2 + $0x60] sm:$0xff]
        %v1911 = vld [vmem:[#allocation2 + $0x68] sm:$0xff]
        %v1912 = vld [vmem:[#allocation2 + $0x70] sm:$0xff]
        %v1913 = vld [vmem:[#allocation2 + $0x78] sm:$0xff]
        %v1914 = vld [vmem:[#allocation2 + $0x80] sm:$0xff]
        %v1915 = vld [vmem:[#allocation2 + $0x88] sm:$0xff]
        %v1916 = vld [vmem:[#allocation2 + $0x90] sm:$0xff]
        %v1917 = vld [vmem:[#allocation2 + $0x98] sm:$0xff]
        %v1918 = vld [vmem:[#allocation2 + $0xa0] sm:$0xff]
        %v1919 = vld [vmem:[#allocation2 + $0xa8] sm:$0xff]
        %v1920 = vld [vmem:[#allocation2 + $0xb0] sm:$0xff]
        %v1921 = vld [vmem:[#allocation2 + $0xb8] sm:$0xff]
        %v1922 = vld [vmem:[#allocation2 + $0xc0] sm:$0xff]
        %v1923 = vld [vmem:[#allocation2 + $0xc8] sm:$0xff]
        %v1924 = vld [vmem:[#allocation2 + $0xd0] sm:$0xff]
        %v1925 = vld [vmem:[#allocation2 + $0xd8] sm:$0xff]
        %v1926 = vld [vmem:[#allocation2 + $0xe0] sm:$0xff]
        %v1927 = vld [vmem:[#allocation2 + $0xe8] sm:$0xff]
        %v1928 = vld [vmem:[#allocation2 + $0xf0] sm:$0xff]
        %v1929 = vld [vmem:[#allocation2 + $0xf8] sm:$0xff]
        %v1931 = vsel %vm749, %v1615, 0
        %v1934 = vsel %vm749, %v1616, 0
        %v1937 = vsel %vm749, %v1617, 0
        %v1940 = vsel %vm749, %v1618, 0
        %1942 = vmatpush.msra.mxu0 0.0
        %1943 = vmatpush.msra.mxu0 0.0
        %1944 = vmatpush.msra.mxu0 0.0
        %1945 = vmatpush.msra.mxu0 0.0
        %1946 = vmatpush.msra.mxu0 0.0
        %1947 = vmatpush.msra.mxu0 0.0
        %1948 = vmatpush.msra.mxu0 0.0
        %1949 = vmatpush.msra.mxu0 0.0
        %1950 = vmatpush.msra.mxu0 0.0
        %1951 = vmatpush.msra.mxu0 0.0
        %1952 = vmatpush.msra.mxu0 0.0
        %1953 = vmatpush.msra.mxu0 0.0
        %1954 = vmatpush.msra.mxu0 %v1922
        %1955 = vmatpush.msra.mxu0 %v1914
        %1956 = vmatpush.msra.mxu0 %v1906
        %1957 = vmatpush.msra.mxu0 %v1898
        %1958 = vmatmul.f32.gmra.mxu0 %v1931
        %v1959 = vpop.f32.mrf.mxu0
        %v1960 = vadd.f32 0.0, %v1959
        %1961 = vmatmul.f32.gmra.mxu0 %v1934
        %v1962 = vpop.f32.mrf.mxu0
        %v1963 = vadd.f32 0.0, %v1962
        %1964 = vmatmul.f32.gmra.mxu0 %v1937
        %v1965 = vpop.f32.mrf.mxu0
        %v1966 = vadd.f32 0.0, %v1965
        %1967 = vmatmul.f32.gmra.mxu0 %v1940
        %v1968 = vpop.f32.mrf.mxu0
        %v1969 = vadd.f32 0.0, %v1968
        %1970 = vdwg.mxu0
        %1971 = vmatpush.msra.mxu0 0.0
        %1972 = vmatpush.msra.mxu0 0.0
        %1973 = vmatpush.msra.mxu0 0.0
        %1974 = vmatpush.msra.mxu0 0.0
        %1975 = vmatpush.msra.mxu0 0.0
        %1976 = vmatpush.msra.mxu0 0.0
        %1977 = vmatpush.msra.mxu0 0.0
        %1978 = vmatpush.msra.mxu0 0.0
        %1979 = vmatpush.msra.mxu0 0.0
        %1980 = vmatpush.msra.mxu0 0.0
        %1981 = vmatpush.msra.mxu0 0.0
        %1982 = vmatpush.msra.mxu0 0.0
        %1983 = vmatpush.msra.mxu0 %v1923
        %1984 = vmatpush.msra.mxu0 %v1915
        %1985 = vmatpush.msra.mxu0 %v1907
        %1986 = vmatpush.msra.mxu0 %v1899
        %1987 = vmatmul.f32.gmra.mxu0 %v1931
        %v1988 = vpop.f32.mrf.mxu0
        %v1989 = vadd.f32 0.0, %v1988
        %1990 = vmatmul.f32.gmra.mxu0 %v1934
        %v1991 = vpop.f32.mrf.mxu0
        %v1992 = vadd.f32 0.0, %v1991
        %1993 = vmatmul.f32.gmra.mxu0 %v1937
        %v1994 = vpop.f32.mrf.mxu0
        %v1995 = vadd.f32 0.0, %v1994
        %1996 = vmatmul.f32.gmra.mxu0 %v1940
        %v1997 = vpop.f32.mrf.mxu0
        %v1998 = vadd.f32 0.0, %v1997
        %1999 = vdwg.mxu0
        %2000 = vmatpush.msra.mxu0 0.0
        %2001 = vmatpush.msra.mxu0 0.0
        %2002 = vmatpush.msra.mxu0 0.0
        %2003 = vmatpush.msra.mxu0 0.0
        %2004 = vmatpush.msra.mxu0 0.0
        %2005 = vmatpush.msra.mxu0 0.0
        %2006 = vmatpush.msra.mxu0 0.0
        %2007 = vmatpush.msra.mxu0 0.0
        %2008 = vmatpush.msra.mxu0 0.0
        %2009 = vmatpush.msra.mxu0 0.0
        %2010 = vmatpush.msra.mxu0 0.0
        %2011 = vmatpush.msra.mxu0 0.0
        %2012 = vmatpush.msra.mxu0 %v1924
        %2013 = vmatpush.msra.mxu0 %v1916
        %2014 = vmatpush.msra.mxu0 %v1908
        %2015 = vmatpush.msra.mxu0 %v1900
        %2016 = vmatmul.f32.gmra.mxu0 %v1931
        %v2017 = vpop.f32.mrf.mxu0
        %v2018 = vadd.f32 0.0, %v2017
        %2019 = vmatmul.f32.gmra.mxu0 %v1934
        %v2020 = vpop.f32.mrf.mxu0
        %v2021 = vadd.f32 0.0, %v2020
        %2022 = vmatmul.f32.gmra.mxu0 %v1937
        %v2023 = vpop.f32.mrf.mxu0
        %v2024 = vadd.f32 0.0, %v2023
        %2025 = vmatmul.f32.gmra.mxu0 %v1940
        %v2026 = vpop.f32.mrf.mxu0
        %v2027 = vadd.f32 0.0, %v2026
        %2028 = vdwg.mxu0
        %2029 = vmatpush.msra.mxu0 0.0
        %2030 = vmatpush.msra.mxu0 0.0
        %2031 = vmatpush.msra.mxu0 0.0
        %2032 = vmatpush.msra.mxu0 0.0
        %2033 = vmatpush.msra.mxu0 0.0
        %2034 = vmatpush.msra.mxu0 0.0
        %2035 = vmatpush.msra.mxu0 0.0
        %2036 = vmatpush.msra.mxu0 0.0
        %2037 = vmatpush.msra.mxu0 0.0
        %2038 = vmatpush.msra.mxu0 0.0
        %2039 = vmatpush.msra.mxu0 0.0
        %2040 = vmatpush.msra.mxu0 0.0
        %2041 = vmatpush.msra.mxu0 %v1925
        %2042 = vmatpush.msra.mxu0 %v1917
        %2043 = vmatpush.msra.mxu0 %v1909
        %2044 = vmatpush.msra.mxu0 %v1901
        %2045 = vmatmul.f32.gmra.mxu0 %v1931
        %v2046 = vpop.f32.mrf.mxu0
        %v2047 = vadd.f32 0.0, %v2046
        %2048 = vmatmul.f32.gmra.mxu0 %v1934
        %v2049 = vpop.f32.mrf.mxu0
        %v2050 = vadd.f32 0.0, %v2049
        %2051 = vmatmul.f32.gmra.mxu0 %v1937
        %v2052 = vpop.f32.mrf.mxu0
        %v2053 = vadd.f32 0.0, %v2052
        %2054 = vmatmul.f32.gmra.mxu0 %v1940
        %v2055 = vpop.f32.mrf.mxu0
        %v2056 = vadd.f32 0.0, %v2055
        %2057 = vdwg.mxu0
        %2058 = vmatpush.msra.mxu0 0.0
        %2059 = vmatpush.msra.mxu0 0.0
        %2060 = vmatpush.msra.mxu0 0.0
        %2061 = vmatpush.msra.mxu0 0.0
        %2062 = vmatpush.msra.mxu0 0.0
        %2063 = vmatpush.msra.mxu0 0.0
        %2064 = vmatpush.msra.mxu0 0.0
        %2065 = vmatpush.msra.mxu0 0.0
        %2066 = vmatpush.msra.mxu0 0.0
        %2067 = vmatpush.msra.mxu0 0.0
        %2068 = vmatpush.msra.mxu0 0.0
        %2069 = vmatpush.msra.mxu0 0.0
        %2070 = vmatpush.msra.mxu0 %v1926
        %2071 = vmatpush.msra.mxu0 %v1918
        %2072 = vmatpush.msra.mxu0 %v1910
        %2073 = vmatpush.msra.mxu0 %v1902
        %2074 = vmatmul.f32.gmra.mxu0 %v1931
        %v2075 = vpop.f32.mrf.mxu0
        %v2076 = vadd.f32 0.0, %v2075
        %2077 = vmatmul.f32.gmra.mxu0 %v1934
        %v2078 = vpop.f32.mrf.mxu0
        %v2079 = vadd.f32 0.0, %v2078
        %2080 = vmatmul.f32.gmra.mxu0 %v1937
        %v2081 = vpop.f32.mrf.mxu0
        %v2082 = vadd.f32 0.0, %v2081
        %2083 = vmatmul.f32.gmra.mxu0 %v1940
        %v2084 = vpop.f32.mrf.mxu0
        %v2085 = vadd.f32 0.0, %v2084
        %2086 = vdwg.mxu0
        %2087 = vmatpush.msra.mxu0 0.0
        %2088 = vmatpush.msra.mxu0 0.0
        %2089 = vmatpush.msra.mxu0 0.0
        %2090 = vmatpush.msra.mxu0 0.0
        %2091 = vmatpush.msra.mxu0 0.0
        %2092 = vmatpush.msra.mxu0 0.0
        %2093 = vmatpush.msra.mxu0 0.0
        %2094 = vmatpush.msra.mxu0 0.0
        %2095 = vmatpush.msra.mxu0 0.0
        %2096 = vmatpush.msra.mxu0 0.0
        %2097 = vmatpush.msra.mxu0 0.0
        %2098 = vmatpush.msra.mxu0 0.0
        %2099 = vmatpush.msra.mxu0 %v1927
        %2100 = vmatpush.msra.mxu0 %v1919
        %2101 = vmatpush.msra.mxu0 %v1911
        %2102 = vmatpush.msra.mxu0 %v1903
        %2103 = vmatmul.f32.gmra.mxu0 %v1931
        %v2104 = vpop.f32.mrf.mxu0
        %v2105 = vadd.f32 0.0, %v2104
        %2106 = vmatmul.f32.gmra.mxu0 %v1934
        %v2107 = vpop.f32.mrf.mxu0
        %v2108 = vadd.f32 0.0, %v2107
        %2109 = vmatmul.f32.gmra.mxu0 %v1937
        %v2110 = vpop.f32.mrf.mxu0
        %v2111 = vadd.f32 0.0, %v2110
        %2112 = vmatmul.f32.gmra.mxu0 %v1940
        %v2113 = vpop.f32.mrf.mxu0
        %v2114 = vadd.f32 0.0, %v2113
        %2115 = vdwg.mxu0
        %2116 = vmatpush.msra.mxu0 0.0
        %2117 = vmatpush.msra.mxu0 0.0
        %2118 = vmatpush.msra.mxu0 0.0
        %2119 = vmatpush.msra.mxu0 0.0
        %2120 = vmatpush.msra.mxu0 0.0
        %2121 = vmatpush.msra.mxu0 0.0
        %2122 = vmatpush.msra.mxu0 0.0
        %2123 = vmatpush.msra.mxu0 0.0
        %2124 = vmatpush.msra.mxu0 0.0
        %2125 = vmatpush.msra.mxu0 0.0
        %2126 = vmatpush.msra.mxu0 0.0
        %2127 = vmatpush.msra.mxu0 0.0
        %2128 = vmatpush.msra.mxu0 %v1928
        %2129 = vmatpush.msra.mxu0 %v1920
        %2130 = vmatpush.msra.mxu0 %v1912
        %2131 = vmatpush.msra.mxu0 %v1904
        %2132 = vmatmul.f32.gmra.mxu0 %v1931
        %v2133 = vpop.f32.mrf.mxu0
        %v2134 = vadd.f32 0.0, %v2133
        %2135 = vmatmul.f32.gmra.mxu0 %v1934
        %v2136 = vpop.f32.mrf.mxu0
        %v2137 = vadd.f32 0.0, %v2136
        %2138 = vmatmul.f32.gmra.mxu0 %v1937
        %v2139 = vpop.f32.mrf.mxu0
        %v2140 = vadd.f32 0.0, %v2139
        %2141 = vmatmul.f32.gmra.mxu0 %v1940
        %v2142 = vpop.f32.mrf.mxu0
        %v2143 = vadd.f32 0.0, %v2142
        %2144 = vdwg.mxu0
        %2145 = vmatpush.msra.mxu0 0.0
        %2146 = vmatpush.msra.mxu0 0.0
        %2147 = vmatpush.msra.mxu0 0.0
        %2148 = vmatpush.msra.mxu0 0.0
        %2149 = vmatpush.msra.mxu0 0.0
        %2150 = vmatpush.msra.mxu0 0.0
        %2151 = vmatpush.msra.mxu0 0.0
        %2152 = vmatpush.msra.mxu0 0.0
        %2153 = vmatpush.msra.mxu0 0.0
        %2154 = vmatpush.msra.mxu0 0.0
        %2155 = vmatpush.msra.mxu0 0.0
        %2156 = vmatpush.msra.mxu0 0.0
        %2157 = vmatpush.msra.mxu0 %v1929
        %2158 = vmatpush.msra.mxu0 %v1921
        %2159 = vmatpush.msra.mxu0 %v1913
        %2160 = vmatpush.msra.mxu0 %v1905
        %2161 = vmatmul.f32.gmra.mxu0 %v1931
        %v2162 = vpop.f32.mrf.mxu0
        %v2163 = vadd.f32 0.0, %v2162
        %2164 = vmatmul.f32.gmra.mxu0 %v1934
        %v2165 = vpop.f32.mrf.mxu0
        %v2166 = vadd.f32 0.0, %v2165
        %2167 = vmatmul.f32.gmra.mxu0 %v1937
        %v2168 = vpop.f32.mrf.mxu0
        %v2169 = vadd.f32 0.0, %v2168
        %2170 = vmatmul.f32.gmra.mxu0 %v1940
        %v2171 = vpop.f32.mrf.mxu0
        %v2172 = vadd.f32 0.0, %v2171
        %2173 = vdwg.mxu0
        %2175 = vset.pattern.permute.xlu0 0
        %2176 = vperm.xlu0 %2175, %v1620
        %v2177 = vpop.permute.xlu0 %2176
        %2180 = vset.pattern.permute.xlu0 0
        %2181 = vperm.xlu0 %2180, %v1621
        %v2182 = vpop.permute.xlu0 %2181
        %2185 = vset.pattern.permute.xlu0 0
        %2186 = vperm.xlu0 %2185, %v1622
        %v2187 = vpop.permute.xlu0 %2186
        %2190 = vset.pattern.permute.xlu0 0
        %2191 = vperm.xlu0 %2190, %v1623
        %v2192 = vpop.permute.xlu0 %2191
        %v2194 = vadd.f32 %v1960, %v2177
        %v2195 = vadd.f32 %v1989, %v2177
        %v2196 = vadd.f32 %v1963, %v2182
        %v2197 = vadd.f32 %v1992, %v2182
        %v2198 = vadd.f32 %v1966, %v2187
        %v2199 = vadd.f32 %v1995, %v2187
        %v2200 = vadd.f32 %v1969, %v2192
        %v2201 = vadd.f32 %v1998, %v2192
        %v2202 = vxor.u32 %v2194, 2147483648
        %v2203 = vxor.u32 %v2195, 2147483648
        %v2204 = vxor.u32 %v2196, 2147483648
        %v2205 = vxor.u32 %v2197, 2147483648
        %v2206 = vxor.u32 %v2198, 2147483648
        %v2207 = vxor.u32 %v2199, 2147483648
        %v2208 = vxor.u32 %v2200, 2147483648
        %v2209 = vxor.u32 %v2201, 2147483648
        %v2210 = vmul.f32 %v2202, 1.442695
        %v2211 = vpow.pop %v2210
        %v2212 = vmul.f32 %v2203, 1.442695
        %v2213 = vpow.pop %v2212
        %v2214 = vmul.f32 %v2204, 1.442695
        %v2215 = vpow.pop %v2214
        %v2216 = vmul.f32 %v2205, 1.442695
        %v2217 = vpow.pop %v2216
        %v2218 = vmul.f32 %v2206, 1.442695
        %v2219 = vpow.pop %v2218
        %v2220 = vmul.f32 %v2207, 1.442695
        %v2221 = vpow.pop %v2220
        %v2222 = vmul.f32 %v2208, 1.442695
        %v2223 = vpow.pop %v2222
        %v2224 = vmul.f32 %v2209, 1.442695
        %v2225 = vpow.pop %v2224
        %v2226 = vadd.f32 %v2211, 1.0
        %v2227 = vadd.f32 %v2213, 1.0
        %v2228 = vadd.f32 %v2215, 1.0
        %v2229 = vadd.f32 %v2217, 1.0
        %v2230 = vadd.f32 %v2219, 1.0
        %v2231 = vadd.f32 %v2221, 1.0
        %v2232 = vadd.f32 %v2223, 1.0
        %v2233 = vadd.f32 %v2225, 1.0
        %v2234 = vrcp.pop %v2226
        %v2235 = vmul.f32 %v2226, %v2234
        %v2236 = vsub.f32 1.0, %v2235
        %v2237 = vmul.f32 %v2234, %v2236
        %v2238 = vadd.f32 %v2234, %v2237
        %vm2239 = vweird.f32 %v2226
        %vm2240 = vweird.f32 %v2234
        %vm2241 = vmor %vm2239, %vm2240
        %v2242 = vsel %vm2241, %v2234, %v2238
        %v2243 = vand.u32 2147483647, %v2226
        %vm2244 = vcmp.eq.f32.partialorder %v2243, 8.507059e+37
        %v2245 = vand.u32 %v2226, 2147483648
        %v2246 = vor.u32 1.1754944e-38, %v2245
        %v2247 = vsel %vm2244, %v2246, %v2242
        %v2248 = vmul.f32 1.0, %v2247
        %v2249 = vrcp.pop %v2227
        %v2250 = vmul.f32 %v2227, %v2249
        %v2251 = vsub.f32 1.0, %v2250
        %v2252 = vmul.f32 %v2249, %v2251
        %v2253 = vadd.f32 %v2249, %v2252
        %vm2254 = vweird.f32 %v2227
        %vm2255 = vweird.f32 %v2249
        %vm2256 = vmor %vm2254, %vm2255
        %v2257 = vsel %vm2256, %v2249, %v2253
        %v2258 = vand.u32 2147483647, %v2227
        %vm2259 = vcmp.eq.f32.partialorder %v2258, 8.507059e+37
        %v2260 = vand.u32 %v2227, 2147483648
        %v2261 = vor.u32 1.1754944e-38, %v2260
        %v2262 = vsel %vm2259, %v2261, %v2257
        %v2263 = vmul.f32 1.0, %v2262
        %v2264 = vrcp.pop %v2228
        %v2265 = vmul.f32 %v2228, %v2264
        %v2266 = vsub.f32 1.0, %v2265
        %v2267 = vmul.f32 %v2264, %v2266
        %v2268 = vadd.f32 %v2264, %v2267
        %vm2269 = vweird.f32 %v2228
        %vm2270 = vweird.f32 %v2264
        %vm2271 = vmor %vm2269, %vm2270
        %v2272 = vsel %vm2271, %v2264, %v2268
        %v2273 = vand.u32 2147483647, %v2228
        %vm2274 = vcmp.eq.f32.partialorder %v2273, 8.507059e+37
        %v2275 = vand.u32 %v2228, 2147483648
        %v2276 = vor.u32 1.1754944e-38, %v2275
        %v2277 = vsel %vm2274, %v2276, %v2272
        %v2278 = vmul.f32 1.0, %v2277
        %v2279 = vrcp.pop %v2229
        %v2280 = vmul.f32 %v2229, %v2279
        %v2281 = vsub.f32 1.0, %v2280
        %v2282 = vmul.f32 %v2279, %v2281
        %v2283 = vadd.f32 %v2279, %v2282
        %vm2284 = vweird.f32 %v2229
        %vm2285 = vweird.f32 %v2279
        %vm2286 = vmor %vm2284, %vm2285
        %v2287 = vsel %vm2286, %v2279, %v2283
        %v2288 = vand.u32 2147483647, %v2229
        %vm2289 = vcmp.eq.f32.partialorder %v2288, 8.507059e+37
        %v2290 = vand.u32 %v2229, 2147483648
        %v2291 = vor.u32 1.1754944e-38, %v2290
        %v2292 = vsel %vm2289, %v2291, %v2287
        %v2293 = vmul.f32 1.0, %v2292
        %v2294 = vrcp.pop %v2230
        %v2295 = vmul.f32 %v2230, %v2294
        %v2296 = vsub.f32 1.0, %v2295
        %v2297 = vmul.f32 %v2294, %v2296
        %v2298 = vadd.f32 %v2294, %v2297
        %vm2299 = vweird.f32 %v2230
        %vm2300 = vweird.f32 %v2294
        %vm2301 = vmor %vm2299, %vm2300
        %v2302 = vsel %vm2301, %v2294, %v2298
        %v2303 = vand.u32 2147483647, %v2230
        %vm2304 = vcmp.eq.f32.partialorder %v2303, 8.507059e+37
        %v2305 = vand.u32 %v2230, 2147483648
        %v2306 = vor.u32 1.1754944e-38, %v2305
        %v2307 = vsel %vm2304, %v2306, %v2302
        %v2308 = vmul.f32 1.0, %v2307
        %v2309 = vrcp.pop %v2231
        %v2310 = vmul.f32 %v2231, %v2309
        %v2311 = vsub.f32 1.0, %v2310
        %v2312 = vmul.f32 %v2309, %v2311
        %v2313 = vadd.f32 %v2309, %v2312
        %vm2314 = vweird.f32 %v2231
        %vm2315 = vweird.f32 %v2309
        %vm2316 = vmor %vm2314, %vm2315
        %v2317 = vsel %vm2316, %v2309, %v2313
        %v2318 = vand.u32 2147483647, %v2231
        %vm2319 = vcmp.eq.f32.partialorder %v2318, 8.507059e+37
        %v2320 = vand.u32 %v2231, 2147483648
        %v2321 = vor.u32 1.1754944e-38, %v2320
        %v2322 = vsel %vm2319, %v2321, %v2317
        %v2323 = vmul.f32 1.0, %v2322
        %v2324 = vrcp.pop %v2232
        %v2325 = vmul.f32 %v2232, %v2324
        %v2326 = vsub.f32 1.0, %v2325
        %v2327 = vmul.f32 %v2324, %v2326
        %v2328 = vadd.f32 %v2324, %v2327
        %vm2329 = vweird.f32 %v2232
        %vm2330 = vweird.f32 %v2324
        %vm2331 = vmor %vm2329, %vm2330
        %v2332 = vsel %vm2331, %v2324, %v2328
        %v2333 = vand.u32 2147483647, %v2232
        %vm2334 = vcmp.eq.f32.partialorder %v2333, 8.507059e+37
        %v2335 = vand.u32 %v2232, 2147483648
        %v2336 = vor.u32 1.1754944e-38, %v2335
        %v2337 = vsel %vm2334, %v2336, %v2332
        %v2338 = vmul.f32 1.0, %v2337
        %v2339 = vrcp.pop %v2233
        %v2340 = vmul.f32 %v2233, %v2339
        %v2341 = vsub.f32 1.0, %v2340
        %v2342 = vmul.f32 %v2339, %v2341
        %v2343 = vadd.f32 %v2339, %v2342
        %vm2344 = vweird.f32 %v2233
        %vm2345 = vweird.f32 %v2339
        %vm2346 = vmor %vm2344, %vm2345
        %v2347 = vsel %vm2346, %v2339, %v2343
        %v2348 = vand.u32 2147483647, %v2233
        %vm2349 = vcmp.eq.f32.partialorder %v2348, 8.507059e+37
        %v2350 = vand.u32 %v2233, 2147483648
        %v2351 = vor.u32 1.1754944e-38, %v2350
        %v2352 = vsel %vm2349, %v2351, %v2347
        %v2353 = vmul.f32 1.0, %v2352
        %v2354 = vsub.f32 1.0, %v2248
        %v2355 = vsub.f32 1.0, %v2263
        %v2356 = vsub.f32 1.0, %v2278
        %v2357 = vsub.f32 1.0, %v2293
        %v2358 = vsub.f32 1.0, %v2308
        %v2359 = vsub.f32 1.0, %v2323
        %v2360 = vsub.f32 1.0, %v2338
        %v2361 = vsub.f32 1.0, %v2353
        %v2362 = vmul.f32 %v2248, %v2354
        %v2363 = vmul.f32 %v2263, %v2355
        %v2364 = vmul.f32 %v2278, %v2356
        %v2365 = vmul.f32 %v2293, %v2357
        %v2366 = vmul.f32 %v2308, %v2358
        %v2367 = vmul.f32 %v2323, %v2359
        %v2368 = vmul.f32 %v2338, %v2360
        %v2369 = vmul.f32 %v2353, %v2361
        %v2370 = vmul.f32 %v2248, 2.0
        %v2371 = vmul.f32 %v2263, 2.0
        %v2372 = vmul.f32 %v2278, 2.0
        %v2373 = vmul.f32 %v2293, 2.0
        %v2374 = vmul.f32 %v2308, 2.0
        %v2375 = vmul.f32 %v2323, 2.0
        %v2376 = vmul.f32 %v2338, 2.0
        %v2377 = vmul.f32 %v2353, 2.0
        %v2378 = vsub.f32 1.0, %v2370
        %v2379 = vsub.f32 1.0, %v2371
        %v2380 = vsub.f32 1.0, %v2372
        %v2381 = vsub.f32 1.0, %v2373
        %v2382 = vsub.f32 1.0, %v2374
        %v2383 = vsub.f32 1.0, %v2375
        %v2384 = vsub.f32 1.0, %v2376
        %v2385 = vsub.f32 1.0, %v2377
        %v2386 = vmul.f32 %v2378, %v2076
        %v2387 = vmul.f32 %v2379, %v2105
        %v2388 = vmul.f32 %v2380, %v2079
        %v2389 = vmul.f32 %v2381, %v2108
        %v2390 = vmul.f32 %v2382, %v2082
        %v2391 = vmul.f32 %v2383, %v2111
        %v2392 = vmul.f32 %v2384, %v2085
        %v2393 = vmul.f32 %v2385, %v2114
        %v2394 = vmul.f32 %v2386, %v2076
        %v2395 = vmul.f32 %v2387, %v2105
        %v2396 = vmul.f32 %v2388, %v2079
        %v2397 = vmul.f32 %v2389, %v2108
        %v2398 = vmul.f32 %v2390, %v2082
        %v2399 = vmul.f32 %v2391, %v2111
        %v2400 = vmul.f32 %v2392, %v2085
        %v2401 = vmul.f32 %v2393, %v2114
        %v2402 = vadd.f32 %v2394, %v2134
        %v2403 = vadd.f32 %v2395, %v2163
        %v2404 = vadd.f32 %v2396, %v2137
        %v2405 = vadd.f32 %v2397, %v2166
        %v2406 = vadd.f32 %v2398, %v2140
        %v2407 = vadd.f32 %v2399, %v2169
        %v2408 = vadd.f32 %v2400, %v2143
        %v2409 = vadd.f32 %v2401, %v2172
        %v2410 = vmul.f32 %v2362, %v2018
        %v2411 = vmul.f32 %v2363, %v2047
        %v2412 = vmul.f32 %v2364, %v2021
        %v2413 = vmul.f32 %v2365, %v2050
        %v2414 = vmul.f32 %v2366, %v2024
        %v2415 = vmul.f32 %v2367, %v2053
        %v2416 = vmul.f32 %v2368, %v2027
        %v2417 = vmul.f32 %v2369, %v2056
        %v2418 = vmul.f32 %v2362, %v2076
        %v2419 = vmul.f32 %v2363, %v2105
        %v2420 = vmul.f32 %v2364, %v2079
        %v2421 = vmul.f32 %v2365, %v2108
        %v2422 = vmul.f32 %v2366, %v2082
        %v2423 = vmul.f32 %v2367, %v2111
        %v2424 = vmul.f32 %v2368, %v2085
        %v2425 = vmul.f32 %v2369, %v2114
        %v2426 = vmul.f32 %v2362, %v2402
        %v2427 = vmul.f32 %v2363, %v2403
        %v2428 = vmul.f32 %v2364, %v2404
        %v2429 = vmul.f32 %v2365, %v2405
        %v2430 = vmul.f32 %v2366, %v2406
        %v2431 = vmul.f32 %v2367, %v2407
        %v2432 = vmul.f32 %v2368, %v2408
        %v2433 = vmul.f32 %v2369, %v2409
        %2434 = vst [vmem:[#allocation2] sm:$0xff] %v2248
        %2435 = vst [vmem:[#allocation2 + $0x8] sm:$0xff] %v2263
        %2436 = vst [vmem:[#allocation2 + $0x40] sm:$0xff] %v2278
        %2437 = vst [vmem:[#allocation2 + $0x48] sm:$0xff] %v2293
        %2438 = vst [vmem:[#allocation2 + $0x80] sm:$0xff] %v2308
        %2439 = vst [vmem:[#allocation2 + $0x88] sm:$0xff] %v2323
        %2440 = vst [vmem:[#allocation2 + $0xc0] sm:$0xff] %v2338
        %2441 = vst [vmem:[#allocation2 + $0xc8] sm:$0xff] %v2353
        %2442 = vst [vmem:[#allocation2 + $0x10] sm:$0xff] %v2410
        %2443 = vst [vmem:[#allocation2 + $0x18] sm:$0xff] %v2411
        %2444 = vst [vmem:[#allocation2 + $0x50] sm:$0xff] %v2412
        %2445 = vst [vmem:[#allocation2 + $0x58] sm:$0xff] %v2413
        %2446 = vst [vmem:[#allocation2 + $0x90] sm:$0xff] %v2414
        %2447 = vst [vmem:[#allocation2 + $0x98] sm:$0xff] %v2415
        %2448 = vst [vmem:[#allocation2 + $0xd0] sm:$0xff] %v2416
        %2449 = vst [vmem:[#allocation2 + $0xd8] sm:$0xff] %v2417
        %2450 = vst [vmem:[#allocation2 + $0x20] sm:$0xff] %v2418
        %2451 = vst [vmem:[#allocation2 + $0x28] sm:$0xff] %v2419
        %2452 = vst [vmem:[#allocation2 + $0x60] sm:$0xff] %v2420
        %2453 = vst [vmem:[#allocation2 + $0x68] sm:$0xff] %v2421
        %2454 = vst [vmem:[#allocation2 + $0xa0] sm:$0xff] %v2422
        %2455 = vst [vmem:[#allocation2 + $0xa8] sm:$0xff] %v2423
        %2456 = vst [vmem:[#allocation2 + $0xe0] sm:$0xff] %v2424
        %2457 = vst [vmem:[#allocation2 + $0xe8] sm:$0xff] %v2425
        %2458 = vst [vmem:[#allocation2 + $0x30] sm:$0xff] %v2426
        %2459 = vst [vmem:[#allocation2 + $0x38] sm:$0xff] %v2427
        %2460 = vst [vmem:[#allocation2 + $0x70] sm:$0xff] %v2428
        %2461 = vst [vmem:[#allocation2 + $0x78] sm:$0xff] %v2429
        %2462 = vst [vmem:[#allocation2 + $0xb0] sm:$0xff] %v2430
        %2463 = vst [vmem:[#allocation2 + $0xb8] sm:$0xff] %v2431
        %2464 = vst [vmem:[#allocation2 + $0xf0] sm:$0xff] %v2432
        %2465 = vst [vmem:[#allocation2 + $0xf8] sm:$0xff] %v2433
        %v2466 = vld [vmem:[#allocation2] sm:$0xff]
        %v2467 = vld [vmem:[#allocation2 + $0x8] sm:$0xff]
        %v2468 = vld [vmem:[#allocation2 + $0x10] sm:$0xff]
        %v2469 = vld [vmem:[#allocation2 + $0x18] sm:$0xff]
        %v2470 = vld [vmem:[#allocation2 + $0x20] sm:$0xff]
        %v2471 = vld [vmem:[#allocation2 + $0x28] sm:$0xff]
        %v2472 = vld [vmem:[#allocation2 + $0x30] sm:$0xff]
        %v2473 = vld [vmem:[#allocation2 + $0x38] sm:$0xff]
        %v2474 = vld [vmem:[#allocation2 + $0x40] sm:$0xff]
        %v2475 = vld [vmem:[#allocation2 + $0x48] sm:$0xff]
        %v2476 = vld [vmem:[#allocation2 + $0x50] sm:$0xff]
        %v2477 = vld [vmem:[#allocation2 + $0x58] sm:$0xff]
        %v2478 = vld [vmem:[#allocation2 + $0x60] sm:$0xff]
        %v2479 = vld [vmem:[#allocation2 + $0x68] sm:$0xff]
        %v2480 = vld [vmem:[#allocation2 + $0x70] sm:$0xff]
        %v2481 = vld [vmem:[#allocation2 + $0x78] sm:$0xff]
        %v2482 = vld [vmem:[#allocation2 + $0x80] sm:$0xff]
        %v2483 = vld [vmem:[#allocation2 + $0x88] sm:$0xff]
        %v2484 = vld [vmem:[#allocation2 + $0x90] sm:$0xff]
        %v2485 = vld [vmem:[#allocation2 + $0x98] sm:$0xff]
        %v2486 = vld [vmem:[#allocation2 + $0xa0] sm:$0xff]
        %v2487 = vld [vmem:[#allocation2 + $0xa8] sm:$0xff]
        %v2488 = vld [vmem:[#allocation2 + $0xb0] sm:$0xff]
        %v2489 = vld [vmem:[#allocation2 + $0xb8] sm:$0xff]
        %v2490 = vld [vmem:[#allocation2 + $0xc0] sm:$0xff]
        %v2491 = vld [vmem:[#allocation2 + $0xc8] sm:$0xff]
        %v2492 = vld [vmem:[#allocation2 + $0xd0] sm:$0xff]
        %v2493 = vld [vmem:[#allocation2 + $0xd8] sm:$0xff]
        %v2494 = vld [vmem:[#allocation2 + $0xe0] sm:$0xff]
        %v2495 = vld [vmem:[#allocation2 + $0xe8] sm:$0xff]
        %v2496 = vld [vmem:[#allocation2 + $0xf0] sm:$0xff]
        %v2497 = vld [vmem:[#allocation2 + $0xf8] sm:$0xff]
        %v2499 = vsel %vm749, %v1625, 0
        %v2502 = vsel %vm749, %v1626, 0
        %v2505 = vsel %vm749, %v1627, 0
        %v2508 = vsel %vm749, %v1628, 0
        %2510 = vmatpush.msra.mxu0 0.0
        %2511 = vmatpush.msra.mxu0 0.0
        %2512 = vmatpush.msra.mxu0 0.0
        %2513 = vmatpush.msra.mxu0 0.0
        %2514 = vmatpush.msra.mxu0 0.0
        %2515 = vmatpush.msra.mxu0 0.0
        %2516 = vmatpush.msra.mxu0 0.0
        %2517 = vmatpush.msra.mxu0 0.0
        %2518 = vmatpush.msra.mxu0 0.0
        %2519 = vmatpush.msra.mxu0 0.0
        %2520 = vmatpush.msra.mxu0 0.0
        %2521 = vmatpush.msra.mxu0 0.0
        %2522 = vmatpush.msra.mxu0 %v2490
        %2523 = vmatpush.msra.mxu0 %v2482
        %2524 = vmatpush.msra.mxu0 %v2474
        %2525 = vmatpush.msra.mxu0 %v2466
        %2526 = vmatmul.f32.gmra.mxu0 %v2499
        %v2527 = vpop.f32.mrf.mxu0
        %v2528 = vadd.f32 0.0, %v2527
        %2529 = vmatmul.f32.gmra.mxu0 %v2502
        %v2530 = vpop.f32.mrf.mxu0
        %v2531 = vadd.f32 0.0, %v2530
        %2532 = vmatmul.f32.gmra.mxu0 %v2505
        %v2533 = vpop.f32.mrf.mxu0
        %v2534 = vadd.f32 0.0, %v2533
        %2535 = vmatmul.f32.gmra.mxu0 %v2508
        %v2536 = vpop.f32.mrf.mxu0
        %v2537 = vadd.f32 0.0, %v2536
        %2538 = vdwg.mxu0
        %2539 = vmatpush.msra.mxu0 0.0
        %2540 = vmatpush.msra.mxu0 0.0
        %2541 = vmatpush.msra.mxu0 0.0
        %2542 = vmatpush.msra.mxu0 0.0
        %2543 = vmatpush.msra.mxu0 0.0
        %2544 = vmatpush.msra.mxu0 0.0
        %2545 = vmatpush.msra.mxu0 0.0
        %2546 = vmatpush.msra.mxu0 0.0
        %2547 = vmatpush.msra.mxu0 0.0
        %2548 = vmatpush.msra.mxu0 0.0
        %2549 = vmatpush.msra.mxu0 0.0
        %2550 = vmatpush.msra.mxu0 0.0
        %2551 = vmatpush.msra.mxu0 %v2491
        %2552 = vmatpush.msra.mxu0 %v2483
        %2553 = vmatpush.msra.mxu0 %v2475
        %2554 = vmatpush.msra.mxu0 %v2467
        %2555 = vmatmul.f32.gmra.mxu0 %v2499
        %v2556 = vpop.f32.mrf.mxu0
        %v2557 = vadd.f32 0.0, %v2556
        %2558 = vmatmul.f32.gmra.mxu0 %v2502
        %v2559 = vpop.f32.mrf.mxu0
        %v2560 = vadd.f32 0.0, %v2559
        %2561 = vmatmul.f32.gmra.mxu0 %v2505
        %v2562 = vpop.f32.mrf.mxu0
        %v2563 = vadd.f32 0.0, %v2562
        %2564 = vmatmul.f32.gmra.mxu0 %v2508
        %v2565 = vpop.f32.mrf.mxu0
        %v2566 = vadd.f32 0.0, %v2565
        %2567 = vdwg.mxu0
        %2568 = vmatpush.msra.mxu0 0.0
        %2569 = vmatpush.msra.mxu0 0.0
        %2570 = vmatpush.msra.mxu0 0.0
        %2571 = vmatpush.msra.mxu0 0.0
        %2572 = vmatpush.msra.mxu0 0.0
        %2573 = vmatpush.msra.mxu0 0.0
        %2574 = vmatpush.msra.mxu0 0.0
        %2575 = vmatpush.msra.mxu0 0.0
        %2576 = vmatpush.msra.mxu0 0.0
        %2577 = vmatpush.msra.mxu0 0.0
        %2578 = vmatpush.msra.mxu0 0.0
        %2579 = vmatpush.msra.mxu0 0.0
        %2580 = vmatpush.msra.mxu0 %v2492
        %2581 = vmatpush.msra.mxu0 %v2484
        %2582 = vmatpush.msra.mxu0 %v2476
        %2583 = vmatpush.msra.mxu0 %v2468
        %2584 = vmatmul.f32.gmra.mxu0 %v2499
        %v2585 = vpop.f32.mrf.mxu0
        %v2586 = vadd.f32 0.0, %v2585
        %2587 = vmatmul.f32.gmra.mxu0 %v2502
        %v2588 = vpop.f32.mrf.mxu0
        %v2589 = vadd.f32 0.0, %v2588
        %2590 = vmatmul.f32.gmra.mxu0 %v2505
        %v2591 = vpop.f32.mrf.mxu0
        %v2592 = vadd.f32 0.0, %v2591
        %2593 = vmatmul.f32.gmra.mxu0 %v2508
        %v2594 = vpop.f32.mrf.mxu0
        %v2595 = vadd.f32 0.0, %v2594
        %2596 = vdwg.mxu0
        %2597 = vmatpush.msra.mxu0 0.0
        %2598 = vmatpush.msra.mxu0 0.0
        %2599 = vmatpush.msra.mxu0 0.0
        %2600 = vmatpush.msra.mxu0 0.0
        %2601 = vmatpush.msra.mxu0 0.0
        %2602 = vmatpush.msra.mxu0 0.0
        %2603 = vmatpush.msra.mxu0 0.0
        %2604 = vmatpush.msra.mxu0 0.0
        %2605 = vmatpush.msra.mxu0 0.0
        %2606 = vmatpush.msra.mxu0 0.0
        %2607 = vmatpush.msra.mxu0 0.0
        %2608 = vmatpush.msra.mxu0 0.0
        %2609 = vmatpush.msra.mxu0 %v2493
        %2610 = vmatpush.msra.mxu0 %v2485
        %2611 = vmatpush.msra.mxu0 %v2477
        %2612 = vmatpush.msra.mxu0 %v2469
        %2613 = vmatmul.f32.gmra.mxu0 %v2499
        %v2614 = vpop.f32.mrf.mxu0
        %v2615 = vadd.f32 0.0, %v2614
        %2616 = vmatmul.f32.gmra.mxu0 %v2502
        %v2617 = vpop.f32.mrf.mxu0
        %v2618 = vadd.f32 0.0, %v2617
        %2619 = vmatmul.f32.gmra.mxu0 %v2505
        %v2620 = vpop.f32.mrf.mxu0
        %v2621 = vadd.f32 0.0, %v2620
        %2622 = vmatmul.f32.gmra.mxu0 %v2508
        %v2623 = vpop.f32.mrf.mxu0
        %v2624 = vadd.f32 0.0, %v2623
        %2625 = vdwg.mxu0
        %2626 = vmatpush.msra.mxu0 0.0
        %2627 = vmatpush.msra.mxu0 0.0
        %2628 = vmatpush.msra.mxu0 0.0
        %2629 = vmatpush.msra.mxu0 0.0
        %2630 = vmatpush.msra.mxu0 0.0
        %2631 = vmatpush.msra.mxu0 0.0
        %2632 = vmatpush.msra.mxu0 0.0
        %2633 = vmatpush.msra.mxu0 0.0
        %2634 = vmatpush.msra.mxu0 0.0
        %2635 = vmatpush.msra.mxu0 0.0
        %2636 = vmatpush.msra.mxu0 0.0
        %2637 = vmatpush.msra.mxu0 0.0
        %2638 = vmatpush.msra.mxu0 %v2494
        %2639 = vmatpush.msra.mxu0 %v2486
        %2640 = vmatpush.msra.mxu0 %v2478
        %2641 = vmatpush.msra.mxu0 %v2470
        %2642 = vmatmul.f32.gmra.mxu0 %v2499
        %v2643 = vpop.f32.mrf.mxu0
        %v2644 = vadd.f32 0.0, %v2643
        %2645 = vmatmul.f32.gmra.mxu0 %v2502
        %v2646 = vpop.f32.mrf.mxu0
        %v2647 = vadd.f32 0.0, %v2646
        %2648 = vmatmul.f32.gmra.mxu0 %v2505
        %v2649 = vpop.f32.mrf.mxu0
        %v2650 = vadd.f32 0.0, %v2649
        %2651 = vmatmul.f32.gmra.mxu0 %v2508
        %v2652 = vpop.f32.mrf.mxu0
        %v2653 = vadd.f32 0.0, %v2652
        %2654 = vdwg.mxu0
        %2655 = vmatpush.msra.mxu0 0.0
        %2656 = vmatpush.msra.mxu0 0.0
        %2657 = vmatpush.msra.mxu0 0.0
        %2658 = vmatpush.msra.mxu0 0.0
        %2659 = vmatpush.msra.mxu0 0.0
        %2660 = vmatpush.msra.mxu0 0.0
        %2661 = vmatpush.msra.mxu0 0.0
        %2662 = vmatpush.msra.mxu0 0.0
        %2663 = vmatpush.msra.mxu0 0.0
        %2664 = vmatpush.msra.mxu0 0.0
        %2665 = vmatpush.msra.mxu0 0.0
        %2666 = vmatpush.msra.mxu0 0.0
        %2667 = vmatpush.msra.mxu0 %v2495
        %2668 = vmatpush.msra.mxu0 %v2487
        %2669 = vmatpush.msra.mxu0 %v2479
        %2670 = vmatpush.msra.mxu0 %v2471
        %2671 = vmatmul.f32.gmra.mxu0 %v2499
        %v2672 = vpop.f32.mrf.mxu0
        %v2673 = vadd.f32 0.0, %v2672
        %2674 = vmatmul.f32.gmra.mxu0 %v2502
        %v2675 = vpop.f32.mrf.mxu0
        %v2676 = vadd.f32 0.0, %v2675
        %2677 = vmatmul.f32.gmra.mxu0 %v2505
        %v2678 = vpop.f32.mrf.mxu0
        %v2679 = vadd.f32 0.0, %v2678
        %2680 = vmatmul.f32.gmra.mxu0 %v2508
        %v2681 = vpop.f32.mrf.mxu0
        %v2682 = vadd.f32 0.0, %v2681
        %2683 = vdwg.mxu0
        %2684 = vmatpush.msra.mxu0 0.0
        %2685 = vmatpush.msra.mxu0 0.0
        %2686 = vmatpush.msra.mxu0 0.0
        %2687 = vmatpush.msra.mxu0 0.0
        %2688 = vmatpush.msra.mxu0 0.0
        %2689 = vmatpush.msra.mxu0 0.0
        %2690 = vmatpush.msra.mxu0 0.0
        %2691 = vmatpush.msra.mxu0 0.0
        %2692 = vmatpush.msra.mxu0 0.0
        %2693 = vmatpush.msra.mxu0 0.0
        %2694 = vmatpush.msra.mxu0 0.0
        %2695 = vmatpush.msra.mxu0 0.0
        %2696 = vmatpush.msra.mxu0 %v2496
        %2697 = vmatpush.msra.mxu0 %v2488
        %2698 = vmatpush.msra.mxu0 %v2480
        %2699 = vmatpush.msra.mxu0 %v2472
        %2700 = vmatmul.f32.gmra.mxu0 %v2499
        %v2701 = vpop.f32.mrf.mxu0
        %v2702 = vadd.f32 0.0, %v2701
        %2703 = vmatmul.f32.gmra.mxu0 %v2502
        %v2704 = vpop.f32.mrf.mxu0
        %v2705 = vadd.f32 0.0, %v2704
        %2706 = vmatmul.f32.gmra.mxu0 %v2505
        %v2707 = vpop.f32.mrf.mxu0
        %v2708 = vadd.f32 0.0, %v2707
        %2709 = vmatmul.f32.gmra.mxu0 %v2508
        %v2710 = vpop.f32.mrf.mxu0
        %v2711 = vadd.f32 0.0, %v2710
        %2712 = vdwg.mxu0
        %2713 = vmatpush.msra.mxu0 0.0
        %2714 = vmatpush.msra.mxu0 0.0
        %2715 = vmatpush.msra.mxu0 0.0
        %2716 = vmatpush.msra.mxu0 0.0
        %2717 = vmatpush.msra.mxu0 0.0
        %2718 = vmatpush.msra.mxu0 0.0
        %2719 = vmatpush.msra.mxu0 0.0
        %2720 = vmatpush.msra.mxu0 0.0
        %2721 = vmatpush.msra.mxu0 0.0
        %2722 = vmatpush.msra.mxu0 0.0
        %2723 = vmatpush.msra.mxu0 0.0
        %2724 = vmatpush.msra.mxu0 0.0
        %2725 = vmatpush.msra.mxu0 %v2497
        %2726 = vmatpush.msra.mxu0 %v2489
        %2727 = vmatpush.msra.mxu0 %v2481
        %2728 = vmatpush.msra.mxu0 %v2473
        %2729 = vmatmul.f32.gmra.mxu0 %v2499
        %v2730 = vpop.f32.mrf.mxu0
        %v2731 = vadd.f32 0.0, %v2730
        %2732 = vmatmul.f32.gmra.mxu0 %v2502
        %v2733 = vpop.f32.mrf.mxu0
        %v2734 = vadd.f32 0.0, %v2733
        %2735 = vmatmul.f32.gmra.mxu0 %v2505
        %v2736 = vpop.f32.mrf.mxu0
        %v2737 = vadd.f32 0.0, %v2736
        %2738 = vmatmul.f32.gmra.mxu0 %v2508
        %v2739 = vpop.f32.mrf.mxu0
        %v2740 = vadd.f32 0.0, %v2739
        %2741 = vdwg.mxu0
        %v2742 = vadd.f32 %v1590, %v2528
        %v2743 = vadd.f32 %v1591, %v2557
        %v2744 = vadd.f32 %v1592, %v2531
        %v2745 = vadd.f32 %v1593, %v2560
        %v2746 = vadd.f32 %v1594, %v2534
        %v2747 = vadd.f32 %v1595, %v2563
        %v2748 = vadd.f32 %v1596, %v2537
        %v2749 = vadd.f32 %v1597, %v2566
        %2751 = vset.pattern.permute.xlu0 0
        %2752 = vperm.xlu0 %2751, %v1630
        %v2753 = vpop.permute.xlu0 %2752
        %2756 = vset.pattern.permute.xlu0 0
        %2757 = vperm.xlu0 %2756, %v1631
        %v2758 = vpop.permute.xlu0 %2757
        %2761 = vset.pattern.permute.xlu0 0
        %2762 = vperm.xlu0 %2761, %v1632
        %v2763 = vpop.permute.xlu0 %2762
        %2766 = vset.pattern.permute.xlu0 0
        %2767 = vperm.xlu0 %2766, %v1633
        %v2768 = vpop.permute.xlu0 %2767
        %v2770 = vadd.f32 %v2742, %v2753
        %v2771 = vadd.f32 %v2743, %v2753
        %v2772 = vadd.f32 %v2744, %v2758
        %v2773 = vadd.f32 %v2745, %v2758
        %v2774 = vadd.f32 %v2746, %v2763
        %v2775 = vadd.f32 %v2747, %v2763
        %v2776 = vadd.f32 %v2748, %v2768
        %v2777 = vadd.f32 %v2749, %v2768
        %v2778 = vadd.f32 %v1598, %v2586
        %v2779 = vadd.f32 %v1599, %v2615
        %v2780 = vadd.f32 %v1600, %v2589
        %v2781 = vadd.f32 %v1601, %v2618
        %v2782 = vadd.f32 %v1602, %v2592
        %v2783 = vadd.f32 %v1603, %v2621
        %v2784 = vadd.f32 %v1604, %v2595
        %v2785 = vadd.f32 %v1605, %v2624
        %v2786 = vadd.f32 %v1606, %v2644
        %v2787 = vadd.f32 %v1607, %v2673
        %v2788 = vadd.f32 %v1608, %v2647
        %v2789 = vadd.f32 %v1609, %v2676
        %v2790 = vadd.f32 %v1610, %v2650
        %v2791 = vadd.f32 %v1611, %v2679
        %v2792 = vadd.f32 %v1612, %v2653
        %v2793 = vadd.f32 %v1613, %v2682
        %v2794 = vadd.f32 %v1522, %v2702
        %v2795 = vadd.f32 %v1551, %v2731
        %v2796 = vadd.f32 %v1525, %v2705
        %v2797 = vadd.f32 %v1554, %v2734
        %v2798 = vadd.f32 %v1528, %v2708
        %v2799 = vadd.f32 %v1557, %v2737
        %v2800 = vadd.f32 %v1531, %v2711
        %v2801 = vadd.f32 %v1560, %v2740
        %s2802 = scalar_lea.vmem %s3, 64
        %v2803 = vld [vmem:[%s2802] sm:$0xff]
        %v2804 = vld [vmem:[%s2802 + $0x8] sm:$0xff]
        %v2805 = vld [vmem:[%s2802 + $0x10] sm:$0xff]
        %v2806 = vld [vmem:[%s2802 + $0x18] sm:$0xff]
        %s2807 = scalar_lea.vmem %s4, 64
        %v2808 = vld [vmem:[%s2807] sm:$0xff]
        %v2809 = vld [vmem:[%s2807 + $0x8] sm:$0xff]
        %v2810 = vld [vmem:[%s2807 + $0x10] sm:$0xff]
        %v2811 = vld [vmem:[%s2807 + $0x18] sm:$0xff]
        %s2812 = scalar_lea.vmem %s5, 64
        %v2813 = vld [vmem:[%s2812] sm:$0xff]
        %v2814 = vld [vmem:[%s2812 + $0x8] sm:$0xff]
        %v2815 = vld [vmem:[%s2812 + $0x10] sm:$0xff]
        %v2816 = vld [vmem:[%s2812 + $0x18] sm:$0xff]
        %s2817 = scalar_lea.vmem %s6, 64
        %v2818 = vld [vmem:[%s2817] sm:$0xff]
        %v2819 = vld [vmem:[%s2817 + $0x8] sm:$0xff]
        %v2820 = vld [vmem:[%s2817 + $0x10] sm:$0xff]
        %v2821 = vld [vmem:[%s2817 + $0x18] sm:$0xff]
        %v2822 = vxor.u32 %v2770, 2147483648
        %v2823 = vxor.u32 %v2771, 2147483648
        %v2824 = vxor.u32 %v2772, 2147483648
        %v2825 = vxor.u32 %v2773, 2147483648
        %v2826 = vxor.u32 %v2774, 2147483648
        %v2827 = vxor.u32 %v2775, 2147483648
        %v2828 = vxor.u32 %v2776, 2147483648
        %v2829 = vxor.u32 %v2777, 2147483648
        %v2830 = vmul.f32 %v2822, 1.442695
        %v2831 = vpow.pop %v2830
        %v2832 = vmul.f32 %v2823, 1.442695
        %v2833 = vpow.pop %v2832
        %v2834 = vmul.f32 %v2824, 1.442695
        %v2835 = vpow.pop %v2834
        %v2836 = vmul.f32 %v2825, 1.442695
        %v2837 = vpow.pop %v2836
        %v2838 = vmul.f32 %v2826, 1.442695
        %v2839 = vpow.pop %v2838
        %v2840 = vmul.f32 %v2827, 1.442695
        %v2841 = vpow.pop %v2840
        %v2842 = vmul.f32 %v2828, 1.442695
        %v2843 = vpow.pop %v2842
        %v2844 = vmul.f32 %v2829, 1.442695
        %v2845 = vpow.pop %v2844
        %v2846 = vadd.f32 %v2831, 1.0
        %v2847 = vadd.f32 %v2833, 1.0
        %v2848 = vadd.f32 %v2835, 1.0
        %v2849 = vadd.f32 %v2837, 1.0
        %v2850 = vadd.f32 %v2839, 1.0
        %v2851 = vadd.f32 %v2841, 1.0
        %v2852 = vadd.f32 %v2843, 1.0
        %v2853 = vadd.f32 %v2845, 1.0
        %v2854 = vrcp.pop %v2846
        %v2855 = vmul.f32 %v2846, %v2854
        %v2856 = vsub.f32 1.0, %v2855
        %v2857 = vmul.f32 %v2854, %v2856
        %v2858 = vadd.f32 %v2854, %v2857
        %vm2859 = vweird.f32 %v2846
        %vm2860 = vweird.f32 %v2854
        %vm2861 = vmor %vm2859, %vm2860
        %v2862 = vsel %vm2861, %v2854, %v2858
        %v2863 = vand.u32 2147483647, %v2846
        %vm2864 = vcmp.eq.f32.partialorder %v2863, 8.507059e+37
        %v2865 = vand.u32 %v2846, 2147483648
        %v2866 = vor.u32 1.1754944e-38, %v2865
        %v2867 = vsel %vm2864, %v2866, %v2862
        %v2868 = vmul.f32 1.0, %v2867
        %v2869 = vrcp.pop %v2847
        %v2870 = vmul.f32 %v2847, %v2869
        %v2871 = vsub.f32 1.0, %v2870
        %v2872 = vmul.f32 %v2869, %v2871
        %v2873 = vadd.f32 %v2869, %v2872
        %vm2874 = vweird.f32 %v2847
        %vm2875 = vweird.f32 %v2869
        %vm2876 = vmor %vm2874, %vm2875
        %v2877 = vsel %vm2876, %v2869, %v2873
        %v2878 = vand.u32 2147483647, %v2847
        %vm2879 = vcmp.eq.f32.partialorder %v2878, 8.507059e+37
        %v2880 = vand.u32 %v2847, 2147483648
        %v2881 = vor.u32 1.1754944e-38, %v2880
        %v2882 = vsel %vm2879, %v2881, %v2877
        %v2883 = vmul.f32 1.0, %v2882
        %v2884 = vrcp.pop %v2848
        %v2885 = vmul.f32 %v2848, %v2884
        %v2886 = vsub.f32 1.0, %v2885
        %v2887 = vmul.f32 %v2884, %v2886
        %v2888 = vadd.f32 %v2884, %v2887
        %vm2889 = vweird.f32 %v2848
        %vm2890 = vweird.f32 %v2884
        %vm2891 = vmor %vm2889, %vm2890
        %v2892 = vsel %vm2891, %v2884, %v2888
        %v2893 = vand.u32 2147483647, %v2848
        %vm2894 = vcmp.eq.f32.partialorder %v2893, 8.507059e+37
        %v2895 = vand.u32 %v2848, 2147483648
        %v2896 = vor.u32 1.1754944e-38, %v2895
        %v2897 = vsel %vm2894, %v2896, %v2892
        %v2898 = vmul.f32 1.0, %v2897
        %v2899 = vrcp.pop %v2849
        %v2900 = vmul.f32 %v2849, %v2899
        %v2901 = vsub.f32 1.0, %v2900
        %v2902 = vmul.f32 %v2899, %v2901
        %v2903 = vadd.f32 %v2899, %v2902
        %vm2904 = vweird.f32 %v2849
        %vm2905 = vweird.f32 %v2899
        %vm2906 = vmor %vm2904, %vm2905
        %v2907 = vsel %vm2906, %v2899, %v2903
        %v2908 = vand.u32 2147483647, %v2849
        %vm2909 = vcmp.eq.f32.partialorder %v2908, 8.507059e+37
        %v2910 = vand.u32 %v2849, 2147483648
        %v2911 = vor.u32 1.1754944e-38, %v2910
        %v2912 = vsel %vm2909, %v2911, %v2907
        %v2913 = vmul.f32 1.0, %v2912
        %v2914 = vrcp.pop %v2850
        %v2915 = vmul.f32 %v2850, %v2914
        %v2916 = vsub.f32 1.0, %v2915
        %v2917 = vmul.f32 %v2914, %v2916
        %v2918 = vadd.f32 %v2914, %v2917
        %vm2919 = vweird.f32 %v2850
        %vm2920 = vweird.f32 %v2914
        %vm2921 = vmor %vm2919, %vm2920
        %v2922 = vsel %vm2921, %v2914, %v2918
        %v2923 = vand.u32 2147483647, %v2850
        %vm2924 = vcmp.eq.f32.partialorder %v2923, 8.507059e+37
        %v2925 = vand.u32 %v2850, 2147483648
        %v2926 = vor.u32 1.1754944e-38, %v2925
        %v2927 = vsel %vm2924, %v2926, %v2922
        %v2928 = vmul.f32 1.0, %v2927
        %v2929 = vrcp.pop %v2851
        %v2930 = vmul.f32 %v2851, %v2929
        %v2931 = vsub.f32 1.0, %v2930
        %v2932 = vmul.f32 %v2929, %v2931
        %v2933 = vadd.f32 %v2929, %v2932
        %vm2934 = vweird.f32 %v2851
        %vm2935 = vweird.f32 %v2929
        %vm2936 = vmor %vm2934, %vm2935
        %v2937 = vsel %vm2936, %v2929, %v2933
        %v2938 = vand.u32 2147483647, %v2851
        %vm2939 = vcmp.eq.f32.partialorder %v2938, 8.507059e+37
        %v2940 = vand.u32 %v2851, 2147483648
        %v2941 = vor.u32 1.1754944e-38, %v2940
        %v2942 = vsel %vm2939, %v2941, %v2937
        %v2943 = vmul.f32 1.0, %v2942
        %v2944 = vrcp.pop %v2852
        %v2945 = vmul.f32 %v2852, %v2944
        %v2946 = vsub.f32 1.0, %v2945
        %v2947 = vmul.f32 %v2944, %v2946
        %v2948 = vadd.f32 %v2944, %v2947
        %vm2949 = vweird.f32 %v2852
        %vm2950 = vweird.f32 %v2944
        %vm2951 = vmor %vm2949, %vm2950
        %v2952 = vsel %vm2951, %v2944, %v2948
        %v2953 = vand.u32 2147483647, %v2852
        %vm2954 = vcmp.eq.f32.partialorder %v2953, 8.507059e+37
        %v2955 = vand.u32 %v2852, 2147483648
        %v2956 = vor.u32 1.1754944e-38, %v2955
        %v2957 = vsel %vm2954, %v2956, %v2952
        %v2958 = vmul.f32 1.0, %v2957
        %v2959 = vrcp.pop %v2853
        %v2960 = vmul.f32 %v2853, %v2959
        %v2961 = vsub.f32 1.0, %v2960
        %v2962 = vmul.f32 %v2959, %v2961
        %v2963 = vadd.f32 %v2959, %v2962
        %vm2964 = vweird.f32 %v2853
        %vm2965 = vweird.f32 %v2959
        %vm2966 = vmor %vm2964, %vm2965
        %v2967 = vsel %vm2966, %v2959, %v2963
        %v2968 = vand.u32 2147483647, %v2853
        %vm2969 = vcmp.eq.f32.partialorder %v2968, 8.507059e+37
        %v2970 = vand.u32 %v2853, 2147483648
        %v2971 = vor.u32 1.1754944e-38, %v2970
        %v2972 = vsel %vm2969, %v2971, %v2967
        %v2973 = vmul.f32 1.0, %v2972
        %v2974 = vsub.f32 1.0, %v2868
        %v2975 = vsub.f32 1.0, %v2883
        %v2976 = vsub.f32 1.0, %v2898
        %v2977 = vsub.f32 1.0, %v2913
        %v2978 = vsub.f32 1.0, %v2928
        %v2979 = vsub.f32 1.0, %v2943
        %v2980 = vsub.f32 1.0, %v2958
        %v2981 = vsub.f32 1.0, %v2973
        %v2982 = vmul.f32 %v2868, %v2974
        %v2983 = vmul.f32 %v2883, %v2975
        %v2984 = vmul.f32 %v2898, %v2976
        %v2985 = vmul.f32 %v2913, %v2977
        %v2986 = vmul.f32 %v2928, %v2978
        %v2987 = vmul.f32 %v2943, %v2979
        %v2988 = vmul.f32 %v2958, %v2980
        %v2989 = vmul.f32 %v2973, %v2981
        %v2990 = vmul.f32 %v2868, 2.0
        %v2991 = vmul.f32 %v2883, 2.0
        %v2992 = vmul.f32 %v2898, 2.0
        %v2993 = vmul.f32 %v2913, 2.0
        %v2994 = vmul.f32 %v2928, 2.0
        %v2995 = vmul.f32 %v2943, 2.0
        %v2996 = vmul.f32 %v2958, 2.0
        %v2997 = vmul.f32 %v2973, 2.0
        %v2998 = vsub.f32 1.0, %v2990
        %v2999 = vsub.f32 1.0, %v2991
        %v3000 = vsub.f32 1.0, %v2992
        %v3001 = vsub.f32 1.0, %v2993
        %v3002 = vsub.f32 1.0, %v2994
        %v3003 = vsub.f32 1.0, %v2995
        %v3004 = vsub.f32 1.0, %v2996
        %v3005 = vsub.f32 1.0, %v2997
        %v3006 = vmul.f32 %v2998, %v2786
        %v3007 = vmul.f32 %v2999, %v2787
        %v3008 = vmul.f32 %v3000, %v2788
        %v3009 = vmul.f32 %v3001, %v2789
        %v3010 = vmul.f32 %v3002, %v2790
        %v3011 = vmul.f32 %v3003, %v2791
        %v3012 = vmul.f32 %v3004, %v2792
        %v3013 = vmul.f32 %v3005, %v2793
        %v3014 = vmul.f32 %v3006, %v2786
        %v3015 = vmul.f32 %v3007, %v2787
        %v3016 = vmul.f32 %v3008, %v2788
        %v3017 = vmul.f32 %v3009, %v2789
        %v3018 = vmul.f32 %v3010, %v2790
        %v3019 = vmul.f32 %v3011, %v2791
        %v3020 = vmul.f32 %v3012, %v2792
        %v3021 = vmul.f32 %v3013, %v2793
        %v3022 = vadd.f32 %v3014, %v2794
        %v3023 = vadd.f32 %v3015, %v2795
        %v3024 = vadd.f32 %v3016, %v2796
        %v3025 = vadd.f32 %v3017, %v2797
        %v3026 = vadd.f32 %v3018, %v2798
        %v3027 = vadd.f32 %v3019, %v2799
        %v3028 = vadd.f32 %v3020, %v2800
        %v3029 = vadd.f32 %v3021, %v2801
        %v3030 = vmul.f32 %v2982, %v2778
        %v3031 = vmul.f32 %v2983, %v2779
        %v3032 = vmul.f32 %v2984, %v2780
        %v3033 = vmul.f32 %v2985, %v2781
        %v3034 = vmul.f32 %v2986, %v2782
        %v3035 = vmul.f32 %v2987, %v2783
        %v3036 = vmul.f32 %v2988, %v2784
        %v3037 = vmul.f32 %v2989, %v2785
        %v3038 = vmul.f32 %v2982, %v2786
        %v3039 = vmul.f32 %v2983, %v2787
        %v3040 = vmul.f32 %v2984, %v2788
        %v3041 = vmul.f32 %v2985, %v2789
        %v3042 = vmul.f32 %v2986, %v2790
        %v3043 = vmul.f32 %v2987, %v2791
        %v3044 = vmul.f32 %v2988, %v2792
        %v3045 = vmul.f32 %v2989, %v2793
        %v3046 = vmul.f32 %v2982, %v3022
        %v3047 = vmul.f32 %v2983, %v3023
        %v3048 = vmul.f32 %v2984, %v3024
        %v3049 = vmul.f32 %v2985, %v3025
        %v3050 = vmul.f32 %v2986, %v3026
        %v3051 = vmul.f32 %v2987, %v3027
        %v3052 = vmul.f32 %v2988, %v3028
        %v3053 = vmul.f32 %v2989, %v3029
        %3054 = vst [vmem:[#allocation2] sm:$0xff] %v2868
        %3055 = vst [vmem:[#allocation2 + $0x8] sm:$0xff] %v2883
        %3056 = vst [vmem:[#allocation2 + $0x40] sm:$0xff] %v2898
        %3057 = vst [vmem:[#allocation2 + $0x48] sm:$0xff] %v2913
        %3058 = vst [vmem:[#allocation2 + $0x80] sm:$0xff] %v2928
        %3059 = vst [vmem:[#allocation2 + $0x88] sm:$0xff] %v2943
        %3060 = vst [vmem:[#allocation2 + $0xc0] sm:$0xff] %v2958
        %3061 = vst [vmem:[#allocation2 + $0xc8] sm:$0xff] %v2973
        %3062 = vst [vmem:[#allocation2 + $0x10] sm:$0xff] %v3030
        %3063 = vst [vmem:[#allocation2 + $0x18] sm:$0xff] %v3031
        %3064 = vst [vmem:[#allocation2 + $0x50] sm:$0xff] %v3032
        %3065 = vst [vmem:[#allocation2 + $0x58] sm:$0xff] %v3033
        %3066 = vst [vmem:[#allocation2 + $0x90] sm:$0xff] %v3034
        %3067 = vst [vmem:[#allocation2 + $0x98] sm:$0xff] %v3035
        %3068 = vst [vmem:[#allocation2 + $0xd0] sm:$0xff] %v3036
        %3069 = vst [vmem:[#allocation2 + $0xd8] sm:$0xff] %v3037
        %3070 = vst [vmem:[#allocation2 + $0x20] sm:$0xff] %v3038
        %3071 = vst [vmem:[#allocation2 + $0x28] sm:$0xff] %v3039
        %3072 = vst [vmem:[#allocation2 + $0x60] sm:$0xff] %v3040
        %3073 = vst [vmem:[#allocation2 + $0x68] sm:$0xff] %v3041
        %3074 = vst [vmem:[#allocation2 + $0xa0] sm:$0xff] %v3042
        %3075 = vst [vmem:[#allocation2 + $0xa8] sm:$0xff] %v3043
        %3076 = vst [vmem:[#allocation2 + $0xe0] sm:$0xff] %v3044
        %3077 = vst [vmem:[#allocation2 + $0xe8] sm:$0xff] %v3045
        %3078 = vst [vmem:[#allocation2 + $0x30] sm:$0xff] %v3046
        %3079 = vst [vmem:[#allocation2 + $0x38] sm:$0xff] %v3047
        %3080 = vst [vmem:[#allocation2 + $0x70] sm:$0xff] %v3048
        %3081 = vst [vmem:[#allocation2 + $0x78] sm:$0xff] %v3049
        %3082 = vst [vmem:[#allocation2 + $0xb0] sm:$0xff] %v3050
        %3083 = vst [vmem:[#allocation2 + $0xb8] sm:$0xff] %v3051
        %3084 = vst [vmem:[#allocation2 + $0xf0] sm:$0xff] %v3052
        %3085 = vst [vmem:[#allocation2 + $0xf8] sm:$0xff] %v3053
        %v3086 = vld [vmem:[#allocation2] sm:$0xff]
        %v3087 = vld [vmem:[#allocation2 + $0x8] sm:$0xff]
        %v3088 = vld [vmem:[#allocation2 + $0x10] sm:$0xff]
        %v3089 = vld [vmem:[#allocation2 + $0x18] sm:$0xff]
        %v3090 = vld [vmem:[#allocation2 + $0x20] sm:$0xff]
        %v3091 = vld [vmem:[#allocation2 + $0x28] sm:$0xff]
        %v3092 = vld [vmem:[#allocation2 + $0x30] sm:$0xff]
        %v3093 = vld [vmem:[#allocation2 + $0x38] sm:$0xff]
        %v3094 = vld [vmem:[#allocation2 + $0x40] sm:$0xff]
        %v3095 = vld [vmem:[#allocation2 + $0x48] sm:$0xff]
        %v3096 = vld [vmem:[#allocation2 + $0x50] sm:$0xff]
        %v3097 = vld [vmem:[#allocation2 + $0x58] sm:$0xff]
        %v3098 = vld [vmem:[#allocation2 + $0x60] sm:$0xff]
        %v3099 = vld [vmem:[#allocation2 + $0x68] sm:$0xff]
        %v3100 = vld [vmem:[#allocation2 + $0x70] sm:$0xff]
        %v3101 = vld [vmem:[#allocation2 + $0x78] sm:$0xff]
        %v3102 = vld [vmem:[#allocation2 + $0x80] sm:$0xff]
        %v3103 = vld [vmem:[#allocation2 + $0x88] sm:$0xff]
        %v3104 = vld [vmem:[#allocation2 + $0x90] sm:$0xff]
        %v3105 = vld [vmem:[#allocation2 + $0x98] sm:$0xff]
        %v3106 = vld [vmem:[#allocation2 + $0xa0] sm:$0xff]
        %v3107 = vld [vmem:[#allocation2 + $0xa8] sm:$0xff]
        %v3108 = vld [vmem:[#allocation2 + $0xb0] sm:$0xff]
        %v3109 = vld [vmem:[#allocation2 + $0xb8] sm:$0xff]
        %v3110 = vld [vmem:[#allocation2 + $0xc0] sm:$0xff]
        %v3111 = vld [vmem:[#allocation2 + $0xc8] sm:$0xff]
        %v3112 = vld [vmem:[#allocation2 + $0xd0] sm:$0xff]
        %v3113 = vld [vmem:[#allocation2 + $0xd8] sm:$0xff]
        %v3114 = vld [vmem:[#allocation2 + $0xe0] sm:$0xff]
        %v3115 = vld [vmem:[#allocation2 + $0xe8] sm:$0xff]
        %v3116 = vld [vmem:[#allocation2 + $0xf0] sm:$0xff]
        %v3117 = vld [vmem:[#allocation2 + $0xf8] sm:$0xff]
        %v3119 = vsel %vm749, %v2803, 0
        %v3122 = vsel %vm749, %v2804, 0
        %v3125 = vsel %vm749, %v2805, 0
        %v3128 = vsel %vm749, %v2806, 0
        %3130 = vmatpush.msra.mxu0 0.0
        %3131 = vmatpush.msra.mxu0 0.0
        %3132 = vmatpush.msra.mxu0 0.0
        %3133 = vmatpush.msra.mxu0 0.0
        %3134 = vmatpush.msra.mxu0 0.0
        %3135 = vmatpush.msra.mxu0 0.0
        %3136 = vmatpush.msra.mxu0 0.0
        %3137 = vmatpush.msra.mxu0 0.0
        %3138 = vmatpush.msra.mxu0 0.0
        %3139 = vmatpush.msra.mxu0 0.0
        %3140 = vmatpush.msra.mxu0 0.0
        %3141 = vmatpush.msra.mxu0 0.0
        %3142 = vmatpush.msra.mxu0 %v3110
        %3143 = vmatpush.msra.mxu0 %v3102
        %3144 = vmatpush.msra.mxu0 %v3094
        %3145 = vmatpush.msra.mxu0 %v3086
        %3146 = vmatmul.f32.gmra.mxu0 %v3119
        %v3147 = vpop.f32.mrf.mxu0
        %v3148 = vadd.f32 0.0, %v3147
        %3149 = vmatmul.f32.gmra.mxu0 %v3122
        %v3150 = vpop.f32.mrf.mxu0
        %v3151 = vadd.f32 0.0, %v3150
        %3152 = vmatmul.f32.gmra.mxu0 %v3125
        %v3153 = vpop.f32.mrf.mxu0
        %v3154 = vadd.f32 0.0, %v3153
        %3155 = vmatmul.f32.gmra.mxu0 %v3128
        %v3156 = vpop.f32.mrf.mxu0
        %v3157 = vadd.f32 0.0, %v3156
        %3158 = vdwg.mxu0
        %3159 = vmatpush.msra.mxu0 0.0
        %3160 = vmatpush.msra.mxu0 0.0
        %3161 = vmatpush.msra.mxu0 0.0
        %3162 = vmatpush.msra.mxu0 0.0
        %3163 = vmatpush.msra.mxu0 0.0
        %3164 = vmatpush.msra.mxu0 0.0
        %3165 = vmatpush.msra.mxu0 0.0
        %3166 = vmatpush.msra.mxu0 0.0
        %3167 = vmatpush.msra.mxu0 0.0
        %3168 = vmatpush.msra.mxu0 0.0
        %3169 = vmatpush.msra.mxu0 0.0
        %3170 = vmatpush.msra.mxu0 0.0
        %3171 = vmatpush.msra.mxu0 %v3111
        %3172 = vmatpush.msra.mxu0 %v3103
        %3173 = vmatpush.msra.mxu0 %v3095
        %3174 = vmatpush.msra.mxu0 %v3087
        %3175 = vmatmul.f32.gmra.mxu0 %v3119
        %v3176 = vpop.f32.mrf.mxu0
        %v3177 = vadd.f32 0.0, %v3176
        %3178 = vmatmul.f32.gmra.mxu0 %v3122
        %v3179 = vpop.f32.mrf.mxu0
        %v3180 = vadd.f32 0.0, %v3179
        %3181 = vmatmul.f32.gmra.mxu0 %v3125
        %v3182 = vpop.f32.mrf.mxu0
        %v3183 = vadd.f32 0.0, %v3182
        %3184 = vmatmul.f32.gmra.mxu0 %v3128
        %v3185 = vpop.f32.mrf.mxu0
        %v3186 = vadd.f32 0.0, %v3185
        %3187 = vdwg.mxu0
        %3188 = vmatpush.msra.mxu0 0.0
        %3189 = vmatpush.msra.mxu0 0.0
        %3190 = vmatpush.msra.mxu0 0.0
        %3191 = vmatpush.msra.mxu0 0.0
        %3192 = vmatpush.msra.mxu0 0.0
        %3193 = vmatpush.msra.mxu0 0.0
        %3194 = vmatpush.msra.mxu0 0.0
        %3195 = vmatpush.msra.mxu0 0.0
        %3196 = vmatpush.msra.mxu0 0.0
        %3197 = vmatpush.msra.mxu0 0.0
        %3198 = vmatpush.msra.mxu0 0.0
        %3199 = vmatpush.msra.mxu0 0.0
        %3200 = vmatpush.msra.mxu0 %v3112
        %3201 = vmatpush.msra.mxu0 %v3104
        %3202 = vmatpush.msra.mxu0 %v3096
        %3203 = vmatpush.msra.mxu0 %v3088
        %3204 = vmatmul.f32.gmra.mxu0 %v3119
        %v3205 = vpop.f32.mrf.mxu0
        %v3206 = vadd.f32 0.0, %v3205
        %3207 = vmatmul.f32.gmra.mxu0 %v3122
        %v3208 = vpop.f32.mrf.mxu0
        %v3209 = vadd.f32 0.0, %v3208
        %3210 = vmatmul.f32.gmra.mxu0 %v3125
        %v3211 = vpop.f32.mrf.mxu0
        %v3212 = vadd.f32 0.0, %v3211
        %3213 = vmatmul.f32.gmra.mxu0 %v3128
        %v3214 = vpop.f32.mrf.mxu0
        %v3215 = vadd.f32 0.0, %v3214
        %3216 = vdwg.mxu0
        %3217 = vmatpush.msra.mxu0 0.0
        %3218 = vmatpush.msra.mxu0 0.0
        %3219 = vmatpush.msra.mxu0 0.0
        %3220 = vmatpush.msra.mxu0 0.0
        %3221 = vmatpush.msra.mxu0 0.0
        %3222 = vmatpush.msra.mxu0 0.0
        %3223 = vmatpush.msra.mxu0 0.0
        %3224 = vmatpush.msra.mxu0 0.0
        %3225 = vmatpush.msra.mxu0 0.0
        %3226 = vmatpush.msra.mxu0 0.0
        %3227 = vmatpush.msra.mxu0 0.0
        %3228 = vmatpush.msra.mxu0 0.0
        %3229 = vmatpush.msra.mxu0 %v3113
        %3230 = vmatpush.msra.mxu0 %v3105
        %3231 = vmatpush.msra.mxu0 %v3097
        %3232 = vmatpush.msra.mxu0 %v3089
        %3233 = vmatmul.f32.gmra.mxu0 %v3119
        %v3234 = vpop.f32.mrf.mxu0
        %v3235 = vadd.f32 0.0, %v3234
        %3236 = vmatmul.f32.gmra.mxu0 %v3122
        %v3237 = vpop.f32.mrf.mxu0
        %v3238 = vadd.f32 0.0, %v3237
        %3239 = vmatmul.f32.gmra.mxu0 %v3125
        %v3240 = vpop.f32.mrf.mxu0
        %v3241 = vadd.f32 0.0, %v3240
        %3242 = vmatmul.f32.gmra.mxu0 %v3128
        %v3243 = vpop.f32.mrf.mxu0
        %v3244 = vadd.f32 0.0, %v3243
        %3245 = vdwg.mxu0
        %3246 = vmatpush.msra.mxu0 0.0
        %3247 = vmatpush.msra.mxu0 0.0
        %3248 = vmatpush.msra.mxu0 0.0
        %3249 = vmatpush.msra.mxu0 0.0
        %3250 = vmatpush.msra.mxu0 0.0
        %3251 = vmatpush.msra.mxu0 0.0
        %3252 = vmatpush.msra.mxu0 0.0
        %3253 = vmatpush.msra.mxu0 0.0
        %3254 = vmatpush.msra.mxu0 0.0
        %3255 = vmatpush.msra.mxu0 0.0
        %3256 = vmatpush.msra.mxu0 0.0
        %3257 = vmatpush.msra.mxu0 0.0
        %3258 = vmatpush.msra.mxu0 %v3114
        %3259 = vmatpush.msra.mxu0 %v3106
        %3260 = vmatpush.msra.mxu0 %v3098
        %3261 = vmatpush.msra.mxu0 %v3090
        %3262 = vmatmul.f32.gmra.mxu0 %v3119
        %v3263 = vpop.f32.mrf.mxu0
        %v3264 = vadd.f32 0.0, %v3263
        %3265 = vmatmul.f32.gmra.mxu0 %v3122
        %v3266 = vpop.f32.mrf.mxu0
        %v3267 = vadd.f32 0.0, %v3266
        %3268 = vmatmul.f32.gmra.mxu0 %v3125
        %v3269 = vpop.f32.mrf.mxu0
        %v3270 = vadd.f32 0.0, %v3269
        %3271 = vmatmul.f32.gmra.mxu0 %v3128
        %v3272 = vpop.f32.mrf.mxu0
        %v3273 = vadd.f32 0.0, %v3272
        %3274 = vdwg.mxu0
        %3275 = vmatpush.msra.mxu0 0.0
        %3276 = vmatpush.msra.mxu0 0.0
        %3277 = vmatpush.msra.mxu0 0.0
        %3278 = vmatpush.msra.mxu0 0.0
        %3279 = vmatpush.msra.mxu0 0.0
        %3280 = vmatpush.msra.mxu0 0.0
        %3281 = vmatpush.msra.mxu0 0.0
        %3282 = vmatpush.msra.mxu0 0.0
        %3283 = vmatpush.msra.mxu0 0.0
        %3284 = vmatpush.msra.mxu0 0.0
        %3285 = vmatpush.msra.mxu0 0.0
        %3286 = vmatpush.msra.mxu0 0.0
        %3287 = vmatpush.msra.mxu0 %v3115
        %3288 = vmatpush.msra.mxu0 %v3107
        %3289 = vmatpush.msra.mxu0 %v3099
        %3290 = vmatpush.msra.mxu0 %v3091
        %3291 = vmatmul.f32.gmra.mxu0 %v3119
        %v3292 = vpop.f32.mrf.mxu0
        %v3293 = vadd.f32 0.0, %v3292
        %3294 = vmatmul.f32.gmra.mxu0 %v3122
        %v3295 = vpop.f32.mrf.mxu0
        %v3296 = vadd.f32 0.0, %v3295
        %3297 = vmatmul.f32.gmra.mxu0 %v3125
        %v3298 = vpop.f32.mrf.mxu0
        %v3299 = vadd.f32 0.0, %v3298
        %3300 = vmatmul.f32.gmra.mxu0 %v3128
        %v3301 = vpop.f32.mrf.mxu0
        %v3302 = vadd.f32 0.0, %v3301
        %3303 = vdwg.mxu0
        %3304 = vmatpush.msra.mxu0 0.0
        %3305 = vmatpush.msra.mxu0 0.0
        %3306 = vmatpush.msra.mxu0 0.0
        %3307 = vmatpush.msra.mxu0 0.0
        %3308 = vmatpush.msra.mxu0 0.0
        %3309 = vmatpush.msra.mxu0 0.0
        %3310 = vmatpush.msra.mxu0 0.0
        %3311 = vmatpush.msra.mxu0 0.0
        %3312 = vmatpush.msra.mxu0 0.0
        %3313 = vmatpush.msra.mxu0 0.0
        %3314 = vmatpush.msra.mxu0 0.0
        %3315 = vmatpush.msra.mxu0 0.0
        %3316 = vmatpush.msra.mxu0 %v3116
        %3317 = vmatpush.msra.mxu0 %v3108
        %3318 = vmatpush.msra.mxu0 %v3100
        %3319 = vmatpush.msra.mxu0 %v3092
        %3320 = vmatmul.f32.gmra.mxu0 %v3119
        %v3321 = vpop.f32.mrf.mxu0
        %v3322 = vadd.f32 0.0, %v3321
        %3323 = vmatmul.f32.gmra.mxu0 %v3122
        %v3324 = vpop.f32.mrf.mxu0
        %v3325 = vadd.f32 0.0, %v3324
        %3326 = vmatmul.f32.gmra.mxu0 %v3125
        %v3327 = vpop.f32.mrf.mxu0
        %v3328 = vadd.f32 0.0, %v3327
        %3329 = vmatmul.f32.gmra.mxu0 %v3128
        %v3330 = vpop.f32.mrf.mxu0
        %v3331 = vadd.f32 0.0, %v3330
        %3332 = vdwg.mxu0
        %3333 = vmatpush.msra.mxu0 0.0
        %3334 = vmatpush.msra.mxu0 0.0
        %3335 = vmatpush.msra.mxu0 0.0
        %3336 = vmatpush.msra.mxu0 0.0
        %3337 = vmatpush.msra.mxu0 0.0
        %3338 = vmatpush.msra.mxu0 0.0
        %3339 = vmatpush.msra.mxu0 0.0
        %3340 = vmatpush.msra.mxu0 0.0
        %3341 = vmatpush.msra.mxu0 0.0
        %3342 = vmatpush.msra.mxu0 0.0
        %3343 = vmatpush.msra.mxu0 0.0
        %3344 = vmatpush.msra.mxu0 0.0
        %3345 = vmatpush.msra.mxu0 %v3117
        %3346 = vmatpush.msra.mxu0 %v3109
        %3347 = vmatpush.msra.mxu0 %v3101
        %3348 = vmatpush.msra.mxu0 %v3093
        %3349 = vmatmul.f32.gmra.mxu0 %v3119
        %v3350 = vpop.f32.mrf.mxu0
        %v3351 = vadd.f32 0.0, %v3350
        %3352 = vmatmul.f32.gmra.mxu0 %v3122
        %v3353 = vpop.f32.mrf.mxu0
        %v3354 = vadd.f32 0.0, %v3353
        %3355 = vmatmul.f32.gmra.mxu0 %v3125
        %v3356 = vpop.f32.mrf.mxu0
        %v3357 = vadd.f32 0.0, %v3356
        %3358 = vmatmul.f32.gmra.mxu0 %v3128
        %v3359 = vpop.f32.mrf.mxu0
        %v3360 = vadd.f32 0.0, %v3359
        %3361 = vdwg.mxu0
        %3363 = vset.pattern.permute.xlu0 0
        %3364 = vperm.xlu0 %3363, %v2808
        %v3365 = vpop.permute.xlu0 %3364
        %3368 = vset.pattern.permute.xlu0 0
        %3369 = vperm.xlu0 %3368, %v2809
        %v3370 = vpop.permute.xlu0 %3369
        %3373 = vset.pattern.permute.xlu0 0
        %3374 = vperm.xlu0 %3373, %v2810
        %v3375 = vpop.permute.xlu0 %3374
        %3378 = vset.pattern.permute.xlu0 0
        %3379 = vperm.xlu0 %3378, %v2811
        %v3380 = vpop.permute.xlu0 %3379
        %v3382 = vadd.f32 %v3148, %v3365
        %v3383 = vadd.f32 %v3177, %v3365
        %v3384 = vadd.f32 %v3151, %v3370
        %v3385 = vadd.f32 %v3180, %v3370
        %v3386 = vadd.f32 %v3154, %v3375
        %v3387 = vadd.f32 %v3183, %v3375
        %v3388 = vadd.f32 %v3157, %v3380
        %v3389 = vadd.f32 %v3186, %v3380
        %v3390 = vxor.u32 %v3382, 2147483648
        %v3391 = vxor.u32 %v3383, 2147483648
        %v3392 = vxor.u32 %v3384, 2147483648
        %v3393 = vxor.u32 %v3385, 2147483648
        %v3394 = vxor.u32 %v3386, 2147483648
        %v3395 = vxor.u32 %v3387, 2147483648
        %v3396 = vxor.u32 %v3388, 2147483648
        %v3397 = vxor.u32 %v3389, 2147483648
        %v3398 = vmul.f32 %v3390, 1.442695
        %v3399 = vpow.pop %v3398
        %v3400 = vmul.f32 %v3391, 1.442695
        %v3401 = vpow.pop %v3400
        %v3402 = vmul.f32 %v3392, 1.442695
        %v3403 = vpow.pop %v3402
        %v3404 = vmul.f32 %v3393, 1.442695
        %v3405 = vpow.pop %v3404
        %v3406 = vmul.f32 %v3394, 1.442695
        %v3407 = vpow.pop %v3406
        %v3408 = vmul.f32 %v3395, 1.442695
        %v3409 = vpow.pop %v3408
        %v3410 = vmul.f32 %v3396, 1.442695
        %v3411 = vpow.pop %v3410
        %v3412 = vmul.f32 %v3397, 1.442695
        %v3413 = vpow.pop %v3412
        %v3414 = vadd.f32 %v3399, 1.0
        %v3415 = vadd.f32 %v3401, 1.0
        %v3416 = vadd.f32 %v3403, 1.0
        %v3417 = vadd.f32 %v3405, 1.0
        %v3418 = vadd.f32 %v3407, 1.0
        %v3419 = vadd.f32 %v3409, 1.0
        %v3420 = vadd.f32 %v3411, 1.0
        %v3421 = vadd.f32 %v3413, 1.0
        %v3422 = vrcp.pop %v3414
        %v3423 = vmul.f32 %v3414, %v3422
        %v3424 = vsub.f32 1.0, %v3423
        %v3425 = vmul.f32 %v3422, %v3424
        %v3426 = vadd.f32 %v3422, %v3425
        %vm3427 = vweird.f32 %v3414
        %vm3428 = vweird.f32 %v3422
        %vm3429 = vmor %vm3427, %vm3428
        %v3430 = vsel %vm3429, %v3422, %v3426
        %v3431 = vand.u32 2147483647, %v3414
        %vm3432 = vcmp.eq.f32.partialorder %v3431, 8.507059e+37
        %v3433 = vand.u32 %v3414, 2147483648
        %v3434 = vor.u32 1.1754944e-38, %v3433
        %v3435 = vsel %vm3432, %v3434, %v3430
        %v3436 = vmul.f32 1.0, %v3435
        %v3437 = vrcp.pop %v3415
        %v3438 = vmul.f32 %v3415, %v3437
        %v3439 = vsub.f32 1.0, %v3438
        %v3440 = vmul.f32 %v3437, %v3439
        %v3441 = vadd.f32 %v3437, %v3440
        %vm3442 = vweird.f32 %v3415
        %vm3443 = vweird.f32 %v3437
        %vm3444 = vmor %vm3442, %vm3443
        %v3445 = vsel %vm3444, %v3437, %v3441
        %v3446 = vand.u32 2147483647, %v3415
        %vm3447 = vcmp.eq.f32.partialorder %v3446, 8.507059e+37
        %v3448 = vand.u32 %v3415, 2147483648
        %v3449 = vor.u32 1.1754944e-38, %v3448
        %v3450 = vsel %vm3447, %v3449, %v3445
        %v3451 = vmul.f32 1.0, %v3450
        %v3452 = vrcp.pop %v3416
        %v3453 = vmul.f32 %v3416, %v3452
        %v3454 = vsub.f32 1.0, %v3453
        %v3455 = vmul.f32 %v3452, %v3454
        %v3456 = vadd.f32 %v3452, %v3455
        %vm3457 = vweird.f32 %v3416
        %vm3458 = vweird.f32 %v3452
        %vm3459 = vmor %vm3457, %vm3458
        %v3460 = vsel %vm3459, %v3452, %v3456
        %v3461 = vand.u32 2147483647, %v3416
        %vm3462 = vcmp.eq.f32.partialorder %v3461, 8.507059e+37
        %v3463 = vand.u32 %v3416, 2147483648
        %v3464 = vor.u32 1.1754944e-38, %v3463
        %v3465 = vsel %vm3462, %v3464, %v3460
        %v3466 = vmul.f32 1.0, %v3465
        %v3467 = vrcp.pop %v3417
        %v3468 = vmul.f32 %v3417, %v3467
        %v3469 = vsub.f32 1.0, %v3468
        %v3470 = vmul.f32 %v3467, %v3469
        %v3471 = vadd.f32 %v3467, %v3470
        %vm3472 = vweird.f32 %v3417
        %vm3473 = vweird.f32 %v3467
        %vm3474 = vmor %vm3472, %vm3473
        %v3475 = vsel %vm3474, %v3467, %v3471
        %v3476 = vand.u32 2147483647, %v3417
        %vm3477 = vcmp.eq.f32.partialorder %v3476, 8.507059e+37
        %v3478 = vand.u32 %v3417, 2147483648
        %v3479 = vor.u32 1.1754944e-38, %v3478
        %v3480 = vsel %vm3477, %v3479, %v3475
        %v3481 = vmul.f32 1.0, %v3480
        %v3482 = vrcp.pop %v3418
        %v3483 = vmul.f32 %v3418, %v3482
        %v3484 = vsub.f32 1.0, %v3483
        %v3485 = vmul.f32 %v3482, %v3484
        %v3486 = vadd.f32 %v3482, %v3485
        %vm3487 = vweird.f32 %v3418
        %vm3488 = vweird.f32 %v3482
        %vm3489 = vmor %vm3487, %vm3488
        %v3490 = vsel %vm3489, %v3482, %v3486
        %v3491 = vand.u32 2147483647, %v3418
        %vm3492 = vcmp.eq.f32.partialorder %v3491, 8.507059e+37
        %v3493 = vand.u32 %v3418, 2147483648
        %v3494 = vor.u32 1.1754944e-38, %v3493
        %v3495 = vsel %vm3492, %v3494, %v3490
        %v3496 = vmul.f32 1.0, %v3495
        %v3497 = vrcp.pop %v3419
        %v3498 = vmul.f32 %v3419, %v3497
        %v3499 = vsub.f32 1.0, %v3498
        %v3500 = vmul.f32 %v3497, %v3499
        %v3501 = vadd.f32 %v3497, %v3500
        %vm3502 = vweird.f32 %v3419
        %vm3503 = vweird.f32 %v3497
        %vm3504 = vmor %vm3502, %vm3503
        %v3505 = vsel %vm3504, %v3497, %v3501
        %v3506 = vand.u32 2147483647, %v3419
        %vm3507 = vcmp.eq.f32.partialorder %v3506, 8.507059e+37
        %v3508 = vand.u32 %v3419, 2147483648
        %v3509 = vor.u32 1.1754944e-38, %v3508
        %v3510 = vsel %vm3507, %v3509, %v3505
        %v3511 = vmul.f32 1.0, %v3510
        %v3512 = vrcp.pop %v3420
        %v3513 = vmul.f32 %v3420, %v3512
        %v3514 = vsub.f32 1.0, %v3513
        %v3515 = vmul.f32 %v3512, %v3514
        %v3516 = vadd.f32 %v3512, %v3515
        %vm3517 = vweird.f32 %v3420
        %vm3518 = vweird.f32 %v3512
        %vm3519 = vmor %vm3517, %vm3518
        %v3520 = vsel %vm3519, %v3512, %v3516
        %v3521 = vand.u32 2147483647, %v3420
        %vm3522 = vcmp.eq.f32.partialorder %v3521, 8.507059e+37
        %v3523 = vand.u32 %v3420, 2147483648
        %v3524 = vor.u32 1.1754944e-38, %v3523
        %v3525 = vsel %vm3522, %v3524, %v3520
        %v3526 = vmul.f32 1.0, %v3525
        %v3527 = vrcp.pop %v3421
        %v3528 = vmul.f32 %v3421, %v3527
        %v3529 = vsub.f32 1.0, %v3528
        %v3530 = vmul.f32 %v3527, %v3529
        %v3531 = vadd.f32 %v3527, %v3530
        %vm3532 = vweird.f32 %v3421
        %vm3533 = vweird.f32 %v3527
        %vm3534 = vmor %vm3532, %vm3533
        %v3535 = vsel %vm3534, %v3527, %v3531
        %v3536 = vand.u32 2147483647, %v3421
        %vm3537 = vcmp.eq.f32.partialorder %v3536, 8.507059e+37
        %v3538 = vand.u32 %v3421, 2147483648
        %v3539 = vor.u32 1.1754944e-38, %v3538
        %v3540 = vsel %vm3537, %v3539, %v3535
        %v3541 = vmul.f32 1.0, %v3540
        %v3542 = vsub.f32 1.0, %v3436
        %v3543 = vsub.f32 1.0, %v3451
        %v3544 = vsub.f32 1.0, %v3466
        %v3545 = vsub.f32 1.0, %v3481
        %v3546 = vsub.f32 1.0, %v3496
        %v3547 = vsub.f32 1.0, %v3511
        %v3548 = vsub.f32 1.0, %v3526
        %v3549 = vsub.f32 1.0, %v3541
        %v3550 = vmul.f32 %v3436, %v3542
        %v3551 = vmul.f32 %v3451, %v3543
        %v3552 = vmul.f32 %v3466, %v3544
        %v3553 = vmul.f32 %v3481, %v3545
        %v3554 = vmul.f32 %v3496, %v3546
        %v3555 = vmul.f32 %v3511, %v3547
        %v3556 = vmul.f32 %v3526, %v3548
        %v3557 = vmul.f32 %v3541, %v3549
        %v3558 = vmul.f32 %v3436, 2.0
        %v3559 = vmul.f32 %v3451, 2.0
        %v3560 = vmul.f32 %v3466, 2.0
        %v3561 = vmul.f32 %v3481, 2.0
        %v3562 = vmul.f32 %v3496, 2.0
        %v3563 = vmul.f32 %v3511, 2.0
        %v3564 = vmul.f32 %v3526, 2.0
        %v3565 = vmul.f32 %v3541, 2.0
        %v3566 = vsub.f32 1.0, %v3558
        %v3567 = vsub.f32 1.0, %v3559
        %v3568 = vsub.f32 1.0, %v3560
        %v3569 = vsub.f32 1.0, %v3561
        %v3570 = vsub.f32 1.0, %v3562
        %v3571 = vsub.f32 1.0, %v3563
        %v3572 = vsub.f32 1.0, %v3564
        %v3573 = vsub.f32 1.0, %v3565
        %v3574 = vmul.f32 %v3566, %v3264
        %v3575 = vmul.f32 %v3567, %v3293
        %v3576 = vmul.f32 %v3568, %v3267
        %v3577 = vmul.f32 %v3569, %v3296
        %v3578 = vmul.f32 %v3570, %v3270
        %v3579 = vmul.f32 %v3571, %v3299
        %v3580 = vmul.f32 %v3572, %v3273
        %v3581 = vmul.f32 %v3573, %v3302
        %v3582 = vmul.f32 %v3574, %v3264
        %v3583 = vmul.f32 %v3575, %v3293
        %v3584 = vmul.f32 %v3576, %v3267
        %v3585 = vmul.f32 %v3577, %v3296
        %v3586 = vmul.f32 %v3578, %v3270
        %v3587 = vmul.f32 %v3579, %v3299
        %v3588 = vmul.f32 %v3580, %v3273
        %v3589 = vmul.f32 %v3581, %v3302
        %v3590 = vadd.f32 %v3582, %v3322
        %v3591 = vadd.f32 %v3583, %v3351
        %v3592 = vadd.f32 %v3584, %v3325
        %v3593 = vadd.f32 %v3585, %v3354
        %v3594 = vadd.f32 %v3586, %v3328
        %v3595 = vadd.f32 %v3587, %v3357
        %v3596 = vadd.f32 %v3588, %v3331
        %v3597 = vadd.f32 %v3589, %v3360
        %v3598 = vmul.f32 %v3550, %v3206
        %v3599 = vmul.f32 %v3551, %v3235
        %v3600 = vmul.f32 %v3552, %v3209
        %v3601 = vmul.f32 %v3553, %v3238
        %v3602 = vmul.f32 %v3554, %v3212
        %v3603 = vmul.f32 %v3555, %v3241
        %v3604 = vmul.f32 %v3556, %v3215
        %v3605 = vmul.f32 %v3557, %v3244
        %v3606 = vmul.f32 %v3550, %v3264
        %v3607 = vmul.f32 %v3551, %v3293
        %v3608 = vmul.f32 %v3552, %v3267
        %v3609 = vmul.f32 %v3553, %v3296
        %v3610 = vmul.f32 %v3554, %v3270
        %v3611 = vmul.f32 %v3555, %v3299
        %v3612 = vmul.f32 %v3556, %v3273
        %v3613 = vmul.f32 %v3557, %v3302
        %v3614 = vmul.f32 %v3550, %v3590
        %v3615 = vmul.f32 %v3551, %v3591
        %v3616 = vmul.f32 %v3552, %v3592
        %v3617 = vmul.f32 %v3553, %v3593
        %v3618 = vmul.f32 %v3554, %v3594
        %v3619 = vmul.f32 %v3555, %v3595
        %v3620 = vmul.f32 %v3556, %v3596
        %v3621 = vmul.f32 %v3557, %v3597
        %3622 = vst [vmem:[#allocation2] sm:$0xff] %v3436
        %3623 = vst [vmem:[#allocation2 + $0x8] sm:$0xff] %v3451
        %3624 = vst [vmem:[#allocation2 + $0x40] sm:$0xff] %v3466
        %3625 = vst [vmem:[#allocation2 + $0x48] sm:$0xff] %v3481
        %3626 = vst [vmem:[#allocation2 + $0x80] sm:$0xff] %v3496
        %3627 = vst [vmem:[#allocation2 + $0x88] sm:$0xff] %v3511
        %3628 = vst [vmem:[#allocation2 + $0xc0] sm:$0xff] %v3526
        %3629 = vst [vmem:[#allocation2 + $0xc8] sm:$0xff] %v3541
        %3630 = vst [vmem:[#allocation2 + $0x10] sm:$0xff] %v3598
        %3631 = vst [vmem:[#allocation2 + $0x18] sm:$0xff] %v3599
        %3632 = vst [vmem:[#allocation2 + $0x50] sm:$0xff] %v3600
        %3633 = vst [vmem:[#allocation2 + $0x58] sm:$0xff] %v3601
        %3634 = vst [vmem:[#allocation2 + $0x90] sm:$0xff] %v3602
        %3635 = vst [vmem:[#allocation2 + $0x98] sm:$0xff] %v3603
        %3636 = vst [vmem:[#allocation2 + $0xd0] sm:$0xff] %v3604
        %3637 = vst [vmem:[#allocation2 + $0xd8] sm:$0xff] %v3605
        %3638 = vst [vmem:[#allocation2 + $0x20] sm:$0xff] %v3606
        %3639 = vst [vmem:[#allocation2 + $0x28] sm:$0xff] %v3607
        %3640 = vst [vmem:[#allocation2 + $0x60] sm:$0xff] %v3608
        %3641 = vst [vmem:[#allocation2 + $0x68] sm:$0xff] %v3609
        %3642 = vst [vmem:[#allocation2 + $0xa0] sm:$0xff] %v3610
        %3643 = vst [vmem:[#allocation2 + $0xa8] sm:$0xff] %v3611
        %3644 = vst [vmem:[#allocation2 + $0xe0] sm:$0xff] %v3612
        %3645 = vst [vmem:[#allocation2 + $0xe8] sm:$0xff] %v3613
        %3646 = vst [vmem:[#allocation2 + $0x30] sm:$0xff] %v3614
        %3647 = vst [vmem:[#allocation2 + $0x38] sm:$0xff] %v3615
        %3648 = vst [vmem:[#allocation2 + $0x70] sm:$0xff] %v3616
        %3649 = vst [vmem:[#allocation2 + $0x78] sm:$0xff] %v3617
        %3650 = vst [vmem:[#allocation2 + $0xb0] sm:$0xff] %v3618
        %3651 = vst [vmem:[#allocation2 + $0xb8] sm:$0xff] %v3619
        %3652 = vst [vmem:[#allocation2 + $0xf0] sm:$0xff] %v3620
        %3653 = vst [vmem:[#allocation2 + $0xf8] sm:$0xff] %v3621
        %v3654 = vld [vmem:[#allocation2] sm:$0xff]
        %v3655 = vld [vmem:[#allocation2 + $0x8] sm:$0xff]
        %v3656 = vld [vmem:[#allocation2 + $0x10] sm:$0xff]
        %v3657 = vld [vmem:[#allocation2 + $0x18] sm:$0xff]
        %v3658 = vld [vmem:[#allocation2 + $0x20] sm:$0xff]
        %v3659 = vld [vmem:[#allocation2 + $0x28] sm:$0xff]
        %v3660 = vld [vmem:[#allocation2 + $0x30] sm:$0xff]
        %v3661 = vld [vmem:[#allocation2 + $0x38] sm:$0xff]
        %v3662 = vld [vmem:[#allocation2 + $0x40] sm:$0xff]
        %v3663 = vld [vmem:[#allocation2 + $0x48] sm:$0xff]
        %v3664 = vld [vmem:[#allocation2 + $0x50] sm:$0xff]
        %v3665 = vld [vmem:[#allocation2 + $0x58] sm:$0xff]
        %v3666 = vld [vmem:[#allocation2 + $0x60] sm:$0xff]
        %v3667 = vld [vmem:[#allocation2 + $0x68] sm:$0xff]
        %v3668 = vld [vmem:[#allocation2 + $0x70] sm:$0xff]
        %v3669 = vld [vmem:[#allocation2 + $0x78] sm:$0xff]
        %v3670 = vld [vmem:[#allocation2 + $0x80] sm:$0xff]
        %v3671 = vld [vmem:[#allocation2 + $0x88] sm:$0xff]
        %v3672 = vld [vmem:[#allocation2 + $0x90] sm:$0xff]
        %v3673 = vld [vmem:[#allocation2 + $0x98] sm:$0xff]
        %v3674 = vld [vmem:[#allocation2 + $0xa0] sm:$0xff]
        %v3675 = vld [vmem:[#allocation2 + $0xa8] sm:$0xff]
        %v3676 = vld [vmem:[#allocation2 + $0xb0] sm:$0xff]
        %v3677 = vld [vmem:[#allocation2 + $0xb8] sm:$0xff]
        %v3678 = vld [vmem:[#allocation2 + $0xc0] sm:$0xff]
        %v3679 = vld [vmem:[#allocation2 + $0xc8] sm:$0xff]
        %v3680 = vld [vmem:[#allocation2 + $0xd0] sm:$0xff]
        %v3681 = vld [vmem:[#allocation2 + $0xd8] sm:$0xff]
        %v3682 = vld [vmem:[#allocation2 + $0xe0] sm:$0xff]
        %v3683 = vld [vmem:[#allocation2 + $0xe8] sm:$0xff]
        %v3684 = vld [vmem:[#allocation2 + $0xf0] sm:$0xff]
        %v3685 = vld [vmem:[#allocation2 + $0xf8] sm:$0xff]
        %v3687 = vsel %vm749, %v2813, 0
        %v3690 = vsel %vm749, %v2814, 0
        %v3693 = vsel %vm749, %v2815, 0
        %v3696 = vsel %vm749, %v2816, 0
        %3698 = vmatpush.msra.mxu0 0.0
        %3699 = vmatpush.msra.mxu0 0.0
        %3700 = vmatpush.msra.mxu0 0.0
        %3701 = vmatpush.msra.mxu0 0.0
        %3702 = vmatpush.msra.mxu0 0.0
        %3703 = vmatpush.msra.mxu0 0.0
        %3704 = vmatpush.msra.mxu0 0.0
        %3705 = vmatpush.msra.mxu0 0.0
        %3706 = vmatpush.msra.mxu0 0.0
        %3707 = vmatpush.msra.mxu0 0.0
        %3708 = vmatpush.msra.mxu0 0.0
        %3709 = vmatpush.msra.mxu0 0.0
        %3710 = vmatpush.msra.mxu0 %v3678
        %3711 = vmatpush.msra.mxu0 %v3670
        %3712 = vmatpush.msra.mxu0 %v3662
        %3713 = vmatpush.msra.mxu0 %v3654
        %3714 = vmatmul.f32.gmra.mxu0 %v3687
        %v3715 = vpop.f32.mrf.mxu0
        %v3716 = vadd.f32 0.0, %v3715
        %3717 = vmatmul.f32.gmra.mxu0 %v3690
        %v3718 = vpop.f32.mrf.mxu0
        %v3719 = vadd.f32 0.0, %v3718
        %3720 = vmatmul.f32.gmra.mxu0 %v3693
        %v3721 = vpop.f32.mrf.mxu0
        %v3722 = vadd.f32 0.0, %v3721
        %3723 = vmatmul.f32.gmra.mxu0 %v3696
        %v3724 = vpop.f32.mrf.mxu0
        %v3725 = vadd.f32 0.0, %v3724
        %3726 = vdwg.mxu0
        %3727 = vmatpush.msra.mxu0 0.0
        %3728 = vmatpush.msra.mxu0 0.0
        %3729 = vmatpush.msra.mxu0 0.0
        %3730 = vmatpush.msra.mxu0 0.0
        %3731 = vmatpush.msra.mxu0 0.0
        %3732 = vmatpush.msra.mxu0 0.0
        %3733 = vmatpush.msra.mxu0 0.0
        %3734 = vmatpush.msra.mxu0 0.0
        %3735 = vmatpush.msra.mxu0 0.0
        %3736 = vmatpush.msra.mxu0 0.0
        %3737 = vmatpush.msra.mxu0 0.0
        %3738 = vmatpush.msra.mxu0 0.0
        %3739 = vmatpush.msra.mxu0 %v3679
        %3740 = vmatpush.msra.mxu0 %v3671
        %3741 = vmatpush.msra.mxu0 %v3663
        %3742 = vmatpush.msra.mxu0 %v3655
        %3743 = vmatmul.f32.gmra.mxu0 %v3687
        %v3744 = vpop.f32.mrf.mxu0
        %v3745 = vadd.f32 0.0, %v3744
        %3746 = vmatmul.f32.gmra.mxu0 %v3690
        %v3747 = vpop.f32.mrf.mxu0
        %v3748 = vadd.f32 0.0, %v3747
        %3749 = vmatmul.f32.gmra.mxu0 %v3693
        %v3750 = vpop.f32.mrf.mxu0
        %v3751 = vadd.f32 0.0, %v3750
        %3752 = vmatmul.f32.gmra.mxu0 %v3696
        %v3753 = vpop.f32.mrf.mxu0
        %v3754 = vadd.f32 0.0, %v3753
        %3755 = vdwg.mxu0
        %3756 = vmatpush.msra.mxu0 0.0
        %3757 = vmatpush.msra.mxu0 0.0
        %3758 = vmatpush.msra.mxu0 0.0
        %3759 = vmatpush.msra.mxu0 0.0
        %3760 = vmatpush.msra.mxu0 0.0
        %3761 = vmatpush.msra.mxu0 0.0
        %3762 = vmatpush.msra.mxu0 0.0
        %3763 = vmatpush.msra.mxu0 0.0
        %3764 = vmatpush.msra.mxu0 0.0
        %3765 = vmatpush.msra.mxu0 0.0
        %3766 = vmatpush.msra.mxu0 0.0
        %3767 = vmatpush.msra.mxu0 0.0
        %3768 = vmatpush.msra.mxu0 %v3680
        %3769 = vmatpush.msra.mxu0 %v3672
        %3770 = vmatpush.msra.mxu0 %v3664
        %3771 = vmatpush.msra.mxu0 %v3656
        %3772 = vmatmul.f32.gmra.mxu0 %v3687
        %v3773 = vpop.f32.mrf.mxu0
        %v3774 = vadd.f32 0.0, %v3773
        %3775 = vmatmul.f32.gmra.mxu0 %v3690
        %v3776 = vpop.f32.mrf.mxu0
        %v3777 = vadd.f32 0.0, %v3776
        %3778 = vmatmul.f32.gmra.mxu0 %v3693
        %v3779 = vpop.f32.mrf.mxu0
        %v3780 = vadd.f32 0.0, %v3779
        %3781 = vmatmul.f32.gmra.mxu0 %v3696
        %v3782 = vpop.f32.mrf.mxu0
        %v3783 = vadd.f32 0.0, %v3782
        %3784 = vdwg.mxu0
        %3785 = vmatpush.msra.mxu0 0.0
        %3786 = vmatpush.msra.mxu0 0.0
        %3787 = vmatpush.msra.mxu0 0.0
        %3788 = vmatpush.msra.mxu0 0.0
        %3789 = vmatpush.msra.mxu0 0.0
        %3790 = vmatpush.msra.mxu0 0.0
        %3791 = vmatpush.msra.mxu0 0.0
        %3792 = vmatpush.msra.mxu0 0.0
        %3793 = vmatpush.msra.mxu0 0.0
        %3794 = vmatpush.msra.mxu0 0.0
        %3795 = vmatpush.msra.mxu0 0.0
        %3796 = vmatpush.msra.mxu0 0.0
        %3797 = vmatpush.msra.mxu0 %v3681
        %3798 = vmatpush.msra.mxu0 %v3673
        %3799 = vmatpush.msra.mxu0 %v3665
        %3800 = vmatpush.msra.mxu0 %v3657
        %3801 = vmatmul.f32.gmra.mxu0 %v3687
        %v3802 = vpop.f32.mrf.mxu0
        %v3803 = vadd.f32 0.0, %v3802
        %3804 = vmatmul.f32.gmra.mxu0 %v3690
        %v3805 = vpop.f32.mrf.mxu0
        %v3806 = vadd.f32 0.0, %v3805
        %3807 = vmatmul.f32.gmra.mxu0 %v3693
        %v3808 = vpop.f32.mrf.mxu0
        %v3809 = vadd.f32 0.0, %v3808
        %3810 = vmatmul.f32.gmra.mxu0 %v3696
        %v3811 = vpop.f32.mrf.mxu0
        %v3812 = vadd.f32 0.0, %v3811
        %3813 = vdwg.mxu0
        %3814 = vmatpush.msra.mxu0 0.0
        %3815 = vmatpush.msra.mxu0 0.0
        %3816 = vmatpush.msra.mxu0 0.0
        %3817 = vmatpush.msra.mxu0 0.0
        %3818 = vmatpush.msra.mxu0 0.0
        %3819 = vmatpush.msra.mxu0 0.0
        %3820 = vmatpush.msra.mxu0 0.0
        %3821 = vmatpush.msra.mxu0 0.0
        %3822 = vmatpush.msra.mxu0 0.0
        %3823 = vmatpush.msra.mxu0 0.0
        %3824 = vmatpush.msra.mxu0 0.0
        %3825 = vmatpush.msra.mxu0 0.0
        %3826 = vmatpush.msra.mxu0 %v3682
        %3827 = vmatpush.msra.mxu0 %v3674
        %3828 = vmatpush.msra.mxu0 %v3666
        %3829 = vmatpush.msra.mxu0 %v3658
        %3830 = vmatmul.f32.gmra.mxu0 %v3687
        %v3831 = vpop.f32.mrf.mxu0
        %v3832 = vadd.f32 0.0, %v3831
        %3833 = vmatmul.f32.gmra.mxu0 %v3690
        %v3834 = vpop.f32.mrf.mxu0
        %v3835 = vadd.f32 0.0, %v3834
        %3836 = vmatmul.f32.gmra.mxu0 %v3693
        %v3837 = vpop.f32.mrf.mxu0
        %v3838 = vadd.f32 0.0, %v3837
        %3839 = vmatmul.f32.gmra.mxu0 %v3696
        %v3840 = vpop.f32.mrf.mxu0
        %v3841 = vadd.f32 0.0, %v3840
        %3842 = vdwg.mxu0
        %3843 = vmatpush.msra.mxu0 0.0
        %3844 = vmatpush.msra.mxu0 0.0
        %3845 = vmatpush.msra.mxu0 0.0
        %3846 = vmatpush.msra.mxu0 0.0
        %3847 = vmatpush.msra.mxu0 0.0
        %3848 = vmatpush.msra.mxu0 0.0
        %3849 = vmatpush.msra.mxu0 0.0
        %3850 = vmatpush.msra.mxu0 0.0
        %3851 = vmatpush.msra.mxu0 0.0
        %3852 = vmatpush.msra.mxu0 0.0
        %3853 = vmatpush.msra.mxu0 0.0
        %3854 = vmatpush.msra.mxu0 0.0
        %3855 = vmatpush.msra.mxu0 %v3683
        %3856 = vmatpush.msra.mxu0 %v3675
        %3857 = vmatpush.msra.mxu0 %v3667
        %3858 = vmatpush.msra.mxu0 %v3659
        %3859 = vmatmul.f32.gmra.mxu0 %v3687
        %v3860 = vpop.f32.mrf.mxu0
        %v3861 = vadd.f32 0.0, %v3860
        %3862 = vmatmul.f32.gmra.mxu0 %v3690
        %v3863 = vpop.f32.mrf.mxu0
        %v3864 = vadd.f32 0.0, %v3863
        %3865 = vmatmul.f32.gmra.mxu0 %v3693
        %v3866 = vpop.f32.mrf.mxu0
        %v3867 = vadd.f32 0.0, %v3866
        %3868 = vmatmul.f32.gmra.mxu0 %v3696
        %v3869 = vpop.f32.mrf.mxu0
        %v3870 = vadd.f32 0.0, %v3869
        %3871 = vdwg.mxu0
        %3872 = vmatpush.msra.mxu0 0.0
        %3873 = vmatpush.msra.mxu0 0.0
        %3874 = vmatpush.msra.mxu0 0.0
        %3875 = vmatpush.msra.mxu0 0.0
        %3876 = vmatpush.msra.mxu0 0.0
        %3877 = vmatpush.msra.mxu0 0.0
        %3878 = vmatpush.msra.mxu0 0.0
        %3879 = vmatpush.msra.mxu0 0.0
        %3880 = vmatpush.msra.mxu0 0.0
        %3881 = vmatpush.msra.mxu0 0.0
        %3882 = vmatpush.msra.mxu0 0.0
        %3883 = vmatpush.msra.mxu0 0.0
        %3884 = vmatpush.msra.mxu0 %v3684
        %3885 = vmatpush.msra.mxu0 %v3676
        %3886 = vmatpush.msra.mxu0 %v3668
        %3887 = vmatpush.msra.mxu0 %v3660
        %3888 = vmatmul.f32.gmra.mxu0 %v3687
        %v3889 = vpop.f32.mrf.mxu0
        %v3890 = vadd.f32 0.0, %v3889
        %3891 = vmatmul.f32.gmra.mxu0 %v3690
        %v3892 = vpop.f32.mrf.mxu0
        %v3893 = vadd.f32 0.0, %v3892
        %3894 = vmatmul.f32.gmra.mxu0 %v3693
        %v3895 = vpop.f32.mrf.mxu0
        %v3896 = vadd.f32 0.0, %v3895
        %3897 = vmatmul.f32.gmra.mxu0 %v3696
        %v3898 = vpop.f32.mrf.mxu0
        %v3899 = vadd.f32 0.0, %v3898
        %3900 = vdwg.mxu0
        %3901 = vmatpush.msra.mxu0 0.0
        %3902 = vmatpush.msra.mxu0 0.0
        %3903 = vmatpush.msra.mxu0 0.0
        %3904 = vmatpush.msra.mxu0 0.0
        %3905 = vmatpush.msra.mxu0 0.0
        %3906 = vmatpush.msra.mxu0 0.0
        %3907 = vmatpush.msra.mxu0 0.0
        %3908 = vmatpush.msra.mxu0 0.0
        %3909 = vmatpush.msra.mxu0 0.0
        %3910 = vmatpush.msra.mxu0 0.0
        %3911 = vmatpush.msra.mxu0 0.0
        %3912 = vmatpush.msra.mxu0 0.0
        %3913 = vmatpush.msra.mxu0 %v3685
        %3914 = vmatpush.msra.mxu0 %v3677
        %3915 = vmatpush.msra.mxu0 %v3669
        %3916 = vmatpush.msra.mxu0 %v3661
        %3917 = vmatmul.f32.gmra.mxu0 %v3687
        %v3918 = vpop.f32.mrf.mxu0
        %v3919 = vadd.f32 0.0, %v3918
        %3920 = vmatmul.f32.gmra.mxu0 %v3690
        %v3921 = vpop.f32.mrf.mxu0
        %v3922 = vadd.f32 0.0, %v3921
        %3923 = vmatmul.f32.gmra.mxu0 %v3693
        %v3924 = vpop.f32.mrf.mxu0
        %v3925 = vadd.f32 0.0, %v3924
        %3926 = vmatmul.f32.gmra.mxu0 %v3696
        %v3927 = vpop.f32.mrf.mxu0
        %v3928 = vadd.f32 0.0, %v3927
        %3929 = vdwg.mxu0
        %v3930 = vadd.f32 %v2770, %v3716
        %v3931 = vadd.f32 %v2771, %v3745
        %v3932 = vadd.f32 %v2772, %v3719
        %v3933 = vadd.f32 %v2773, %v3748
        %v3934 = vadd.f32 %v2774, %v3722
        %v3935 = vadd.f32 %v2775, %v3751
        %v3936 = vadd.f32 %v2776, %v3725
        %v3937 = vadd.f32 %v2777, %v3754
        %3939 = vset.pattern.permute.xlu0 0
        %3940 = vperm.xlu0 %3939, %v2818
        %v3941 = vpop.permute.xlu0 %3940
        %3944 = vset.pattern.permute.xlu0 0
        %3945 = vperm.xlu0 %3944, %v2819
        %v3946 = vpop.permute.xlu0 %3945
        %3949 = vset.pattern.permute.xlu0 0
        %3950 = vperm.xlu0 %3949, %v2820
        %v3951 = vpop.permute.xlu0 %3950
        %3954 = vset.pattern.permute.xlu0 0
        %3955 = vperm.xlu0 %3954, %v2821
        %v3956 = vpop.permute.xlu0 %3955
        %v3958 = vadd.f32 %v3930, %v3941
        %v3959 = vadd.f32 %v3931, %v3941
        %v3960 = vadd.f32 %v3932, %v3946
        %v3961 = vadd.f32 %v3933, %v3946
        %v3962 = vadd.f32 %v3934, %v3951
        %v3963 = vadd.f32 %v3935, %v3951
        %v3964 = vadd.f32 %v3936, %v3956
        %v3965 = vadd.f32 %v3937, %v3956
        %v3966 = vadd.f32 %v2778, %v3774
        %v3967 = vadd.f32 %v2779, %v3803
        %v3968 = vadd.f32 %v2780, %v3777
        %v3969 = vadd.f32 %v2781, %v3806
        %v3970 = vadd.f32 %v2782, %v3780
        %v3971 = vadd.f32 %v2783, %v3809
        %v3972 = vadd.f32 %v2784, %v3783
        %v3973 = vadd.f32 %v2785, %v3812
        %v3974 = vadd.f32 %v2786, %v3832
        %v3975 = vadd.f32 %v2787, %v3861
        %v3976 = vadd.f32 %v2788, %v3835
        %v3977 = vadd.f32 %v2789, %v3864
        %v3978 = vadd.f32 %v2790, %v3838
        %v3979 = vadd.f32 %v2791, %v3867
        %v3980 = vadd.f32 %v2792, %v3841
        %v3981 = vadd.f32 %v2793, %v3870
        %v3982 = vadd.f32 %v2794, %v3890
        %v3983 = vadd.f32 %v2795, %v3919
        %v3984 = vadd.f32 %v2796, %v3893
        %v3985 = vadd.f32 %v2797, %v3922
        %v3986 = vadd.f32 %v2798, %v3896
        %v3987 = vadd.f32 %v2799, %v3925
        %v3988 = vadd.f32 %v2800, %v3899
        %v3989 = vadd.f32 %v2801, %v3928
        %s3990 = scalar_lea.vmem %s3, 96
        %v3991 = vld [vmem:[%s3990] sm:$0xff]
        %v3992 = vld [vmem:[%s3990 + $0x8] sm:$0xff]
        %v3993 = vld [vmem:[%s3990 + $0x10] sm:$0xff]
        %v3994 = vld [vmem:[%s3990 + $0x18] sm:$0xff]
        %s3995 = scalar_lea.vmem %s4, 96
        %v3996 = vld [vmem:[%s3995] sm:$0xff]
        %v3997 = vld [vmem:[%s3995 + $0x8] sm:$0xff]
        %v3998 = vld [vmem:[%s3995 + $0x10] sm:$0xff]
        %v3999 = vld [vmem:[%s3995 + $0x18] sm:$0xff]
        %s4000 = scalar_lea.vmem %s5, 96
        %v4001 = vld [vmem:[%s4000] sm:$0xff]
        %v4002 = vld [vmem:[%s4000 + $0x8] sm:$0xff]
        %v4003 = vld [vmem:[%s4000 + $0x10] sm:$0xff]
        %v4004 = vld [vmem:[%s4000 + $0x18] sm:$0xff]
        %s4005 = scalar_lea.vmem %s6, 96
        %v4006 = vld [vmem:[%s4005] sm:$0xff]
        %v4007 = vld [vmem:[%s4005 + $0x8] sm:$0xff]
        %v4008 = vld [vmem:[%s4005 + $0x10] sm:$0xff]
        %v4009 = vld [vmem:[%s4005 + $0x18] sm:$0xff]
        %v4010 = vxor.u32 %v3958, 2147483648
        %v4011 = vxor.u32 %v3959, 2147483648
        %v4012 = vxor.u32 %v3960, 2147483648
        %v4013 = vxor.u32 %v3961, 2147483648
        %v4014 = vxor.u32 %v3962, 2147483648
        %v4015 = vxor.u32 %v3963, 2147483648
        %v4016 = vxor.u32 %v3964, 2147483648
        %v4017 = vxor.u32 %v3965, 2147483648
        %v4018 = vmul.f32 %v4010, 1.442695
        %v4019 = vpow.pop %v4018
        %v4020 = vmul.f32 %v4011, 1.442695
        %v4021 = vpow.pop %v4020
        %v4022 = vmul.f32 %v4012, 1.442695
        %v4023 = vpow.pop %v4022
        %v4024 = vmul.f32 %v4013, 1.442695
        %v4025 = vpow.pop %v4024
        %v4026 = vmul.f32 %v4014, 1.442695
        %v4027 = vpow.pop %v4026
        %v4028 = vmul.f32 %v4015, 1.442695
        %v4029 = vpow.pop %v4028
        %v4030 = vmul.f32 %v4016, 1.442695
        %v4031 = vpow.pop %v4030
        %v4032 = vmul.f32 %v4017, 1.442695
        %v4033 = vpow.pop %v4032
        %v4034 = vadd.f32 %v4019, 1.0
        %v4035 = vadd.f32 %v4021, 1.0
        %v4036 = vadd.f32 %v4023, 1.0
        %v4037 = vadd.f32 %v4025, 1.0
        %v4038 = vadd.f32 %v4027, 1.0
        %v4039 = vadd.f32 %v4029, 1.0
        %v4040 = vadd.f32 %v4031, 1.0
        %v4041 = vadd.f32 %v4033, 1.0
        %v4042 = vrcp.pop %v4034
        %v4043 = vmul.f32 %v4034, %v4042
        %v4044 = vsub.f32 1.0, %v4043
        %v4045 = vmul.f32 %v4042, %v4044
        %v4046 = vadd.f32 %v4042, %v4045
        %vm4047 = vweird.f32 %v4034
        %vm4048 = vweird.f32 %v4042
        %vm4049 = vmor %vm4047, %vm4048
        %v4050 = vsel %vm4049, %v4042, %v4046
        %v4051 = vand.u32 2147483647, %v4034
        %vm4052 = vcmp.eq.f32.partialorder %v4051, 8.507059e+37
        %v4053 = vand.u32 %v4034, 2147483648
        %v4054 = vor.u32 1.1754944e-38, %v4053
        %v4055 = vsel %vm4052, %v4054, %v4050
        %v4056 = vmul.f32 1.0, %v4055
        %v4057 = vrcp.pop %v4035
        %v4058 = vmul.f32 %v4035, %v4057
        %v4059 = vsub.f32 1.0, %v4058
        %v4060 = vmul.f32 %v4057, %v4059
        %v4061 = vadd.f32 %v4057, %v4060
        %vm4062 = vweird.f32 %v4035
        %vm4063 = vweird.f32 %v4057
        %vm4064 = vmor %vm4062, %vm4063
        %v4065 = vsel %vm4064, %v4057, %v4061
        %v4066 = vand.u32 2147483647, %v4035
        %vm4067 = vcmp.eq.f32.partialorder %v4066, 8.507059e+37
        %v4068 = vand.u32 %v4035, 2147483648
        %v4069 = vor.u32 1.1754944e-38, %v4068
        %v4070 = vsel %vm4067, %v4069, %v4065
        %v4071 = vmul.f32 1.0, %v4070
        %v4072 = vrcp.pop %v4036
        %v4073 = vmul.f32 %v4036, %v4072
        %v4074 = vsub.f32 1.0, %v4073
        %v4075 = vmul.f32 %v4072, %v4074
        %v4076 = vadd.f32 %v4072, %v4075
        %vm4077 = vweird.f32 %v4036
        %vm4078 = vweird.f32 %v4072
        %vm4079 = vmor %vm4077, %vm4078
        %v4080 = vsel %vm4079, %v4072, %v4076
        %v4081 = vand.u32 2147483647, %v4036
        %vm4082 = vcmp.eq.f32.partialorder %v4081, 8.507059e+37
        %v4083 = vand.u32 %v4036, 2147483648
        %v4084 = vor.u32 1.1754944e-38, %v4083
        %v4085 = vsel %vm4082, %v4084, %v4080
        %v4086 = vmul.f32 1.0, %v4085
        %v4087 = vrcp.pop %v4037
        %v4088 = vmul.f32 %v4037, %v4087
        %v4089 = vsub.f32 1.0, %v4088
        %v4090 = vmul.f32 %v4087, %v4089
        %v4091 = vadd.f32 %v4087, %v4090
        %vm4092 = vweird.f32 %v4037
        %vm4093 = vweird.f32 %v4087
        %vm4094 = vmor %vm4092, %vm4093
        %v4095 = vsel %vm4094, %v4087, %v4091
        %v4096 = vand.u32 2147483647, %v4037
        %vm4097 = vcmp.eq.f32.partialorder %v4096, 8.507059e+37
        %v4098 = vand.u32 %v4037, 2147483648
        %v4099 = vor.u32 1.1754944e-38, %v4098
        %v4100 = vsel %vm4097, %v4099, %v4095
        %v4101 = vmul.f32 1.0, %v4100
        %v4102 = vrcp.pop %v4038
        %v4103 = vmul.f32 %v4038, %v4102
        %v4104 = vsub.f32 1.0, %v4103
        %v4105 = vmul.f32 %v4102, %v4104
        %v4106 = vadd.f32 %v4102, %v4105
        %vm4107 = vweird.f32 %v4038
        %vm4108 = vweird.f32 %v4102
        %vm4109 = vmor %vm4107, %vm4108
        %v4110 = vsel %vm4109, %v4102, %v4106
        %v4111 = vand.u32 2147483647, %v4038
        %vm4112 = vcmp.eq.f32.partialorder %v4111, 8.507059e+37
        %v4113 = vand.u32 %v4038, 2147483648
        %v4114 = vor.u32 1.1754944e-38, %v4113
        %v4115 = vsel %vm4112, %v4114, %v4110
        %v4116 = vmul.f32 1.0, %v4115
        %v4117 = vrcp.pop %v4039
        %v4118 = vmul.f32 %v4039, %v4117
        %v4119 = vsub.f32 1.0, %v4118
        %v4120 = vmul.f32 %v4117, %v4119
        %v4121 = vadd.f32 %v4117, %v4120
        %vm4122 = vweird.f32 %v4039
        %vm4123 = vweird.f32 %v4117
        %vm4124 = vmor %vm4122, %vm4123
        %v4125 = vsel %vm4124, %v4117, %v4121
        %v4126 = vand.u32 2147483647, %v4039
        %vm4127 = vcmp.eq.f32.partialorder %v4126, 8.507059e+37
        %v4128 = vand.u32 %v4039, 2147483648
        %v4129 = vor.u32 1.1754944e-38, %v4128
        %v4130 = vsel %vm4127, %v4129, %v4125
        %v4131 = vmul.f32 1.0, %v4130
        %v4132 = vrcp.pop %v4040
        %v4133 = vmul.f32 %v4040, %v4132
        %v4134 = vsub.f32 1.0, %v4133
        %v4135 = vmul.f32 %v4132, %v4134
        %v4136 = vadd.f32 %v4132, %v4135
        %vm4137 = vweird.f32 %v4040
        %vm4138 = vweird.f32 %v4132
        %vm4139 = vmor %vm4137, %vm4138
        %v4140 = vsel %vm4139, %v4132, %v4136
        %v4141 = vand.u32 2147483647, %v4040
        %vm4142 = vcmp.eq.f32.partialorder %v4141, 8.507059e+37
        %v4143 = vand.u32 %v4040, 2147483648
        %v4144 = vor.u32 1.1754944e-38, %v4143
        %v4145 = vsel %vm4142, %v4144, %v4140
        %v4146 = vmul.f32 1.0, %v4145
        %v4147 = vrcp.pop %v4041
        %v4148 = vmul.f32 %v4041, %v4147
        %v4149 = vsub.f32 1.0, %v4148
        %v4150 = vmul.f32 %v4147, %v4149
        %v4151 = vadd.f32 %v4147, %v4150
        %vm4152 = vweird.f32 %v4041
        %vm4153 = vweird.f32 %v4147
        %vm4154 = vmor %vm4152, %vm4153
        %v4155 = vsel %vm4154, %v4147, %v4151
        %v4156 = vand.u32 2147483647, %v4041
        %vm4157 = vcmp.eq.f32.partialorder %v4156, 8.507059e+37
        %v4158 = vand.u32 %v4041, 2147483648
        %v4159 = vor.u32 1.1754944e-38, %v4158
        %v4160 = vsel %vm4157, %v4159, %v4155
        %v4161 = vmul.f32 1.0, %v4160
        %v4162 = vsub.f32 1.0, %v4056
        %v4163 = vsub.f32 1.0, %v4071
        %v4164 = vsub.f32 1.0, %v4086
        %v4165 = vsub.f32 1.0, %v4101
        %v4166 = vsub.f32 1.0, %v4116
        %v4167 = vsub.f32 1.0, %v4131
        %v4168 = vsub.f32 1.0, %v4146
        %v4169 = vsub.f32 1.0, %v4161
        %v4170 = vmul.f32 %v4056, %v4162
        %v4171 = vmul.f32 %v4071, %v4163
        %v4172 = vmul.f32 %v4086, %v4164
        %v4173 = vmul.f32 %v4101, %v4165
        %v4174 = vmul.f32 %v4116, %v4166
        %v4175 = vmul.f32 %v4131, %v4167
        %v4176 = vmul.f32 %v4146, %v4168
        %v4177 = vmul.f32 %v4161, %v4169
        %v4178 = vmul.f32 %v4056, 2.0
        %v4179 = vmul.f32 %v4071, 2.0
        %v4180 = vmul.f32 %v4086, 2.0
        %v4181 = vmul.f32 %v4101, 2.0
        %v4182 = vmul.f32 %v4116, 2.0
        %v4183 = vmul.f32 %v4131, 2.0
        %v4184 = vmul.f32 %v4146, 2.0
        %v4185 = vmul.f32 %v4161, 2.0
        %v4186 = vsub.f32 1.0, %v4178
        %v4187 = vsub.f32 1.0, %v4179
        %v4188 = vsub.f32 1.0, %v4180
        %v4189 = vsub.f32 1.0, %v4181
        %v4190 = vsub.f32 1.0, %v4182
        %v4191 = vsub.f32 1.0, %v4183
        %v4192 = vsub.f32 1.0, %v4184
        %v4193 = vsub.f32 1.0, %v4185
        %v4194 = vmul.f32 %v4186, %v3974
        %v4195 = vmul.f32 %v4187, %v3975
        %v4196 = vmul.f32 %v4188, %v3976
        %v4197 = vmul.f32 %v4189, %v3977
        %v4198 = vmul.f32 %v4190, %v3978
        %v4199 = vmul.f32 %v4191, %v3979
        %v4200 = vmul.f32 %v4192, %v3980
        %v4201 = vmul.f32 %v4193, %v3981
        %v4202 = vmul.f32 %v4194, %v3974
        %v4203 = vmul.f32 %v4195, %v3975
        %v4204 = vmul.f32 %v4196, %v3976
        %v4205 = vmul.f32 %v4197, %v3977
        %v4206 = vmul.f32 %v4198, %v3978
        %v4207 = vmul.f32 %v4199, %v3979
        %v4208 = vmul.f32 %v4200, %v3980
        %v4209 = vmul.f32 %v4201, %v3981
        %v4210 = vadd.f32 %v4202, %v3982
        %v4211 = vadd.f32 %v4203, %v3983
        %v4212 = vadd.f32 %v4204, %v3984
        %v4213 = vadd.f32 %v4205, %v3985
        %v4214 = vadd.f32 %v4206, %v3986
        %v4215 = vadd.f32 %v4207, %v3987
        %v4216 = vadd.f32 %v4208, %v3988
        %v4217 = vadd.f32 %v4209, %v3989
        %v4218 = vmul.f32 %v4170, %v3966
        %v4219 = vmul.f32 %v4171, %v3967
        %v4220 = vmul.f32 %v4172, %v3968
        %v4221 = vmul.f32 %v4173, %v3969
        %v4222 = vmul.f32 %v4174, %v3970
        %v4223 = vmul.f32 %v4175, %v3971
        %v4224 = vmul.f32 %v4176, %v3972
        %v4225 = vmul.f32 %v4177, %v3973
        %v4226 = vmul.f32 %v4170, %v3974
        %v4227 = vmul.f32 %v4171, %v3975
        %v4228 = vmul.f32 %v4172, %v3976
        %v4229 = vmul.f32 %v4173, %v3977
        %v4230 = vmul.f32 %v4174, %v3978
        %v4231 = vmul.f32 %v4175, %v3979
        %v4232 = vmul.f32 %v4176, %v3980
        %v4233 = vmul.f32 %v4177, %v3981
        %v4234 = vmul.f32 %v4170, %v4210
        %v4235 = vmul.f32 %v4171, %v4211
        %v4236 = vmul.f32 %v4172, %v4212
        %v4237 = vmul.f32 %v4173, %v4213
        %v4238 = vmul.f32 %v4174, %v4214
        %v4239 = vmul.f32 %v4175, %v4215
        %v4240 = vmul.f32 %v4176, %v4216
        %v4241 = vmul.f32 %v4177, %v4217
        %4242 = vst [vmem:[#allocation2] sm:$0xff] %v4056
        %4243 = vst [vmem:[#allocation2 + $0x8] sm:$0xff] %v4071
        %4244 = vst [vmem:[#allocation2 + $0x40] sm:$0xff] %v4086
        %4245 = vst [vmem:[#allocation2 + $0x48] sm:$0xff] %v4101
        %4246 = vst [vmem:[#allocation2 + $0x80] sm:$0xff] %v4116
        %4247 = vst [vmem:[#allocation2 + $0x88] sm:$0xff] %v4131
        %4248 = vst [vmem:[#allocation2 + $0xc0] sm:$0xff] %v4146
        %4249 = vst [vmem:[#allocation2 + $0xc8] sm:$0xff] %v4161
        %4250 = vst [vmem:[#allocation2 + $0x10] sm:$0xff] %v4218
        %4251 = vst [vmem:[#allocation2 + $0x18] sm:$0xff] %v4219
        %4252 = vst [vmem:[#allocation2 + $0x50] sm:$0xff] %v4220
        %4253 = vst [vmem:[#allocation2 + $0x58] sm:$0xff] %v4221
        %4254 = vst [vmem:[#allocation2 + $0x90] sm:$0xff] %v4222
        %4255 = vst [vmem:[#allocation2 + $0x98] sm:$0xff] %v4223
        %4256 = vst [vmem:[#allocation2 + $0xd0] sm:$0xff] %v4224
        %4257 = vst [vmem:[#allocation2 + $0xd8] sm:$0xff] %v4225
        %4258 = vst [vmem:[#allocation2 + $0x20] sm:$0xff] %v4226
        %4259 = vst [vmem:[#allocation2 + $0x28] sm:$0xff] %v4227
        %4260 = vst [vmem:[#allocation2 + $0x60] sm:$0xff] %v4228
        %4261 = vst [vmem:[#allocation2 + $0x68] sm:$0xff] %v4229
        %4262 = vst [vmem:[#allocation2 + $0xa0] sm:$0xff] %v4230
        %4263 = vst [vmem:[#allocation2 + $0xa8] sm:$0xff] %v4231
        %4264 = vst [vmem:[#allocation2 + $0xe0] sm:$0xff] %v4232
        %4265 = vst [vmem:[#allocation2 + $0xe8] sm:$0xff] %v4233
        %4266 = vst [vmem:[#allocation2 + $0x30] sm:$0xff] %v4234
        %4267 = vst [vmem:[#allocation2 + $0x38] sm:$0xff] %v4235
        %4268 = vst [vmem:[#allocation2 + $0x70] sm:$0xff] %v4236
        %4269 = vst [vmem:[#allocation2 + $0x78] sm:$0xff] %v4237
        %4270 = vst [vmem:[#allocation2 + $0xb0] sm:$0xff] %v4238
        %4271 = vst [vmem:[#allocation2 + $0xb8] sm:$0xff] %v4239
        %4272 = vst [vmem:[#allocation2 + $0xf0] sm:$0xff] %v4240
        %4273 = vst [vmem:[#allocation2 + $0xf8] sm:$0xff] %v4241
        %v4274 = vld [vmem:[#allocation2] sm:$0xff]
        %v4275 = vld [vmem:[#allocation2 + $0x8] sm:$0xff]
        %v4276 = vld [vmem:[#allocation2 + $0x10] sm:$0xff]
        %v4277 = vld [vmem:[#allocation2 + $0x18] sm:$0xff]
        %v4278 = vld [vmem:[#allocation2 + $0x20] sm:$0xff]
        %v4279 = vld [vmem:[#allocation2 + $0x28] sm:$0xff]
        %v4280 = vld [vmem:[#allocation2 + $0x30] sm:$0xff]
        %v4281 = vld [vmem:[#allocation2 + $0x38] sm:$0xff]
        %v4282 = vld [vmem:[#allocation2 + $0x40] sm:$0xff]
        %v4283 = vld [vmem:[#allocation2 + $0x48] sm:$0xff]
        %v4284 = vld [vmem:[#allocation2 + $0x50] sm:$0xff]
        %v4285 = vld [vmem:[#allocation2 + $0x58] sm:$0xff]
        %v4286 = vld [vmem:[#allocation2 + $0x60] sm:$0xff]
        %v4287 = vld [vmem:[#allocation2 + $0x68] sm:$0xff]
        %v4288 = vld [vmem:[#allocation2 + $0x70] sm:$0xff]
        %v4289 = vld [vmem:[#allocation2 + $0x78] sm:$0xff]
        %v4290 = vld [vmem:[#allocation2 + $0x80] sm:$0xff]
        %v4291 = vld [vmem:[#allocation2 + $0x88] sm:$0xff]
        %v4292 = vld [vmem:[#allocation2 + $0x90] sm:$0xff]
        %v4293 = vld [vmem:[#allocation2 + $0x98] sm:$0xff]
        %v4294 = vld [vmem:[#allocation2 + $0xa0] sm:$0xff]
        %v4295 = vld [vmem:[#allocation2 + $0xa8] sm:$0xff]
        %v4296 = vld [vmem:[#allocation2 + $0xb0] sm:$0xff]
        %v4297 = vld [vmem:[#allocation2 + $0xb8] sm:$0xff]
        %v4298 = vld [vmem:[#allocation2 + $0xc0] sm:$0xff]
        %v4299 = vld [vmem:[#allocation2 + $0xc8] sm:$0xff]
        %v4300 = vld [vmem:[#allocation2 + $0xd0] sm:$0xff]
        %v4301 = vld [vmem:[#allocation2 + $0xd8] sm:$0xff]
        %v4302 = vld [vmem:[#allocation2 + $0xe0] sm:$0xff]
        %v4303 = vld [vmem:[#allocation2 + $0xe8] sm:$0xff]
        %v4304 = vld [vmem:[#allocation2 + $0xf0] sm:$0xff]
        %v4305 = vld [vmem:[#allocation2 + $0xf8] sm:$0xff]
        %v4307 = vsel %vm749, %v3991, 0
        %v4310 = vsel %vm749, %v3992, 0
        %v4313 = vsel %vm749, %v3993, 0
        %v4316 = vsel %vm749, %v3994, 0
        %4318 = vmatpush.msra.mxu0 0.0
        %4319 = vmatpush.msra.mxu0 0.0
        %4320 = vmatpush.msra.mxu0 0.0
        %4321 = vmatpush.msra.mxu0 0.0
        %4322 = vmatpush.msra.mxu0 0.0
        %4323 = vmatpush.msra.mxu0 0.0
        %4324 = vmatpush.msra.mxu0 0.0
        %4325 = vmatpush.msra.mxu0 0.0
        %4326 = vmatpush.msra.mxu0 0.0
        %4327 = vmatpush.msra.mxu0 0.0
        %4328 = vmatpush.msra.mxu0 0.0
        %4329 = vmatpush.msra.mxu0 0.0
        %4330 = vmatpush.msra.mxu0 %v4298
        %4331 = vmatpush.msra.mxu0 %v4290
        %4332 = vmatpush.msra.mxu0 %v4282
        %4333 = vmatpush.msra.mxu0 %v4274
        %4334 = vmatmul.f32.gmra.mxu0 %v4307
        %v4335 = vpop.f32.mrf.mxu0
        %v4336 = vadd.f32 0.0, %v4335
        %4337 = vmatmul.f32.gmra.mxu0 %v4310
        %v4338 = vpop.f32.mrf.mxu0
        %v4339 = vadd.f32 0.0, %v4338
        %4340 = vmatmul.f32.gmra.mxu0 %v4313
        %v4341 = vpop.f32.mrf.mxu0
        %v4342 = vadd.f32 0.0, %v4341
        %4343 = vmatmul.f32.gmra.mxu0 %v4316
        %v4344 = vpop.f32.mrf.mxu0
        %v4345 = vadd.f32 0.0, %v4344
        %4346 = vdwg.mxu0
        %4347 = vmatpush.msra.mxu0 0.0
        %4348 = vmatpush.msra.mxu0 0.0
        %4349 = vmatpush.msra.mxu0 0.0
        %4350 = vmatpush.msra.mxu0 0.0
        %4351 = vmatpush.msra.mxu0 0.0
        %4352 = vmatpush.msra.mxu0 0.0
        %4353 = vmatpush.msra.mxu0 0.0
        %4354 = vmatpush.msra.mxu0 0.0
        %4355 = vmatpush.msra.mxu0 0.0
        %4356 = vmatpush.msra.mxu0 0.0
        %4357 = vmatpush.msra.mxu0 0.0
        %4358 = vmatpush.msra.mxu0 0.0
        %4359 = vmatpush.msra.mxu0 %v4299
        %4360 = vmatpush.msra.mxu0 %v4291
        %4361 = vmatpush.msra.mxu0 %v4283
        %4362 = vmatpush.msra.mxu0 %v4275
        %4363 = vmatmul.f32.gmra.mxu0 %v4307
        %v4364 = vpop.f32.mrf.mxu0
        %v4365 = vadd.f32 0.0, %v4364
        %4366 = vmatmul.f32.gmra.mxu0 %v4310
        %v4367 = vpop.f32.mrf.mxu0
        %v4368 = vadd.f32 0.0, %v4367
        %4369 = vmatmul.f32.gmra.mxu0 %v4313
        %v4370 = vpop.f32.mrf.mxu0
        %v4371 = vadd.f32 0.0, %v4370
        %4372 = vmatmul.f32.gmra.mxu0 %v4316
        %v4373 = vpop.f32.mrf.mxu0
        %v4374 = vadd.f32 0.0, %v4373
        %4375 = vdwg.mxu0
        %4376 = vmatpush.msra.mxu0 0.0
        %4377 = vmatpush.msra.mxu0 0.0
        %4378 = vmatpush.msra.mxu0 0.0
        %4379 = vmatpush.msra.mxu0 0.0
        %4380 = vmatpush.msra.mxu0 0.0
        %4381 = vmatpush.msra.mxu0 0.0
        %4382 = vmatpush.msra.mxu0 0.0
        %4383 = vmatpush.msra.mxu0 0.0
        %4384 = vmatpush.msra.mxu0 0.0
        %4385 = vmatpush.msra.mxu0 0.0
        %4386 = vmatpush.msra.mxu0 0.0
        %4387 = vmatpush.msra.mxu0 0.0
        %4388 = vmatpush.msra.mxu0 %v4300
        %4389 = vmatpush.msra.mxu0 %v4292
        %4390 = vmatpush.msra.mxu0 %v4284
        %4391 = vmatpush.msra.mxu0 %v4276
        %4392 = vmatmul.f32.gmra.mxu0 %v4307
        %v4393 = vpop.f32.mrf.mxu0
        %v4394 = vadd.f32 0.0, %v4393
        %4395 = vmatmul.f32.gmra.mxu0 %v4310
        %v4396 = vpop.f32.mrf.mxu0
        %v4397 = vadd.f32 0.0, %v4396
        %4398 = vmatmul.f32.gmra.mxu0 %v4313
        %v4399 = vpop.f32.mrf.mxu0
        %v4400 = vadd.f32 0.0, %v4399
        %4401 = vmatmul.f32.gmra.mxu0 %v4316
        %v4402 = vpop.f32.mrf.mxu0
        %v4403 = vadd.f32 0.0, %v4402
        %4404 = vdwg.mxu0
        %4405 = vmatpush.msra.mxu0 0.0
        %4406 = vmatpush.msra.mxu0 0.0
        %4407 = vmatpush.msra.mxu0 0.0
        %4408 = vmatpush.msra.mxu0 0.0
        %4409 = vmatpush.msra.mxu0 0.0
        %4410 = vmatpush.msra.mxu0 0.0
        %4411 = vmatpush.msra.mxu0 0.0
        %4412 = vmatpush.msra.mxu0 0.0
        %4413 = vmatpush.msra.mxu0 0.0
        %4414 = vmatpush.msra.mxu0 0.0
        %4415 = vmatpush.msra.mxu0 0.0
        %4416 = vmatpush.msra.mxu0 0.0
        %4417 = vmatpush.msra.mxu0 %v4301
        %4418 = vmatpush.msra.mxu0 %v4293
        %4419 = vmatpush.msra.mxu0 %v4285
        %4420 = vmatpush.msra.mxu0 %v4277
        %4421 = vmatmul.f32.gmra.mxu0 %v4307
        %v4422 = vpop.f32.mrf.mxu0
        %v4423 = vadd.f32 0.0, %v4422
        %4424 = vmatmul.f32.gmra.mxu0 %v4310
        %v4425 = vpop.f32.mrf.mxu0
        %v4426 = vadd.f32 0.0, %v4425
        %4427 = vmatmul.f32.gmra.mxu0 %v4313
        %v4428 = vpop.f32.mrf.mxu0
        %v4429 = vadd.f32 0.0, %v4428
        %4430 = vmatmul.f32.gmra.mxu0 %v4316
        %v4431 = vpop.f32.mrf.mxu0
        %v4432 = vadd.f32 0.0, %v4431
        %4433 = vdwg.mxu0
        %4434 = vmatpush.msra.mxu0 0.0
        %4435 = vmatpush.msra.mxu0 0.0
        %4436 = vmatpush.msra.mxu0 0.0
        %4437 = vmatpush.msra.mxu0 0.0
        %4438 = vmatpush.msra.mxu0 0.0
        %4439 = vmatpush.msra.mxu0 0.0
        %4440 = vmatpush.msra.mxu0 0.0
        %4441 = vmatpush.msra.mxu0 0.0
        %4442 = vmatpush.msra.mxu0 0.0
        %4443 = vmatpush.msra.mxu0 0.0
        %4444 = vmatpush.msra.mxu0 0.0
        %4445 = vmatpush.msra.mxu0 0.0
        %4446 = vmatpush.msra.mxu0 %v4302
        %4447 = vmatpush.msra.mxu0 %v4294
        %4448 = vmatpush.msra.mxu0 %v4286
        %4449 = vmatpush.msra.mxu0 %v4278
        %4450 = vmatmul.f32.gmra.mxu0 %v4307
        %v4451 = vpop.f32.mrf.mxu0
        %v4452 = vadd.f32 0.0, %v4451
        %4453 = vmatmul.f32.gmra.mxu0 %v4310
        %v4454 = vpop.f32.mrf.mxu0
        %v4455 = vadd.f32 0.0, %v4454
        %4456 = vmatmul.f32.gmra.mxu0 %v4313
        %v4457 = vpop.f32.mrf.mxu0
        %v4458 = vadd.f32 0.0, %v4457
        %4459 = vmatmul.f32.gmra.mxu0 %v4316
        %v4460 = vpop.f32.mrf.mxu0
        %v4461 = vadd.f32 0.0, %v4460
        %4462 = vdwg.mxu0
        %4463 = vmatpush.msra.mxu0 0.0
        %4464 = vmatpush.msra.mxu0 0.0
        %4465 = vmatpush.msra.mxu0 0.0
        %4466 = vmatpush.msra.mxu0 0.0
        %4467 = vmatpush.msra.mxu0 0.0
        %4468 = vmatpush.msra.mxu0 0.0
        %4469 = vmatpush.msra.mxu0 0.0
        %4470 = vmatpush.msra.mxu0 0.0
        %4471 = vmatpush.msra.mxu0 0.0
        %4472 = vmatpush.msra.mxu0 0.0
        %4473 = vmatpush.msra.mxu0 0.0
        %4474 = vmatpush.msra.mxu0 0.0
        %4475 = vmatpush.msra.mxu0 %v4303
        %4476 = vmatpush.msra.mxu0 %v4295
        %4477 = vmatpush.msra.mxu0 %v4287
        %4478 = vmatpush.msra.mxu0 %v4279
        %4479 = vmatmul.f32.gmra.mxu0 %v4307
        %v4480 = vpop.f32.mrf.mxu0
        %v4481 = vadd.f32 0.0, %v4480
        %4482 = vmatmul.f32.gmra.mxu0 %v4310
        %v4483 = vpop.f32.mrf.mxu0
        %v4484 = vadd.f32 0.0, %v4483
        %4485 = vmatmul.f32.gmra.mxu0 %v4313
        %v4486 = vpop.f32.mrf.mxu0
        %v4487 = vadd.f32 0.0, %v4486
        %4488 = vmatmul.f32.gmra.mxu0 %v4316
        %v4489 = vpop.f32.mrf.mxu0
        %v4490 = vadd.f32 0.0, %v4489
        %4491 = vdwg.mxu0
        %4492 = vmatpush.msra.mxu0 0.0
        %4493 = vmatpush.msra.mxu0 0.0
        %4494 = vmatpush.msra.mxu0 0.0
        %4495 = vmatpush.msra.mxu0 0.0
        %4496 = vmatpush.msra.mxu0 0.0
        %4497 = vmatpush.msra.mxu0 0.0
        %4498 = vmatpush.msra.mxu0 0.0
        %4499 = vmatpush.msra.mxu0 0.0
        %4500 = vmatpush.msra.mxu0 0.0
        %4501 = vmatpush.msra.mxu0 0.0
        %4502 = vmatpush.msra.mxu0 0.0
        %4503 = vmatpush.msra.mxu0 0.0
        %4504 = vmatpush.msra.mxu0 %v4304
        %4505 = vmatpush.msra.mxu0 %v4296
        %4506 = vmatpush.msra.mxu0 %v4288
        %4507 = vmatpush.msra.mxu0 %v4280
        %4508 = vmatmul.f32.gmra.mxu0 %v4307
        %v4509 = vpop.f32.mrf.mxu0
        %v4510 = vadd.f32 0.0, %v4509
        %4511 = vmatmul.f32.gmra.mxu0 %v4310
        %v4512 = vpop.f32.mrf.mxu0
        %v4513 = vadd.f32 0.0, %v4512
        %4514 = vmatmul.f32.gmra.mxu0 %v4313
        %v4515 = vpop.f32.mrf.mxu0
        %v4516 = vadd.f32 0.0, %v4515
        %4517 = vmatmul.f32.gmra.mxu0 %v4316
        %v4518 = vpop.f32.mrf.mxu0
        %v4519 = vadd.f32 0.0, %v4518
        %4520 = vdwg.mxu0
        %4521 = vmatpush.msra.mxu0 0.0
        %4522 = vmatpush.msra.mxu0 0.0
        %4523 = vmatpush.msra.mxu0 0.0
        %4524 = vmatpush.msra.mxu0 0.0
        %4525 = vmatpush.msra.mxu0 0.0
        %4526 = vmatpush.msra.mxu0 0.0
        %4527 = vmatpush.msra.mxu0 0.0
        %4528 = vmatpush.msra.mxu0 0.0
        %4529 = vmatpush.msra.mxu0 0.0
        %4530 = vmatpush.msra.mxu0 0.0
        %4531 = vmatpush.msra.mxu0 0.0
        %4532 = vmatpush.msra.mxu0 0.0
        %4533 = vmatpush.msra.mxu0 %v4305
        %4534 = vmatpush.msra.mxu0 %v4297
        %4535 = vmatpush.msra.mxu0 %v4289
        %4536 = vmatpush.msra.mxu0 %v4281
        %4537 = vmatmul.f32.gmra.mxu0 %v4307
        %v4538 = vpop.f32.mrf.mxu0
        %v4539 = vadd.f32 0.0, %v4538
        %4540 = vmatmul.f32.gmra.mxu0 %v4310
        %v4541 = vpop.f32.mrf.mxu0
        %v4542 = vadd.f32 0.0, %v4541
        %4543 = vmatmul.f32.gmra.mxu0 %v4313
        %v4544 = vpop.f32.mrf.mxu0
        %v4545 = vadd.f32 0.0, %v4544
        %4546 = vmatmul.f32.gmra.mxu0 %v4316
        %v4547 = vpop.f32.mrf.mxu0
        %v4548 = vadd.f32 0.0, %v4547
        %4549 = vdwg.mxu0
        %4551 = vset.pattern.permute.xlu0 0
        %4552 = vperm.xlu0 %4551, %v3996
        %v4553 = vpop.permute.xlu0 %4552
        %4556 = vset.pattern.permute.xlu0 0
        %4557 = vperm.xlu0 %4556, %v3997
        %v4558 = vpop.permute.xlu0 %4557
        %4561 = vset.pattern.permute.xlu0 0
        %4562 = vperm.xlu0 %4561, %v3998
        %v4563 = vpop.permute.xlu0 %4562
        %4566 = vset.pattern.permute.xlu0 0
        %4567 = vperm.xlu0 %4566, %v3999
        %v4568 = vpop.permute.xlu0 %4567
        %v4570 = vadd.f32 %v4336, %v4553
        %v4571 = vadd.f32 %v4365, %v4553
        %v4572 = vadd.f32 %v4339, %v4558
        %v4573 = vadd.f32 %v4368, %v4558
        %v4574 = vadd.f32 %v4342, %v4563
        %v4575 = vadd.f32 %v4371, %v4563
        %v4576 = vadd.f32 %v4345, %v4568
        %v4577 = vadd.f32 %v4374, %v4568
        %v4578 = vxor.u32 %v4570, 2147483648
        %v4579 = vxor.u32 %v4571, 2147483648
        %v4580 = vxor.u32 %v4572, 2147483648
        %v4581 = vxor.u32 %v4573, 2147483648
        %v4582 = vxor.u32 %v4574, 2147483648
        %v4583 = vxor.u32 %v4575, 2147483648
        %v4584 = vxor.u32 %v4576, 2147483648
        %v4585 = vxor.u32 %v4577, 2147483648
        %v4586 = vmul.f32 %v4578, 1.442695
        %v4587 = vpow.pop %v4586
        %v4588 = vmul.f32 %v4579, 1.442695
        %v4589 = vpow.pop %v4588
        %v4590 = vmul.f32 %v4580, 1.442695
        %v4591 = vpow.pop %v4590
        %v4592 = vmul.f32 %v4581, 1.442695
        %v4593 = vpow.pop %v4592
        %v4594 = vmul.f32 %v4582, 1.442695
        %v4595 = vpow.pop %v4594
        %v4596 = vmul.f32 %v4583, 1.442695
        %v4597 = vpow.pop %v4596
        %v4598 = vmul.f32 %v4584, 1.442695
        %v4599 = vpow.pop %v4598
        %v4600 = vmul.f32 %v4585, 1.442695
        %v4601 = vpow.pop %v4600
        %v4602 = vadd.f32 %v4587, 1.0
        %v4603 = vadd.f32 %v4589, 1.0
        %v4604 = vadd.f32 %v4591, 1.0
        %v4605 = vadd.f32 %v4593, 1.0
        %v4606 = vadd.f32 %v4595, 1.0
        %v4607 = vadd.f32 %v4597, 1.0
        %v4608 = vadd.f32 %v4599, 1.0
        %v4609 = vadd.f32 %v4601, 1.0
        %v4610 = vrcp.pop %v4602
        %v4611 = vmul.f32 %v4602, %v4610
        %v4612 = vsub.f32 1.0, %v4611
        %v4613 = vmul.f32 %v4610, %v4612
        %v4614 = vadd.f32 %v4610, %v4613
        %vm4615 = vweird.f32 %v4602
        %vm4616 = vweird.f32 %v4610
        %vm4617 = vmor %vm4615, %vm4616
        %v4618 = vsel %vm4617, %v4610, %v4614
        %v4619 = vand.u32 2147483647, %v4602
        %vm4620 = vcmp.eq.f32.partialorder %v4619, 8.507059e+37
        %v4621 = vand.u32 %v4602, 2147483648
        %v4622 = vor.u32 1.1754944e-38, %v4621
        %v4623 = vsel %vm4620, %v4622, %v4618
        %v4624 = vmul.f32 1.0, %v4623
        %v4625 = vrcp.pop %v4603
        %v4626 = vmul.f32 %v4603, %v4625
        %v4627 = vsub.f32 1.0, %v4626
        %v4628 = vmul.f32 %v4625, %v4627
        %v4629 = vadd.f32 %v4625, %v4628
        %vm4630 = vweird.f32 %v4603
        %vm4631 = vweird.f32 %v4625
        %vm4632 = vmor %vm4630, %vm4631
        %v4633 = vsel %vm4632, %v4625, %v4629
        %v4634 = vand.u32 2147483647, %v4603
        %vm4635 = vcmp.eq.f32.partialorder %v4634, 8.507059e+37
        %v4636 = vand.u32 %v4603, 2147483648
        %v4637 = vor.u32 1.1754944e-38, %v4636
        %v4638 = vsel %vm4635, %v4637, %v4633
        %v4639 = vmul.f32 1.0, %v4638
        %v4640 = vrcp.pop %v4604
        %v4641 = vmul.f32 %v4604, %v4640
        %v4642 = vsub.f32 1.0, %v4641
        %v4643 = vmul.f32 %v4640, %v4642
        %v4644 = vadd.f32 %v4640, %v4643
        %vm4645 = vweird.f32 %v4604
        %vm4646 = vweird.f32 %v4640
        %vm4647 = vmor %vm4645, %vm4646
        %v4648 = vsel %vm4647, %v4640, %v4644
        %v4649 = vand.u32 2147483647, %v4604
        %vm4650 = vcmp.eq.f32.partialorder %v4649, 8.507059e+37
        %v4651 = vand.u32 %v4604, 2147483648
        %v4652 = vor.u32 1.1754944e-38, %v4651
        %v4653 = vsel %vm4650, %v4652, %v4648
        %v4654 = vmul.f32 1.0, %v4653
        %v4655 = vrcp.pop %v4605
        %v4656 = vmul.f32 %v4605, %v4655
        %v4657 = vsub.f32 1.0, %v4656
        %v4658 = vmul.f32 %v4655, %v4657
        %v4659 = vadd.f32 %v4655, %v4658
        %vm4660 = vweird.f32 %v4605
        %vm4661 = vweird.f32 %v4655
        %vm4662 = vmor %vm4660, %vm4661
        %v4663 = vsel %vm4662, %v4655, %v4659
        %v4664 = vand.u32 2147483647, %v4605
        %vm4665 = vcmp.eq.f32.partialorder %v4664, 8.507059e+37
        %v4666 = vand.u32 %v4605, 2147483648
        %v4667 = vor.u32 1.1754944e-38, %v4666
        %v4668 = vsel %vm4665, %v4667, %v4663
        %v4669 = vmul.f32 1.0, %v4668
        %v4670 = vrcp.pop %v4606
        %v4671 = vmul.f32 %v4606, %v4670
        %v4672 = vsub.f32 1.0, %v4671
        %v4673 = vmul.f32 %v4670, %v4672
        %v4674 = vadd.f32 %v4670, %v4673
        %vm4675 = vweird.f32 %v4606
        %vm4676 = vweird.f32 %v4670
        %vm4677 = vmor %vm4675, %vm4676
        %v4678 = vsel %vm4677, %v4670, %v4674
        %v4679 = vand.u32 2147483647, %v4606
        %vm4680 = vcmp.eq.f32.partialorder %v4679, 8.507059e+37
        %v4681 = vand.u32 %v4606, 2147483648
        %v4682 = vor.u32 1.1754944e-38, %v4681
        %v4683 = vsel %vm4680, %v4682, %v4678
        %v4684 = vmul.f32 1.0, %v4683
        %v4685 = vrcp.pop %v4607
        %v4686 = vmul.f32 %v4607, %v4685
        %v4687 = vsub.f32 1.0, %v4686
        %v4688 = vmul.f32 %v4685, %v4687
        %v4689 = vadd.f32 %v4685, %v4688
        %vm4690 = vweird.f32 %v4607
        %vm4691 = vweird.f32 %v4685
        %vm4692 = vmor %vm4690, %vm4691
        %v4693 = vsel %vm4692, %v4685, %v4689
        %v4694 = vand.u32 2147483647, %v4607
        %vm4695 = vcmp.eq.f32.partialorder %v4694, 8.507059e+37
        %v4696 = vand.u32 %v4607, 2147483648
        %v4697 = vor.u32 1.1754944e-38, %v4696
        %v4698 = vsel %vm4695, %v4697, %v4693
        %v4699 = vmul.f32 1.0, %v4698
        %v4700 = vrcp.pop %v4608
        %v4701 = vmul.f32 %v4608, %v4700
        %v4702 = vsub.f32 1.0, %v4701
        %v4703 = vmul.f32 %v4700, %v4702
        %v4704 = vadd.f32 %v4700, %v4703
        %vm4705 = vweird.f32 %v4608
        %vm4706 = vweird.f32 %v4700
        %vm4707 = vmor %vm4705, %vm4706
        %v4708 = vsel %vm4707, %v4700, %v4704
        %v4709 = vand.u32 2147483647, %v4608
        %vm4710 = vcmp.eq.f32.partialorder %v4709, 8.507059e+37
        %v4711 = vand.u32 %v4608, 2147483648
        %v4712 = vor.u32 1.1754944e-38, %v4711
        %v4713 = vsel %vm4710, %v4712, %v4708
        %v4714 = vmul.f32 1.0, %v4713
        %v4715 = vrcp.pop %v4609
        %v4716 = vmul.f32 %v4609, %v4715
        %v4717 = vsub.f32 1.0, %v4716
        %v4718 = vmul.f32 %v4715, %v4717
        %v4719 = vadd.f32 %v4715, %v4718
        %vm4720 = vweird.f32 %v4609
        %vm4721 = vweird.f32 %v4715
        %vm4722 = vmor %vm4720, %vm4721
        %v4723 = vsel %vm4722, %v4715, %v4719
        %v4724 = vand.u32 2147483647, %v4609
        %vm4725 = vcmp.eq.f32.partialorder %v4724, 8.507059e+37
        %v4726 = vand.u32 %v4609, 2147483648
        %v4727 = vor.u32 1.1754944e-38, %v4726
        %v4728 = vsel %vm4725, %v4727, %v4723
        %v4729 = vmul.f32 1.0, %v4728
        %v4730 = vsub.f32 1.0, %v4624
        %v4731 = vsub.f32 1.0, %v4639
        %v4732 = vsub.f32 1.0, %v4654
        %v4733 = vsub.f32 1.0, %v4669
        %v4734 = vsub.f32 1.0, %v4684
        %v4735 = vsub.f32 1.0, %v4699
        %v4736 = vsub.f32 1.0, %v4714
        %v4737 = vsub.f32 1.0, %v4729
        %v4738 = vmul.f32 %v4624, %v4730
        %v4739 = vmul.f32 %v4639, %v4731
        %v4740 = vmul.f32 %v4654, %v4732
        %v4741 = vmul.f32 %v4669, %v4733
        %v4742 = vmul.f32 %v4684, %v4734
        %v4743 = vmul.f32 %v4699, %v4735
        %v4744 = vmul.f32 %v4714, %v4736
        %v4745 = vmul.f32 %v4729, %v4737
        %v4746 = vmul.f32 %v4624, 2.0
        %v4747 = vmul.f32 %v4639, 2.0
        %v4748 = vmul.f32 %v4654, 2.0
        %v4749 = vmul.f32 %v4669, 2.0
        %v4750 = vmul.f32 %v4684, 2.0
        %v4751 = vmul.f32 %v4699, 2.0
        %v4752 = vmul.f32 %v4714, 2.0
        %v4753 = vmul.f32 %v4729, 2.0
        %v4754 = vsub.f32 1.0, %v4746
        %v4755 = vsub.f32 1.0, %v4747
        %v4756 = vsub.f32 1.0, %v4748
        %v4757 = vsub.f32 1.0, %v4749
        %v4758 = vsub.f32 1.0, %v4750
        %v4759 = vsub.f32 1.0, %v4751
        %v4760 = vsub.f32 1.0, %v4752
        %v4761 = vsub.f32 1.0, %v4753
        %v4762 = vmul.f32 %v4754, %v4452
        %v4763 = vmul.f32 %v4755, %v4481
        %v4764 = vmul.f32 %v4756, %v4455
        %v4765 = vmul.f32 %v4757, %v4484
        %v4766 = vmul.f32 %v4758, %v4458
        %v4767 = vmul.f32 %v4759, %v4487
        %v4768 = vmul.f32 %v4760, %v4461
        %v4769 = vmul.f32 %v4761, %v4490
        %v4770 = vmul.f32 %v4762, %v4452
        %v4771 = vmul.f32 %v4763, %v4481
        %v4772 = vmul.f32 %v4764, %v4455
        %v4773 = vmul.f32 %v4765, %v4484
        %v4774 = vmul.f32 %v4766, %v4458
        %v4775 = vmul.f32 %v4767, %v4487
        %v4776 = vmul.f32 %v4768, %v4461
        %v4777 = vmul.f32 %v4769, %v4490
        %v4778 = vadd.f32 %v4770, %v4510
        %v4779 = vadd.f32 %v4771, %v4539
        %v4780 = vadd.f32 %v4772, %v4513
        %v4781 = vadd.f32 %v4773, %v4542
        %v4782 = vadd.f32 %v4774, %v4516
        %v4783 = vadd.f32 %v4775, %v4545
        %v4784 = vadd.f32 %v4776, %v4519
        %v4785 = vadd.f32 %v4777, %v4548
        %v4786 = vmul.f32 %v4738, %v4394
        %v4787 = vmul.f32 %v4739, %v4423
        %v4788 = vmul.f32 %v4740, %v4397
        %v4789 = vmul.f32 %v4741, %v4426
        %v4790 = vmul.f32 %v4742, %v4400
        %v4791 = vmul.f32 %v4743, %v4429
        %v4792 = vmul.f32 %v4744, %v4403
        %v4793 = vmul.f32 %v4745, %v4432
        %v4794 = vmul.f32 %v4738, %v4452
        %v4795 = vmul.f32 %v4739, %v4481
        %v4796 = vmul.f32 %v4740, %v4455
        %v4797 = vmul.f32 %v4741, %v4484
        %v4798 = vmul.f32 %v4742, %v4458
        %v4799 = vmul.f32 %v4743, %v4487
        %v4800 = vmul.f32 %v4744, %v4461
        %v4801 = vmul.f32 %v4745, %v4490
        %v4802 = vmul.f32 %v4738, %v4778
        %v4803 = vmul.f32 %v4739, %v4779
        %v4804 = vmul.f32 %v4740, %v4780
        %v4805 = vmul.f32 %v4741, %v4781
        %v4806 = vmul.f32 %v4742, %v4782
        %v4807 = vmul.f32 %v4743, %v4783
        %v4808 = vmul.f32 %v4744, %v4784
        %v4809 = vmul.f32 %v4745, %v4785
        %4810 = vst [vmem:[#allocation2] sm:$0xff] %v4624
        %4811 = vst [vmem:[#allocation2 + $0x8] sm:$0xff] %v4639
        %4812 = vst [vmem:[#allocation2 + $0x40] sm:$0xff] %v4654
        %4813 = vst [vmem:[#allocation2 + $0x48] sm:$0xff] %v4669
        %4814 = vst [vmem:[#allocation2 + $0x80] sm:$0xff] %v4684
        %4815 = vst [vmem:[#allocation2 + $0x88] sm:$0xff] %v4699
        %4816 = vst [vmem:[#allocation2 + $0xc0] sm:$0xff] %v4714
        %4817 = vst [vmem:[#allocation2 + $0xc8] sm:$0xff] %v4729
        %4818 = vst [vmem:[#allocation2 + $0x10] sm:$0xff] %v4786
        %4819 = vst [vmem:[#allocation2 + $0x18] sm:$0xff] %v4787
        %4820 = vst [vmem:[#allocation2 + $0x50] sm:$0xff] %v4788
        %4821 = vst [vmem:[#allocation2 + $0x58] sm:$0xff] %v4789
        %4822 = vst [vmem:[#allocation2 + $0x90] sm:$0xff] %v4790
        %4823 = vst [vmem:[#allocation2 + $0x98] sm:$0xff] %v4791
        %4824 = vst [vmem:[#allocation2 + $0xd0] sm:$0xff] %v4792
        %4825 = vst [vmem:[#allocation2 + $0xd8] sm:$0xff] %v4793
        %4826 = vst [vmem:[#allocation2 + $0x20] sm:$0xff] %v4794
        %4827 = vst [vmem:[#allocation2 + $0x28] sm:$0xff] %v4795
        %4828 = vst [vmem:[#allocation2 + $0x60] sm:$0xff] %v4796
        %4829 = vst [vmem:[#allocation2 + $0x68] sm:$0xff] %v4797
        %4830 = vst [vmem:[#allocation2 + $0xa0] sm:$0xff] %v4798
        %4831 = vst [vmem:[#allocation2 + $0xa8] sm:$0xff] %v4799
        %4832 = vst [vmem:[#allocation2 + $0xe0] sm:$0xff] %v4800
        %4833 = vst [vmem:[#allocation2 + $0xe8] sm:$0xff] %v4801
        %4834 = vst [vmem:[#allocation2 + $0x30] sm:$0xff] %v4802
        %4835 = vst [vmem:[#allocation2 + $0x38] sm:$0xff] %v4803
        %4836 = vst [vmem:[#allocation2 + $0x70] sm:$0xff] %v4804
        %4837 = vst [vmem:[#allocation2 + $0x78] sm:$0xff] %v4805
        %4838 = vst [vmem:[#allocation2 + $0xb0] sm:$0xff] %v4806
        %4839 = vst [vmem:[#allocation2 + $0xb8] sm:$0xff] %v4807
        %4840 = vst [vmem:[#allocation2 + $0xf0] sm:$0xff] %v4808
        %4841 = vst [vmem:[#allocation2 + $0xf8] sm:$0xff] %v4809
        %v4842 = vld [vmem:[#allocation2] sm:$0xff]
        %v4843 = vld [vmem:[#allocation2 + $0x8] sm:$0xff]
        %v4844 = vld [vmem:[#allocation2 + $0x10] sm:$0xff]
        %v4845 = vld [vmem:[#allocation2 + $0x18] sm:$0xff]
        %v4846 = vld [vmem:[#allocation2 + $0x20] sm:$0xff]
        %v4847 = vld [vmem:[#allocation2 + $0x28] sm:$0xff]
        %v4848 = vld [vmem:[#allocation2 + $0x30] sm:$0xff]
        %v4849 = vld [vmem:[#allocation2 + $0x38] sm:$0xff]
        %v4850 = vld [vmem:[#allocation2 + $0x40] sm:$0xff]
        %v4851 = vld [vmem:[#allocation2 + $0x48] sm:$0xff]
        %v4852 = vld [vmem:[#allocation2 + $0x50] sm:$0xff]
        %v4853 = vld [vmem:[#allocation2 + $0x58] sm:$0xff]
        %v4854 = vld [vmem:[#allocation2 + $0x60] sm:$0xff]
        %v4855 = vld [vmem:[#allocation2 + $0x68] sm:$0xff]
        %v4856 = vld [vmem:[#allocation2 + $0x70] sm:$0xff]
        %v4857 = vld [vmem:[#allocation2 + $0x78] sm:$0xff]
        %v4858 = vld [vmem:[#allocation2 + $0x80] sm:$0xff]
        %v4859 = vld [vmem:[#allocation2 + $0x88] sm:$0xff]
        %v4860 = vld [vmem:[#allocation2 + $0x90] sm:$0xff]
        %v4861 = vld [vmem:[#allocation2 + $0x98] sm:$0xff]
        %v4862 = vld [vmem:[#allocation2 + $0xa0] sm:$0xff]
        %v4863 = vld [vmem:[#allocation2 + $0xa8] sm:$0xff]
        %v4864 = vld [vmem:[#allocation2 + $0xb0] sm:$0xff]
        %v4865 = vld [vmem:[#allocation2 + $0xb8] sm:$0xff]
        %v4866 = vld [vmem:[#allocation2 + $0xc0] sm:$0xff]
        %v4867 = vld [vmem:[#allocation2 + $0xc8] sm:$0xff]
        %v4868 = vld [vmem:[#allocation2 + $0xd0] sm:$0xff]
        %v4869 = vld [vmem:[#allocation2 + $0xd8] sm:$0xff]
        %v4870 = vld [vmem:[#allocation2 + $0xe0] sm:$0xff]
        %v4871 = vld [vmem:[#allocation2 + $0xe8] sm:$0xff]
        %v4872 = vld [vmem:[#allocation2 + $0xf0] sm:$0xff]
        %v4873 = vld [vmem:[#allocation2 + $0xf8] sm:$0xff]
        %v4875 = vsel %vm749, %v4001, 0
        %v4878 = vsel %vm749, %v4002, 0
        %v4881 = vsel %vm749, %v4003, 0
        %v4884 = vsel %vm749, %v4004, 0
        %4886 = vmatpush.msra.mxu0 0.0
        %4887 = vmatpush.msra.mxu0 0.0
        %4888 = vmatpush.msra.mxu0 0.0
        %4889 = vmatpush.msra.mxu0 0.0
        %4890 = vmatpush.msra.mxu0 0.0
        %4891 = vmatpush.msra.mxu0 0.0
        %4892 = vmatpush.msra.mxu0 0.0
        %4893 = vmatpush.msra.mxu0 0.0
        %4894 = vmatpush.msra.mxu0 0.0
        %4895 = vmatpush.msra.mxu0 0.0
        %4896 = vmatpush.msra.mxu0 0.0
        %4897 = vmatpush.msra.mxu0 0.0
        %4898 = vmatpush.msra.mxu0 %v4866
        %4899 = vmatpush.msra.mxu0 %v4858
        %4900 = vmatpush.msra.mxu0 %v4850
        %4901 = vmatpush.msra.mxu0 %v4842
        %4902 = vmatmul.f32.gmra.mxu0 %v4875
        %v4903 = vpop.f32.mrf.mxu0
        %v4904 = vadd.f32 0.0, %v4903
        %4905 = vmatmul.f32.gmra.mxu0 %v4878
        %v4906 = vpop.f32.mrf.mxu0
        %v4907 = vadd.f32 0.0, %v4906
        %4908 = vmatmul.f32.gmra.mxu0 %v4881
        %v4909 = vpop.f32.mrf.mxu0
        %v4910 = vadd.f32 0.0, %v4909
        %4911 = vmatmul.f32.gmra.mxu0 %v4884
        %v4912 = vpop.f32.mrf.mxu0
        %v4913 = vadd.f32 0.0, %v4912
        %4914 = vdwg.mxu0
        %4915 = vmatpush.msra.mxu0 0.0
        %4916 = vmatpush.msra.mxu0 0.0
        %4917 = vmatpush.msra.mxu0 0.0
        %4918 = vmatpush.msra.mxu0 0.0
        %4919 = vmatpush.msra.mxu0 0.0
        %4920 = vmatpush.msra.mxu0 0.0
        %4921 = vmatpush.msra.mxu0 0.0
        %4922 = vmatpush.msra.mxu0 0.0
        %4923 = vmatpush.msra.mxu0 0.0
        %4924 = vmatpush.msra.mxu0 0.0
        %4925 = vmatpush.msra.mxu0 0.0
        %4926 = vmatpush.msra.mxu0 0.0
        %4927 = vmatpush.msra.mxu0 %v4867
        %4928 = vmatpush.msra.mxu0 %v4859
        %4929 = vmatpush.msra.mxu0 %v4851
        %4930 = vmatpush.msra.mxu0 %v4843
        %4931 = vmatmul.f32.gmra.mxu0 %v4875
        %v4932 = vpop.f32.mrf.mxu0
        %v4933 = vadd.f32 0.0, %v4932
        %4934 = vmatmul.f32.gmra.mxu0 %v4878
        %v4935 = vpop.f32.mrf.mxu0
        %v4936 = vadd.f32 0.0, %v4935
        %4937 = vmatmul.f32.gmra.mxu0 %v4881
        %v4938 = vpop.f32.mrf.mxu0
        %v4939 = vadd.f32 0.0, %v4938
        %4940 = vmatmul.f32.gmra.mxu0 %v4884
        %v4941 = vpop.f32.mrf.mxu0
        %v4942 = vadd.f32 0.0, %v4941
        %4943 = vdwg.mxu0
        %4944 = vmatpush.msra.mxu0 0.0
        %4945 = vmatpush.msra.mxu0 0.0
        %4946 = vmatpush.msra.mxu0 0.0
        %4947 = vmatpush.msra.mxu0 0.0
        %4948 = vmatpush.msra.mxu0 0.0
        %4949 = vmatpush.msra.mxu0 0.0
        %4950 = vmatpush.msra.mxu0 0.0
        %4951 = vmatpush.msra.mxu0 0.0
        %4952 = vmatpush.msra.mxu0 0.0
        %4953 = vmatpush.msra.mxu0 0.0
        %4954 = vmatpush.msra.mxu0 0.0
        %4955 = vmatpush.msra.mxu0 0.0
        %4956 = vmatpush.msra.mxu0 %v4868
        %4957 = vmatpush.msra.mxu0 %v4860
        %4958 = vmatpush.msra.mxu0 %v4852
        %4959 = vmatpush.msra.mxu0 %v4844
        %4960 = vmatmul.f32.gmra.mxu0 %v4875
        %v4961 = vpop.f32.mrf.mxu0
        %v4962 = vadd.f32 0.0, %v4961
        %4963 = vmatmul.f32.gmra.mxu0 %v4878
        %v4964 = vpop.f32.mrf.mxu0
        %v4965 = vadd.f32 0.0, %v4964
        %4966 = vmatmul.f32.gmra.mxu0 %v4881
        %v4967 = vpop.f32.mrf.mxu0
        %v4968 = vadd.f32 0.0, %v4967
        %4969 = vmatmul.f32.gmra.mxu0 %v4884
        %v4970 = vpop.f32.mrf.mxu0
        %v4971 = vadd.f32 0.0, %v4970
        %4972 = vdwg.mxu0
        %4973 = vmatpush.msra.mxu0 0.0
        %4974 = vmatpush.msra.mxu0 0.0
        %4975 = vmatpush.msra.mxu0 0.0
        %4976 = vmatpush.msra.mxu0 0.0
        %4977 = vmatpush.msra.mxu0 0.0
        %4978 = vmatpush.msra.mxu0 0.0
        %4979 = vmatpush.msra.mxu0 0.0
        %4980 = vmatpush.msra.mxu0 0.0
        %4981 = vmatpush.msra.mxu0 0.0
        %4982 = vmatpush.msra.mxu0 0.0
        %4983 = vmatpush.msra.mxu0 0.0
        %4984 = vmatpush.msra.mxu0 0.0
        %4985 = vmatpush.msra.mxu0 %v4869
        %4986 = vmatpush.msra.mxu0 %v4861
        %4987 = vmatpush.msra.mxu0 %v4853
        %4988 = vmatpush.msra.mxu0 %v4845
        %4989 = vmatmul.f32.gmra.mxu0 %v4875
        %v4990 = vpop.f32.mrf.mxu0
        %v4991 = vadd.f32 0.0, %v4990
        %4992 = vmatmul.f32.gmra.mxu0 %v4878
        %v4993 = vpop.f32.mrf.mxu0
        %v4994 = vadd.f32 0.0, %v4993
        %4995 = vmatmul.f32.gmra.mxu0 %v4881
        %v4996 = vpop.f32.mrf.mxu0
        %v4997 = vadd.f32 0.0, %v4996
        %4998 = vmatmul.f32.gmra.mxu0 %v4884
        %v4999 = vpop.f32.mrf.mxu0
        %v5000 = vadd.f32 0.0, %v4999
        %5001 = vdwg.mxu0
        %5002 = vmatpush.msra.mxu0 0.0
        %5003 = vmatpush.msra.mxu0 0.0
        %5004 = vmatpush.msra.mxu0 0.0
        %5005 = vmatpush.msra.mxu0 0.0
        %5006 = vmatpush.msra.mxu0 0.0
        %5007 = vmatpush.msra.mxu0 0.0
        %5008 = vmatpush.msra.mxu0 0.0
        %5009 = vmatpush.msra.mxu0 0.0
        %5010 = vmatpush.msra.mxu0 0.0
        %5011 = vmatpush.msra.mxu0 0.0
        %5012 = vmatpush.msra.mxu0 0.0
        %5013 = vmatpush.msra.mxu0 0.0
        %5014 = vmatpush.msra.mxu0 %v4870
        %5015 = vmatpush.msra.mxu0 %v4862
        %5016 = vmatpush.msra.mxu0 %v4854
        %5017 = vmatpush.msra.mxu0 %v4846
        %5018 = vmatmul.f32.gmra.mxu0 %v4875
        %v5019 = vpop.f32.mrf.mxu0
        %v5020 = vadd.f32 0.0, %v5019
        %5021 = vmatmul.f32.gmra.mxu0 %v4878
        %v5022 = vpop.f32.mrf.mxu0
        %v5023 = vadd.f32 0.0, %v5022
        %5024 = vmatmul.f32.gmra.mxu0 %v4881
        %v5025 = vpop.f32.mrf.mxu0
        %v5026 = vadd.f32 0.0, %v5025
        %5027 = vmatmul.f32.gmra.mxu0 %v4884
        %v5028 = vpop.f32.mrf.mxu0
        %v5029 = vadd.f32 0.0, %v5028
        %5030 = vdwg.mxu0
        %5031 = vmatpush.msra.mxu0 0.0
        %5032 = vmatpush.msra.mxu0 0.0
        %5033 = vmatpush.msra.mxu0 0.0
        %5034 = vmatpush.msra.mxu0 0.0
        %5035 = vmatpush.msra.mxu0 0.0
        %5036 = vmatpush.msra.mxu0 0.0
        %5037 = vmatpush.msra.mxu0 0.0
        %5038 = vmatpush.msra.mxu0 0.0
        %5039 = vmatpush.msra.mxu0 0.0
        %5040 = vmatpush.msra.mxu0 0.0
        %5041 = vmatpush.msra.mxu0 0.0
        %5042 = vmatpush.msra.mxu0 0.0
        %5043 = vmatpush.msra.mxu0 %v4871
        %5044 = vmatpush.msra.mxu0 %v4863
        %5045 = vmatpush.msra.mxu0 %v4855
        %5046 = vmatpush.msra.mxu0 %v4847
        %5047 = vmatmul.f32.gmra.mxu0 %v4875
        %v5048 = vpop.f32.mrf.mxu0
        %v5049 = vadd.f32 0.0, %v5048
        %5050 = vmatmul.f32.gmra.mxu0 %v4878
        %v5051 = vpop.f32.mrf.mxu0
        %v5052 = vadd.f32 0.0, %v5051
        %5053 = vmatmul.f32.gmra.mxu0 %v4881
        %v5054 = vpop.f32.mrf.mxu0
        %v5055 = vadd.f32 0.0, %v5054
        %5056 = vmatmul.f32.gmra.mxu0 %v4884
        %v5057 = vpop.f32.mrf.mxu0
        %v5058 = vadd.f32 0.0, %v5057
        %5059 = vdwg.mxu0
        %5060 = vmatpush.msra.mxu0 0.0
        %5061 = vmatpush.msra.mxu0 0.0
        %5062 = vmatpush.msra.mxu0 0.0
        %5063 = vmatpush.msra.mxu0 0.0
        %5064 = vmatpush.msra.mxu0 0.0
        %5065 = vmatpush.msra.mxu0 0.0
        %5066 = vmatpush.msra.mxu0 0.0
        %5067 = vmatpush.msra.mxu0 0.0
        %5068 = vmatpush.msra.mxu0 0.0
        %5069 = vmatpush.msra.mxu0 0.0
        %5070 = vmatpush.msra.mxu0 0.0
        %5071 = vmatpush.msra.mxu0 0.0
        %5072 = vmatpush.msra.mxu0 %v4872
        %5073 = vmatpush.msra.mxu0 %v4864
        %5074 = vmatpush.msra.mxu0 %v4856
        %5075 = vmatpush.msra.mxu0 %v4848
        %5076 = vmatmul.f32.gmra.mxu0 %v4875
        %v5077 = vpop.f32.mrf.mxu0
        %v5078 = vadd.f32 0.0, %v5077
        %5079 = vmatmul.f32.gmra.mxu0 %v4878
        %v5080 = vpop.f32.mrf.mxu0
        %v5081 = vadd.f32 0.0, %v5080
        %5082 = vmatmul.f32.gmra.mxu0 %v4881
        %v5083 = vpop.f32.mrf.mxu0
        %v5084 = vadd.f32 0.0, %v5083
        %5085 = vmatmul.f32.gmra.mxu0 %v4884
        %v5086 = vpop.f32.mrf.mxu0
        %v5087 = vadd.f32 0.0, %v5086
        %5088 = vdwg.mxu0
        %5089 = vmatpush.msra.mxu0 0.0
        %5090 = vmatpush.msra.mxu0 0.0
        %5091 = vmatpush.msra.mxu0 0.0
        %5092 = vmatpush.msra.mxu0 0.0
        %5093 = vmatpush.msra.mxu0 0.0
        %5094 = vmatpush.msra.mxu0 0.0
        %5095 = vmatpush.msra.mxu0 0.0
        %5096 = vmatpush.msra.mxu0 0.0
        %5097 = vmatpush.msra.mxu0 0.0
        %5098 = vmatpush.msra.mxu0 0.0
        %5099 = vmatpush.msra.mxu0 0.0
        %5100 = vmatpush.msra.mxu0 0.0
        %5101 = vmatpush.msra.mxu0 %v4873
        %5102 = vmatpush.msra.mxu0 %v4865
        %5103 = vmatpush.msra.mxu0 %v4857
        %5104 = vmatpush.msra.mxu0 %v4849
        %5105 = vmatmul.f32.gmra.mxu0 %v4875
        %v5106 = vpop.f32.mrf.mxu0
        %v5107 = vadd.f32 0.0, %v5106
        %5108 = vmatmul.f32.gmra.mxu0 %v4878
        %v5109 = vpop.f32.mrf.mxu0
        %v5110 = vadd.f32 0.0, %v5109
        %5111 = vmatmul.f32.gmra.mxu0 %v4881
        %v5112 = vpop.f32.mrf.mxu0
        %v5113 = vadd.f32 0.0, %v5112
        %5114 = vmatmul.f32.gmra.mxu0 %v4884
        %v5115 = vpop.f32.mrf.mxu0
        %v5116 = vadd.f32 0.0, %v5115
        %5117 = vdwg.mxu0
        %v5118 = vadd.f32 %v3958, %v4904
        %v5119 = vadd.f32 %v3959, %v4933
        %v5120 = vadd.f32 %v3960, %v4907
        %v5121 = vadd.f32 %v3961, %v4936
        %v5122 = vadd.f32 %v3962, %v4910
        %v5123 = vadd.f32 %v3963, %v4939
        %v5124 = vadd.f32 %v3964, %v4913
        %v5125 = vadd.f32 %v3965, %v4942
        %5127 = vset.pattern.permute.xlu0 0
        %5128 = vperm.xlu0 %5127, %v4006
        %v5129 = vpop.permute.xlu0 %5128
        %5132 = vset.pattern.permute.xlu0 0
        %5133 = vperm.xlu0 %5132, %v4007
        %v5134 = vpop.permute.xlu0 %5133
        %5137 = vset.pattern.permute.xlu0 0
        %5138 = vperm.xlu0 %5137, %v4008
        %v5139 = vpop.permute.xlu0 %5138
        %5142 = vset.pattern.permute.xlu0 0
        %5143 = vperm.xlu0 %5142, %v4009
        %v5144 = vpop.permute.xlu0 %5143
        %v5146 = vadd.f32 %v5118, %v5129
        %v5147 = vadd.f32 %v5119, %v5129
        %v5148 = vadd.f32 %v5120, %v5134
        %v5149 = vadd.f32 %v5121, %v5134
        %v5150 = vadd.f32 %v5122, %v5139
        %v5151 = vadd.f32 %v5123, %v5139
        %v5152 = vadd.f32 %v5124, %v5144
        %v5153 = vadd.f32 %v5125, %v5144
        %v5154 = vadd.f32 %v3966, %v4962
        %v5155 = vadd.f32 %v3967, %v4991
        %v5156 = vadd.f32 %v3968, %v4965
        %v5157 = vadd.f32 %v3969, %v4994
        %v5158 = vadd.f32 %v3970, %v4968
        %v5159 = vadd.f32 %v3971, %v4997
        %v5160 = vadd.f32 %v3972, %v4971
        %v5161 = vadd.f32 %v3973, %v5000
        %v5162 = vadd.f32 %v3974, %v5020
        %v5163 = vadd.f32 %v3975, %v5049
        %v5164 = vadd.f32 %v3976, %v5023
        %v5165 = vadd.f32 %v3977, %v5052
        %v5166 = vadd.f32 %v3978, %v5026
        %v5167 = vadd.f32 %v3979, %v5055
        %v5168 = vadd.f32 %v3980, %v5029
        %v5169 = vadd.f32 %v3981, %v5058
        %v5170 = vadd.f32 %v3982, %v5078
        %v5171 = vadd.f32 %v3983, %v5107
        %v5172 = vadd.f32 %v3984, %v5081
        %v5173 = vadd.f32 %v3985, %v5110
        %v5174 = vadd.f32 %v3986, %v5084
        %v5175 = vadd.f32 %v3987, %v5113
        %v5176 = vadd.f32 %v3988, %v5087
        %v5177 = vadd.f32 %v3989, %v5116
        %v5178 = vxor.u32 %v5146, 2147483648
        %v5179 = vxor.u32 %v5147, 2147483648
        %v5180 = vxor.u32 %v5148, 2147483648
        %v5181 = vxor.u32 %v5149, 2147483648
        %v5182 = vxor.u32 %v5150, 2147483648
        %v5183 = vxor.u32 %v5151, 2147483648
        %v5184 = vxor.u32 %v5152, 2147483648
        %v5185 = vxor.u32 %v5153, 2147483648
        %v5186 = vmul.f32 %v5178, 1.442695
        %v5187 = vpow.pop %v5186
        %v5188 = vmul.f32 %v5179, 1.442695
        %v5189 = vpow.pop %v5188
        %v5190 = vmul.f32 %v5180, 1.442695
        %v5191 = vpow.pop %v5190
        %v5192 = vmul.f32 %v5181, 1.442695
        %v5193 = vpow.pop %v5192
        %v5194 = vmul.f32 %v5182, 1.442695
        %v5195 = vpow.pop %v5194
        %v5196 = vmul.f32 %v5183, 1.442695
        %v5197 = vpow.pop %v5196
        %v5198 = vmul.f32 %v5184, 1.442695
        %v5199 = vpow.pop %v5198
        %v5200 = vmul.f32 %v5185, 1.442695
        %v5201 = vpow.pop %v5200
        %v5202 = vadd.f32 %v5187, 1.0
        %v5203 = vadd.f32 %v5189, 1.0
        %v5204 = vadd.f32 %v5191, 1.0
        %v5205 = vadd.f32 %v5193, 1.0
        %v5206 = vadd.f32 %v5195, 1.0
        %v5207 = vadd.f32 %v5197, 1.0
        %v5208 = vadd.f32 %v5199, 1.0
        %v5209 = vadd.f32 %v5201, 1.0
        %v5210 = vrcp.pop %v5202
        %v5211 = vmul.f32 %v5202, %v5210
        %v5212 = vsub.f32 1.0, %v5211
        %v5213 = vmul.f32 %v5210, %v5212
        %v5214 = vadd.f32 %v5210, %v5213
        %vm5215 = vweird.f32 %v5202
        %vm5216 = vweird.f32 %v5210
        %vm5217 = vmor %vm5215, %vm5216
        %v5218 = vsel %vm5217, %v5210, %v5214
        %v5219 = vand.u32 2147483647, %v5202
        %vm5220 = vcmp.eq.f32.partialorder %v5219, 8.507059e+37
        %v5221 = vand.u32 %v5202, 2147483648
        %v5222 = vor.u32 1.1754944e-38, %v5221
        %v5223 = vsel %vm5220, %v5222, %v5218
        %v5224 = vmul.f32 1.0, %v5223
        %v5225 = vrcp.pop %v5203
        %v5226 = vmul.f32 %v5203, %v5225
        %v5227 = vsub.f32 1.0, %v5226
        %v5228 = vmul.f32 %v5225, %v5227
        %v5229 = vadd.f32 %v5225, %v5228
        %vm5230 = vweird.f32 %v5203
        %vm5231 = vweird.f32 %v5225
        %vm5232 = vmor %vm5230, %vm5231
        %v5233 = vsel %vm5232, %v5225, %v5229
        %v5234 = vand.u32 2147483647, %v5203
        %vm5235 = vcmp.eq.f32.partialorder %v5234, 8.507059e+37
        %v5236 = vand.u32 %v5203, 2147483648
        %v5237 = vor.u32 1.1754944e-38, %v5236
        %v5238 = vsel %vm5235, %v5237, %v5233
        %v5239 = vmul.f32 1.0, %v5238
        %v5240 = vrcp.pop %v5204
        %v5241 = vmul.f32 %v5204, %v5240
        %v5242 = vsub.f32 1.0, %v5241
        %v5243 = vmul.f32 %v5240, %v5242
        %v5244 = vadd.f32 %v5240, %v5243
        %vm5245 = vweird.f32 %v5204
        %vm5246 = vweird.f32 %v5240
        %vm5247 = vmor %vm5245, %vm5246
        %v5248 = vsel %vm5247, %v5240, %v5244
        %v5249 = vand.u32 2147483647, %v5204
        %vm5250 = vcmp.eq.f32.partialorder %v5249, 8.507059e+37
        %v5251 = vand.u32 %v5204, 2147483648
        %v5252 = vor.u32 1.1754944e-38, %v5251
        %v5253 = vsel %vm5250, %v5252, %v5248
        %v5254 = vmul.f32 1.0, %v5253
        %v5255 = vrcp.pop %v5205
        %v5256 = vmul.f32 %v5205, %v5255
        %v5257 = vsub.f32 1.0, %v5256
        %v5258 = vmul.f32 %v5255, %v5257
        %v5259 = vadd.f32 %v5255, %v5258
        %vm5260 = vweird.f32 %v5205
        %vm5261 = vweird.f32 %v5255
        %vm5262 = vmor %vm5260, %vm5261
        %v5263 = vsel %vm5262, %v5255, %v5259
        %v5264 = vand.u32 2147483647, %v5205
        %vm5265 = vcmp.eq.f32.partialorder %v5264, 8.507059e+37
        %v5266 = vand.u32 %v5205, 2147483648
        %v5267 = vor.u32 1.1754944e-38, %v5266
        %v5268 = vsel %vm5265, %v5267, %v5263
        %v5269 = vmul.f32 1.0, %v5268
        %v5270 = vrcp.pop %v5206
        %v5271 = vmul.f32 %v5206, %v5270
        %v5272 = vsub.f32 1.0, %v5271
        %v5273 = vmul.f32 %v5270, %v5272
        %v5274 = vadd.f32 %v5270, %v5273
        %vm5275 = vweird.f32 %v5206
        %vm5276 = vweird.f32 %v5270
        %vm5277 = vmor %vm5275, %vm5276
        %v5278 = vsel %vm5277, %v5270, %v5274
        %v5279 = vand.u32 2147483647, %v5206
        %vm5280 = vcmp.eq.f32.partialorder %v5279, 8.507059e+37
        %v5281 = vand.u32 %v5206, 2147483648
        %v5282 = vor.u32 1.1754944e-38, %v5281
        %v5283 = vsel %vm5280, %v5282, %v5278
        %v5284 = vmul.f32 1.0, %v5283
        %v5285 = vrcp.pop %v5207
        %v5286 = vmul.f32 %v5207, %v5285
        %v5287 = vsub.f32 1.0, %v5286
        %v5288 = vmul.f32 %v5285, %v5287
        %v5289 = vadd.f32 %v5285, %v5288
        %vm5290 = vweird.f32 %v5207
        %vm5291 = vweird.f32 %v5285
        %vm5292 = vmor %vm5290, %vm5291
        %v5293 = vsel %vm5292, %v5285, %v5289
        %v5294 = vand.u32 2147483647, %v5207
        %vm5295 = vcmp.eq.f32.partialorder %v5294, 8.507059e+37
        %v5296 = vand.u32 %v5207, 2147483648
        %v5297 = vor.u32 1.1754944e-38, %v5296
        %v5298 = vsel %vm5295, %v5297, %v5293
        %v5299 = vmul.f32 1.0, %v5298
        %v5300 = vrcp.pop %v5208
        %v5301 = vmul.f32 %v5208, %v5300
        %v5302 = vsub.f32 1.0, %v5301
        %v5303 = vmul.f32 %v5300, %v5302
        %v5304 = vadd.f32 %v5300, %v5303
        %vm5305 = vweird.f32 %v5208
        %vm5306 = vweird.f32 %v5300
        %vm5307 = vmor %vm5305, %vm5306
        %v5308 = vsel %vm5307, %v5300, %v5304
        %v5309 = vand.u32 2147483647, %v5208
        %vm5310 = vcmp.eq.f32.partialorder %v5309, 8.507059e+37
        %v5311 = vand.u32 %v5208, 2147483648
        %v5312 = vor.u32 1.1754944e-38, %v5311
        %v5313 = vsel %vm5310, %v5312, %v5308
        %v5314 = vmul.f32 1.0, %v5313
        %v5315 = vrcp.pop %v5209
        %v5316 = vmul.f32 %v5209, %v5315
        %v5317 = vsub.f32 1.0, %v5316
        %v5318 = vmul.f32 %v5315, %v5317
        %v5319 = vadd.f32 %v5315, %v5318
        %vm5320 = vweird.f32 %v5209
        %vm5321 = vweird.f32 %v5315
        %vm5322 = vmor %vm5320, %vm5321
        %v5323 = vsel %vm5322, %v5315, %v5319
        %v5324 = vand.u32 2147483647, %v5209
        %vm5325 = vcmp.eq.f32.partialorder %v5324, 8.507059e+37
        %v5326 = vand.u32 %v5209, 2147483648
        %v5327 = vor.u32 1.1754944e-38, %v5326
        %v5328 = vsel %vm5325, %v5327, %v5323
        %v5329 = vmul.f32 1.0, %v5328
        %v5330 = vsub.f32 1.0, %v5224
        %v5331 = vsub.f32 1.0, %v5239
        %v5332 = vsub.f32 1.0, %v5254
        %v5333 = vsub.f32 1.0, %v5269
        %v5334 = vsub.f32 1.0, %v5284
        %v5335 = vsub.f32 1.0, %v5299
        %v5336 = vsub.f32 1.0, %v5314
        %v5337 = vsub.f32 1.0, %v5329
        %v5338 = vmul.f32 %v5224, %v5330
        %v5339 = vmul.f32 %v5239, %v5331
        %v5340 = vmul.f32 %v5254, %v5332
        %v5341 = vmul.f32 %v5269, %v5333
        %v5342 = vmul.f32 %v5284, %v5334
        %v5343 = vmul.f32 %v5299, %v5335
        %v5344 = vmul.f32 %v5314, %v5336
        %v5345 = vmul.f32 %v5329, %v5337
        %v5346 = vmul.f32 %v5224, 2.0
        %v5347 = vmul.f32 %v5239, 2.0
        %v5348 = vmul.f32 %v5254, 2.0
        %v5349 = vmul.f32 %v5269, 2.0
        %v5350 = vmul.f32 %v5284, 2.0
        %v5351 = vmul.f32 %v5299, 2.0
        %v5352 = vmul.f32 %v5314, 2.0
        %v5353 = vmul.f32 %v5329, 2.0
        %v5354 = vsub.f32 1.0, %v5346
        %v5355 = vsub.f32 1.0, %v5347
        %v5356 = vsub.f32 1.0, %v5348
        %v5357 = vsub.f32 1.0, %v5349
        %v5358 = vsub.f32 1.0, %v5350
        %v5359 = vsub.f32 1.0, %v5351
        %v5360 = vsub.f32 1.0, %v5352
        %v5361 = vsub.f32 1.0, %v5353
        %v5362 = vmul.f32 %v5354, %v5162
        %v5363 = vmul.f32 %v5355, %v5163
        %v5364 = vmul.f32 %v5356, %v5164
        %v5365 = vmul.f32 %v5357, %v5165
        %v5366 = vmul.f32 %v5358, %v5166
        %v5367 = vmul.f32 %v5359, %v5167
        %v5368 = vmul.f32 %v5360, %v5168
        %v5369 = vmul.f32 %v5361, %v5169
        %v5370 = vmul.f32 %v5362, %v5162
        %v5371 = vmul.f32 %v5363, %v5163
        %v5372 = vmul.f32 %v5364, %v5164
        %v5373 = vmul.f32 %v5365, %v5165
        %v5374 = vmul.f32 %v5366, %v5166
        %v5375 = vmul.f32 %v5367, %v5167
        %v5376 = vmul.f32 %v5368, %v5168
        %v5377 = vmul.f32 %v5369, %v5169
        %v5378 = vadd.f32 %v5370, %v5170
        %v5379 = vadd.f32 %v5371, %v5171
        %v5380 = vadd.f32 %v5372, %v5172
        %v5381 = vadd.f32 %v5373, %v5173
        %v5382 = vadd.f32 %v5374, %v5174
        %v5383 = vadd.f32 %v5375, %v5175
        %v5384 = vadd.f32 %v5376, %v5176
        %v5385 = vadd.f32 %v5377, %v5177
        %5386 = vst [vmem:[#allocation2] sm:$0xff] %v5224
        %5387 = vst [vmem:[#allocation2 + $0x8] sm:$0xff] %v5239
        %5388 = vst [vmem:[#allocation2 + $0x40] sm:$0xff] %v5254
        %5389 = vst [vmem:[#allocation2 + $0x48] sm:$0xff] %v5269
        %5390 = vst [vmem:[#allocation2 + $0x80] sm:$0xff] %v5284
        %5391 = vst [vmem:[#allocation2 + $0x88] sm:$0xff] %v5299
        %5392 = vst [vmem:[#allocation2 + $0xc0] sm:$0xff] %v5314
        %5393 = vst [vmem:[#allocation2 + $0xc8] sm:$0xff] %v5329
        %v5394 = vmul.f32 %v5338, %v5154
        %v5395 = vmul.f32 %v5339, %v5155
        %v5396 = vmul.f32 %v5340, %v5156
        %v5397 = vmul.f32 %v5341, %v5157
        %v5398 = vmul.f32 %v5342, %v5158
        %v5399 = vmul.f32 %v5343, %v5159
        %v5400 = vmul.f32 %v5344, %v5160
        %v5401 = vmul.f32 %v5345, %v5161
        %5402 = vst [vmem:[#allocation2 + $0x10] sm:$0xff] %v5394
        %5403 = vst [vmem:[#allocation2 + $0x18] sm:$0xff] %v5395
        %5404 = vst [vmem:[#allocation2 + $0x50] sm:$0xff] %v5396
        %5405 = vst [vmem:[#allocation2 + $0x58] sm:$0xff] %v5397
        %5406 = vst [vmem:[#allocation2 + $0x90] sm:$0xff] %v5398
        %5407 = vst [vmem:[#allocation2 + $0x98] sm:$0xff] %v5399
        %5408 = vst [vmem:[#allocation2 + $0xd0] sm:$0xff] %v5400
        %5409 = vst [vmem:[#allocation2 + $0xd8] sm:$0xff] %v5401
        %v5410 = vmul.f32 %v5338, %v5162
        %v5411 = vmul.f32 %v5339, %v5163
        %v5412 = vmul.f32 %v5340, %v5164
        %v5413 = vmul.f32 %v5341, %v5165
        %v5414 = vmul.f32 %v5342, %v5166
        %v5415 = vmul.f32 %v5343, %v5167
        %v5416 = vmul.f32 %v5344, %v5168
        %v5417 = vmul.f32 %v5345, %v5169
        %5418 = vst [vmem:[#allocation2 + $0x20] sm:$0xff] %v5410
        %5419 = vst [vmem:[#allocation2 + $0x28] sm:$0xff] %v5411
        %5420 = vst [vmem:[#allocation2 + $0x60] sm:$0xff] %v5412
        %5421 = vst [vmem:[#allocation2 + $0x68] sm:$0xff] %v5413
        %5422 = vst [vmem:[#allocation2 + $0xa0] sm:$0xff] %v5414
        %5423 = vst [vmem:[#allocation2 + $0xa8] sm:$0xff] %v5415
        %5424 = vst [vmem:[#allocation2 + $0xe0] sm:$0xff] %v5416
        %5425 = vst [vmem:[#allocation2 + $0xe8] sm:$0xff] %v5417
        %v5426 = vmul.f32 %v5338, %v5378
        %v5427 = vmul.f32 %v5339, %v5379
        %v5428 = vmul.f32 %v5340, %v5380
        %v5429 = vmul.f32 %v5341, %v5381
        %v5430 = vmul.f32 %v5342, %v5382
        %v5431 = vmul.f32 %v5343, %v5383
        %v5432 = vmul.f32 %v5344, %v5384
        %v5433 = vmul.f32 %v5345, %v5385
        %5434 = vst [vmem:[#allocation2 + $0x30] sm:$0xff] %v5426
        %5435 = vst [vmem:[#allocation2 + $0x38] sm:$0xff] %v5427
        %5436 = vst [vmem:[#allocation2 + $0x70] sm:$0xff] %v5428
        %5437 = vst [vmem:[#allocation2 + $0x78] sm:$0xff] %v5429
        %5438 = vst [vmem:[#allocation2 + $0xb0] sm:$0xff] %v5430
        %5439 = vst [vmem:[#allocation2 + $0xb8] sm:$0xff] %v5431
        %5440 = vst [vmem:[#allocation2 + $0xf0] sm:$0xff] %v5432
        %5441 = vst [vmem:[#allocation2 + $0xf8] sm:$0xff] %v5433
        %v5442 = vld [vmem:[%s7] sm:$0xff]
        %v5443 = vld [vmem:[%s7 + $0x8] sm:$0xff]
        %v5444 = vld [vmem:[%s7 + $0x10] sm:$0xff]
        %v5445 = vld [vmem:[%s7 + $0x18] sm:$0xff]
        %v5446 = vld [vmem:[#allocation2] sm:$0xff]
        %v5447 = vld [vmem:[#allocation2 + $0x8] sm:$0xff]
        %v5448 = vld [vmem:[#allocation2 + $0x10] sm:$0xff]
        %v5449 = vld [vmem:[#allocation2 + $0x18] sm:$0xff]
        %v5450 = vld [vmem:[#allocation2 + $0x20] sm:$0xff]
        %v5451 = vld [vmem:[#allocation2 + $0x28] sm:$0xff]
        %v5452 = vld [vmem:[#allocation2 + $0x30] sm:$0xff]
        %v5453 = vld [vmem:[#allocation2 + $0x38] sm:$0xff]
        %v5454 = vld [vmem:[#allocation2 + $0x40] sm:$0xff]
        %v5455 = vld [vmem:[#allocation2 + $0x48] sm:$0xff]
        %v5456 = vld [vmem:[#allocation2 + $0x50] sm:$0xff]
        %v5457 = vld [vmem:[#allocation2 + $0x58] sm:$0xff]
        %v5458 = vld [vmem:[#allocation2 + $0x60] sm:$0xff]
        %v5459 = vld [vmem:[#allocation2 + $0x68] sm:$0xff]
        %v5460 = vld [vmem:[#allocation2 + $0x70] sm:$0xff]
        %v5461 = vld [vmem:[#allocation2 + $0x78] sm:$0xff]
        %v5462 = vld [vmem:[#allocation2 + $0x80] sm:$0xff]
        %v5463 = vld [vmem:[#allocation2 + $0x88] sm:$0xff]
        %v5464 = vld [vmem:[#allocation2 + $0x90] sm:$0xff]
        %v5465 = vld [vmem:[#allocation2 + $0x98] sm:$0xff]
        %v5466 = vld [vmem:[#allocation2 + $0xa0] sm:$0xff]
        %v5467 = vld [vmem:[#allocation2 + $0xa8] sm:$0xff]
        %v5468 = vld [vmem:[#allocation2 + $0xb0] sm:$0xff]
        %v5469 = vld [vmem:[#allocation2 + $0xb8] sm:$0xff]
        %v5470 = vld [vmem:[#allocation2 + $0xc0] sm:$0xff]
        %v5471 = vld [vmem:[#allocation2 + $0xc8] sm:$0xff]
        %v5472 = vld [vmem:[#allocation2 + $0xd0] sm:$0xff]
        %v5473 = vld [vmem:[#allocation2 + $0xd8] sm:$0xff]
        %v5474 = vld [vmem:[#allocation2 + $0xe0] sm:$0xff]
        %v5475 = vld [vmem:[#allocation2 + $0xe8] sm:$0xff]
        %v5476 = vld [vmem:[#allocation2 + $0xf0] sm:$0xff]
        %v5477 = vld [vmem:[#allocation2 + $0xf8] sm:$0xff]
        %5479 = vset.pattern.permute.xlu0 0
        %5480 = vperm.xlu0 %5479, %v5442
        %v5481 = vpop.permute.xlu0 %5480
        %5484 = vset.pattern.permute.xlu0 0
        %5485 = vperm.xlu0 %5484, %v5443
        %v5486 = vpop.permute.xlu0 %5485
        %5489 = vset.pattern.permute.xlu0 0
        %5490 = vperm.xlu0 %5489, %v5444
        %v5491 = vpop.permute.xlu0 %5490
        %5494 = vset.pattern.permute.xlu0 0
        %5495 = vperm.xlu0 %5494, %v5445
        %v5496 = vpop.permute.xlu0 %5495
        %v5498 = vmul.f32 %v5481, %v5446
        %v5499 = vmul.f32 %v5481, %v5447
        %v5500 = vmul.f32 %v5481, %v5448
        %v5501 = vmul.f32 %v5481, %v5449
        %v5502 = vmul.f32 %v5481, %v5450
        %v5503 = vmul.f32 %v5481, %v5451
        %v5504 = vmul.f32 %v5481, %v5452
        %v5505 = vmul.f32 %v5481, %v5453
        %v5506 = vmul.f32 %v5486, %v5454
        %v5507 = vmul.f32 %v5486, %v5455
        %v5508 = vmul.f32 %v5486, %v5456
        %v5509 = vmul.f32 %v5486, %v5457
        %v5510 = vmul.f32 %v5486, %v5458
        %v5511 = vmul.f32 %v5486, %v5459
        %v5512 = vmul.f32 %v5486, %v5460
        %v5513 = vmul.f32 %v5486, %v5461
        %v5514 = vmul.f32 %v5491, %v5462
        %v5515 = vmul.f32 %v5491, %v5463
        %v5516 = vmul.f32 %v5491, %v5464
        %v5517 = vmul.f32 %v5491, %v5465
        %v5518 = vmul.f32 %v5491, %v5466
        %v5519 = vmul.f32 %v5491, %v5467
        %v5520 = vmul.f32 %v5491, %v5468
        %v5521 = vmul.f32 %v5491, %v5469
        %v5522 = vmul.f32 %v5496, %v5470
        %v5523 = vmul.f32 %v5496, %v5471
        %v5524 = vmul.f32 %v5496, %v5472
        %v5525 = vmul.f32 %v5496, %v5473
        %v5526 = vmul.f32 %v5496, %v5474
        %v5527 = vmul.f32 %v5496, %v5475
        %v5528 = vmul.f32 %v5496, %v5476
        %v5529 = vmul.f32 %v5496, %v5477
        %v5530 = vadd.f32 %v5498, %v5506
        %v5531 = vadd.f32 %v5530, %v5514
        %v5532 = vadd.f32 %v5531, %v5522
        %v5533 = vrot.slane %v5532, 4
        %v5534 = vadd.f32 %v5532, %v5533
        %v5535 = vrot.slane %v5534, 2
        %v5536 = vadd.f32 %v5534, %v5535
        %v5537 = vrot.slane %v5536, 1
        %v5538 = vadd.f32 %v5536, %v5537
        %v5539 = vadd.f32 %v5499, %v5507
        %v5540 = vadd.f32 %v5539, %v5515
        %v5541 = vadd.f32 %v5540, %v5523
        %v5542 = vrot.slane %v5541, 4
        %v5543 = vadd.f32 %v5541, %v5542
        %v5544 = vrot.slane %v5543, 2
        %v5545 = vadd.f32 %v5543, %v5544
        %v5546 = vrot.slane %v5545, 1
        %v5547 = vadd.f32 %v5545, %v5546
        %v5548 = vadd.f32 %v5500, %v5508
        %v5549 = vadd.f32 %v5548, %v5516
        %v5550 = vadd.f32 %v5549, %v5524
        %v5551 = vrot.slane %v5550, 4
        %v5552 = vadd.f32 %v5550, %v5551
        %v5553 = vrot.slane %v5552, 2
        %v5554 = vadd.f32 %v5552, %v5553
        %v5555 = vrot.slane %v5554, 1
        %v5556 = vadd.f32 %v5554, %v5555
        %v5557 = vadd.f32 %v5501, %v5509
        %v5558 = vadd.f32 %v5557, %v5517
        %v5559 = vadd.f32 %v5558, %v5525
        %v5560 = vrot.slane %v5559, 4
        %v5561 = vadd.f32 %v5559, %v5560
        %v5562 = vrot.slane %v5561, 2
        %v5563 = vadd.f32 %v5561, %v5562
        %v5564 = vrot.slane %v5563, 1
        %v5565 = vadd.f32 %v5563, %v5564
        %v5566 = vadd.f32 %v5502, %v5510
        %v5567 = vadd.f32 %v5566, %v5518
        %v5568 = vadd.f32 %v5567, %v5526
        %v5569 = vrot.slane %v5568, 4
        %v5570 = vadd.f32 %v5568, %v5569
        %v5571 = vrot.slane %v5570, 2
        %v5572 = vadd.f32 %v5570, %v5571
        %v5573 = vrot.slane %v5572, 1
        %v5574 = vadd.f32 %v5572, %v5573
        %v5575 = vadd.f32 %v5503, %v5511
        %v5576 = vadd.f32 %v5575, %v5519
        %v5577 = vadd.f32 %v5576, %v5527
        %v5578 = vrot.slane %v5577, 4
        %v5579 = vadd.f32 %v5577, %v5578
        %v5580 = vrot.slane %v5579, 2
        %v5581 = vadd.f32 %v5579, %v5580
        %v5582 = vrot.slane %v5581, 1
        %v5583 = vadd.f32 %v5581, %v5582
        %v5584 = vadd.f32 %v5504, %v5512
        %v5585 = vadd.f32 %v5584, %v5520
        %v5586 = vadd.f32 %v5585, %v5528
        %v5587 = vrot.slane %v5586, 4
        %v5588 = vadd.f32 %v5586, %v5587
        %v5589 = vrot.slane %v5588, 2
        %v5590 = vadd.f32 %v5588, %v5589
        %v5591 = vrot.slane %v5590, 1
        %v5592 = vadd.f32 %v5590, %v5591
        %v5593 = vadd.f32 %v5505, %v5513
        %v5594 = vadd.f32 %v5593, %v5521
        %v5595 = vadd.f32 %v5594, %v5529
        %v5596 = vrot.slane %v5595, 4
        %v5597 = vadd.f32 %v5595, %v5596
        %v5598 = vrot.slane %v5597, 2
        %v5599 = vadd.f32 %v5597, %v5598
        %v5600 = vrot.slane %v5599, 1
        %v5601 = vadd.f32 %v5599, %v5600
        %v5602 = vld [vmem:[#allocation3] sm:$0x1]
        %5604 = vset.pattern.permute.xlu0 0
        %5605 = vperm.xlu0 %5604, %v5602
        %v5606 = vpop.permute.xlu0 %5605
        %v5608 = vperm.slane %v5606, 0
        %v5609 = vadd.f32 %v5538, %v5608
        %v5610 = vadd.f32 %v5547, %v5608
        %v5611 = vmul.f32 %v5592, 0.0001
        %v5612 = vmul.f32 %v5601, 0.0001
        %v5613 = vsub.f32 %v5556, %v5611
        %v5614 = vsub.f32 %v5565, %v5612
        %v5615 = vmul.f32 %v5609, 5.0
        %v5616 = vmul.f32 %v5610, 5.0
        %v5617 = vmul.f32 %v5615, %v5609
        %v5618 = vmul.f32 %v5616, %v5610
        %v5619 = vmul.f32 %v5617, %v5609
        %v5620 = vmul.f32 %v5618, %v5610
        %v5621 = vadd.f32 %v5613, %v5619
        %v5622 = vadd.f32 %v5614, %v5620
        %v5623 = vsub.f32 %v5621, %v5615
        %v5624 = vsub.f32 %v5622, %v5616
        %vm5625 = vcmask 1040384
        %v5626 = vsel %vm5625, %v5609, %v5556
        %v5627 = vsel %vm5625, %v5610, %v5565
        %vm5628 = vcmask 1041408
        %v5629 = vsel %vm5628, %v5626, %v5574
        %v5630 = vsel %vm5628, %v5627, %v5583
        %vm5631 = vcmask 1042432
        %v5632 = vsel %vm5631, %v5629, %v5592
        %v5633 = vsel %vm5631, %v5630, %v5601
        %vm5634 = vcmask 1043456
        %v5635 = vsel %vm5634, %v5632, %v5623
        %v5636 = vsel %vm5634, %v5633, %v5624
        %5637 = vst [vmem:[%s328] sm:$0x1f] %v5635
        %5638 = vst [vmem:[%s328 + $0x8] sm:$0x1f] %v5636
        %s5639 = sand.u32 %s227, 1
        %s5640 = scalar_lea.sflag [#allocation5], %s5639
        %s5641 = sand.u32 %s227, 1
        %s5642 = smul.addr %s5641, 16
        %s5643 = scalar_lea.vmem [#allocation4], %s5642
        // Predicated region
        $region57: #{tpu_custom_call.1} parent=55 // pred_check
          %p5644 = pneg %p237
        $region58: #{tpu_custom_call.1} parent=55 // pred_check_branch
          %5646 = sbr.rel (%p5644) target = $region60
        $region59: #{tpu_custom_call.1} parent=55 // pred_region
          %s5647 = smul.u32 2, %s25
          %5649 = vsyncadd %s5640, 0
          %s5650 = smul.addr %s5647, 8
          %s5651 = scalar_lea.hbm %s9, %s5650
          %s5653 = sshll.u32 %s5643, 4
          %s5654 = int_to_ptr.vmem [resolvable:$true] %s5653
          %s5655 = sshll.u32 %s5651, 4
          %s5656 = int_to_ptr.hbm [resolvable:$true] %s5655
          %5658 = dma.vmem_to_hbm [thread:$0]  %s5654, 256, %s5656, %s5640
        $region60: #{tpu_custom_call.1} parent=55 // pred_fallthru
          _
      $region56: #{tpu_custom_call.1} parent=5 // pred_fallthru
        _
      %p5659 = scmp.le.s32.totalorder 2, %s20
      // Predicated region
      $region61: #{tpu_custom_call.1} parent=5 // pred_check
        %p5660 = pneg %p5659
      $region62: #{tpu_custom_call.1} parent=5 // pred_check_branch
        %5662 = sbr.rel (%p5660) target = $region64
      $region63: #{tpu_custom_call.1} parent=5 // pred_region
        %s5663 = ssub.s32 %s20, 2
        // Predicated region
        $region65: #{tpu_custom_call.1} parent=63 // pred_check
          %p5664 = pneg %p243
        $region66: #{tpu_custom_call.1} parent=63 // pred_check_branch
          %5666 = sbr.rel (%p5664) target = $region68
        $region67: #{tpu_custom_call.1} parent=63 // pred_region
          %s5667 = sand.u32 %s228, 1
          %s5668 = scalar_lea.sflag [#allocation5], %s5667
          %s5669 = sand.u32 %s228, 1
          %s5670 = smul.addr %s5669, 16
          %s5671 = scalar_lea.vmem [#allocation4], %s5670
          %5673 = dma.done %s5668, 256
        $region68: #{tpu_custom_call.1} parent=63 // pred_fallthru
          _
      $region64: #{tpu_custom_call.1} parent=5 // pred_fallthru
        _
    $region6: #{tpu_custom_call.1} parent=1 // loop_footer
      %s24 = sadd.s32 1, %s20
    $region7: #{tpu_custom_call.1} parent=1 // loop_footer_branch
      %19 = sbr.rel target = $region3
    $region8: #{tpu_custom_call.1} parent=1 // loop_exit
      _
    %5674 = vsyncpa [#allocation5], 1
    %s5675 = scalar_lea.sflag [#allocation5], 1
    %5676 = vsyncpa %s5675, 1

</llo_original>
